<compile_context>
chip_gen: v7x
topology: tpu7x:2x2x1
jax: 0.10.0
libtpu: 0.0.40
codegen_flags: <defaults>
</compile_context>

<pallas_src>
import jax
import jax.numpy as jnp
import numpy as np
from jax.experimental import pallas as pl
from jax.experimental.pallas import tpu as pltpu

LRELU_SLOPE = 0.1


def _round_up(x, m):
    return ((x + m - 1) // m) * m


# --------------------------------------------------------------------------
# Bundling policy: fuse `nb` consecutive groups into one block-diagonal matmul
# so both the im2col copy width (nb*cin_g) and the matmul N (nb*cout_g) are
# lane-dense (>=128) where possible, with a cap on the bundled-weight VMEM.
# --------------------------------------------------------------------------
def _choose_bundle(groups, cin_g, cout_g, K, max_weight_bytes=8 * 1024 * 1024):
    divisors = [d for d in range(1, groups + 1) if groups % d == 0]
    nb = groups                                   # default: widest possible copies
    for d in divisors:                            # smallest fully lane-dense divisor
        if d * cin_g >= 128 and d * cout_g >= 128:
            nb = d
            break
    # cap total block-diagonal weight bytes: (groups/nb) bundles of (K*nb*cin_g, nb*cout_g)
    while nb > 1 and (groups // nb) * (K * nb * cin_g) * (nb * cout_g) * 2 > max_weight_bytes:
        smaller = [d for d in divisors if d < nb]
        nb = smaller[-1] if smaller else 1
    return nb


# --------------------------------------------------------------------------
# Per-layer time-tile choice from a conservative VMEM footprint model.
# --------------------------------------------------------------------------
def _choose_lt(Lout, K, s, H, Cin, Cout, cin_b, cout_b, n_bundles, n_patch_slots,
               out_bytes, lt_max, budget_bytes=26 * 1024 * 1024):
    cap = min((lt_max // H) * H, _round_up(max(Lout, 1), H))
    cap = max(cap, H)

    def footprint(lt):
        return (2 * s * lt * Cin * 2                      # current input block (x2 buffers, bf16)
                + 2 * s * H * Cin * 2                     # halo block (x2 buffers)
                + s * (lt + H) * Cin * 2                  # window scratch
                + n_patch_slots * lt * K * cin_b * 2      # im2col scratch
                + 2 * n_bundles * K * cin_b * cout_b * 2  # weights (assume double-buffered)
                + 2 * lt * Cout * out_bytes               # output block (x2 buffers)
                + 2 * Cout * 4)                           # bias

    lt = cap
    while lt > H and footprint(lt) > budget_bytes:
        lt -= H
    return lt


# --------------------------------------------------------------------------
# Pallas kernel: grouped Conv1d with fused LeakyReLU on the *input*.
#   in-kernel im2col (one lane-dense copy per tap per bundle) -> one MXU matmul
#   per bundle of groups (block-diagonal weights), f32 accumulation.
# --------------------------------------------------------------------------
def _make_conv_kernel(K, stride, Lt, n_bundles, cin_b, cout_b,
                      n_patch_slots, apply_in_lrelu, slope):
    qr = [divmod(k, stride) for k in range(K)]            # tap k = q*stride + r

    def kernel(xc_ref, xn_ref, w_ref, b_ref, o_ref, win_ref, patch_ref):
        # xc_ref    : (1, s, Lt, Cin) bf16   current tile (phase-major)
        # xn_ref    : (1, s, H,  Cin) bf16   halo rows of the next tile
        # w_ref     : (n_bundles, K*cin_b, cout_b) bf16   block-diagonal bundled weights
        # b_ref     : (1, Cout) f32
        # o_ref     : (1, Lt, Cout)          pre-activation output (bf16 or f32)
        # win_ref   : (s, Lt+H, Cin) bf16    scratch: assembled window
        # patch_ref : (n_patch_slots, Lt, K*cin_b) bf16   scratch: per-bundle im2col
        def prep(v):
            if not apply_in_lrelu:
                return v
            return jnp.where(v >= 0, v, slope * v)        # bf16 leaky-relu (fused producer act)

        # assemble the window; leaky-relu of the producer's pre-activation is fused here
        # (zero padding is invariant under leaky-relu)
        win_ref[:, :Lt, :] = prep(xc_ref[0])
        win_ref[:, Lt:, :] = prep(xn_ref[0])

        for bi in range(n_bundles):
            c0 = bi * cin_b
            slot = bi % n_patch_slots                     # double-buffer across bundles
            # im2col: ONE contiguous copy per tap (width cin_b), lane-dense on deep layers
            for k, (q, r) in enumerate(qr):
                patch_ref[slot, :, k * cin_b:(k + 1) * cin_b] = \
                    win_ref[r, q:q + Lt, c0:c0 + cin_b]
            # one fat matmul per bundle on the MXU, f32 accumulation
            acc = jnp.dot(patch_ref[slot], w_ref[bi],
                          preferred_element_type=jnp.float32)
            acc = acc + b_ref[:, bi * cout_b:(bi + 1) * cout_b]
            o_ref[0, :, bi * cout_b:(bi + 1) * cout_b] = acc.astype(o_ref.dtype)

    return kernel


def conv1d_lrelu_fused_pallas(x, w, b, *, stride, padding, groups, apply_in_lrelu,
                              out_dtype=jnp.bfloat16, lt_max=1024):
    """Grouped PyTorch-semantics Conv1d on channels-last input.

    If apply_in_lrelu is True the kernel consumes leaky_relu(x) (x being the previous
    layer's bf16 pre-activation).  Returns the pre-activation (B, Lout, Cout).

    x : (B, L, Cin)   float32 or bfloat16
    w : (Cout, Cin//groups, K)   PyTorch Conv1d weight layout
    b : (Cout,)
    """
    B, L, Cin = x.shape
    Cout, cin_g, K = w.shape
    assert Cin == cin_g * groups and Cout % groups == 0
    cout_g = Cout // groups
    s = stride
    Lout = (L + 2 * padding - K) // s + 1
    q_max = (K - 1) // s                       # max phase-row offset of any tap
    H = _round_up(max(q_max, 1), 16)           # halo rows per phase (sublane aligned)

    nb = _choose_bundle(groups, cin_g, cout_g, K)
    n_bundles = groups // nb
    cin_b, cout_b = nb * cin_g, nb * cout_g
    n_patch_slots = 2 if n_bundles > 1 else 1

    out_bytes = jnp.dtype(out_dtype).itemsize
    Lt = _choose_lt(Lout, K, s, H, Cin, Cout, cin_b, cout_b, n_bundles,
                    n_patch_slots, out_bytes, lt_max)
    assert Lt % H == 0 and Lt >= H
    halo_step = Lt // H
    n_tiles = -(-Lout // Lt)
    Lout_p = n_tiles * Lt

    # Phase-major repack (no duplication): xr[b, r, q, c] = xpad[b, q*s + r, c]
    # => tap k = q_k*s + r_k of output row t reads xr[b, r_k, q_k + t, :]
    min_nc = -(-(L + padding) // s)                       # must cover left pad + signal
    NCp = Lt * max(n_tiles + 1, -(-min_nc // Lt))         # halo block (ii+1) always exists
    assert NCp >= Lout_p + H and NCp % H == 0
    total = NCp * s
    xb = x.astype(jnp.bfloat16)
    xpad = jnp.pad(xb, ((0, 0), (padding, total - L - padding), (0, 0)))
    xr = xpad.reshape(B, NCp, s, Cin).transpose(0, 2, 1, 3)

    # block-diagonal bundled weights: (n_bundles, K*cin_b, cout_b),
    # contraction rows ordered (k, local_group, ci) to match the im2col layout
    w_g = w.reshape(n_bundles, nb, cout_g, cin_g, K).astype(jnp.float32)
    eye = jnp.eye(nb, dtype=jnp.float32)
    wr = jnp.einsum('bgoik,gh->bkgiho', w_g, eye)
    wr = wr.reshape(n_bundles, K * cin_b, cout_b).astype(jnp.bfloat16)
    br = b.reshape(1, Cout).astype(jnp.float32)

    kernel = _make_conv_kernel(K, s, Lt, n_bundles, cin_b, cout_b,
                               n_patch_slots, apply_in_lrelu, LRELU_SLOPE)

    out = pl.pallas_call(
        kernel,
        out_shape=jax.ShapeDtypeStruct((B, Lout_p, Cout), out_dtype),
        grid=(B, n_tiles),
        in_specs=[
            pl.BlockSpec((1, s, Lt, Cin), lambda bb, ii: (bb, 0, ii, 0)),
            pl.BlockSpec((1, s, H, Cin),
                         lambda bb, ii: (bb, 0, (ii + 1) * halo_step, 0)),
            pl.BlockSpec((n_bundles, K * cin_b, cout_b), lambda bb, ii: (0, 0, 0)),
            pl.BlockSpec((1, Cout), lambda bb, ii: (0, 0)),
        ],
        out_specs=pl.BlockSpec((1, Lt, Cout), lambda bb, ii: (bb, ii, 0)),
        scratch_shapes=[
            pltpu.VMEM((s, Lt + H, Cin), jnp.bfloat16),
            pltpu.VMEM((n_patch_slots, Lt, K * cin_b), jnp.bfloat16),
        ],
        compiler_params=pltpu.CompilerParams(
            dimension_semantics=("parallel", "parallel"),
            vmem_limit_bytes=32 * 1024 * 1024),
    )(xr, xr, wr, br)
    # TODO(synk): fuse the next layer's phase-major repack into out_specs (saves one XLA
    # pad/transpose pass per activation) and lane-pack time for the small-channel early
    # layers (Cin=1/16/32); also specialize the Cout=1 output layer to per-tap dots so it
    # skips the im2col patch. Skipped to keep the index math simple.
    return out[:, :Lout, :]


# --------------------------------------------------------------------------
# Parameter construction (deterministic, PyTorch-default-style init).
# weight_norm(v, g=||v||) is the identity on the effective weight at init.
# --------------------------------------------------------------------------
def init_params(key, channels=16, num_layers=5, max_channels=512, max_groups=8):
    def conv_init(k, cout, cin_g, ksz):
        kw, kb = jax.random.split(k)
        bound = 1.0 / np.sqrt(cin_g * ksz)
        w = jax.random.uniform(kw, (cout, cin_g, ksz), jnp.float32, -bound, bound)
        b = jax.random.uniform(kb, (cout,), jnp.float32, -bound, bound)
        return w, b

    keys = jax.random.split(key, num_layers + 2)
    params = {}
    params["input"] = conv_init(keys[0], channels, 1, 41) + (1,)
    convs = []
    c, g = channels, 1
    for i in range(num_layers):
        cout = min(c * 2, max_channels)
        w, b = conv_init(keys[i + 1], cout, c // g, 41)
        convs.append((w, b, g))
        g = min(g * 2, max_groups)
        c = cout
    params["convs"] = convs
    params["output"] = conv_init(keys[-1], 1, c, 21) + (1,)
    return params


# --------------------------------------------------------------------------
# Forward pass (mirrors ScaleDiscriminator.forward).  Each Pallas layer emits
# only the bf16 pre-activation; the leaky-relu is applied inside the next layer.
# --------------------------------------------------------------------------
def scale_discriminator_forward(params, x, scale=1, lt_max=1024):
    # x: (B, T) float32 (same as the PyTorch input before .unsqueeze(1))
    B, T = x.shape
    if scale > 1:                               # nn.AvgPool1d(scale); identity for scale=1
        Tp = (T // scale) * scale
        x = x[:, :Tp].reshape(B, Tp // scale, scale).mean(-1)
    h = x[:, :, None]                           # (B, L, C=1) channels-last

    w, b, g = params["input"]
    h = conv1d_lrelu_fused_pallas(h, w, b, stride=3, padding=21, groups=g,
                                  apply_in_lrelu=False, out_dtype=jnp.bfloat16,
                                  lt_max=lt_max)
    feats = []
    for (w, b, g) in params["convs"]:
        h = conv1d_lrelu_fused_pallas(h, w, b, stride=3, padding=21, groups=g,
                                      apply_in_lrelu=True, out_dtype=jnp.bfloat16,
                                      lt_max=lt_max)
        feats.append(jnp.transpose(h, (0, 2, 1)))          # PyTorch (B, C, L) pre-act (bf16)
    w, b, g = params["output"]
    out = conv1d_lrelu_fused_pallas(h, w, b, stride=1, padding=11, groups=g,
                                    apply_in_lrelu=True, out_dtype=jnp.float32,
                                    lt_max=lt_max)
    return jnp.transpose(out, (0, 2, 1)), feats            # ((B, 1, L_out), [feats...])


# --------------------------------------------------------------------------
# Pure-JAX reference with numerics matched to the kernels (bf16 operands and
# bf16 activation storage, f32 accumulation) so the tolerance only absorbs
# summation-order noise.
# --------------------------------------------------------------------------
def _ref_conv1d(x_ncl, w, b, stride, padding, groups, apply_in_lrelu):
    xb = x_ncl.astype(jnp.bfloat16)                       # bf16 storage of the input
    if apply_in_lrelu:
        xb = jnp.where(xb >= 0, xb, LRELU_SLOPE * xb)     # bf16 leaky-relu (matches kernel)
    xb = xb.astype(jnp.float32)
    wb = w.astype(jnp.bfloat16).astype(jnp.float32)
    y = jax.lax.conv_general_dilated(
        xb, wb, window_strides=(stride,), padding=[(padding, padding)],
        dimension_numbers=("NCH", "OIH", "NCH"), feature_group_count=groups,
        precision=jax.lax.Precision.HIGHEST)
    return y + b[None, :, None]


def _ref_forward(params, x, scale=1):
    B, T = x.shape
    if scale > 1:
        Tp = (T // scale) * scale
        x = x[:, :Tp].reshape(B, Tp // scale, scale).mean(-1)
    h = x[:, None, :]
    w, b, g = params["input"]
    h = _ref_conv1d(h, w, b, 3, 21, g, apply_in_lrelu=False)
    h = h.astype(jnp.bfloat16).astype(jnp.float32)        # bf16 activation storage
    feats = []
    for (w, b, g) in params["convs"]:
        h = _ref_conv1d(h, w, b, 3, 21, g, apply_in_lrelu=True)
        h = h.astype(jnp.bfloat16).astype(jnp.float32)    # bf16 storage (matches kernel out)
        feats.append(h)
    w, b, g = params["output"]
    out = _ref_conv1d(h, w, b, 1, 11, g, apply_in_lrelu=True)
    return out, feats


if __name__ == "__main__":
    key = jax.random.PRNGKey(0)
    kp, kx = jax.random.split(key)
    params = init_params(kp)

    def check(T, lt_max):
        kxt = jax.random.fold_in(kx, T)
        x = jax.random.normal(kxt, (2, T), jnp.float32)

        out, feats = scale_discriminator_forward(params, x, scale=1, lt_max=lt_max)
        out = jax.block_until_ready(out)
        feats = [jax.block_until_ready(f) for f in feats]

        ref_out, ref_feats = _ref_forward(params, x, scale=1)
        np.testing.assert_allclose(np.asarray(out, dtype=np.float32),
                                   np.asarray(ref_out, dtype=np.float32),
                                   rtol=1e-2, atol=1e-2)
        for f, rf in zip(feats, ref_feats):
            np.testing.assert_allclose(np.asarray(f.astype(jnp.float32)),
                                       np.asarray(rf, dtype=np.float32),
                                       rtol=1e-2, atol=2e-2)

    check(T=768, lt_max=1024)      # single-tile path per layer, multi-bundle layer included
    check(T=4096, lt_max=16)       # forces multi-tile + halo path (incl. grouped conv layers)

    print("KERNEL_OK")
</pallas_src>

<mosaic_0001>
module attributes {stable_mosaic.version = 11 : i64} {
  func.func @kernel(%arg0: i32, %arg1: i32, %arg2: memref<1x3x272x1xbf16, #tpu.memory_space<vmem>>, %arg3: memref<1x3x16x1xbf16, #tpu.memory_space<vmem>>, %arg4: memref<1x41x16xbf16, #tpu.memory_space<vmem>>, %arg5: memref<1x16xf32, #tpu.memory_space<vmem>>, %arg6: memref<1x272x16xbf16, #tpu.memory_space<vmem>>, %arg7: memref<3x288x1xbf16, #tpu.memory_space<vmem>>, %arg8: memref<1x272x41xbf16, #tpu.memory_space<vmem>>) attributes {dimension_semantics = [#tpu.dimension_semantics<parallel>, #tpu.dimension_semantics<parallel>], iteration_bounds = array<i64: 2, 1>, scalar_prefetch = 0 : i64, scratch_operands = 2 : i64, tpu.core_type = #tpu.core_type<tc>, window_params = [{transform_indices = @transform_0, window_bounds = array<i64: 1, 3, 272, 1>}, {transform_indices = @transform_1, window_bounds = array<i64: 1, 3, 16, 1>}, {pipeline_mode = #tpu.pipeline_mode<synchronous>, transform_indices = @transform_2, window_bounds = array<i64: 1, 41, 16>}, {pipeline_mode = #tpu.pipeline_mode<synchronous>, transform_indices = @transform_3, window_bounds = array<i64: 1, 16>}, {transform_indices = @transform_4, window_bounds = array<i64: 1, 272, 16>}]} {
    %c0 = arith.constant 0 : index
    %c0_0 = arith.constant 0 : index
    %c0_1 = arith.constant 0 : index
    %c0_2 = arith.constant 0 : index
    %0 = vector.load %arg2[%c0, %c0_0, %c0_1, %c0_2] : memref<1x3x272x1xbf16, #tpu.memory_space<vmem>>, vector<1x3x272x1xbf16>
    %1 = vector.shape_cast %0 : vector<1x3x272x1xbf16> to vector<3x272x1xbf16>
    %c0_3 = arith.constant 0 : index
    %c0_4 = arith.constant 0 : index
    %c0_5 = arith.constant 0 : index
    %2 = vector.load %arg7[%c0_3, %c0_4, %c0_5] : memref<3x288x1xbf16, #tpu.memory_space<vmem>>, vector<3x272x1xbf16>
    tpu.vector_store %arg7[%c0_3, %c0_4, %c0_5], %1 {strides = array<i32>} : memref<3x288x1xbf16, #tpu.memory_space<vmem>>, vector<3x272x1xbf16>,
    %c0_6 = arith.constant 0 : index
    %c0_7 = arith.constant 0 : index
    %c0_8 = arith.constant 0 : index
    %c0_9 = arith.constant 0 : index
    %3 = vector.load %arg3[%c0_6, %c0_7, %c0_8, %c0_9] : memref<1x3x16x1xbf16, #tpu.memory_space<vmem>>, vector<1x3x16x1xbf16>
    %4 = vector.shape_cast %3 : vector<1x3x16x1xbf16> to vector<3x16x1xbf16>
    %c0_10 = arith.constant 0 : index
    %c272 = arith.constant 272 : index
    %c0_11 = arith.constant 0 : index
    %5 = vector.load %arg7[%c0_10, %c272, %c0_11] : memref<3x288x1xbf16, #tpu.memory_space<vmem>>, vector<3x16x1xbf16>
    tpu.vector_store %arg7[%c0_10, %c272, %c0_11], %4 {strides = array<i32>} : memref<3x288x1xbf16, #tpu.memory_space<vmem>>, vector<3x16x1xbf16>,
    %c0_12 = arith.constant 0 : index
    %c0_13 = arith.constant 0 : index
    %c0_14 = arith.constant 0 : index
    %6 = vector.load %arg7[%c0_12, %c0_13, %c0_14] : memref<3x288x1xbf16, #tpu.memory_space<vmem>>, vector<1x272x1xbf16>
    %7 = vector.shape_cast %6 : vector<1x272x1xbf16> to vector<272x1xbf16>
    %c0_15 = arith.constant 0 : index
    %c0_16 = arith.constant 0 : index
    %c0_17 = arith.constant 0 : index
    %8 = vector.load %arg8[%c0_15, %c0_16, %c0_17] : memref<1x272x41xbf16, #tpu.memory_space<vmem>>, vector<1x272x1xbf16>
    %9 = vector.shape_cast %8 : vector<1x272x1xbf16> to vector<272x1xbf16>
    %10 = vector.shape_cast %7 : vector<272x1xbf16> to vector<1x272x1xbf16>
    tpu.vector_store %arg8[%c0_15, %c0_16, %c0_17], %10 {strides = array<i32>} : memref<1x272x41xbf16, #tpu.memory_space<vmem>>, vector<1x272x1xbf16>,
    %c1 = arith.constant 1 : index
    %c0_18 = arith.constant 0 : index
    %c0_19 = arith.constant 0 : index
    %11 = vector.load %arg7[%c1, %c0_18, %c0_19] : memref<3x288x1xbf16, #tpu.memory_space<vmem>>, vector<1x272x1xbf16>
    %12 = vector.shape_cast %11 : vector<1x272x1xbf16> to vector<272x1xbf16>
    %c0_20 = arith.constant 0 : index
    %c0_21 = arith.constant 0 : index
    %c1_22 = arith.constant 1 : index
    %13 = vector.load %arg8[%c0_20, %c0_21, %c1_22] : memref<1x272x41xbf16, #tpu.memory_space<vmem>>, vector<1x272x1xbf16>
    %14 = vector.shape_cast %13 : vector<1x272x1xbf16> to vector<272x1xbf16>
    %15 = vector.shape_cast %12 : vector<272x1xbf16> to vector<1x272x1xbf16>
    tpu.vector_store %arg8[%c0_20, %c0_21, %c1_22], %15 {strides = array<i32>} : memref<1x272x41xbf16, #tpu.memory_space<vmem>>, vector<1x272x1xbf16>,
    %c2 = arith.constant 2 : index
    %c0_23 = arith.constant 0 : index
    %c0_24 = arith.constant 0 : index
    %16 = vector.load %arg7[%c2, %c0_23, %c0_24] : memref<3x288x1xbf16, #tpu.memory_space<vmem>>, vector<1x272x1xbf16>
    %17 = vector.shape_cast %16 : vector<1x272x1xbf16> to vector<272x1xbf16>
    %c0_25 = arith.constant 0 : index
    %c0_26 = arith.constant 0 : index
    %c2_27 = arith.constant 2 : index
    %18 = vector.load %arg8[%c0_25, %c0_26, %c2_27] : memref<1x272x41xbf16, #tpu.memory_space<vmem>>, vector<1x272x1xbf16>
    %19 = vector.shape_cast %18 : vector<1x272x1xbf16> to vector<272x1xbf16>
    %20 = vector.shape_cast %17 : vector<272x1xbf16> to vector<1x272x1xbf16>
    tpu.vector_store %arg8[%c0_25, %c0_26, %c2_27], %20 {strides = array<i32>} : memref<1x272x41xbf16, #tpu.memory_space<vmem>>, vector<1x272x1xbf16>,
    %c0_28 = arith.constant 0 : index
    %c1_29 = arith.constant 1 : index
    %c0_30 = arith.constant 0 : index
    %21 = vector.load %arg7[%c0_28, %c1_29, %c0_30] : memref<3x288x1xbf16, #tpu.memory_space<vmem>>, vector<1x272x1xbf16>
    %22 = vector.shape_cast %21 : vector<1x272x1xbf16> to vector<272x1xbf16>
    %c0_31 = arith.constant 0 : index
    %c0_32 = arith.constant 0 : index
    %c3 = arith.constant 3 : index
    %23 = vector.load %arg8[%c0_31, %c0_32, %c3] : memref<1x272x41xbf16, #tpu.memory_space<vmem>>, vector<1x272x1xbf16>
    %24 = vector.shape_cast %23 : vector<1x272x1xbf16> to vector<272x1xbf16>
    %25 = vector.shape_cast %22 : vector<272x1xbf16> to vector<1x272x1xbf16>
    tpu.vector_store %arg8[%c0_31, %c0_32, %c3], %25 {strides = array<i32>} : memref<1x272x41xbf16, #tpu.memory_space<vmem>>, vector<1x272x1xbf16>,
    %c1_33 = arith.constant 1 : index
    %c1_34 = arith.constant 1 : index
    %c0_35 = arith.constant 0 : index
    %26 = vector.load %arg7[%c1_33, %c1_34, %c0_35] : memref<3x288x1xbf16, #tpu.memory_space<vmem>>, vector<1x272x1xbf16>
    %27 = vector.shape_cast %26 : vector<1x272x1xbf16> to vector<272x1xbf16>
    %c0_36 = arith.constant 0 : index
    %c0_37 = arith.constant 0 : index
    %c4 = arith.constant 4 : index
    %28 = vector.load %arg8[%c0_36, %c0_37, %c4] : memref<1x272x41xbf16, #tpu.memory_space<vmem>>, vector<1x272x1xbf16>
    %29 = vector.shape_cast %28 : vector<1x272x1xbf16> to vector<272x1xbf16>
    %30 = vector.shape_cast %27 : vector<272x1xbf16> to vector<1x272x1xbf16>
    tpu.vector_store %arg8[%c0_36, %c0_37, %c4], %30 {strides = array<i32>} : memref<1x272x41xbf16, #tpu.memory_space<vmem>>, vector<1x272x1xbf16>,
    %c2_38 = arith.constant 2 : index
    %c1_39 = arith.constant 1 : index
    %c0_40 = arith.constant 0 : index
    %31 = vector.load %arg7[%c2_38, %c1_39, %c0_40] : memref<3x288x1xbf16, #tpu.memory_space<vmem>>, vector<1x272x1xbf16>
    %32 = vector.shape_cast %31 : vector<1x272x1xbf16> to vector<272x1xbf16>
    %c0_41 = arith.constant 0 : index
    %c0_42 = arith.constant 0 : index
    %c5 = arith.constant 5 : index
    %33 = vector.load %arg8[%c0_41, %c0_42, %c5] : memref<1x272x41xbf16, #tpu.memory_space<vmem>>, vector<1x272x1xbf16>
    %34 = vector.shape_cast %33 : vector<1x272x1xbf16> to vector<272x1xbf16>
    %35 = vector.shape_cast %32 : vector<272x1xbf16> to vector<1x272x1xbf16>
    tpu.vector_store %arg8[%c0_41, %c0_42, %c5], %35 {strides = array<i32>} : memref<1x272x41xbf16, #tpu.memory_space<vmem>>, vector<1x272x1xbf16>,
    %c0_43 = arith.constant 0 : index
    %c2_44 = arith.constant 2 : index
    %c0_45 = arith.constant 0 : index
    %36 = vector.load %arg7[%c0_43, %c2_44, %c0_45] : memref<3x288x1xbf16, #tpu.memory_space<vmem>>, vector<1x272x1xbf16>
    %37 = vector.shape_cast %36 : vector<1x272x1xbf16> to vector<272x1xbf16>
    %c0_46 = arith.constant 0 : index
    %c0_47 = arith.constant 0 : index
    %c6 = arith.constant 6 : index
    %38 = vector.load %arg8[%c0_46, %c0_47, %c6] : memref<1x272x41xbf16, #tpu.memory_space<vmem>>, vector<1x272x1xbf16>
    %39 = vector.shape_cast %38 : vector<1x272x1xbf16> to vector<272x1xbf16>
    %40 = vector.shape_cast %37 : vector<272x1xbf16> to vector<1x272x1xbf16>
    tpu.vector_store %arg8[%c0_46, %c0_47, %c6], %40 {strides = array<i32>} : memref<1x272x41xbf16, #tpu.memory_space<vmem>>, vector<1x272x1xbf16>,
    %c1_48 = arith.constant 1 : index
    %c2_49 = arith.constant 2 : index
    %c0_50 = arith.constant 0 : index
    %41 = vector.load %arg7[%c1_48, %c2_49, %c0_50] : memref<3x288x1xbf16, #tpu.memory_space<vmem>>, vector<1x272x1xbf16>
    %42 = vector.shape_cast %41 : vector<1x272x1xbf16> to vector<272x1xbf16>
    %c0_51 = arith.constant 0 : index
    %c0_52 = arith.constant 0 : index
    %c7 = arith.constant 7 : index
    %43 = vector.load %arg8[%c0_51, %c0_52, %c7] : memref<1x272x41xbf16, #tpu.memory_space<vmem>>, vector<1x272x1xbf16>
    %44 = vector.shape_cast %43 : vector<1x272x1xbf16> to vector<272x1xbf16>
    %45 = vector.shape_cast %42 : vector<272x1xbf16> to vector<1x272x1xbf16>
    tpu.vector_store %arg8[%c0_51, %c0_52, %c7], %45 {strides = array<i32>} : memref<1x272x41xbf16, #tpu.memory_space<vmem>>, vector<1x272x1xbf16>,
    %c2_53 = arith.constant 2 : index
    %c2_54 = arith.constant 2 : index
    %c0_55 = arith.constant 0 : index
    %46 = vector.load %arg7[%c2_53, %c2_54, %c0_55] : memref<3x288x1xbf16, #tpu.memory_space<vmem>>, vector<1x272x1xbf16>
    %47 = vector.shape_cast %46 : vector<1x272x1xbf16> to vector<272x1xbf16>
    %c0_56 = arith.constant 0 : index
    %c0_57 = arith.constant 0 : index
    %c8 = arith.constant 8 : index
    %48 = vector.load %arg8[%c0_56, %c0_57, %c8] : memref<1x272x41xbf16, #tpu.memory_space<vmem>>, vector<1x272x1xbf16>
    %49 = vector.shape_cast %48 : vector<1x272x1xbf16> to vector<272x1xbf16>
    %50 = vector.shape_cast %47 : vector<272x1xbf16> to vector<1x272x1xbf16>
    tpu.vector_store %arg8[%c0_56, %c0_57, %c8], %50 {strides = array<i32>} : memref<1x272x41xbf16, #tpu.memory_space<vmem>>, vector<1x272x1xbf16>,
    %c0_58 = arith.constant 0 : index
    %c3_59 = arith.constant 3 : index
    %c0_60 = arith.constant 0 : index
    %51 = vector.load %arg7[%c0_58, %c3_59, %c0_60] : memref<3x288x1xbf16, #tpu.memory_space<vmem>>, vector<1x272x1xbf16>
    %52 = vector.shape_cast %51 : vector<1x272x1xbf16> to vector<272x1xbf16>
    %c0_61 = arith.constant 0 : index
    %c0_62 = arith.constant 0 : index
    %c9 = arith.constant 9 : index
    %53 = vector.load %arg8[%c0_61, %c0_62, %c9] : memref<1x272x41xbf16, #tpu.memory_space<vmem>>, vector<1x272x1xbf16>
    %54 = vector.shape_cast %53 : vector<1x272x1xbf16> to vector<272x1xbf16>
    %55 = vector.shape_cast %52 : vector<272x1xbf16> to vector<1x272x1xbf16>
    tpu.vector_store %arg8[%c0_61, %c0_62, %c9], %55 {strides = array<i32>} : memref<1x272x41xbf16, #tpu.memory_space<vmem>>, vector<1x272x1xbf16>,
    %c1_63 = arith.constant 1 : index
    %c3_64 = arith.constant 3 : index
    %c0_65 = arith.constant 0 : index
    %56 = vector.load %arg7[%c1_63, %c3_64, %c0_65] : memref<3x288x1xbf16, #tpu.memory_space<vmem>>, vector<1x272x1xbf16>
    %57 = vector.shape_cast %56 : vector<1x272x1xbf16> to vector<272x1xbf16>
    %c0_66 = arith.constant 0 : index
    %c0_67 = arith.constant 0 : index
    %c10 = arith.constant 10 : index
    %58 = vector.load %arg8[%c0_66, %c0_67, %c10] : memref<1x272x41xbf16, #tpu.memory_space<vmem>>, vector<1x272x1xbf16>
    %59 = vector.shape_cast %58 : vector<1x272x1xbf16> to vector<272x1xbf16>
    %60 = vector.shape_cast %57 : vector<272x1xbf16> to vector<1x272x1xbf16>
    tpu.vector_store %arg8[%c0_66, %c0_67, %c10], %60 {strides = array<i32>} : memref<1x272x41xbf16, #tpu.memory_space<vmem>>, vector<1x272x1xbf16>,
    %c2_68 = arith.constant 2 : index
    %c3_69 = arith.constant 3 : index
    %c0_70 = arith.constant 0 : index
    %61 = vector.load %arg7[%c2_68, %c3_69, %c0_70] : memref<3x288x1xbf16, #tpu.memory_space<vmem>>, vector<1x272x1xbf16>
    %62 = vector.shape_cast %61 : vector<1x272x1xbf16> to vector<272x1xbf16>
    %c0_71 = arith.constant 0 : index
    %c0_72 = arith.constant 0 : index
    %c11 = arith.constant 11 : index
    %63 = vector.load %arg8[%c0_71, %c0_72, %c11] : memref<1x272x41xbf16, #tpu.memory_space<vmem>>, vector<1x272x1xbf16>
    %64 = vector.shape_cast %63 : vector<1x272x1xbf16> to vector<272x1xbf16>
    %65 = vector.shape_cast %62 : vector<272x1xbf16> to vector<1x272x1xbf16>
    tpu.vector_store %arg8[%c0_71, %c0_72, %c11], %65 {strides = array<i32>} : memref<1x272x41xbf16, #tpu.memory_space<vmem>>, vector<1x272x1xbf16>,
    %c0_73 = arith.constant 0 : index
    %c4_74 = arith.constant 4 : index
    %c0_75 = arith.constant 0 : index
    %66 = vector.load %arg7[%c0_73, %c4_74, %c0_75] : memref<3x288x1xbf16, #tpu.memory_space<vmem>>, vector<1x272x1xbf16>
    %67 = vector.shape_cast %66 : vector<1x272x1xbf16> to vector<272x1xbf16>
    %c0_76 = arith.constant 0 : index
    %c0_77 = arith.constant 0 : index
    %c12 = arith.constant 12 : index
    %68 = vector.load %arg8[%c0_76, %c0_77, %c12] : memref<1x272x41xbf16, #tpu.memory_space<vmem>>, vector<1x272x1xbf16>
    %69 = vector.shape_cast %68 : vector<1x272x1xbf16> to vector<272x1xbf16>
    %70 = vector.shape_cast %67 : vector<272x1xbf16> to vector<1x272x1xbf16>
    tpu.vector_store %arg8[%c0_76, %c0_77, %c12], %70 {strides = array<i32>} : memref<1x272x41xbf16, #tpu.memory_space<vmem>>, vector<1x272x1xbf16>,
    %c1_78 = arith.constant 1 : index
    %c4_79 = arith.constant 4 : index
    %c0_80 = arith.constant 0 : index
    %71 = vector.load %arg7[%c1_78, %c4_79, %c0_80] : memref<3x288x1xbf16, #tpu.memory_space<vmem>>, vector<1x272x1xbf16>
    %72 = vector.shape_cast %71 : vector<1x272x1xbf16> to vector<272x1xbf16>
    %c0_81 = arith.constant 0 : index
    %c0_82 = arith.constant 0 : index
    %c13 = arith.constant 13 : index
    %73 = vector.load %arg8[%c0_81, %c0_82, %c13] : memref<1x272x41xbf16, #tpu.memory_space<vmem>>, vector<1x272x1xbf16>
    %74 = vector.shape_cast %73 : vector<1x272x1xbf16> to vector<272x1xbf16>
    %75 = vector.shape_cast %72 : vector<272x1xbf16> to vector<1x272x1xbf16>
    tpu.vector_store %arg8[%c0_81, %c0_82, %c13], %75 {strides = array<i32>} : memref<1x272x41xbf16, #tpu.memory_space<vmem>>, vector<1x272x1xbf16>,
    %c2_83 = arith.constant 2 : index
    %c4_84 = arith.constant 4 : index
    %c0_85 = arith.constant 0 : index
    %76 = vector.load %arg7[%c2_83, %c4_84, %c0_85] : memref<3x288x1xbf16, #tpu.memory_space<vmem>>, vector<1x272x1xbf16>
    %77 = vector.shape_cast %76 : vector<1x272x1xbf16> to vector<272x1xbf16>
    %c0_86 = arith.constant 0 : index
    %c0_87 = arith.constant 0 : index
    %c14 = arith.constant 14 : index
    %78 = vector.load %arg8[%c0_86, %c0_87, %c14] : memref<1x272x41xbf16, #tpu.memory_space<vmem>>, vector<1x272x1xbf16>
    %79 = vector.shape_cast %78 : vector<1x272x1xbf16> to vector<272x1xbf16>
    %80 = vector.shape_cast %77 : vector<272x1xbf16> to vector<1x272x1xbf16>
    tpu.vector_store %arg8[%c0_86, %c0_87, %c14], %80 {strides = array<i32>} : memref<1x272x41xbf16, #tpu.memory_space<vmem>>, vector<1x272x1xbf16>,
    %c0_88 = arith.constant 0 : index
    %c5_89 = arith.constant 5 : index
    %c0_90 = arith.constant 0 : index
    %81 = vector.load %arg7[%c0_88, %c5_89, %c0_90] : memref<3x288x1xbf16, #tpu.memory_space<vmem>>, vector<1x272x1xbf16>
    %82 = vector.shape_cast %81 : vector<1x272x1xbf16> to vector<272x1xbf16>
    %c0_91 = arith.constant 0 : index
    %c0_92 = arith.constant 0 : index
    %c15 = arith.constant 15 : index
    %83 = vector.load %arg8[%c0_91, %c0_92, %c15] : memref<1x272x41xbf16, #tpu.memory_space<vmem>>, vector<1x272x1xbf16>
    %84 = vector.shape_cast %83 : vector<1x272x1xbf16> to vector<272x1xbf16>
    %85 = vector.shape_cast %82 : vector<272x1xbf16> to vector<1x272x1xbf16>
    tpu.vector_store %arg8[%c0_91, %c0_92, %c15], %85 {strides = array<i32>} : memref<1x272x41xbf16, #tpu.memory_space<vmem>>, vector<1x272x1xbf16>,
    %c1_93 = arith.constant 1 : index
    %c5_94 = arith.constant 5 : index
    %c0_95 = arith.constant 0 : index
    %86 = vector.load %arg7[%c1_93, %c5_94, %c0_95] : memref<3x288x1xbf16, #tpu.memory_space<vmem>>, vector<1x272x1xbf16>
    %87 = vector.shape_cast %86 : vector<1x272x1xbf16> to vector<272x1xbf16>
    %c0_96 = arith.constant 0 : index
    %c0_97 = arith.constant 0 : index
    %c16 = arith.constant 16 : index
    %88 = vector.load %arg8[%c0_96, %c0_97, %c16] : memref<1x272x41xbf16, #tpu.memory_space<vmem>>, vector<1x272x1xbf16>
    %89 = vector.shape_cast %88 : vector<1x272x1xbf16> to vector<272x1xbf16>
    %90 = vector.shape_cast %87 : vector<272x1xbf16> to vector<1x272x1xbf16>
    tpu.vector_store %arg8[%c0_96, %c0_97, %c16], %90 {strides = array<i32>} : memref<1x272x41xbf16, #tpu.memory_space<vmem>>, vector<1x272x1xbf16>,
    %c2_98 = arith.constant 2 : index
    %c5_99 = arith.constant 5 : index
    %c0_100 = arith.constant 0 : index
    %91 = vector.load %arg7[%c2_98, %c5_99, %c0_100] : memref<3x288x1xbf16, #tpu.memory_space<vmem>>, vector<1x272x1xbf16>
    %92 = vector.shape_cast %91 : vector<1x272x1xbf16> to vector<272x1xbf16>
    %c0_101 = arith.constant 0 : index
    %c0_102 = arith.constant 0 : index
    %c17 = arith.constant 17 : index
    %93 = vector.load %arg8[%c0_101, %c0_102, %c17] : memref<1x272x41xbf16, #tpu.memory_space<vmem>>, vector<1x272x1xbf16>
    %94 = vector.shape_cast %93 : vector<1x272x1xbf16> to vector<272x1xbf16>
    %95 = vector.shape_cast %92 : vector<272x1xbf16> to vector<1x272x1xbf16>
    tpu.vector_store %arg8[%c0_101, %c0_102, %c17], %95 {strides = array<i32>} : memref<1x272x41xbf16, #tpu.memory_space<vmem>>, vector<1x272x1xbf16>,
    %c0_103 = arith.constant 0 : index
    %c6_104 = arith.constant 6 : index
    %c0_105 = arith.constant 0 : index
    %96 = vector.load %arg7[%c0_103, %c6_104, %c0_105] : memref<3x288x1xbf16, #tpu.memory_space<vmem>>, vector<1x272x1xbf16>
    %97 = vector.shape_cast %96 : vector<1x272x1xbf16> to vector<272x1xbf16>
    %c0_106 = arith.constant 0 : index
    %c0_107 = arith.constant 0 : index
    %c18 = arith.constant 18 : index
    %98 = vector.load %arg8[%c0_106, %c0_107, %c18] : memref<1x272x41xbf16, #tpu.memory_space<vmem>>, vector<1x272x1xbf16>
    %99 = vector.shape_cast %98 : vector<1x272x1xbf16> to vector<272x1xbf16>
    %100 = vector.shape_cast %97 : vector<272x1xbf16> to vector<1x272x1xbf16>
    tpu.vector_store %arg8[%c0_106, %c0_107, %c18], %100 {strides = array<i32>} : memref<1x272x41xbf16, #tpu.memory_space<vmem>>, vector<1x272x1xbf16>,
    %c1_108 = arith.constant 1 : index
    %c6_109 = arith.constant 6 : index
    %c0_110 = arith.constant 0 : index
    %101 = vector.load %arg7[%c1_108, %c6_109, %c0_110] : memref<3x288x1xbf16, #tpu.memory_space<vmem>>, vector<1x272x1xbf16>
    %102 = vector.shape_cast %101 : vector<1x272x1xbf16> to vector<272x1xbf16>
    %c0_111 = arith.constant 0 : index
    %c0_112 = arith.constant 0 : index
    %c19 = arith.constant 19 : index
    %103 = vector.load %arg8[%c0_111, %c0_112, %c19] : memref<1x272x41xbf16, #tpu.memory_space<vmem>>, vector<1x272x1xbf16>
    %104 = vector.shape_cast %103 : vector<1x272x1xbf16> to vector<272x1xbf16>
    %105 = vector.shape_cast %102 : vector<272x1xbf16> to vector<1x272x1xbf16>
    tpu.vector_store %arg8[%c0_111, %c0_112, %c19], %105 {strides = array<i32>} : memref<1x272x41xbf16, #tpu.memory_space<vmem>>, vector<1x272x1xbf16>,
    %c2_113 = arith.constant 2 : index
    %c6_114 = arith.constant 6 : index
    %c0_115 = arith.constant 0 : index
    %106 = vector.load %arg7[%c2_113, %c6_114, %c0_115] : memref<3x288x1xbf16, #tpu.memory_space<vmem>>, vector<1x272x1xbf16>
    %107 = vector.shape_cast %106 : vector<1x272x1xbf16> to vector<272x1xbf16>
    %c0_116 = arith.constant 0 : index
    %c0_117 = arith.constant 0 : index
    %c20 = arith.constant 20 : index
    %108 = vector.load %arg8[%c0_116, %c0_117, %c20] : memref<1x272x41xbf16, #tpu.memory_space<vmem>>, vector<1x272x1xbf16>
    %109 = vector.shape_cast %108 : vector<1x272x1xbf16> to vector<272x1xbf16>
    %110 = vector.shape_cast %107 : vector<272x1xbf16> to vector<1x272x1xbf16>
    tpu.vector_store %arg8[%c0_116, %c0_117, %c20], %110 {strides = array<i32>} : memref<1x272x41xbf16, #tpu.memory_space<vmem>>, vector<1x272x1xbf16>,
    %c0_118 = arith.constant 0 : index
    %c7_119 = arith.constant 7 : index
    %c0_120 = arith.constant 0 : index
    %111 = vector.load %arg7[%c0_118, %c7_119, %c0_120] : memref<3x288x1xbf16, #tpu.memory_space<vmem>>, vector<1x272x1xbf16>
    %112 = vector.shape_cast %111 : vector<1x272x1xbf16> to vector<272x1xbf16>
    %c0_121 = arith.constant 0 : index
    %c0_122 = arith.constant 0 : index
    %c21 = arith.constant 21 : index
    %113 = vector.load %arg8[%c0_121, %c0_122, %c21] : memref<1x272x41xbf16, #tpu.memory_space<vmem>>, vector<1x272x1xbf16>
    %114 = vector.shape_cast %113 : vector<1x272x1xbf16> to vector<272x1xbf16>
    %115 = vector.shape_cast %112 : vector<272x1xbf16> to vector<1x272x1xbf16>
    tpu.vector_store %arg8[%c0_121, %c0_122, %c21], %115 {strides = array<i32>} : memref<1x272x41xbf16, #tpu.memory_space<vmem>>, vector<1x272x1xbf16>,
    %c1_123 = arith.constant 1 : index
    %c7_124 = arith.constant 7 : index
    %c0_125 = arith.constant 0 : index
    %116 = vector.load %arg7[%c1_123, %c7_124, %c0_125] : memref<3x288x1xbf16, #tpu.memory_space<vmem>>, vector<1x272x1xbf16>
    %117 = vector.shape_cast %116 : vector<1x272x1xbf16> to vector<272x1xbf16>
    %c0_126 = arith.constant 0 : index
    %c0_127 = arith.constant 0 : index
    %c22 = arith.constant 22 : index
    %118 = vector.load %arg8[%c0_126, %c0_127, %c22] : memref<1x272x41xbf16, #tpu.memory_space<vmem>>, vector<1x272x1xbf16>
    %119 = vector.shape_cast %118 : vector<1x272x1xbf16> to vector<272x1xbf16>
    %120 = vector.shape_cast %117 : vector<272x1xbf16> to vector<1x272x1xbf16>
    tpu.vector_store %arg8[%c0_126, %c0_127, %c22], %120 {strides = array<i32>} : memref<1x272x41xbf16, #tpu.memory_space<vmem>>, vector<1x272x1xbf16>,
    %c2_128 = arith.constant 2 : index
    %c7_129 = arith.constant 7 : index
    %c0_130 = arith.constant 0 : index
    %121 = vector.load %arg7[%c2_128, %c7_129, %c0_130] : memref<3x288x1xbf16, #tpu.memory_space<vmem>>, vector<1x272x1xbf16>
    %122 = vector.shape_cast %121 : vector<1x272x1xbf16> to vector<272x1xbf16>
    %c0_131 = arith.constant 0 : index
    %c0_132 = arith.constant 0 : index
    %c23 = arith.constant 23 : index
    %123 = vector.load %arg8[%c0_131, %c0_132, %c23] : memref<1x272x41xbf16, #tpu.memory_space<vmem>>, vector<1x272x1xbf16>
    %124 = vector.shape_cast %123 : vector<1x272x1xbf16> to vector<272x1xbf16>
    %125 = vector.shape_cast %122 : vector<272x1xbf16> to vector<1x272x1xbf16>
    tpu.vector_store %arg8[%c0_131, %c0_132, %c23], %125 {strides = array<i32>} : memref<1x272x41xbf16, #tpu.memory_space<vmem>>, vector<1x272x1xbf16>,
    %c0_133 = arith.constant 0 : index
    %c8_134 = arith.constant 8 : index
    %c0_135 = arith.constant 0 : index
    %126 = vector.load %arg7[%c0_133, %c8_134, %c0_135] : memref<3x288x1xbf16, #tpu.memory_space<vmem>>, vector<1x272x1xbf16>
    %127 = vector.shape_cast %126 : vector<1x272x1xbf16> to vector<272x1xbf16>
    %c0_136 = arith.constant 0 : index
    %c0_137 = arith.constant 0 : index
    %c24 = arith.constant 24 : index
    %128 = vector.load %arg8[%c0_136, %c0_137, %c24] : memref<1x272x41xbf16, #tpu.memory_space<vmem>>, vector<1x272x1xbf16>
    %129 = vector.shape_cast %128 : vector<1x272x1xbf16> to vector<272x1xbf16>
    %130 = vector.shape_cast %127 : vector<272x1xbf16> to vector<1x272x1xbf16>
    tpu.vector_store %arg8[%c0_136, %c0_137, %c24], %130 {strides = array<i32>} : memref<1x272x41xbf16, #tpu.memory_space<vmem>>, vector<1x272x1xbf16>,
    %c1_138 = arith.constant 1 : index
    %c8_139 = arith.constant 8 : index
    %c0_140 = arith.constant 0 : index
    %131 = vector.load %arg7[%c1_138, %c8_139, %c0_140] : memref<3x288x1xbf16, #tpu.memory_space<vmem>>, vector<1x272x1xbf16>
    %132 = vector.shape_cast %131 : vector<1x272x1xbf16> to vector<272x1xbf16>
    %c0_141 = arith.constant 0 : index
    %c0_142 = arith.constant 0 : index
    %c25 = arith.constant 25 : index
    %133 = vector.load %arg8[%c0_141, %c0_142, %c25] : memref<1x272x41xbf16, #tpu.memory_space<vmem>>, vector<1x272x1xbf16>
    %134 = vector.shape_cast %133 : vector<1x272x1xbf16> to vector<272x1xbf16>
    %135 = vector.shape_cast %132 : vector<272x1xbf16> to vector<1x272x1xbf16>
    tpu.vector_store %arg8[%c0_141, %c0_142, %c25], %135 {strides = array<i32>} : memref<1x272x41xbf16, #tpu.memory_space<vmem>>, vector<1x272x1xbf16>,
    %c2_143 = arith.constant 2 : index
    %c8_144 = arith.constant 8 : index
    %c0_145 = arith.constant 0 : index
    %136 = vector.load %arg7[%c2_143, %c8_144, %c0_145] : memref<3x288x1xbf16, #tpu.memory_space<vmem>>, vector<1x272x1xbf16>
    %137 = vector.shape_cast %136 : vector<1x272x1xbf16> to vector<272x1xbf16>
    %c0_146 = arith.constant 0 : index
    %c0_147 = arith.constant 0 : index
    %c26 = arith.constant 26 : index
    %138 = vector.load %arg8[%c0_146, %c0_147, %c26] : memref<1x272x41xbf16, #tpu.memory_space<vmem>>, vector<1x272x1xbf16>
    %139 = vector.shape_cast %138 : vector<1x272x1xbf16> to vector<272x1xbf16>
    %140 = vector.shape_cast %137 : vector<272x1xbf16> to vector<1x272x1xbf16>
    tpu.vector_store %arg8[%c0_146, %c0_147, %c26], %140 {strides = array<i32>} : memref<1x272x41xbf16, #tpu.memory_space<vmem>>, vector<1x272x1xbf16>,
    %c0_148 = arith.constant 0 : index
    %c9_149 = arith.constant 9 : index
    %c0_150 = arith.constant 0 : index
    %141 = vector.load %arg7[%c0_148, %c9_149, %c0_150] : memref<3x288x1xbf16, #tpu.memory_space<vmem>>, vector<1x272x1xbf16>
    %142 = vector.shape_cast %141 : vector<1x272x1xbf16> to vector<272x1xbf16>
    %c0_151 = arith.constant 0 : index
    %c0_152 = arith.constant 0 : index
    %c27 = arith.constant 27 : index
    %143 = vector.load %arg8[%c0_151, %c0_152, %c27] : memref<1x272x41xbf16, #tpu.memory_space<vmem>>, vector<1x272x1xbf16>
    %144 = vector.shape_cast %143 : vector<1x272x1xbf16> to vector<272x1xbf16>
    %145 = vector.shape_cast %142 : vector<272x1xbf16> to vector<1x272x1xbf16>
    tpu.vector_store %arg8[%c0_151, %c0_152, %c27], %145 {strides = array<i32>} : memref<1x272x41xbf16, #tpu.memory_space<vmem>>, vector<1x272x1xbf16>,
    %c1_153 = arith.constant 1 : index
    %c9_154 = arith.constant 9 : index
    %c0_155 = arith.constant 0 : index
    %146 = vector.load %arg7[%c1_153, %c9_154, %c0_155] : memref<3x288x1xbf16, #tpu.memory_space<vmem>>, vector<1x272x1xbf16>
    %147 = vector.shape_cast %146 : vector<1x272x1xbf16> to vector<272x1xbf16>
    %c0_156 = arith.constant 0 : index
    %c0_157 = arith.constant 0 : index
    %c28 = arith.constant 28 : index
    %148 = vector.load %arg8[%c0_156, %c0_157, %c28] : memref<1x272x41xbf16, #tpu.memory_space<vmem>>, vector<1x272x1xbf16>
    %149 = vector.shape_cast %148 : vector<1x272x1xbf16> to vector<272x1xbf16>
    %150 = vector.shape_cast %147 : vector<272x1xbf16> to vector<1x272x1xbf16>
    tpu.vector_store %arg8[%c0_156, %c0_157, %c28], %150 {strides = array<i32>} : memref<1x272x41xbf16, #tpu.memory_space<vmem>>, vector<1x272x1xbf16>,
    %c2_158 = arith.constant 2 : index
    %c9_159 = arith.constant 9 : index
    %c0_160 = arith.constant 0 : index
    %151 = vector.load %arg7[%c2_158, %c9_159, %c0_160] : memref<3x288x1xbf16, #tpu.memory_space<vmem>>, vector<1x272x1xbf16>
    %152 = vector.shape_cast %151 : vector<1x272x1xbf16> to vector<272x1xbf16>
    %c0_161 = arith.constant 0 : index
    %c0_162 = arith.constant 0 : index
    %c29 = arith.constant 29 : index
    %153 = vector.load %arg8[%c0_161, %c0_162, %c29] : memref<1x272x41xbf16, #tpu.memory_space<vmem>>, vector<1x272x1xbf16>
    %154 = vector.shape_cast %153 : vector<1x272x1xbf16> to vector<272x1xbf16>
    %155 = vector.shape_cast %152 : vector<272x1xbf16> to vector<1x272x1xbf16>
    tpu.vector_store %arg8[%c0_161, %c0_162, %c29], %155 {strides = array<i32>} : memref<1x272x41xbf16, #tpu.memory_space<vmem>>, vector<1x272x1xbf16>,
    %c0_163 = arith.constant 0 : index
    %c10_164 = arith.constant 10 : index
    %c0_165 = arith.constant 0 : index
    %156 = vector.load %arg7[%c0_163, %c10_164, %c0_165] : memref<3x288x1xbf16, #tpu.memory_space<vmem>>, vector<1x272x1xbf16>
    %157 = vector.shape_cast %156 : vector<1x272x1xbf16> to vector<272x1xbf16>
    %c0_166 = arith.constant 0 : index
    %c0_167 = arith.constant 0 : index
    %c30 = arith.constant 30 : index
    %158 = vector.load %arg8[%c0_166, %c0_167, %c30] : memref<1x272x41xbf16, #tpu.memory_space<vmem>>, vector<1x272x1xbf16>
    %159 = vector.shape_cast %158 : vector<1x272x1xbf16> to vector<272x1xbf16>
    %160 = vector.shape_cast %157 : vector<272x1xbf16> to vector<1x272x1xbf16>
    tpu.vector_store %arg8[%c0_166, %c0_167, %c30], %160 {strides = array<i32>} : memref<1x272x41xbf16, #tpu.memory_space<vmem>>, vector<1x272x1xbf16>,
    %c1_168 = arith.constant 1 : index
    %c10_169 = arith.constant 10 : index
    %c0_170 = arith.constant 0 : index
    %161 = vector.load %arg7[%c1_168, %c10_169, %c0_170] : memref<3x288x1xbf16, #tpu.memory_space<vmem>>, vector<1x272x1xbf16>
    %162 = vector.shape_cast %161 : vector<1x272x1xbf16> to vector<272x1xbf16>
    %c0_171 = arith.constant 0 : index
    %c0_172 = arith.constant 0 : index
    %c31 = arith.constant 31 : index
    %163 = vector.load %arg8[%c0_171, %c0_172, %c31] : memref<1x272x41xbf16, #tpu.memory_space<vmem>>, vector<1x272x1xbf16>
    %164 = vector.shape_cast %163 : vector<1x272x1xbf16> to vector<272x1xbf16>
    %165 = vector.shape_cast %162 : vector<272x1xbf16> to vector<1x272x1xbf16>
    tpu.vector_store %arg8[%c0_171, %c0_172, %c31], %165 {strides = array<i32>} : memref<1x272x41xbf16, #tpu.memory_space<vmem>>, vector<1x272x1xbf16>,
    %c2_173 = arith.constant 2 : index
    %c10_174 = arith.constant 10 : index
    %c0_175 = arith.constant 0 : index
    %166 = vector.load %arg7[%c2_173, %c10_174, %c0_175] : memref<3x288x1xbf16, #tpu.memory_space<vmem>>, vector<1x272x1xbf16>
    %167 = vector.shape_cast %166 : vector<1x272x1xbf16> to vector<272x1xbf16>
    %c0_176 = arith.constant 0 : index
    %c0_177 = arith.constant 0 : index
    %c32 = arith.constant 32 : index
    %168 = vector.load %arg8[%c0_176, %c0_177, %c32] : memref<1x272x41xbf16, #tpu.memory_space<vmem>>, vector<1x272x1xbf16>
    %169 = vector.shape_cast %168 : vector<1x272x1xbf16> to vector<272x1xbf16>
    %170 = vector.shape_cast %167 : vector<272x1xbf16> to vector<1x272x1xbf16>
    tpu.vector_store %arg8[%c0_176, %c0_177, %c32], %170 {strides = array<i32>} : memref<1x272x41xbf16, #tpu.memory_space<vmem>>, vector<1x272x1xbf16>,
    %c0_178 = arith.constant 0 : index
    %c11_179 = arith.constant 11 : index
    %c0_180 = arith.constant 0 : index
    %171 = vector.load %arg7[%c0_178, %c11_179, %c0_180] : memref<3x288x1xbf16, #tpu.memory_space<vmem>>, vector<1x272x1xbf16>
    %172 = vector.shape_cast %171 : vector<1x272x1xbf16> to vector<272x1xbf16>
    %c0_181 = arith.constant 0 : index
    %c0_182 = arith.constant 0 : index
    %c33 = arith.constant 33 : index
    %173 = vector.load %arg8[%c0_181, %c0_182, %c33] : memref<1x272x41xbf16, #tpu.memory_space<vmem>>, vector<1x272x1xbf16>
    %174 = vector.shape_cast %173 : vector<1x272x1xbf16> to vector<272x1xbf16>
    %175 = vector.shape_cast %172 : vector<272x1xbf16> to vector<1x272x1xbf16>
    tpu.vector_store %arg8[%c0_181, %c0_182, %c33], %175 {strides = array<i32>} : memref<1x272x41xbf16, #tpu.memory_space<vmem>>, vector<1x272x1xbf16>,
    %c1_183 = arith.constant 1 : index
    %c11_184 = arith.constant 11 : index
    %c0_185 = arith.constant 0 : index
    %176 = vector.load %arg7[%c1_183, %c11_184, %c0_185] : memref<3x288x1xbf16, #tpu.memory_space<vmem>>, vector<1x272x1xbf16>
    %177 = vector.shape_cast %176 : vector<1x272x1xbf16> to vector<272x1xbf16>
    %c0_186 = arith.constant 0 : index
    %c0_187 = arith.constant 0 : index
    %c34 = arith.constant 34 : index
    %178 = vector.load %arg8[%c0_186, %c0_187, %c34] : memref<1x272x41xbf16, #tpu.memory_space<vmem>>, vector<1x272x1xbf16>
    %179 = vector.shape_cast %178 : vector<1x272x1xbf16> to vector<272x1xbf16>
    %180 = vector.shape_cast %177 : vector<272x1xbf16> to vector<1x272x1xbf16>
    tpu.vector_store %arg8[%c0_186, %c0_187, %c34], %180 {strides = array<i32>} : memref<1x272x41xbf16, #tpu.memory_space<vmem>>, vector<1x272x1xbf16>,
    %c2_188 = arith.constant 2 : index
    %c11_189 = arith.constant 11 : index
    %c0_190 = arith.constant 0 : index
    %181 = vector.load %arg7[%c2_188, %c11_189, %c0_190] : memref<3x288x1xbf16, #tpu.memory_space<vmem>>, vector<1x272x1xbf16>
    %182 = vector.shape_cast %181 : vector<1x272x1xbf16> to vector<272x1xbf16>
    %c0_191 = arith.constant 0 : index
    %c0_192 = arith.constant 0 : index
    %c35 = arith.constant 35 : index
    %183 = vector.load %arg8[%c0_191, %c0_192, %c35] : memref<1x272x41xbf16, #tpu.memory_space<vmem>>, vector<1x272x1xbf16>
    %184 = vector.shape_cast %183 : vector<1x272x1xbf16> to vector<272x1xbf16>
    %185 = vector.shape_cast %182 : vector<272x1xbf16> to vector<1x272x1xbf16>
    tpu.vector_store %arg8[%c0_191, %c0_192, %c35], %185 {strides = array<i32>} : memref<1x272x41xbf16, #tpu.memory_space<vmem>>, vector<1x272x1xbf16>,
    %c0_193 = arith.constant 0 : index
    %c12_194 = arith.constant 12 : index
    %c0_195 = arith.constant 0 : index
    %186 = vector.load %arg7[%c0_193, %c12_194, %c0_195] : memref<3x288x1xbf16, #tpu.memory_space<vmem>>, vector<1x272x1xbf16>
    %187 = vector.shape_cast %186 : vector<1x272x1xbf16> to vector<272x1xbf16>
    %c0_196 = arith.constant 0 : index
    %c0_197 = arith.constant 0 : index
    %c36 = arith.constant 36 : index
    %188 = vector.load %arg8[%c0_196, %c0_197, %c36] : memref<1x272x41xbf16, #tpu.memory_space<vmem>>, vector<1x272x1xbf16>
    %189 = vector.shape_cast %188 : vector<1x272x1xbf16> to vector<272x1xbf16>
    %190 = vector.shape_cast %187 : vector<272x1xbf16> to vector<1x272x1xbf16>
    tpu.vector_store %arg8[%c0_196, %c0_197, %c36], %190 {strides = array<i32>} : memref<1x272x41xbf16, #tpu.memory_space<vmem>>, vector<1x272x1xbf16>,
    %c1_198 = arith.constant 1 : index
    %c12_199 = arith.constant 12 : index
    %c0_200 = arith.constant 0 : index
    %191 = vector.load %arg7[%c1_198, %c12_199, %c0_200] : memref<3x288x1xbf16, #tpu.memory_space<vmem>>, vector<1x272x1xbf16>
    %192 = vector.shape_cast %191 : vector<1x272x1xbf16> to vector<272x1xbf16>
    %c0_201 = arith.constant 0 : index
    %c0_202 = arith.constant 0 : index
    %c37 = arith.constant 37 : index
    %193 = vector.load %arg8[%c0_201, %c0_202, %c37] : memref<1x272x41xbf16, #tpu.memory_space<vmem>>, vector<1x272x1xbf16>
    %194 = vector.shape_cast %193 : vector<1x272x1xbf16> to vector<272x1xbf16>
    %195 = vector.shape_cast %192 : vector<272x1xbf16> to vector<1x272x1xbf16>
    tpu.vector_store %arg8[%c0_201, %c0_202, %c37], %195 {strides = array<i32>} : memref<1x272x41xbf16, #tpu.memory_space<vmem>>, vector<1x272x1xbf16>,
    %c2_203 = arith.constant 2 : index
    %c12_204 = arith.constant 12 : index
    %c0_205 = arith.constant 0 : index
    %196 = vector.load %arg7[%c2_203, %c12_204, %c0_205] : memref<3x288x1xbf16, #tpu.memory_space<vmem>>, vector<1x272x1xbf16>
    %197 = vector.shape_cast %196 : vector<1x272x1xbf16> to vector<272x1xbf16>
    %c0_206 = arith.constant 0 : index
    %c0_207 = arith.constant 0 : index
    %c38 = arith.constant 38 : index
    %198 = vector.load %arg8[%c0_206, %c0_207, %c38] : memref<1x272x41xbf16, #tpu.memory_space<vmem>>, vector<1x272x1xbf16>
    %199 = vector.shape_cast %198 : vector<1x272x1xbf16> to vector<272x1xbf16>
    %200 = vector.shape_cast %197 : vector<272x1xbf16> to vector<1x272x1xbf16>
    tpu.vector_store %arg8[%c0_206, %c0_207, %c38], %200 {strides = array<i32>} : memref<1x272x41xbf16, #tpu.memory_space<vmem>>, vector<1x272x1xbf16>,
    %c0_208 = arith.constant 0 : index
    %c13_209 = arith.constant 13 : index
    %c0_210 = arith.constant 0 : index
    %201 = vector.load %arg7[%c0_208, %c13_209, %c0_210] : memref<3x288x1xbf16, #tpu.memory_space<vmem>>, vector<1x272x1xbf16>
    %202 = vector.shape_cast %201 : vector<1x272x1xbf16> to vector<272x1xbf16>
    %c0_211 = arith.constant 0 : index
    %c0_212 = arith.constant 0 : index
    %c39 = arith.constant 39 : index
    %203 = vector.load %arg8[%c0_211, %c0_212, %c39] : memref<1x272x41xbf16, #tpu.memory_space<vmem>>, vector<1x272x1xbf16>
    %204 = vector.shape_cast %203 : vector<1x272x1xbf16> to vector<272x1xbf16>
    %205 = vector.shape_cast %202 : vector<272x1xbf16> to vector<1x272x1xbf16>
    tpu.vector_store %arg8[%c0_211, %c0_212, %c39], %205 {strides = array<i32>} : memref<1x272x41xbf16, #tpu.memory_space<vmem>>, vector<1x272x1xbf16>,
    %c1_213 = arith.constant 1 : index
    %c13_214 = arith.constant 13 : index
    %c0_215 = arith.constant 0 : index
    %206 = vector.load %arg7[%c1_213, %c13_214, %c0_215] : memref<3x288x1xbf16, #tpu.memory_space<vmem>>, vector<1x272x1xbf16>
    %207 = vector.shape_cast %206 : vector<1x272x1xbf16> to vector<272x1xbf16>
    %c0_216 = arith.constant 0 : index
    %c0_217 = arith.constant 0 : index
    %c40 = arith.constant 40 : index
    %208 = vector.load %arg8[%c0_216, %c0_217, %c40] : memref<1x272x41xbf16, #tpu.memory_space<vmem>>, vector<1x272x1xbf16>
    %209 = vector.shape_cast %208 : vector<1x272x1xbf16> to vector<272x1xbf16>
    %210 = vector.shape_cast %207 : vector<272x1xbf16> to vector<1x272x1xbf16>
    tpu.vector_store %arg8[%c0_216, %c0_217, %c40], %210 {strides = array<i32>} : memref<1x272x41xbf16, #tpu.memory_space<vmem>>, vector<1x272x1xbf16>,
    %c0_218 = arith.constant 0 : index
    %c0_219 = arith.constant 0 : index
    %c0_220 = arith.constant 0 : index
    %211 = vector.load %arg8[%c0_218, %c0_219, %c0_220] : memref<1x272x41xbf16, #tpu.memory_space<vmem>>, vector<1x272x41xbf16>
    %212 = vector.shape_cast %211 : vector<1x272x41xbf16> to vector<272x41xbf16>
    %c0_221 = arith.constant 0 : index
    %c0_222 = arith.constant 0 : index
    %c0_223 = arith.constant 0 : index
    %213 = vector.load %arg4[%c0_221, %c0_222, %c0_223] : memref<1x41x16xbf16, #tpu.memory_space<vmem>>, vector<1x41x16xbf16>
    %214 = vector.shape_cast %213 : vector<1x41x16xbf16> to vector<41x16xbf16>
    %cst = arith.constant dense<0.000000e+00> : vector<272x16xf32>
    %215 = tpu.matmul %212, %214, %cst {dimension_numbers = #tpu.dot_dimension_numbers<[1], [0], [0], [1], [0, 0, 1, 1], [], []>} : vector<272x41xbf16>, vector<41x16xbf16>, vector<272x16xf32> -> vector<272x16xf32>
    %c0_224 = arith.constant 0 : index
    %c0_225 = arith.constant 0 : index
    %216 = vector.load %arg5[%c0_224, %c0_225] : memref<1x16xf32, #tpu.memory_space<vmem>>, vector<1x16xf32>
    %217 = vector.broadcast %216 : vector<1x16xf32> to vector<272x16xf32>
    %218 = arith.addf %215, %217 : vector<272x16xf32>
    %219 = arith.truncf %218 : vector<272x16xf32> to vector<272x16xbf16>
    %c0_226 = arith.constant 0 : index
    %c0_227 = arith.constant 0 : index
    %c0_228 = arith.constant 0 : index
    %220 = vector.load %arg6[%c0_226, %c0_227, %c0_228] : memref<1x272x16xbf16, #tpu.memory_space<vmem>>, vector<1x272x16xbf16>
    %221 = vector.shape_cast %220 : vector<1x272x16xbf16> to vector<272x16xbf16>
    %222 = vector.shape_cast %219 : vector<272x16xbf16> to vector<1x272x16xbf16>
    tpu.vector_store %arg6[%c0_226, %c0_227, %c0_228], %222 {strides = array<i32>} : memref<1x272x16xbf16, #tpu.memory_space<vmem>>, vector<1x272x16xbf16>,
    return
  }
  func.func @transform_0(%arg0: i32, %arg1: i32) -> (i32, i32, i32, i32) {
    %c0_i32 = arith.constant 0 : i32
    %c0_i32_0 = arith.constant 0 : i32
    %c0_i32_1 = arith.constant 0 : i32
    return %arg0, %c0_i32, %arg1, %c0_i32_0 : i32, i32, i32, i32
  }
  func.func @transform_1(%arg0: i32, %arg1: i32) -> (i32, i32, i32, i32) {
    %c1_i32 = arith.constant 1 : i32
    %0 = arith.addi %arg1, %c1_i32 : i32
    %c17_i32 = arith.constant 17 : i32
    %1 = arith.muli %0, %c17_i32 : i32
    %c0_i32 = arith.constant 0 : i32
    %c0_i32_0 = arith.constant 0 : i32
    %c0_i32_1 = arith.constant 0 : i32
    return %arg0, %c0_i32, %1, %c0_i32_0 : i32, i32, i32, i32
  }
  func.func @transform_2(%arg0: i32, %arg1: i32) -> (i32, i32, i32) {
    %c0_i32 = arith.constant 0 : i32
    %c0_i32_0 = arith.constant 0 : i32
    %c0_i32_1 = arith.constant 0 : i32
    %c0_i32_2 = arith.constant 0 : i32
    return %c0_i32, %c0_i32_0, %c0_i32_1 : i32, i32, i32
  }
  func.func @transform_3(%arg0: i32, %arg1: i32) -> (i32, i32) {
    %c0_i32 = arith.constant 0 : i32
    %c0_i32_0 = arith.constant 0 : i32
    %c0_i32_1 = arith.constant 0 : i32
    return %c0_i32, %c0_i32_0 : i32, i32
  }
  func.func @transform_4(%arg0: i32, %arg1: i32) -> (i32, i32, i32) {
    %c0_i32 = arith.constant 0 : i32
    %c0_i32_0 = arith.constant 0 : i32
    return %arg0, %arg1, %c0_i32 : i32, i32, i32
  }
}

</mosaic_0001>

<llo_original>
// kernel: tpu_custom_call.1
$region0: #{tpu_custom_call.1}
  #allocation0 [shape = 'u32[]', space=smem, size = 0x4, offset = 0x4, fixed_abs, tag = 'smem constant byte address 0x4 - core index']
  #allocation1 [shape = 'u32[144,128]{1,0:T(1,128)}', space=vmem, size = 0x12000, scoped, tag = 'internal scratch']
  #allocation2 [shape = 'bf16[3,288,1]{2,1,0:T(16,128)(2,1)}', space=vmem, size = 0x36000, scoped, tag = 'scratch operand']
  #allocation3 [shape = 'bf16[1,272,41]{2,1,0:T(16,128)(2,1)}', space=vmem, size = 0x11000, scoped, tag = 'scratch operand']
  %s0 = inlined_call_operand.vmem [shape: bf16[2,3,544,1], index: 0, kind: input, shape index: {}]
  %s1 = inlined_call_operand.vmem [shape: bf16[2,3,544,1], index: 1, kind: input, shape index: {}]
  %s2 = inlined_call_operand.vmem [shape: bf16[1,41,16], index: 2, kind: input, shape index: {}]
  %s3 = inlined_call_operand.vmem [shape: f32[1,16], index: 3, kind: input, shape index: {}]
  %s4 = inlined_call_operand.vmem [shape: bf16[2,272,16], index: 4, kind: output, shape index: {}]
  %s5 = sld [smem:[#allocation0]]
  $region131: #{tpu_custom_call.1} parent=0
    _
  %s7 = ssub.s32 1, %s5
  %s8 = scalar_select 0, %s7, %s5
  $region1: #{tpu_custom_call.1} parent=0
    #allocation4 [shape = 'u8[417792]{0}', space=vmem, size = 0x66000, scoped, tag = 'input window, operand 0']
    #allocation5 [shape = 'u8[24576]{0}', space=vmem, size = 0x6000, scoped, tag = 'input window, operand 1']
    loop: start=0, step=1, limit=4
    $region2: #{tpu_custom_call.1} parent=1 // loop_pre_header
      _
    $region3: #{tpu_custom_call.1} parent=1 // loop_header
      %s10 = sphi 0, %s14
      %p11 = scmp.ge.s32.totalorder %s10, 4
      %s17 = sphi 0, %s29
      %s18 = sphi 0, %s25
      %s19 = sphi 0, %s17
      %s20 = sphi 0, %s18
      %s21 = sphi 0, %s19
      %s22 = sphi 0, %s20
      %s34 = sphi 0, %s36
      %s37 = sphi 0, %s34
      %s38 = sphi 0, %s37
      %s54 = sphi 0, %s38
      %s66 = sphi 0, %s68
      %s69 = sphi 0, %s66
      %s70 = sphi 0, %s69
      %s86 = sphi 0, %s70
      %s90 = sphi 0, %s90
      %s92 = sphi 0, %s90
      %s93 = sphi 0, %s92
      %s107 = sphi 0, %s93
      %s111 = sphi 0, %s111
      %s113 = sphi 0, %s111
      %s114 = sphi 0, %s113
      %s128 = sphi 0, %s114
      %s136 = sphi 0, %s138
      %s139 = sphi 0, %s136
      %s140 = sphi 0, %s139
      %s156 = sphi 0, %s140
    $region4: #{tpu_custom_call.1} parent=1 // loop_header_branch
      %13 = sbr.rel (%p11) target = $region8
    $region5: #{tpu_custom_call.1} parent=1 // loop_body
      %s15 = ssub.s32 %s10, 1
      %s16 = ssub.s32 %s10, 2
      %s23 = sadd.s32 1, %s18
      %p24 = scmp.ge.s32.totalorder %s23, 1
      %s25 = scalar_select %p24, 0, %s23
      %s26 = sadd.s32 1, %s17
      %s27 = scalar_select %p24, %s26, %s17
      %p28 = scmp.ge.s32.totalorder %s27, 2
      %s29 = scalar_select %p28, 0, %s27
      %s30 = ssub.s32 %s17, %s29
      %s31 = ssub.s32 %s18, %s25
      %s32 = sor.u32 %s30, %s31
      %p33 = scmp.eq.s32.totalorder %s32, 0
      %s35 = sadd.s32 %s34, 1
      %s36 = scalar_select %p33, %s34, %s35
      %p39 = pneg %p33
      %p40 = scmp.eq.s32.totalorder %s10, 1
      %p41 = por %p39, %p40
      %p42 = scmp.ne.s32.totalorder %s34, %s37
      %p43 = scmp.eq.s32.totalorder %s10, 0
      %p44 = por %p42, %p43
      %p45 = scmp.ne.s32.totalorder %s34, %s37
      %p46 = scmp.eq.s32.totalorder %s15, 1
      %p47 = por %p45, %p46
      %p48 = scmp.ne.s32.totalorder %s37, %s38
      %p49 = scmp.eq.s32.totalorder %s15, 0
      %p50 = por %p48, %p49
      %p51 = scmp.ne.s32.totalorder %s37, %s38
      %p52 = scmp.eq.s32.totalorder %s16, 1
      %p53 = por %p51, %p52
      %p55 = scmp.ne.s32.totalorder %s38, %s54
      %p56 = scmp.eq.s32.totalorder %s16, 0
      %p57 = por %p55, %p56
      %s58 = sadd.s32 %s18, 1
      %s59 = smul.u32 %s58, 17
      %s60 = sadd.s32 %s25, 1
      %s61 = smul.u32 %s60, 17
      %s62 = ssub.s32 %s17, %s29
      %s63 = ssub.s32 %s59, %s61
      %s64 = sor.u32 %s62, %s63
      %p65 = scmp.eq.s32.totalorder %s64, 0
      %s67 = sadd.s32 %s66, 1
      %s68 = scalar_select %p65, %s66, %s67
      %p71 = pneg %p65
      %p72 = scmp.eq.s32.totalorder %s10, 1
      %p73 = por %p71, %p72
      %p74 = scmp.ne.s32.totalorder %s66, %s69
      %p75 = scmp.eq.s32.totalorder %s10, 0
      %p76 = por %p74, %p75
      %p77 = scmp.ne.s32.totalorder %s66, %s69
      %p78 = scmp.eq.s32.totalorder %s15, 1
      %p79 = por %p77, %p78
      %p80 = scmp.ne.s32.totalorder %s69, %s70
      %p81 = scmp.eq.s32.totalorder %s15, 0
      %p82 = por %p80, %p81
      %p83 = scmp.ne.s32.totalorder %s69, %s70
      %p84 = scmp.eq.s32.totalorder %s16, 1
      %p85 = por %p83, %p84
      %p87 = scmp.ne.s32.totalorder %s70, %s86
      %p88 = scmp.eq.s32.totalorder %s16, 0
      %p89 = por %p87, %p88
      %s91 = sadd.s32 %s90, 1
      %p94 = scmp.eq.s32.totalorder %s10, 1
      %p95 = scmp.ne.s32.totalorder %s90, %s92
      %p96 = scmp.eq.s32.totalorder %s10, 0
      %p97 = por %p95, %p96
      %p98 = scmp.ne.s32.totalorder %s90, %s92
      %p99 = scmp.eq.s32.totalorder %s15, 1
      %p100 = por %p98, %p99
      %p101 = scmp.ne.s32.totalorder %s92, %s93
      %p102 = scmp.eq.s32.totalorder %s15, 0
      %p103 = por %p101, %p102
      %p104 = scmp.ne.s32.totalorder %s92, %s93
      %p105 = scmp.eq.s32.totalorder %s16, 1
      %p106 = por %p104, %p105
      %p108 = scmp.ne.s32.totalorder %s93, %s107
      %p109 = scmp.eq.s32.totalorder %s16, 0
      %p110 = por %p108, %p109
      %s112 = sadd.s32 %s111, 1
      %p115 = scmp.eq.s32.totalorder %s10, 1
      %p116 = scmp.ne.s32.totalorder %s111, %s113
      %p117 = scmp.eq.s32.totalorder %s10, 0
      %p118 = por %p116, %p117
      %p119 = scmp.ne.s32.totalorder %s111, %s113
      %p120 = scmp.eq.s32.totalorder %s15, 1
      %p121 = por %p119, %p120
      %p122 = scmp.ne.s32.totalorder %s113, %s114
      %p123 = scmp.eq.s32.totalorder %s15, 0
      %p124 = por %p122, %p123
      %p125 = scmp.ne.s32.totalorder %s113, %s114
      %p126 = scmp.eq.s32.totalorder %s16, 1
      %p127 = por %p125, %p126
      %p129 = scmp.ne.s32.totalorder %s114, %s128
      %p130 = scmp.eq.s32.totalorder %s16, 0
      %p131 = por %p129, %p130
      %s132 = ssub.s32 %s17, %s29
      %s133 = ssub.s32 %s18, %s25
      %s134 = sor.u32 %s132, %s133
      %p135 = scmp.eq.s32.totalorder %s134, 0
      %s137 = sadd.s32 %s136, 1
      %s138 = scalar_select %p135, %s136, %s137
      %p141 = pneg %p135
      %p142 = scmp.eq.s32.totalorder %s10, 1
      %p143 = por %p141, %p142
      %p144 = scmp.ne.s32.totalorder %s136, %s139
      %p145 = scmp.eq.s32.totalorder %s10, 0
      %p146 = por %p144, %p145
      %p147 = scmp.ne.s32.totalorder %s136, %s139
      %p148 = scmp.eq.s32.totalorder %s15, 1
      %p149 = por %p147, %p148
      %p150 = scmp.ne.s32.totalorder %s139, %s140
      %p151 = scmp.eq.s32.totalorder %s15, 0
      %p152 = por %p150, %p151
      %p153 = scmp.ne.s32.totalorder %s139, %s140
      %p154 = scmp.eq.s32.totalorder %s16, 1
      %p155 = por %p153, %p154
      %p157 = scmp.ne.s32.totalorder %s140, %s156
      %p158 = scmp.eq.s32.totalorder %s16, 0
      %p159 = por %p157, %p158
      %p160 = scmp.le.s32.totalorder 1, %s10
      %p161 = scmp.lt.s32.totalorder %s10, 3
      %p162 = pnand %p160, %p161
      %p163 = pneg %p162
      // Predicated region
      $region9: #{tpu_custom_call.1} parent=5 // pred_check
        _
      $region10: #{tpu_custom_call.1} parent=5 // pred_check_branch
        %165 = sbr.rel (%p162) target = $region12
      $region11: #{tpu_custom_call.1} parent=5 // pred_region
        %s166 = ssub.s32 %s10, 1
        // Predicated region
        $region13: #{tpu_custom_call.1} parent=11 // pred_check
          %p167 = pneg %p103
        $region14: #{tpu_custom_call.1} parent=11 // pred_check_branch
          %169 = sbr.rel (%p167) target = $region16
        $region15: #{tpu_custom_call.1} parent=11 // pred_region
          _
        $region16: #{tpu_custom_call.1} parent=11 // pred_fallthru
          _
        // Predicated region
        $region17: #{tpu_custom_call.1} parent=11 // pred_check
          %p170 = pneg %p124
        $region18: #{tpu_custom_call.1} parent=11 // pred_check_branch
          %172 = sbr.rel (%p170) target = $region20
        $region19: #{tpu_custom_call.1} parent=11 // pred_region
          _
        $region20: #{tpu_custom_call.1} parent=11 // pred_fallthru
          _
      $region12: #{tpu_custom_call.1} parent=5 // pred_fallthru
        _
      %p173 = scmp.lt.s32.totalorder %s10, 2
      // Predicated region
      $region21: #{tpu_custom_call.1} parent=5 // pred_check
        %p174 = pneg %p173
      $region22: #{tpu_custom_call.1} parent=5 // pred_check_branch
        %176 = sbr.rel (%p174) target = $region24
      $region23: #{tpu_custom_call.1} parent=5 // pred_region
        // Predicated region
        $region25: #{tpu_custom_call.1} parent=23 // pred_check
          %p177 = pneg %p44
        $region26: #{tpu_custom_call.1} parent=23 // pred_check_branch
          %179 = sbr.rel (%p177) target = $region28
        $region27: #{tpu_custom_call.1} parent=23 // pred_region
          %s180 = sand.u32 %s34, 1
          %s181 = sand.u32 %s34, 1
          %s182 = smul.addr %s181, 408
          %s183 = scalar_lea.vmem [#allocation4], %s182
          %s184 = smul.u32 34, %s18
          %s185 = smul.addr %s17, 204
          %s186 = sadd.s32 %s184, %s185
          %s187 = smul.addr %s186, 4
          %s188 = scalar_lea.vmem %s0, %s187
          // Predicated region
          $region29: #{tpu_custom_call.1} parent=27 // pred_check
            _
          $region30: #{tpu_custom_call.1} parent=27 // pred_check_branch
            %190 = sbr.rel (0) target = $region32
          $region31: #{tpu_custom_call.1} parent=27 // pred_region
            // Predicated region
            $region33: #{tpu_custom_call.1} parent=31 // pred_check
              _
            $region34: #{tpu_custom_call.1} parent=31 // pred_check_branch
              %192 = sbr.rel target = $region36
            $region35: #{tpu_custom_call.1} parent=31 // pred_region
              // Predicated region
              $region48: #{tpu_custom_call.1} parent=35 // pred_check
                _
              $region49: #{tpu_custom_call.1} parent=35 // pred_check_branch
                %409 = sbr.rel (0) target = $region51
              $region50: #{tpu_custom_call.1} parent=35 // pred_region
                loop: start=0, step=1, limit=1
                $region52: #{tpu_custom_call.1} parent=50 // loop_pre_header
                  _
                $region53: #{tpu_custom_call.1} parent=50 // loop_header
                  %s411 = sphi 0, %s415
                  %p412 = scmp.ge.s32.totalorder %s411, 1
                  %s416 = sphi %s188, %s188
                  %s417 = sphi %s183, %s183
                $region54: #{tpu_custom_call.1} parent=50 // loop_header_branch
                  %414 = sbr.rel (%p412) target = $region58
                $region55: #{tpu_custom_call.1} parent=50 // loop_body
                  _
                $region56: #{tpu_custom_call.1} parent=50 // loop_footer
                  %s415 = sadd.s32 1, %s411
                $region57: #{tpu_custom_call.1} parent=50 // loop_footer_branch
                  %410 = sbr.rel target = $region53
                $region58: #{tpu_custom_call.1} parent=50 // loop_exit
                  _
                loop: start=0, step=1, limit=1
                $region59: #{tpu_custom_call.1} parent=50 // loop_pre_header
                  _
                $region60: #{tpu_custom_call.1} parent=50 // loop_header
                  %s420 = sphi 0, %s424
                  %p421 = scmp.ge.s32.totalorder %s420, 1
                  %s425 = sphi %s188, %s188
                  %s426 = sphi %s183, %s183
                $region61: #{tpu_custom_call.1} parent=50 // loop_header_branch
                  %423 = sbr.rel (%p421) target = $region65
                $region62: #{tpu_custom_call.1} parent=50 // loop_body
                  %v427 = vld [vmem:[%s425] sm:$0xf]
                  %428 = vst [vmem:[%s426] sm:$0xf] %v427
                  %v429 = vld [vmem:[%s425 + $0x4] sm:$0xf]
                  %430 = vst [vmem:[%s426 + $0x4] sm:$0xf] %v429
                  %v431 = vld [vmem:[%s425 + $0x8] sm:$0xf]
                  %432 = vst [vmem:[%s426 + $0x8] sm:$0xf] %v431
                  %v433 = vld [vmem:[%s425 + $0xc] sm:$0xf]
                  %434 = vst [vmem:[%s426 + $0xc] sm:$0xf] %v433
                  %v435 = vld [vmem:[%s425 + $0x10] sm:$0xf]
                  %436 = vst [vmem:[%s426 + $0x10] sm:$0xf] %v435
                  %v437 = vld [vmem:[%s425 + $0x14] sm:$0xf]
                  %438 = vst [vmem:[%s426 + $0x14] sm:$0xf] %v437
                  %v439 = vld [vmem:[%s425 + $0x18] sm:$0xf]
                  %440 = vst [vmem:[%s426 + $0x18] sm:$0xf] %v439
                  %v441 = vld [vmem:[%s425 + $0x1c] sm:$0xf]
                  %442 = vst [vmem:[%s426 + $0x1c] sm:$0xf] %v441
                  %v443 = vld [vmem:[%s425 + $0x20] sm:$0xf]
                  %444 = vst [vmem:[%s426 + $0x20] sm:$0xf] %v443
                  %v445 = vld [vmem:[%s425 + $0x24] sm:$0xf]
                  %446 = vst [vmem:[%s426 + $0x24] sm:$0xf] %v445
                  %v447 = vld [vmem:[%s425 + $0x28] sm:$0xf]
                  %448 = vst [vmem:[%s426 + $0x28] sm:$0xf] %v447
                  %v449 = vld [vmem:[%s425 + $0x2c] sm:$0xf]
                  %450 = vst [vmem:[%s426 + $0x2c] sm:$0xf] %v449
                  %v451 = vld [vmem:[%s425 + $0x30] sm:$0xf]
                  %452 = vst [vmem:[%s426 + $0x30] sm:$0xf] %v451
                  %v453 = vld [vmem:[%s425 + $0x34] sm:$0xf]
                  %454 = vst [vmem:[%s426 + $0x34] sm:$0xf] %v453
                  %v455 = vld [vmem:[%s425 + $0x38] sm:$0xf]
                  %456 = vst [vmem:[%s426 + $0x38] sm:$0xf] %v455
                  %v457 = vld [vmem:[%s425 + $0x3c] sm:$0xf]
                  %458 = vst [vmem:[%s426 + $0x3c] sm:$0xf] %v457
                  %v459 = vld [vmem:[%s425 + $0x40] sm:$0xf]
                  %460 = vst [vmem:[%s426 + $0x40] sm:$0xf] %v459
                  %v461 = vld [vmem:[%s425 + $0x44] sm:$0xf]
                  %462 = vst [vmem:[%s426 + $0x44] sm:$0xf] %v461
                  %v463 = vld [vmem:[%s425 + $0x48] sm:$0xf]
                  %464 = vst [vmem:[%s426 + $0x48] sm:$0xf] %v463
                  %v465 = vld [vmem:[%s425 + $0x4c] sm:$0xf]
                  %466 = vst [vmem:[%s426 + $0x4c] sm:$0xf] %v465
                  %v467 = vld [vmem:[%s425 + $0x50] sm:$0xf]
                  %468 = vst [vmem:[%s426 + $0x50] sm:$0xf] %v467
                  %v469 = vld [vmem:[%s425 + $0x54] sm:$0xf]
                  %470 = vst [vmem:[%s426 + $0x54] sm:$0xf] %v469
                  %v471 = vld [vmem:[%s425 + $0x58] sm:$0xf]
                  %472 = vst [vmem:[%s426 + $0x58] sm:$0xf] %v471
                  %v473 = vld [vmem:[%s425 + $0x5c] sm:$0xf]
                  %474 = vst [vmem:[%s426 + $0x5c] sm:$0xf] %v473
                  %v475 = vld [vmem:[%s425 + $0x60] sm:$0xf]
                  %476 = vst [vmem:[%s426 + $0x60] sm:$0xf] %v475
                  %v477 = vld [vmem:[%s425 + $0x64] sm:$0xf]
                  %478 = vst [vmem:[%s426 + $0x64] sm:$0xf] %v477
                  %v479 = vld [vmem:[%s425 + $0x68] sm:$0xf]
                  %480 = vst [vmem:[%s426 + $0x68] sm:$0xf] %v479
                  %v481 = vld [vmem:[%s425 + $0x6c] sm:$0xf]
                  %482 = vst [vmem:[%s426 + $0x6c] sm:$0xf] %v481
                  %v483 = vld [vmem:[%s425 + $0x70] sm:$0xf]
                  %484 = vst [vmem:[%s426 + $0x70] sm:$0xf] %v483
                  %v485 = vld [vmem:[%s425 + $0x74] sm:$0xf]
                  %486 = vst [vmem:[%s426 + $0x74] sm:$0xf] %v485
                  %v487 = vld [vmem:[%s425 + $0x78] sm:$0xf]
                  %488 = vst [vmem:[%s426 + $0x78] sm:$0xf] %v487
                  %v489 = vld [vmem:[%s425 + $0x7c] sm:$0xf]
                  %490 = vst [vmem:[%s426 + $0x7c] sm:$0xf] %v489
                  %v491 = vld [vmem:[%s425 + $0x80] sm:$0xf]
                  %492 = vst [vmem:[%s426 + $0x80] sm:$0xf] %v491
                  %v493 = vld [vmem:[%s425 + $0x84] sm:$0xf]
                  %494 = vst [vmem:[%s426 + $0x84] sm:$0xf] %v493
                  %v495 = vld [vmem:[%s425 + $0x110] sm:$0xf]
                  %496 = vst [vmem:[%s426 + $0x88] sm:$0xf] %v495
                  %v497 = vld [vmem:[%s425 + $0x114] sm:$0xf]
                  %498 = vst [vmem:[%s426 + $0x8c] sm:$0xf] %v497
                  %v499 = vld [vmem:[%s425 + $0x118] sm:$0xf]
                  %500 = vst [vmem:[%s426 + $0x90] sm:$0xf] %v499
                  %v501 = vld [vmem:[%s425 + $0x11c] sm:$0xf]
                  %502 = vst [vmem:[%s426 + $0x94] sm:$0xf] %v501
                  %v503 = vld [vmem:[%s425 + $0x120] sm:$0xf]
                  %504 = vst [vmem:[%s426 + $0x98] sm:$0xf] %v503
                  %v505 = vld [vmem:[%s425 + $0x124] sm:$0xf]
                  %506 = vst [vmem:[%s426 + $0x9c] sm:$0xf] %v505
                  %v507 = vld [vmem:[%s425 + $0x128] sm:$0xf]
                  %508 = vst [vmem:[%s426 + $0xa0] sm:$0xf] %v507
                  %v509 = vld [vmem:[%s425 + $0x12c] sm:$0xf]
                  %510 = vst [vmem:[%s426 + $0xa4] sm:$0xf] %v509
                  %v511 = vld [vmem:[%s425 + $0x130] sm:$0xf]
                  %512 = vst [vmem:[%s426 + $0xa8] sm:$0xf] %v511
                  %v513 = vld [vmem:[%s425 + $0x134] sm:$0xf]
                  %514 = vst [vmem:[%s426 + $0xac] sm:$0xf] %v513
                  %v515 = vld [vmem:[%s425 + $0x138] sm:$0xf]
                  %516 = vst [vmem:[%s426 + $0xb0] sm:$0xf] %v515
                  %v517 = vld [vmem:[%s425 + $0x13c] sm:$0xf]
                  %518 = vst [vmem:[%s426 + $0xb4] sm:$0xf] %v517
                  %v519 = vld [vmem:[%s425 + $0x140] sm:$0xf]
                  %520 = vst [vmem:[%s426 + $0xb8] sm:$0xf] %v519
                  %v521 = vld [vmem:[%s425 + $0x144] sm:$0xf]
                  %522 = vst [vmem:[%s426 + $0xbc] sm:$0xf] %v521
                  %v523 = vld [vmem:[%s425 + $0x148] sm:$0xf]
                  %524 = vst [vmem:[%s426 + $0xc0] sm:$0xf] %v523
                  %v525 = vld [vmem:[%s425 + $0x14c] sm:$0xf]
                  %526 = vst [vmem:[%s426 + $0xc4] sm:$0xf] %v525
                  %v527 = vld [vmem:[%s425 + $0x150] sm:$0xf]
                  %528 = vst [vmem:[%s426 + $0xc8] sm:$0xf] %v527
                  %v529 = vld [vmem:[%s425 + $0x154] sm:$0xf]
                  %530 = vst [vmem:[%s426 + $0xcc] sm:$0xf] %v529
                  %v531 = vld [vmem:[%s425 + $0x158] sm:$0xf]
                  %532 = vst [vmem:[%s426 + $0xd0] sm:$0xf] %v531
                  %v533 = vld [vmem:[%s425 + $0x15c] sm:$0xf]
                  %534 = vst [vmem:[%s426 + $0xd4] sm:$0xf] %v533
                  %v535 = vld [vmem:[%s425 + $0x160] sm:$0xf]
                  %536 = vst [vmem:[%s426 + $0xd8] sm:$0xf] %v535
                  %v537 = vld [vmem:[%s425 + $0x164] sm:$0xf]
                  %538 = vst [vmem:[%s426 + $0xdc] sm:$0xf] %v537
                  %v539 = vld [vmem:[%s425 + $0x168] sm:$0xf]
                  %540 = vst [vmem:[%s426 + $0xe0] sm:$0xf] %v539
                  %v541 = vld [vmem:[%s425 + $0x16c] sm:$0xf]
                  %542 = vst [vmem:[%s426 + $0xe4] sm:$0xf] %v541
                  %v543 = vld [vmem:[%s425 + $0x170] sm:$0xf]
                  %544 = vst [vmem:[%s426 + $0xe8] sm:$0xf] %v543
                  %v545 = vld [vmem:[%s425 + $0x174] sm:$0xf]
                  %546 = vst [vmem:[%s426 + $0xec] sm:$0xf] %v545
                  %v547 = vld [vmem:[%s425 + $0x178] sm:$0xf]
                  %548 = vst [vmem:[%s426 + $0xf0] sm:$0xf] %v547
                  %v549 = vld [vmem:[%s425 + $0x17c] sm:$0xf]
                  %550 = vst [vmem:[%s426 + $0xf4] sm:$0xf] %v549
                  %v551 = vld [vmem:[%s425 + $0x180] sm:$0xf]
                  %552 = vst [vmem:[%s426 + $0xf8] sm:$0xf] %v551
                  %v553 = vld [vmem:[%s425 + $0x184] sm:$0xf]
                  %554 = vst [vmem:[%s426 + $0xfc] sm:$0xf] %v553
                  %v555 = vld [vmem:[%s425 + $0x188] sm:$0xf]
                  %556 = vst [vmem:[%s426 + $0x100] sm:$0xf] %v555
                  %v557 = vld [vmem:[%s425 + $0x18c] sm:$0xf]
                  %558 = vst [vmem:[%s426 + $0x104] sm:$0xf] %v557
                  %v559 = vld [vmem:[%s425 + $0x190] sm:$0xf]
                  %560 = vst [vmem:[%s426 + $0x108] sm:$0xf] %v559
                  %v561 = vld [vmem:[%s425 + $0x194] sm:$0xf]
                  %562 = vst [vmem:[%s426 + $0x10c] sm:$0xf] %v561
                  %v563 = vld [vmem:[%s425 + $0x220] sm:$0xf]
                  %564 = vst [vmem:[%s426 + $0x110] sm:$0xf] %v563
                  %v565 = vld [vmem:[%s425 + $0x224] sm:$0xf]
                  %566 = vst [vmem:[%s426 + $0x114] sm:$0xf] %v565
                  %v567 = vld [vmem:[%s425 + $0x228] sm:$0xf]
                  %568 = vst [vmem:[%s426 + $0x118] sm:$0xf] %v567
                  %v569 = vld [vmem:[%s425 + $0x22c] sm:$0xf]
                  %570 = vst [vmem:[%s426 + $0x11c] sm:$0xf] %v569
                  %v571 = vld [vmem:[%s425 + $0x230] sm:$0xf]
                  %572 = vst [vmem:[%s426 + $0x120] sm:$0xf] %v571
                  %v573 = vld [vmem:[%s425 + $0x234] sm:$0xf]
                  %574 = vst [vmem:[%s426 + $0x124] sm:$0xf] %v573
                  %v575 = vld [vmem:[%s425 + $0x238] sm:$0xf]
                  %576 = vst [vmem:[%s426 + $0x128] sm:$0xf] %v575
                  %v577 = vld [vmem:[%s425 + $0x23c] sm:$0xf]
                  %578 = vst [vmem:[%s426 + $0x12c] sm:$0xf] %v577
                  %v579 = vld [vmem:[%s425 + $0x240] sm:$0xf]
                  %580 = vst [vmem:[%s426 + $0x130] sm:$0xf] %v579
                  %v581 = vld [vmem:[%s425 + $0x244] sm:$0xf]
                  %582 = vst [vmem:[%s426 + $0x134] sm:$0xf] %v581
                  %v583 = vld [vmem:[%s425 + $0x248] sm:$0xf]
                  %584 = vst [vmem:[%s426 + $0x138] sm:$0xf] %v583
                  %v585 = vld [vmem:[%s425 + $0x24c] sm:$0xf]
                  %586 = vst [vmem:[%s426 + $0x13c] sm:$0xf] %v585
                  %v587 = vld [vmem:[%s425 + $0x250] sm:$0xf]
                  %588 = vst [vmem:[%s426 + $0x140] sm:$0xf] %v587
                  %v589 = vld [vmem:[%s425 + $0x254] sm:$0xf]
                  %590 = vst [vmem:[%s426 + $0x144] sm:$0xf] %v589
                  %v591 = vld [vmem:[%s425 + $0x258] sm:$0xf]
                  %592 = vst [vmem:[%s426 + $0x148] sm:$0xf] %v591
                  %v593 = vld [vmem:[%s425 + $0x25c] sm:$0xf]
                  %594 = vst [vmem:[%s426 + $0x14c] sm:$0xf] %v593
                  %v595 = vld [vmem:[%s425 + $0x260] sm:$0xf]
                  %596 = vst [vmem:[%s426 + $0x150] sm:$0xf] %v595
                  %v597 = vld [vmem:[%s425 + $0x264] sm:$0xf]
                  %598 = vst [vmem:[%s426 + $0x154] sm:$0xf] %v597
                  %v599 = vld [vmem:[%s425 + $0x268] sm:$0xf]
                  %600 = vst [vmem:[%s426 + $0x158] sm:$0xf] %v599
                  %v601 = vld [vmem:[%s425 + $0x26c] sm:$0xf]
                  %602 = vst [vmem:[%s426 + $0x15c] sm:$0xf] %v601
                  %v603 = vld [vmem:[%s425 + $0x270] sm:$0xf]
                  %604 = vst [vmem:[%s426 + $0x160] sm:$0xf] %v603
                  %v605 = vld [vmem:[%s425 + $0x274] sm:$0xf]
                  %606 = vst [vmem:[%s426 + $0x164] sm:$0xf] %v605
                  %v607 = vld [vmem:[%s425 + $0x278] sm:$0xf]
                  %608 = vst [vmem:[%s426 + $0x168] sm:$0xf] %v607
                  %v609 = vld [vmem:[%s425 + $0x27c] sm:$0xf]
                  %610 = vst [vmem:[%s426 + $0x16c] sm:$0xf] %v609
                  %v611 = vld [vmem:[%s425 + $0x280] sm:$0xf]
                  %612 = vst [vmem:[%s426 + $0x170] sm:$0xf] %v611
                  %v613 = vld [vmem:[%s425 + $0x284] sm:$0xf]
                  %614 = vst [vmem:[%s426 + $0x174] sm:$0xf] %v613
                  %v615 = vld [vmem:[%s425 + $0x288] sm:$0xf]
                  %616 = vst [vmem:[%s426 + $0x178] sm:$0xf] %v615
                  %v617 = vld [vmem:[%s425 + $0x28c] sm:$0xf]
                  %618 = vst [vmem:[%s426 + $0x17c] sm:$0xf] %v617
                  %v619 = vld [vmem:[%s425 + $0x290] sm:$0xf]
                  %620 = vst [vmem:[%s426 + $0x180] sm:$0xf] %v619
                  %v621 = vld [vmem:[%s425 + $0x294] sm:$0xf]
                  %622 = vst [vmem:[%s426 + $0x184] sm:$0xf] %v621
                  %v623 = vld [vmem:[%s425 + $0x298] sm:$0xf]
                  %624 = vst [vmem:[%s426 + $0x188] sm:$0xf] %v623
                  %v625 = vld [vmem:[%s425 + $0x29c] sm:$0xf]
                  %626 = vst [vmem:[%s426 + $0x18c] sm:$0xf] %v625
                  %v627 = vld [vmem:[%s425 + $0x2a0] sm:$0xf]
                  %628 = vst [vmem:[%s426 + $0x190] sm:$0xf] %v627
                  %v629 = vld [vmem:[%s425 + $0x2a4] sm:$0xf]
                  %630 = vst [vmem:[%s426 + $0x194] sm:$0xf] %v629
                $region63: #{tpu_custom_call.1} parent=50 // loop_footer
                  %s424 = sadd.s32 1, %s420
                $region64: #{tpu_custom_call.1} parent=50 // loop_footer_branch
                  %419 = sbr.rel target = $region60
                $region65: #{tpu_custom_call.1} parent=50 // loop_exit
                  _
              $region51: #{tpu_custom_call.1} parent=35 // pred_fallthru
                _
            $region36: #{tpu_custom_call.1} parent=31 // pred_fallthru
              _
            // Predicated region
            $region37: #{tpu_custom_call.1} parent=31 // pred_check
              _
            $region38: #{tpu_custom_call.1} parent=31 // pred_check_branch
              %194 = sbr.rel (0) target = $region40
            $region39: #{tpu_custom_call.1} parent=31 // pred_region
              loop: start=0, step=1, limit=1
              $region41: #{tpu_custom_call.1} parent=39 // loop_pre_header
                _
              $region42: #{tpu_custom_call.1} parent=39 // loop_header
                %s197 = sphi 0, %s201
                %p198 = scmp.ge.s32.totalorder %s197, 1
                %s202 = sphi %s188, %s188
                %s203 = sphi %s183, %s183
              $region43: #{tpu_custom_call.1} parent=39 // loop_header_branch
                %200 = sbr.rel (%p198) target = $region47
              $region44: #{tpu_custom_call.1} parent=39 // loop_body
                %v204 = vld [vmem:[%s202] sm:$0xf]
                %205 = vst [vmem:[%s203] sm:$0xf] %v204
                %v206 = vld [vmem:[%s202 + $0x4] sm:$0xf]
                %207 = vst [vmem:[%s203 + $0x4] sm:$0xf] %v206
                %v208 = vld [vmem:[%s202 + $0x8] sm:$0xf]
                %209 = vst [vmem:[%s203 + $0x8] sm:$0xf] %v208
                %v210 = vld [vmem:[%s202 + $0xc] sm:$0xf]
                %211 = vst [vmem:[%s203 + $0xc] sm:$0xf] %v210
                %v212 = vld [vmem:[%s202 + $0x10] sm:$0xf]
                %213 = vst [vmem:[%s203 + $0x10] sm:$0xf] %v212
                %v214 = vld [vmem:[%s202 + $0x14] sm:$0xf]
                %215 = vst [vmem:[%s203 + $0x14] sm:$0xf] %v214
                %v216 = vld [vmem:[%s202 + $0x18] sm:$0xf]
                %217 = vst [vmem:[%s203 + $0x18] sm:$0xf] %v216
                %v218 = vld [vmem:[%s202 + $0x1c] sm:$0xf]
                %219 = vst [vmem:[%s203 + $0x1c] sm:$0xf] %v218
                %v220 = vld [vmem:[%s202 + $0x20] sm:$0xf]
                %221 = vst [vmem:[%s203 + $0x20] sm:$0xf] %v220
                %v222 = vld [vmem:[%s202 + $0x24] sm:$0xf]
                %223 = vst [vmem:[%s203 + $0x24] sm:$0xf] %v222
                %v224 = vld [vmem:[%s202 + $0x28] sm:$0xf]
                %225 = vst [vmem:[%s203 + $0x28] sm:$0xf] %v224
                %v226 = vld [vmem:[%s202 + $0x2c] sm:$0xf]
                %227 = vst [vmem:[%s203 + $0x2c] sm:$0xf] %v226
                %v228 = vld [vmem:[%s202 + $0x30] sm:$0xf]
                %229 = vst [vmem:[%s203 + $0x30] sm:$0xf] %v228
                %v230 = vld [vmem:[%s202 + $0x34] sm:$0xf]
                %231 = vst [vmem:[%s203 + $0x34] sm:$0xf] %v230
                %v232 = vld [vmem:[%s202 + $0x38] sm:$0xf]
                %233 = vst [vmem:[%s203 + $0x38] sm:$0xf] %v232
                %v234 = vld [vmem:[%s202 + $0x3c] sm:$0xf]
                %235 = vst [vmem:[%s203 + $0x3c] sm:$0xf] %v234
                %v236 = vld [vmem:[%s202 + $0x40] sm:$0xf]
                %237 = vst [vmem:[%s203 + $0x40] sm:$0xf] %v236
                %v238 = vld [vmem:[%s202 + $0x44] sm:$0xf]
                %239 = vst [vmem:[%s203 + $0x44] sm:$0xf] %v238
                %v240 = vld [vmem:[%s202 + $0x48] sm:$0xf]
                %241 = vst [vmem:[%s203 + $0x48] sm:$0xf] %v240
                %v242 = vld [vmem:[%s202 + $0x4c] sm:$0xf]
                %243 = vst [vmem:[%s203 + $0x4c] sm:$0xf] %v242
                %v244 = vld [vmem:[%s202 + $0x50] sm:$0xf]
                %245 = vst [vmem:[%s203 + $0x50] sm:$0xf] %v244
                %v246 = vld [vmem:[%s202 + $0x54] sm:$0xf]
                %247 = vst [vmem:[%s203 + $0x54] sm:$0xf] %v246
                %v248 = vld [vmem:[%s202 + $0x58] sm:$0xf]
                %249 = vst [vmem:[%s203 + $0x58] sm:$0xf] %v248
                %v250 = vld [vmem:[%s202 + $0x5c] sm:$0xf]
                %251 = vst [vmem:[%s203 + $0x5c] sm:$0xf] %v250
                %v252 = vld [vmem:[%s202 + $0x60] sm:$0xf]
                %253 = vst [vmem:[%s203 + $0x60] sm:$0xf] %v252
                %v254 = vld [vmem:[%s202 + $0x64] sm:$0xf]
                %255 = vst [vmem:[%s203 + $0x64] sm:$0xf] %v254
                %v256 = vld [vmem:[%s202 + $0x68] sm:$0xf]
                %257 = vst [vmem:[%s203 + $0x68] sm:$0xf] %v256
                %v258 = vld [vmem:[%s202 + $0x6c] sm:$0xf]
                %259 = vst [vmem:[%s203 + $0x6c] sm:$0xf] %v258
                %v260 = vld [vmem:[%s202 + $0x70] sm:$0xf]
                %261 = vst [vmem:[%s203 + $0x70] sm:$0xf] %v260
                %v262 = vld [vmem:[%s202 + $0x74] sm:$0xf]
                %263 = vst [vmem:[%s203 + $0x74] sm:$0xf] %v262
                %v264 = vld [vmem:[%s202 + $0x78] sm:$0xf]
                %265 = vst [vmem:[%s203 + $0x78] sm:$0xf] %v264
                %v266 = vld [vmem:[%s202 + $0x7c] sm:$0xf]
                %267 = vst [vmem:[%s203 + $0x7c] sm:$0xf] %v266
                %v268 = vld [vmem:[%s202 + $0x80] sm:$0xf]
                %269 = vst [vmem:[%s203 + $0x80] sm:$0xf] %v268
                %v270 = vld [vmem:[%s202 + $0x84] sm:$0xf]
                %271 = vst [vmem:[%s203 + $0x84] sm:$0xf] %v270
                %v272 = vld [vmem:[%s202 + $0x110] sm:$0xf]
                %273 = vst [vmem:[%s203 + $0x88] sm:$0xf] %v272
                %v274 = vld [vmem:[%s202 + $0x114] sm:$0xf]
                %275 = vst [vmem:[%s203 + $0x8c] sm:$0xf] %v274
                %v276 = vld [vmem:[%s202 + $0x118] sm:$0xf]
                %277 = vst [vmem:[%s203 + $0x90] sm:$0xf] %v276
                %v278 = vld [vmem:[%s202 + $0x11c] sm:$0xf]
                %279 = vst [vmem:[%s203 + $0x94] sm:$0xf] %v278
                %v280 = vld [vmem:[%s202 + $0x120] sm:$0xf]
                %281 = vst [vmem:[%s203 + $0x98] sm:$0xf] %v280
                %v282 = vld [vmem:[%s202 + $0x124] sm:$0xf]
                %283 = vst [vmem:[%s203 + $0x9c] sm:$0xf] %v282
                %v284 = vld [vmem:[%s202 + $0x128] sm:$0xf]
                %285 = vst [vmem:[%s203 + $0xa0] sm:$0xf] %v284
                %v286 = vld [vmem:[%s202 + $0x12c] sm:$0xf]
                %287 = vst [vmem:[%s203 + $0xa4] sm:$0xf] %v286
                %v288 = vld [vmem:[%s202 + $0x130] sm:$0xf]
                %289 = vst [vmem:[%s203 + $0xa8] sm:$0xf] %v288
                %v290 = vld [vmem:[%s202 + $0x134] sm:$0xf]
                %291 = vst [vmem:[%s203 + $0xac] sm:$0xf] %v290
                %v292 = vld [vmem:[%s202 + $0x138] sm:$0xf]
                %293 = vst [vmem:[%s203 + $0xb0] sm:$0xf] %v292
                %v294 = vld [vmem:[%s202 + $0x13c] sm:$0xf]
                %295 = vst [vmem:[%s203 + $0xb4] sm:$0xf] %v294
                %v296 = vld [vmem:[%s202 + $0x140] sm:$0xf]
                %297 = vst [vmem:[%s203 + $0xb8] sm:$0xf] %v296
                %v298 = vld [vmem:[%s202 + $0x144] sm:$0xf]
                %299 = vst [vmem:[%s203 + $0xbc] sm:$0xf] %v298
                %v300 = vld [vmem:[%s202 + $0x148] sm:$0xf]
                %301 = vst [vmem:[%s203 + $0xc0] sm:$0xf] %v300
                %v302 = vld [vmem:[%s202 + $0x14c] sm:$0xf]
                %303 = vst [vmem:[%s203 + $0xc4] sm:$0xf] %v302
                %v304 = vld [vmem:[%s202 + $0x150] sm:$0xf]
                %305 = vst [vmem:[%s203 + $0xc8] sm:$0xf] %v304
                %v306 = vld [vmem:[%s202 + $0x154] sm:$0xf]
                %307 = vst [vmem:[%s203 + $0xcc] sm:$0xf] %v306
                %v308 = vld [vmem:[%s202 + $0x158] sm:$0xf]
                %309 = vst [vmem:[%s203 + $0xd0] sm:$0xf] %v308
                %v310 = vld [vmem:[%s202 + $0x15c] sm:$0xf]
                %311 = vst [vmem:[%s203 + $0xd4] sm:$0xf] %v310
                %v312 = vld [vmem:[%s202 + $0x160] sm:$0xf]
                %313 = vst [vmem:[%s203 + $0xd8] sm:$0xf] %v312
                %v314 = vld [vmem:[%s202 + $0x164] sm:$0xf]
                %315 = vst [vmem:[%s203 + $0xdc] sm:$0xf] %v314
                %v316 = vld [vmem:[%s202 + $0x168] sm:$0xf]
                %317 = vst [vmem:[%s203 + $0xe0] sm:$0xf] %v316
                %v318 = vld [vmem:[%s202 + $0x16c] sm:$0xf]
                %319 = vst [vmem:[%s203 + $0xe4] sm:$0xf] %v318
                %v320 = vld [vmem:[%s202 + $0x170] sm:$0xf]
                %321 = vst [vmem:[%s203 + $0xe8] sm:$0xf] %v320
                %v322 = vld [vmem:[%s202 + $0x174] sm:$0xf]
                %323 = vst [vmem:[%s203 + $0xec] sm:$0xf] %v322
                %v324 = vld [vmem:[%s202 + $0x178] sm:$0xf]
                %325 = vst [vmem:[%s203 + $0xf0] sm:$0xf] %v324
                %v326 = vld [vmem:[%s202 + $0x17c] sm:$0xf]
                %327 = vst [vmem:[%s203 + $0xf4] sm:$0xf] %v326
                %v328 = vld [vmem:[%s202 + $0x180] sm:$0xf]
                %329 = vst [vmem:[%s203 + $0xf8] sm:$0xf] %v328
                %v330 = vld [vmem:[%s202 + $0x184] sm:$0xf]
                %331 = vst [vmem:[%s203 + $0xfc] sm:$0xf] %v330
                %v332 = vld [vmem:[%s202 + $0x188] sm:$0xf]
                %333 = vst [vmem:[%s203 + $0x100] sm:$0xf] %v332
                %v334 = vld [vmem:[%s202 + $0x18c] sm:$0xf]
                %335 = vst [vmem:[%s203 + $0x104] sm:$0xf] %v334
                %v336 = vld [vmem:[%s202 + $0x190] sm:$0xf]
                %337 = vst [vmem:[%s203 + $0x108] sm:$0xf] %v336
                %v338 = vld [vmem:[%s202 + $0x194] sm:$0xf]
                %339 = vst [vmem:[%s203 + $0x10c] sm:$0xf] %v338
                %v340 = vld [vmem:[%s202 + $0x220] sm:$0xf]
                %341 = vst [vmem:[%s203 + $0x110] sm:$0xf] %v340
                %v342 = vld [vmem:[%s202 + $0x224] sm:$0xf]
                %343 = vst [vmem:[%s203 + $0x114] sm:$0xf] %v342
                %v344 = vld [vmem:[%s202 + $0x228] sm:$0xf]
                %345 = vst [vmem:[%s203 + $0x118] sm:$0xf] %v344
                %v346 = vld [vmem:[%s202 + $0x22c] sm:$0xf]
                %347 = vst [vmem:[%s203 + $0x11c] sm:$0xf] %v346
                %v348 = vld [vmem:[%s202 + $0x230] sm:$0xf]
                %349 = vst [vmem:[%s203 + $0x120] sm:$0xf] %v348
                %v350 = vld [vmem:[%s202 + $0x234] sm:$0xf]
                %351 = vst [vmem:[%s203 + $0x124] sm:$0xf] %v350
                %v352 = vld [vmem:[%s202 + $0x238] sm:$0xf]
                %353 = vst [vmem:[%s203 + $0x128] sm:$0xf] %v352
                %v354 = vld [vmem:[%s202 + $0x23c] sm:$0xf]
                %355 = vst [vmem:[%s203 + $0x12c] sm:$0xf] %v354
                %v356 = vld [vmem:[%s202 + $0x240] sm:$0xf]
                %357 = vst [vmem:[%s203 + $0x130] sm:$0xf] %v356
                %v358 = vld [vmem:[%s202 + $0x244] sm:$0xf]
                %359 = vst [vmem:[%s203 + $0x134] sm:$0xf] %v358
                %v360 = vld [vmem:[%s202 + $0x248] sm:$0xf]
                %361 = vst [vmem:[%s203 + $0x138] sm:$0xf] %v360
                %v362 = vld [vmem:[%s202 + $0x24c] sm:$0xf]
                %363 = vst [vmem:[%s203 + $0x13c] sm:$0xf] %v362
                %v364 = vld [vmem:[%s202 + $0x250] sm:$0xf]
                %365 = vst [vmem:[%s203 + $0x140] sm:$0xf] %v364
                %v366 = vld [vmem:[%s202 + $0x254] sm:$0xf]
                %367 = vst [vmem:[%s203 + $0x144] sm:$0xf] %v366
                %v368 = vld [vmem:[%s202 + $0x258] sm:$0xf]
                %369 = vst [vmem:[%s203 + $0x148] sm:$0xf] %v368
                %v370 = vld [vmem:[%s202 + $0x25c] sm:$0xf]
                %371 = vst [vmem:[%s203 + $0x14c] sm:$0xf] %v370
                %v372 = vld [vmem:[%s202 + $0x260] sm:$0xf]
                %373 = vst [vmem:[%s203 + $0x150] sm:$0xf] %v372
                %v374 = vld [vmem:[%s202 + $0x264] sm:$0xf]
                %375 = vst [vmem:[%s203 + $0x154] sm:$0xf] %v374
                %v376 = vld [vmem:[%s202 + $0x268] sm:$0xf]
                %377 = vst [vmem:[%s203 + $0x158] sm:$0xf] %v376
                %v378 = vld [vmem:[%s202 + $0x26c] sm:$0xf]
                %379 = vst [vmem:[%s203 + $0x15c] sm:$0xf] %v378
                %v380 = vld [vmem:[%s202 + $0x270] sm:$0xf]
                %381 = vst [vmem:[%s203 + $0x160] sm:$0xf] %v380
                %v382 = vld [vmem:[%s202 + $0x274] sm:$0xf]
                %383 = vst [vmem:[%s203 + $0x164] sm:$0xf] %v382
                %v384 = vld [vmem:[%s202 + $0x278] sm:$0xf]
                %385 = vst [vmem:[%s203 + $0x168] sm:$0xf] %v384
                %v386 = vld [vmem:[%s202 + $0x27c] sm:$0xf]
                %387 = vst [vmem:[%s203 + $0x16c] sm:$0xf] %v386
                %v388 = vld [vmem:[%s202 + $0x280] sm:$0xf]
                %389 = vst [vmem:[%s203 + $0x170] sm:$0xf] %v388
                %v390 = vld [vmem:[%s202 + $0x284] sm:$0xf]
                %391 = vst [vmem:[%s203 + $0x174] sm:$0xf] %v390
                %v392 = vld [vmem:[%s202 + $0x288] sm:$0xf]
                %393 = vst [vmem:[%s203 + $0x178] sm:$0xf] %v392
                %v394 = vld [vmem:[%s202 + $0x28c] sm:$0xf]
                %395 = vst [vmem:[%s203 + $0x17c] sm:$0xf] %v394
                %v396 = vld [vmem:[%s202 + $0x290] sm:$0xf]
                %397 = vst [vmem:[%s203 + $0x180] sm:$0xf] %v396
                %v398 = vld [vmem:[%s202 + $0x294] sm:$0xf]
                %399 = vst [vmem:[%s203 + $0x184] sm:$0xf] %v398
                %v400 = vld [vmem:[%s202 + $0x298] sm:$0xf]
                %401 = vst [vmem:[%s203 + $0x188] sm:$0xf] %v400
                %v402 = vld [vmem:[%s202 + $0x29c] sm:$0xf]
                %403 = vst [vmem:[%s203 + $0x18c] sm:$0xf] %v402
                %v404 = vld [vmem:[%s202 + $0x2a0] sm:$0xf]
                %405 = vst [vmem:[%s203 + $0x190] sm:$0xf] %v404
                %v406 = vld [vmem:[%s202 + $0x2a4] sm:$0xf]
                %407 = vst [vmem:[%s203 + $0x194] sm:$0xf] %v406
              $region45: #{tpu_custom_call.1} parent=39 // loop_footer
                %s201 = sadd.s32 1, %s197
              $region46: #{tpu_custom_call.1} parent=39 // loop_footer_branch
                %196 = sbr.rel target = $region42
              $region47: #{tpu_custom_call.1} parent=39 // loop_exit
                _
            $region40: #{tpu_custom_call.1} parent=31 // pred_fallthru
              _
          $region32: #{tpu_custom_call.1} parent=27 // pred_fallthru
            _
          %631 = vnop
        $region28: #{tpu_custom_call.1} parent=23 // pred_fallthru
          _
        // Predicated region
        $region66: #{tpu_custom_call.1} parent=23 // pred_check
          %p632 = pneg %p76
        $region67: #{tpu_custom_call.1} parent=23 // pred_check_branch
          %634 = sbr.rel (%p632) target = $region69
        $region68: #{tpu_custom_call.1} parent=23 // pred_region
          %s635 = sand.u32 %s66, 1
          %s636 = sand.u32 %s66, 1
          %s637 = smul.addr %s636, 24
          %s638 = scalar_lea.vmem [#allocation5], %s637
          %s639 = sadd.s32 %s18, 1
          %s640 = smul.u32 %s639, 17
          %s641 = smul.u32 2, %s640
          %s642 = smul.addr %s17, 204
          %s643 = sadd.s32 %s641, %s642
          %s644 = smul.addr %s643, 4
          %s645 = scalar_lea.vmem %s1, %s644
          // Predicated region
          $region70: #{tpu_custom_call.1} parent=68 // pred_check
            _
          $region71: #{tpu_custom_call.1} parent=68 // pred_check_branch
            %647 = sbr.rel (0) target = $region73
          $region72: #{tpu_custom_call.1} parent=68 // pred_region
            // Predicated region
            $region74: #{tpu_custom_call.1} parent=72 // pred_check
              _
            $region75: #{tpu_custom_call.1} parent=72 // pred_check_branch
              %649 = sbr.rel target = $region77
            $region76: #{tpu_custom_call.1} parent=72 // pred_region
              // Predicated region
              $region89: #{tpu_custom_call.1} parent=76 // pred_check
                _
              $region90: #{tpu_custom_call.1} parent=76 // pred_check_branch
                %674 = sbr.rel (0) target = $region92
              $region91: #{tpu_custom_call.1} parent=76 // pred_region
                loop: start=0, step=1, limit=1
                $region93: #{tpu_custom_call.1} parent=91 // loop_pre_header
                  _
                $region94: #{tpu_custom_call.1} parent=91 // loop_header
                  %s676 = sphi 0, %s680
                  %p677 = scmp.ge.s32.totalorder %s676, 1
                  %s681 = sphi %s645, %s645
                  %s682 = sphi %s638, %s638
                $region95: #{tpu_custom_call.1} parent=91 // loop_header_branch
                  %679 = sbr.rel (%p677) target = $region99
                $region96: #{tpu_custom_call.1} parent=91 // loop_body
                  _
                $region97: #{tpu_custom_call.1} parent=91 // loop_footer
                  %s680 = sadd.s32 1, %s676
                $region98: #{tpu_custom_call.1} parent=91 // loop_footer_branch
                  %675 = sbr.rel target = $region94
                $region99: #{tpu_custom_call.1} parent=91 // loop_exit
                  _
                loop: start=0, step=1, limit=1
                $region100: #{tpu_custom_call.1} parent=91 // loop_pre_header
                  _
                $region101: #{tpu_custom_call.1} parent=91 // loop_header
                  %s685 = sphi 0, %s689
                  %p686 = scmp.ge.s32.totalorder %s685, 1
                  %s690 = sphi %s645, %s645
                  %s691 = sphi %s638, %s638
                $region102: #{tpu_custom_call.1} parent=91 // loop_header_branch
                  %688 = sbr.rel (%p686) target = $region106
                $region103: #{tpu_custom_call.1} parent=91 // loop_body
                  %v692 = vld [vmem:[%s690] sm:$0xf]
                  %693 = vst [vmem:[%s691] sm:$0xf] %v692
                  %v694 = vld [vmem:[%s690 + $0x4] sm:$0xf]
                  %695 = vst [vmem:[%s691 + $0x4] sm:$0xf] %v694
                  %v696 = vld [vmem:[%s690 + $0x110] sm:$0xf]
                  %697 = vst [vmem:[%s691 + $0x8] sm:$0xf] %v696
                  %v698 = vld [vmem:[%s690 + $0x114] sm:$0xf]
                  %699 = vst [vmem:[%s691 + $0xc] sm:$0xf] %v698
                  %v700 = vld [vmem:[%s690 + $0x220] sm:$0xf]
                  %701 = vst [vmem:[%s691 + $0x10] sm:$0xf] %v700
                  %v702 = vld [vmem:[%s690 + $0x224] sm:$0xf]
                  %703 = vst [vmem:[%s691 + $0x14] sm:$0xf] %v702
                $region104: #{tpu_custom_call.1} parent=91 // loop_footer
                  %s689 = sadd.s32 1, %s685
                $region105: #{tpu_custom_call.1} parent=91 // loop_footer_branch
                  %684 = sbr.rel target = $region101
                $region106: #{tpu_custom_call.1} parent=91 // loop_exit
                  _
              $region92: #{tpu_custom_call.1} parent=76 // pred_fallthru
                _
            $region77: #{tpu_custom_call.1} parent=72 // pred_fallthru
              _
            // Predicated region
            $region78: #{tpu_custom_call.1} parent=72 // pred_check
              _
            $region79: #{tpu_custom_call.1} parent=72 // pred_check_branch
              %651 = sbr.rel (0) target = $region81
            $region80: #{tpu_custom_call.1} parent=72 // pred_region
              loop: start=0, step=1, limit=1
              $region82: #{tpu_custom_call.1} parent=80 // loop_pre_header
                _
              $region83: #{tpu_custom_call.1} parent=80 // loop_header
                %s654 = sphi 0, %s658
                %p655 = scmp.ge.s32.totalorder %s654, 1
                %s659 = sphi %s645, %s645
                %s660 = sphi %s638, %s638
              $region84: #{tpu_custom_call.1} parent=80 // loop_header_branch
                %657 = sbr.rel (%p655) target = $region88
              $region85: #{tpu_custom_call.1} parent=80 // loop_body
                %v661 = vld [vmem:[%s659] sm:$0xf]
                %662 = vst [vmem:[%s660] sm:$0xf] %v661
                %v663 = vld [vmem:[%s659 + $0x4] sm:$0xf]
                %664 = vst [vmem:[%s660 + $0x4] sm:$0xf] %v663
                %v665 = vld [vmem:[%s659 + $0x110] sm:$0xf]
                %666 = vst [vmem:[%s660 + $0x8] sm:$0xf] %v665
                %v667 = vld [vmem:[%s659 + $0x114] sm:$0xf]
                %668 = vst [vmem:[%s660 + $0xc] sm:$0xf] %v667
                %v669 = vld [vmem:[%s659 + $0x220] sm:$0xf]
                %670 = vst [vmem:[%s660 + $0x10] sm:$0xf] %v669
                %v671 = vld [vmem:[%s659 + $0x224] sm:$0xf]
                %672 = vst [vmem:[%s660 + $0x14] sm:$0xf] %v671
              $region86: #{tpu_custom_call.1} parent=80 // loop_footer
                %s658 = sadd.s32 1, %s654
              $region87: #{tpu_custom_call.1} parent=80 // loop_footer_branch
                %653 = sbr.rel target = $region83
              $region88: #{tpu_custom_call.1} parent=80 // loop_exit
                _
            $region81: #{tpu_custom_call.1} parent=72 // pred_fallthru
              _
          $region73: #{tpu_custom_call.1} parent=68 // pred_fallthru
            _
          %704 = vnop
        $region69: #{tpu_custom_call.1} parent=23 // pred_fallthru
          _
      $region24: #{tpu_custom_call.1} parent=5 // pred_fallthru
        _
      %p705 = scmp.le.s32.totalorder 1, %s10
      %p706 = scmp.lt.s32.totalorder %s10, 3
      %p707 = pnand %p705, %p706
      %p708 = pneg %p707
      // Predicated region
      $region107: #{tpu_custom_call.1} parent=5 // pred_check
        _
      $region108: #{tpu_custom_call.1} parent=5 // pred_check_branch
        %710 = sbr.rel (%p707) target = $region110
      $region109: #{tpu_custom_call.1} parent=5 // pred_region
        %s711 = ssub.s32 %s10, 1
        %s712 = sand.u32 %s37, 1
        %s713 = sand.u32 %s37, 1
        %s714 = smul.addr %s713, 408
        %s715 = scalar_lea.vmem [#allocation4], %s714
        // Predicated region
        $region111: #{tpu_custom_call.1} parent=109 // pred_check
          %p716 = pneg %p50
        $region112: #{tpu_custom_call.1} parent=109 // pred_check_branch
          %718 = sbr.rel (%p716) target = $region114
        $region113: #{tpu_custom_call.1} parent=109 // pred_region
          _
        $region114: #{tpu_custom_call.1} parent=109 // pred_fallthru
          _
        %s719 = sand.u32 %s69, 1
        %s720 = sand.u32 %s69, 1
        %s721 = smul.addr %s720, 24
        %s722 = scalar_lea.vmem [#allocation5], %s721
        // Predicated region
        $region115: #{tpu_custom_call.1} parent=109 // pred_check
          %p723 = pneg %p82
        $region116: #{tpu_custom_call.1} parent=109 // pred_check_branch
          %725 = sbr.rel (%p723) target = $region118
        $region117: #{tpu_custom_call.1} parent=109 // pred_region
          _
        $region118: #{tpu_custom_call.1} parent=109 // pred_fallthru
          _
        %s726 = sand.u32 %s37, 1
        %s727 = sand.u32 %s37, 1
        %s728 = smul.addr %s727, 408
        %s729 = scalar_lea.vmem [#allocation4], %s728
        %p730 = pneg %p50
        %p731 = pneg %p47
        %s732 = sand.u32 %s69, 1
        %s733 = sand.u32 %s69, 1
        %s734 = smul.addr %s733, 24
        %s735 = scalar_lea.vmem [#allocation5], %s734
        %p736 = pneg %p82
        %p737 = pneg %p79
        %p738 = pneg %p103
        %p739 = pneg %p100
        %p740 = pneg %p124
        %p741 = pneg %p121
        %p742 = pneg %p152
        %p743 = pneg %p149
        %s744 = smul.u32 34, %s20
        %p745 = scmp.lt.s32.totalorder %s19, 1
        %s746 = scalar_select %p745, %s19, 1
        %p747 = scmp.lt.s32.totalorder %s744, 33
        %s748 = scalar_select %p747, %s744, 33
        %s749 = smul.addr %s746, 34
        %s750 = sadd.s32 %s748, %s749
        %s751 = smul.addr %s750, 4
        %s752 = scalar_lea.vmem %s4, %s751
        %s753 = smul.u32 34, %s20
        %s754 = sadd.s32 %s20, 1
        %s755 = smul.u32 %s754, 17
        %s756 = smul.u32 2, %s755
        %s757 = smul.u32 34, %s20
        %p758 = scmp.lt.s32.totalorder %s19, 1
        %s759 = scalar_select %p758, %s19, 1
        %p760 = scmp.lt.s32.totalorder %s757, 33
        %s761 = scalar_select %p760, %s757, 33
        %s762 = smul.addr %s759, 34
        %s763 = sadd.s32 %s761, %s762
        %s764 = smul.addr %s763, 4
        %s765 = scalar_lea.vmem %s4, %s764
        %s766 = smul.u32 34, %s20
        %v768 = vld [vmem:[%s715] sm:$0xf]
        %v769 = vld [vmem:[%s715 + $0x4] sm:$0xf]
        %v770 = vld [vmem:[%s715 + $0x8] sm:$0xf]
        %v771 = vld [vmem:[%s715 + $0xc] sm:$0xf]
        %v772 = vld [vmem:[%s715 + $0x10] sm:$0xf]
        %v773 = vld [vmem:[%s715 + $0x14] sm:$0xf]
        %v774 = vld [vmem:[%s715 + $0x18] sm:$0xf]
        %v775 = vld [vmem:[%s715 + $0x1c] sm:$0xf]
        %v776 = vld [vmem:[%s715 + $0x20] sm:$0xf]
        %v777 = vld [vmem:[%s715 + $0x24] sm:$0xf]
        %v778 = vld [vmem:[%s715 + $0x28] sm:$0xf]
        %v779 = vld [vmem:[%s715 + $0x2c] sm:$0xf]
        %v780 = vld [vmem:[%s715 + $0x30] sm:$0xf]
        %v781 = vld [vmem:[%s715 + $0x34] sm:$0xf]
        %v782 = vld [vmem:[%s715 + $0x38] sm:$0xf]
        %v783 = vld [vmem:[%s715 + $0x3c] sm:$0xf]
        %v784 = vld [vmem:[%s715 + $0x40] sm:$0xf]
        %v785 = vld [vmem:[%s715 + $0x44] sm:$0xf]
        %v786 = vld [vmem:[%s715 + $0x48] sm:$0xf]
        %v787 = vld [vmem:[%s715 + $0x4c] sm:$0xf]
        %v788 = vld [vmem:[%s715 + $0x50] sm:$0xf]
        %v789 = vld [vmem:[%s715 + $0x54] sm:$0xf]
        %v790 = vld [vmem:[%s715 + $0x58] sm:$0xf]
        %v791 = vld [vmem:[%s715 + $0x5c] sm:$0xf]
        %v792 = vld [vmem:[%s715 + $0x60] sm:$0xf]
        %v793 = vld [vmem:[%s715 + $0x64] sm:$0xf]
        %v794 = vld [vmem:[%s715 + $0x68] sm:$0xf]
        %v795 = vld [vmem:[%s715 + $0x6c] sm:$0xf]
        %v796 = vld [vmem:[%s715 + $0x70] sm:$0xf]
        %v797 = vld [vmem:[%s715 + $0x74] sm:$0xf]
        %v798 = vld [vmem:[%s715 + $0x78] sm:$0xf]
        %v799 = vld [vmem:[%s715 + $0x7c] sm:$0xf]
        %v800 = vld [vmem:[%s715 + $0x80] sm:$0xf]
        %v801 = vld [vmem:[%s715 + $0x84] sm:$0xf]
        %v802 = vld [vmem:[%s715 + $0x88] sm:$0xf]
        %v803 = vld [vmem:[%s715 + $0x8c] sm:$0xf]
        %v804 = vld [vmem:[%s715 + $0x90] sm:$0xf]
        %v805 = vld [vmem:[%s715 + $0x94] sm:$0xf]
        %v806 = vld [vmem:[%s715 + $0x98] sm:$0xf]
        %v807 = vld [vmem:[%s715 + $0x9c] sm:$0xf]
        %v808 = vld [vmem:[%s715 + $0xa0] sm:$0xf]
        %v809 = vld [vmem:[%s715 + $0xa4] sm:$0xf]
        %v810 = vld [vmem:[%s715 + $0xa8] sm:$0xf]
        %v811 = vld [vmem:[%s715 + $0xac] sm:$0xf]
        %v812 = vld [vmem:[%s715 + $0xb0] sm:$0xf]
        %v813 = vld [vmem:[%s715 + $0xb4] sm:$0xf]
        %v814 = vld [vmem:[%s715 + $0xb8] sm:$0xf]
        %v815 = vld [vmem:[%s715 + $0xbc] sm:$0xf]
        %v816 = vld [vmem:[%s715 + $0xc0] sm:$0xf]
        %v817 = vld [vmem:[%s715 + $0xc4] sm:$0xf]
        %v818 = vld [vmem:[%s715 + $0xc8] sm:$0xf]
        %v819 = vld [vmem:[%s715 + $0xcc] sm:$0xf]
        %v820 = vld [vmem:[%s715 + $0xd0] sm:$0xf]
        %v821 = vld [vmem:[%s715 + $0xd4] sm:$0xf]
        %v822 = vld [vmem:[%s715 + $0xd8] sm:$0xf]
        %v823 = vld [vmem:[%s715 + $0xdc] sm:$0xf]
        %v824 = vld [vmem:[%s715 + $0xe0] sm:$0xf]
        %v825 = vld [vmem:[%s715 + $0xe4] sm:$0xf]
        %v826 = vld [vmem:[%s715 + $0xe8] sm:$0xf]
        %v827 = vld [vmem:[%s715 + $0xec] sm:$0xf]
        %v828 = vld [vmem:[%s715 + $0xf0] sm:$0xf]
        %v829 = vld [vmem:[%s715 + $0xf4] sm:$0xf]
        %v830 = vld [vmem:[%s715 + $0xf8] sm:$0xf]
        %v831 = vld [vmem:[%s715 + $0xfc] sm:$0xf]
        %v832 = vld [vmem:[%s715 + $0x100] sm:$0xf]
        %v833 = vld [vmem:[%s715 + $0x104] sm:$0xf]
        %v834 = vld [vmem:[%s715 + $0x108] sm:$0xf]
        %v835 = vld [vmem:[%s715 + $0x10c] sm:$0xf]
        %v836 = vld [vmem:[%s715 + $0x110] sm:$0xf]
        %v837 = vld [vmem:[%s715 + $0x114] sm:$0xf]
        %v838 = vld [vmem:[%s715 + $0x118] sm:$0xf]
        %v839 = vld [vmem:[%s715 + $0x11c] sm:$0xf]
        %v840 = vld [vmem:[%s715 + $0x120] sm:$0xf]
        %v841 = vld [vmem:[%s715 + $0x124] sm:$0xf]
        %v842 = vld [vmem:[%s715 + $0x128] sm:$0xf]
        %v843 = vld [vmem:[%s715 + $0x12c] sm:$0xf]
        %v844 = vld [vmem:[%s715 + $0x130] sm:$0xf]
        %v845 = vld [vmem:[%s715 + $0x134] sm:$0xf]
        %v846 = vld [vmem:[%s715 + $0x138] sm:$0xf]
        %v847 = vld [vmem:[%s715 + $0x13c] sm:$0xf]
        %v848 = vld [vmem:[%s715 + $0x140] sm:$0xf]
        %v849 = vld [vmem:[%s715 + $0x144] sm:$0xf]
        %v850 = vld [vmem:[%s715 + $0x148] sm:$0xf]
        %v851 = vld [vmem:[%s715 + $0x14c] sm:$0xf]
        %v852 = vld [vmem:[%s715 + $0x150] sm:$0xf]
        %v853 = vld [vmem:[%s715 + $0x154] sm:$0xf]
        %v854 = vld [vmem:[%s715 + $0x158] sm:$0xf]
        %v855 = vld [vmem:[%s715 + $0x15c] sm:$0xf]
        %v856 = vld [vmem:[%s715 + $0x160] sm:$0xf]
        %v857 = vld [vmem:[%s715 + $0x164] sm:$0xf]
        %v858 = vld [vmem:[%s715 + $0x168] sm:$0xf]
        %v859 = vld [vmem:[%s715 + $0x16c] sm:$0xf]
        %v860 = vld [vmem:[%s715 + $0x170] sm:$0xf]
        %v861 = vld [vmem:[%s715 + $0x174] sm:$0xf]
        %v862 = vld [vmem:[%s715 + $0x178] sm:$0xf]
        %v863 = vld [vmem:[%s715 + $0x17c] sm:$0xf]
        %v864 = vld [vmem:[%s715 + $0x180] sm:$0xf]
        %v865 = vld [vmem:[%s715 + $0x184] sm:$0xf]
        %v866 = vld [vmem:[%s715 + $0x188] sm:$0xf]
        %v867 = vld [vmem:[%s715 + $0x18c] sm:$0xf]
        %v868 = vld [vmem:[%s715 + $0x190] sm:$0xf]
        %v869 = vld [vmem:[%s715 + $0x194] sm:$0xf]
        %v972 = vunpack.c.l.b16 %v768
        %v973 = vunpack.c.l.b16 %v769
        %v974 = vunpack.c.l.b16 %v770
        %v975 = vunpack.c.l.b16 %v771
        %v976 = vunpack.c.l.b16 %v772
        %v977 = vunpack.c.l.b16 %v773
        %v978 = vunpack.c.l.b16 %v774
        %v979 = vunpack.c.l.b16 %v775
        %v980 = vunpack.c.l.b16 %v776
        %v981 = vunpack.c.l.b16 %v777
        %v982 = vunpack.c.l.b16 %v778
        %v983 = vunpack.c.l.b16 %v779
        %v984 = vunpack.c.l.b16 %v780
        %v985 = vunpack.c.l.b16 %v781
        %v986 = vunpack.c.l.b16 %v782
        %v987 = vunpack.c.l.b16 %v783
        %v988 = vunpack.c.l.b16 %v784
        %v989 = vunpack.c.l.b16 %v785
        %v990 = vunpack.c.l.b16 %v786
        %v991 = vunpack.c.l.b16 %v787
        %v992 = vunpack.c.l.b16 %v788
        %v993 = vunpack.c.l.b16 %v789
        %v994 = vunpack.c.l.b16 %v790
        %v995 = vunpack.c.l.b16 %v791
        %v996 = vunpack.c.l.b16 %v792
        %v997 = vunpack.c.l.b16 %v793
        %v998 = vunpack.c.l.b16 %v794
        %v999 = vunpack.c.l.b16 %v795
        %v1000 = vunpack.c.l.b16 %v796
        %v1001 = vunpack.c.l.b16 %v797
        %v1002 = vunpack.c.l.b16 %v798
        %v1003 = vunpack.c.l.b16 %v799
        %v1004 = vunpack.c.l.b16 %v800
        %v1005 = vunpack.c.l.b16 %v801
        %v1006 = vunpack.c.l.b16 %v802
        %v1007 = vunpack.c.l.b16 %v803
        %v1008 = vunpack.c.l.b16 %v804
        %v1009 = vunpack.c.l.b16 %v805
        %v1010 = vunpack.c.l.b16 %v806
        %v1011 = vunpack.c.l.b16 %v807
        %v1012 = vunpack.c.l.b16 %v808
        %v1013 = vunpack.c.l.b16 %v809
        %v1014 = vunpack.c.l.b16 %v810
        %v1015 = vunpack.c.l.b16 %v811
        %v1016 = vunpack.c.l.b16 %v812
        %v1017 = vunpack.c.l.b16 %v813
        %v1018 = vunpack.c.l.b16 %v814
        %v1019 = vunpack.c.l.b16 %v815
        %v1020 = vunpack.c.l.b16 %v816
        %v1021 = vunpack.c.l.b16 %v817
        %v1022 = vunpack.c.l.b16 %v818
        %v1023 = vunpack.c.l.b16 %v819
        %v1024 = vunpack.c.l.b16 %v820
        %v1025 = vunpack.c.l.b16 %v821
        %v1026 = vunpack.c.l.b16 %v822
        %v1027 = vunpack.c.l.b16 %v823
        %v1028 = vunpack.c.l.b16 %v824
        %v1029 = vunpack.c.l.b16 %v825
        %v1030 = vunpack.c.l.b16 %v826
        %v1031 = vunpack.c.l.b16 %v827
        %v1032 = vunpack.c.l.b16 %v828
        %v1033 = vunpack.c.l.b16 %v829
        %v1034 = vunpack.c.l.b16 %v830
        %v1035 = vunpack.c.l.b16 %v831
        %v1036 = vunpack.c.l.b16 %v832
        %v1037 = vunpack.c.l.b16 %v833
        %v1038 = vunpack.c.l.b16 %v834
        %v1039 = vunpack.c.l.b16 %v835
        %v1040 = vunpack.c.l.b16 %v836
        %v1041 = vunpack.c.l.b16 %v837
        %v1042 = vunpack.c.l.b16 %v838
        %v1043 = vunpack.c.l.b16 %v839
        %v1044 = vunpack.c.l.b16 %v840
        %v1045 = vunpack.c.l.b16 %v841
        %v1046 = vunpack.c.l.b16 %v842
        %v1047 = vunpack.c.l.b16 %v843
        %v1048 = vunpack.c.l.b16 %v844
        %v1049 = vunpack.c.l.b16 %v845
        %v1050 = vunpack.c.l.b16 %v846
        %v1051 = vunpack.c.l.b16 %v847
        %v1052 = vunpack.c.l.b16 %v848
        %v1053 = vunpack.c.l.b16 %v849
        %v1054 = vunpack.c.l.b16 %v850
        %v1055 = vunpack.c.l.b16 %v851
        %v1056 = vunpack.c.l.b16 %v852
        %v1057 = vunpack.c.l.b16 %v853
        %v1058 = vunpack.c.l.b16 %v854
        %v1059 = vunpack.c.l.b16 %v855
        %v1060 = vunpack.c.l.b16 %v856
        %v1061 = vunpack.c.l.b16 %v857
        %v1062 = vunpack.c.l.b16 %v858
        %v1063 = vunpack.c.l.b16 %v859
        %v1064 = vunpack.c.l.b16 %v860
        %v1065 = vunpack.c.l.b16 %v861
        %v1066 = vunpack.c.l.b16 %v862
        %v1067 = vunpack.c.l.b16 %v863
        %v1068 = vunpack.c.l.b16 %v864
        %v1069 = vunpack.c.l.b16 %v865
        %v1070 = vunpack.c.l.b16 %v866
        %v1071 = vunpack.c.l.b16 %v867
        %v1072 = vunpack.c.l.b16 %v868
        %v1073 = vunpack.c.l.b16 %v869
        %v1074 = vpack.c.b16 %v973, %v972
        %v1075 = vpack.c.b16 %v975, %v974
        %v1076 = vpack.c.b16 %v977, %v976
        %v1077 = vpack.c.b16 %v979, %v978
        %v1078 = vpack.c.b16 %v981, %v980
        %v1079 = vpack.c.b16 %v983, %v982
        %v1080 = vpack.c.b16 %v985, %v984
        %v1081 = vpack.c.b16 %v987, %v986
        %v1082 = vpack.c.b16 %v989, %v988
        %v1083 = vpack.c.b16 %v991, %v990
        %v1084 = vpack.c.b16 %v993, %v992
        %v1085 = vpack.c.b16 %v995, %v994
        %v1086 = vpack.c.b16 %v997, %v996
        %v1087 = vpack.c.b16 %v999, %v998
        %v1088 = vpack.c.b16 %v1001, %v1000
        %v1089 = vpack.c.b16 %v1003, %v1002
        %v1090 = vpack.c.b16 %v1005, %v1004
        %v1091 = vpack.c.b16 %v1007, %v1006
        %v1092 = vpack.c.b16 %v1009, %v1008
        %v1093 = vpack.c.b16 %v1011, %v1010
        %v1094 = vpack.c.b16 %v1013, %v1012
        %v1095 = vpack.c.b16 %v1015, %v1014
        %v1096 = vpack.c.b16 %v1017, %v1016
        %v1097 = vpack.c.b16 %v1019, %v1018
        %v1098 = vpack.c.b16 %v1021, %v1020
        %v1099 = vpack.c.b16 %v1023, %v1022
        %v1100 = vpack.c.b16 %v1025, %v1024
        %v1101 = vpack.c.b16 %v1027, %v1026
        %v1102 = vpack.c.b16 %v1029, %v1028
        %v1103 = vpack.c.b16 %v1031, %v1030
        %v1104 = vpack.c.b16 %v1033, %v1032
        %v1105 = vpack.c.b16 %v1035, %v1034
        %v1106 = vpack.c.b16 %v1037, %v1036
        %v1107 = vpack.c.b16 %v1039, %v1038
        %v1108 = vpack.c.b16 %v1041, %v1040
        %v1109 = vpack.c.b16 %v1043, %v1042
        %v1110 = vpack.c.b16 %v1045, %v1044
        %v1111 = vpack.c.b16 %v1047, %v1046
        %v1112 = vpack.c.b16 %v1049, %v1048
        %v1113 = vpack.c.b16 %v1051, %v1050
        %v1114 = vpack.c.b16 %v1053, %v1052
        %v1115 = vpack.c.b16 %v1055, %v1054
        %v1116 = vpack.c.b16 %v1057, %v1056
        %v1117 = vpack.c.b16 %v1059, %v1058
        %v1118 = vpack.c.b16 %v1061, %v1060
        %v1119 = vpack.c.b16 %v1063, %v1062
        %v1120 = vpack.c.b16 %v1065, %v1064
        %v1121 = vpack.c.b16 %v1067, %v1066
        %v1122 = vpack.c.b16 %v1069, %v1068
        %v1123 = vpack.c.b16 %v1071, %v1070
        %v1124 = vpack.c.b16 %v1073, %v1072
        %vm1176 = vcmask 7168
        %1177 = vst.msk [vmem:[#allocation2] sm:$0xff] %vm1176, %v1074
        %1178 = vst.msk [vmem:[#allocation2 + $0x8] sm:$0xff] %vm1176, %v1075
        %1179 = vst.msk [vmem:[#allocation2 + $0x10] sm:$0xff] %vm1176, %v1076
        %1180 = vst.msk [vmem:[#allocation2 + $0x18] sm:$0xff] %vm1176, %v1077
        %1181 = vst.msk [vmem:[#allocation2 + $0x20] sm:$0xff] %vm1176, %v1078
        %1182 = vst.msk [vmem:[#allocation2 + $0x28] sm:$0xff] %vm1176, %v1079
        %1183 = vst.msk [vmem:[#allocation2 + $0x30] sm:$0xff] %vm1176, %v1080
        %1184 = vst.msk [vmem:[#allocation2 + $0x38] sm:$0xff] %vm1176, %v1081
        %1185 = vst.msk [vmem:[#allocation2 + $0x40] sm:$0xff] %vm1176, %v1082
        %1186 = vst.msk [vmem:[#allocation2 + $0x48] sm:$0xff] %vm1176, %v1083
        %1187 = vst.msk [vmem:[#allocation2 + $0x50] sm:$0xff] %vm1176, %v1084
        %1188 = vst.msk [vmem:[#allocation2 + $0x58] sm:$0xff] %vm1176, %v1085
        %1189 = vst.msk [vmem:[#allocation2 + $0x60] sm:$0xff] %vm1176, %v1086
        %1190 = vst.msk [vmem:[#allocation2 + $0x68] sm:$0xff] %vm1176, %v1087
        %1191 = vst.msk [vmem:[#allocation2 + $0x70] sm:$0xff] %vm1176, %v1088
        %1192 = vst.msk [vmem:[#allocation2 + $0x78] sm:$0xff] %vm1176, %v1089
        %1193 = vst.msk [vmem:[#allocation2 + $0x80] sm:$0xff] %vm1176, %v1090
        %1194 = vst.msk [vmem:[#allocation2 + $0x90] sm:$0xff] %vm1176, %v1091
        %1195 = vst.msk [vmem:[#allocation2 + $0x98] sm:$0xff] %vm1176, %v1092
        %1196 = vst.msk [vmem:[#allocation2 + $0xa0] sm:$0xff] %vm1176, %v1093
        %1197 = vst.msk [vmem:[#allocation2 + $0xa8] sm:$0xff] %vm1176, %v1094
        %1198 = vst.msk [vmem:[#allocation2 + $0xb0] sm:$0xff] %vm1176, %v1095
        %1199 = vst.msk [vmem:[#allocation2 + $0xb8] sm:$0xff] %vm1176, %v1096
        %1200 = vst.msk [vmem:[#allocation2 + $0xc0] sm:$0xff] %vm1176, %v1097
        %1201 = vst.msk [vmem:[#allocation2 + $0xc8] sm:$0xff] %vm1176, %v1098
        %1202 = vst.msk [vmem:[#allocation2 + $0xd0] sm:$0xff] %vm1176, %v1099
        %1203 = vst.msk [vmem:[#allocation2 + $0xd8] sm:$0xff] %vm1176, %v1100
        %1204 = vst.msk [vmem:[#allocation2 + $0xe0] sm:$0xff] %vm1176, %v1101
        %1205 = vst.msk [vmem:[#allocation2 + $0xe8] sm:$0xff] %vm1176, %v1102
        %1206 = vst.msk [vmem:[#allocation2 + $0xf0] sm:$0xff] %vm1176, %v1103
        %1207 = vst.msk [vmem:[#allocation2 + $0xf8] sm:$0xff] %vm1176, %v1104
        %1208 = vst.msk [vmem:[#allocation2 + $0x100] sm:$0xff] %vm1176, %v1105
        %1209 = vst.msk [vmem:[#allocation2 + $0x108] sm:$0xff] %vm1176, %v1106
        %1210 = vst.msk [vmem:[#allocation2 + $0x110] sm:$0xff] %vm1176, %v1107
        %1211 = vst.msk [vmem:[#allocation2 + $0x120] sm:$0xff] %vm1176, %v1108
        %1212 = vst.msk [vmem:[#allocation2 + $0x128] sm:$0xff] %vm1176, %v1109
        %1213 = vst.msk [vmem:[#allocation2 + $0x130] sm:$0xff] %vm1176, %v1110
        %1214 = vst.msk [vmem:[#allocation2 + $0x138] sm:$0xff] %vm1176, %v1111
        %1215 = vst.msk [vmem:[#allocation2 + $0x140] sm:$0xff] %vm1176, %v1112
        %1216 = vst.msk [vmem:[#allocation2 + $0x148] sm:$0xff] %vm1176, %v1113
        %1217 = vst.msk [vmem:[#allocation2 + $0x150] sm:$0xff] %vm1176, %v1114
        %1218 = vst.msk [vmem:[#allocation2 + $0x158] sm:$0xff] %vm1176, %v1115
        %1219 = vst.msk [vmem:[#allocation2 + $0x160] sm:$0xff] %vm1176, %v1116
        %1220 = vst.msk [vmem:[#allocation2 + $0x168] sm:$0xff] %vm1176, %v1117
        %1221 = vst.msk [vmem:[#allocation2 + $0x170] sm:$0xff] %vm1176, %v1118
        %1222 = vst.msk [vmem:[#allocation2 + $0x178] sm:$0xff] %vm1176, %v1119
        %1223 = vst.msk [vmem:[#allocation2 + $0x180] sm:$0xff] %vm1176, %v1120
        %1224 = vst.msk [vmem:[#allocation2 + $0x188] sm:$0xff] %vm1176, %v1121
        %1225 = vst.msk [vmem:[#allocation2 + $0x190] sm:$0xff] %vm1176, %v1122
        %1226 = vst.msk [vmem:[#allocation2 + $0x198] sm:$0xff] %vm1176, %v1123
        %1227 = vst.msk [vmem:[#allocation2 + $0x1a0] sm:$0xff] %vm1176, %v1124
        %v1228 = vld [vmem:[%s722] sm:$0xf]
        %v1229 = vld [vmem:[%s722 + $0x4] sm:$0xf]
        %v1230 = vld [vmem:[%s722 + $0x8] sm:$0xf]
        %v1231 = vld [vmem:[%s722 + $0xc] sm:$0xf]
        %v1232 = vld [vmem:[%s722 + $0x10] sm:$0xf]
        %v1233 = vld [vmem:[%s722 + $0x14] sm:$0xf]
        %v1240 = vunpack.c.l.b16 %v1228
        %v1241 = vunpack.c.l.b16 %v1229
        %v1242 = vunpack.c.l.b16 %v1230
        %v1243 = vunpack.c.l.b16 %v1231
        %v1244 = vunpack.c.l.b16 %v1232
        %v1245 = vunpack.c.l.b16 %v1233
        %v1246 = vpack.c.b16 %v1241, %v1240
        %v1247 = vpack.c.b16 %v1243, %v1242
        %v1248 = vpack.c.b16 %v1245, %v1244
        %1252 = vst.msk [vmem:[#allocation2 + $0x88] sm:$0xff] %vm1176, %v1246
        %1253 = vst.msk [vmem:[#allocation2 + $0x118] sm:$0xff] %vm1176, %v1247
        %1254 = vst.msk [vmem:[#allocation2 + $0x1a8] sm:$0xff] %vm1176, %v1248
        %v1255 = vld [vmem:[#allocation2] sm:$0xff]
        %v1256 = vld [vmem:[#allocation2 + $0x8] sm:$0xff]
        %v1257 = vld [vmem:[#allocation2 + $0x10] sm:$0xff]
        %v1258 = vld [vmem:[#allocation2 + $0x18] sm:$0xff]
        %v1259 = vld [vmem:[#allocation2 + $0x20] sm:$0xff]
        %v1260 = vld [vmem:[#allocation2 + $0x28] sm:$0xff]
        %v1261 = vld [vmem:[#allocation2 + $0x30] sm:$0xff]
        %v1262 = vld [vmem:[#allocation2 + $0x38] sm:$0xff]
        %v1263 = vld [vmem:[#allocation2 + $0x40] sm:$0xff]
        %v1264 = vld [vmem:[#allocation2 + $0x48] sm:$0xff]
        %v1265 = vld [vmem:[#allocation2 + $0x50] sm:$0xff]
        %v1266 = vld [vmem:[#allocation2 + $0x58] sm:$0xff]
        %v1267 = vld [vmem:[#allocation2 + $0x60] sm:$0xff]
        %v1268 = vld [vmem:[#allocation2 + $0x68] sm:$0xff]
        %v1269 = vld [vmem:[#allocation2 + $0x70] sm:$0xff]
        %v1270 = vld [vmem:[#allocation2 + $0x78] sm:$0xff]
        %v1271 = vld [vmem:[#allocation2 + $0x80] sm:$0xff]
        %1272 = vst.msk [vmem:[#allocation3] sm:$0xff] %vm1176, %v1255
        %1273 = vst.msk [vmem:[#allocation3 + $0x8] sm:$0xff] %vm1176, %v1256
        %1274 = vst.msk [vmem:[#allocation3 + $0x10] sm:$0xff] %vm1176, %v1257
        %1275 = vst.msk [vmem:[#allocation3 + $0x18] sm:$0xff] %vm1176, %v1258
        %1276 = vst.msk [vmem:[#allocation3 + $0x20] sm:$0xff] %vm1176, %v1259
        %1277 = vst.msk [vmem:[#allocation3 + $0x28] sm:$0xff] %vm1176, %v1260
        %1278 = vst.msk [vmem:[#allocation3 + $0x30] sm:$0xff] %vm1176, %v1261
        %1279 = vst.msk [vmem:[#allocation3 + $0x38] sm:$0xff] %vm1176, %v1262
        %1280 = vst.msk [vmem:[#allocation3 + $0x40] sm:$0xff] %vm1176, %v1263
        %1281 = vst.msk [vmem:[#allocation3 + $0x48] sm:$0xff] %vm1176, %v1264
        %1282 = vst.msk [vmem:[#allocation3 + $0x50] sm:$0xff] %vm1176, %v1265
        %1283 = vst.msk [vmem:[#allocation3 + $0x58] sm:$0xff] %vm1176, %v1266
        %1284 = vst.msk [vmem:[#allocation3 + $0x60] sm:$0xff] %vm1176, %v1267
        %1285 = vst.msk [vmem:[#allocation3 + $0x68] sm:$0xff] %vm1176, %v1268
        %1286 = vst.msk [vmem:[#allocation3 + $0x70] sm:$0xff] %vm1176, %v1269
        %1287 = vst.msk [vmem:[#allocation3 + $0x78] sm:$0xff] %vm1176, %v1270
        %1288 = vst.msk [vmem:[#allocation3 + $0x80] sm:$0xff] %vm1176, %v1271
        %s1289 = scalar_lea.vmem [#allocation2], 144
        %v1290 = vld [vmem:[%s1289] sm:$0xff]
        %v1291 = vld [vmem:[%s1289 + $0x8] sm:$0xff]
        %v1292 = vld [vmem:[%s1289 + $0x10] sm:$0xff]
        %v1293 = vld [vmem:[%s1289 + $0x18] sm:$0xff]
        %v1294 = vld [vmem:[%s1289 + $0x20] sm:$0xff]
        %v1295 = vld [vmem:[%s1289 + $0x28] sm:$0xff]
        %v1296 = vld [vmem:[%s1289 + $0x30] sm:$0xff]
        %v1297 = vld [vmem:[%s1289 + $0x38] sm:$0xff]
        %v1298 = vld [vmem:[%s1289 + $0x40] sm:$0xff]
        %v1299 = vld [vmem:[%s1289 + $0x48] sm:$0xff]
        %v1300 = vld [vmem:[%s1289 + $0x50] sm:$0xff]
        %v1301 = vld [vmem:[%s1289 + $0x58] sm:$0xff]
        %v1302 = vld [vmem:[%s1289 + $0x60] sm:$0xff]
        %v1303 = vld [vmem:[%s1289 + $0x68] sm:$0xff]
        %v1304 = vld [vmem:[%s1289 + $0x70] sm:$0xff]
        %v1305 = vld [vmem:[%s1289 + $0x78] sm:$0xff]
        %v1306 = vld [vmem:[%s1289 + $0x80] sm:$0xff]
        %1324 = vrot.lane.b32.xlu0 %v1290, 1
        %v1325 = vpop.permute.xlu0 %1324
        %1326 = vrot.lane.b32.xlu0 %v1291, 1
        %v1327 = vpop.permute.xlu0 %1326
        %1328 = vrot.lane.b32.xlu0 %v1292, 1
        %v1329 = vpop.permute.xlu0 %1328
        %1330 = vrot.lane.b32.xlu0 %v1293, 1
        %v1331 = vpop.permute.xlu0 %1330
        %1332 = vrot.lane.b32.xlu0 %v1294, 1
        %v1333 = vpop.permute.xlu0 %1332
        %1334 = vrot.lane.b32.xlu0 %v1295, 1
        %v1335 = vpop.permute.xlu0 %1334
        %1336 = vrot.lane.b32.xlu0 %v1296, 1
        %v1337 = vpop.permute.xlu0 %1336
        %1338 = vrot.lane.b32.xlu0 %v1297, 1
        %v1339 = vpop.permute.xlu0 %1338
        %1340 = vrot.lane.b32.xlu0 %v1298, 1
        %v1341 = vpop.permute.xlu0 %1340
        %1342 = vrot.lane.b32.xlu0 %v1299, 1
        %v1343 = vpop.permute.xlu0 %1342
        %1344 = vrot.lane.b32.xlu0 %v1300, 1
        %v1345 = vpop.permute.xlu0 %1344
        %1346 = vrot.lane.b32.xlu0 %v1301, 1
        %v1347 = vpop.permute.xlu0 %1346
        %1348 = vrot.lane.b32.xlu0 %v1302, 1
        %v1349 = vpop.permute.xlu0 %1348
        %1350 = vrot.lane.b32.xlu0 %v1303, 1
        %v1351 = vpop.permute.xlu0 %1350
        %1352 = vrot.lane.b32.xlu0 %v1304, 1
        %v1353 = vpop.permute.xlu0 %1352
        %1354 = vrot.lane.b32.xlu0 %v1305, 1
        %v1355 = vpop.permute.xlu0 %1354
        %1356 = vrot.lane.b32.xlu0 %v1306, 1
        %v1357 = vpop.permute.xlu0 %1356
        %vm1375 = vcmask 15368
        %1376 = vst.msk [vmem:[#allocation3] sm:$0xff] %vm1375, %v1325
        %1377 = vst.msk [vmem:[#allocation3 + $0x8] sm:$0xff] %vm1375, %v1327
        %1378 = vst.msk [vmem:[#allocation3 + $0x10] sm:$0xff] %vm1375, %v1329
        %1379 = vst.msk [vmem:[#allocation3 + $0x18] sm:$0xff] %vm1375, %v1331
        %1380 = vst.msk [vmem:[#allocation3 + $0x20] sm:$0xff] %vm1375, %v1333
        %1381 = vst.msk [vmem:[#allocation3 + $0x28] sm:$0xff] %vm1375, %v1335
        %1382 = vst.msk [vmem:[#allocation3 + $0x30] sm:$0xff] %vm1375, %v1337
        %1383 = vst.msk [vmem:[#allocation3 + $0x38] sm:$0xff] %vm1375, %v1339
        %1384 = vst.msk [vmem:[#allocation3 + $0x40] sm:$0xff] %vm1375, %v1341
        %1385 = vst.msk [vmem:[#allocation3 + $0x48] sm:$0xff] %vm1375, %v1343
        %1386 = vst.msk [vmem:[#allocation3 + $0x50] sm:$0xff] %vm1375, %v1345
        %1387 = vst.msk [vmem:[#allocation3 + $0x58] sm:$0xff] %vm1375, %v1347
        %1388 = vst.msk [vmem:[#allocation3 + $0x60] sm:$0xff] %vm1375, %v1349
        %1389 = vst.msk [vmem:[#allocation3 + $0x68] sm:$0xff] %vm1375, %v1351
        %1390 = vst.msk [vmem:[#allocation3 + $0x70] sm:$0xff] %vm1375, %v1353
        %1391 = vst.msk [vmem:[#allocation3 + $0x78] sm:$0xff] %vm1375, %v1355
        %1392 = vst.msk [vmem:[#allocation3 + $0x80] sm:$0xff] %vm1375, %v1357
        %s1393 = scalar_lea.vmem [#allocation2], 288
        %v1394 = vld [vmem:[%s1393] sm:$0xff]
        %v1395 = vld [vmem:[%s1393 + $0x8] sm:$0xff]
        %v1396 = vld [vmem:[%s1393 + $0x10] sm:$0xff]
        %v1397 = vld [vmem:[%s1393 + $0x18] sm:$0xff]
        %v1398 = vld [vmem:[%s1393 + $0x20] sm:$0xff]
        %v1399 = vld [vmem:[%s1393 + $0x28] sm:$0xff]
        %v1400 = vld [vmem:[%s1393 + $0x30] sm:$0xff]
        %v1401 = vld [vmem:[%s1393 + $0x38] sm:$0xff]
        %v1402 = vld [vmem:[%s1393 + $0x40] sm:$0xff]
        %v1403 = vld [vmem:[%s1393 + $0x48] sm:$0xff]
        %v1404 = vld [vmem:[%s1393 + $0x50] sm:$0xff]
        %v1405 = vld [vmem:[%s1393 + $0x58] sm:$0xff]
        %v1406 = vld [vmem:[%s1393 + $0x60] sm:$0xff]
        %v1407 = vld [vmem:[%s1393 + $0x68] sm:$0xff]
        %v1408 = vld [vmem:[%s1393 + $0x70] sm:$0xff]
        %v1409 = vld [vmem:[%s1393 + $0x78] sm:$0xff]
        %v1410 = vld [vmem:[%s1393 + $0x80] sm:$0xff]
        %1428 = vrot.lane.b32.xlu0 %v1394, 2
        %v1429 = vpop.permute.xlu0 %1428
        %1430 = vrot.lane.b32.xlu0 %v1395, 2
        %v1431 = vpop.permute.xlu0 %1430
        %1432 = vrot.lane.b32.xlu0 %v1396, 2
        %v1433 = vpop.permute.xlu0 %1432
        %1434 = vrot.lane.b32.xlu0 %v1397, 2
        %v1435 = vpop.permute.xlu0 %1434
        %1436 = vrot.lane.b32.xlu0 %v1398, 2
        %v1437 = vpop.permute.xlu0 %1436
        %1438 = vrot.lane.b32.xlu0 %v1399, 2
        %v1439 = vpop.permute.xlu0 %1438
        %1440 = vrot.lane.b32.xlu0 %v1400, 2
        %v1441 = vpop.permute.xlu0 %1440
        %1442 = vrot.lane.b32.xlu0 %v1401, 2
        %v1443 = vpop.permute.xlu0 %1442
        %1444 = vrot.lane.b32.xlu0 %v1402, 2
        %v1445 = vpop.permute.xlu0 %1444
        %1446 = vrot.lane.b32.xlu0 %v1403, 2
        %v1447 = vpop.permute.xlu0 %1446
        %1448 = vrot.lane.b32.xlu0 %v1404, 2
        %v1449 = vpop.permute.xlu0 %1448
        %1450 = vrot.lane.b32.xlu0 %v1405, 2
        %v1451 = vpop.permute.xlu0 %1450
        %1452 = vrot.lane.b32.xlu0 %v1406, 2
        %v1453 = vpop.permute.xlu0 %1452
        %1454 = vrot.lane.b32.xlu0 %v1407, 2
        %v1455 = vpop.permute.xlu0 %1454
        %1456 = vrot.lane.b32.xlu0 %v1408, 2
        %v1457 = vpop.permute.xlu0 %1456
        %1458 = vrot.lane.b32.xlu0 %v1409, 2
        %v1459 = vpop.permute.xlu0 %1458
        %1460 = vrot.lane.b32.xlu0 %v1410, 2
        %v1461 = vpop.permute.xlu0 %1460
        %vm1479 = vcmask 23568
        %1480 = vst.msk [vmem:[#allocation3] sm:$0xff] %vm1479, %v1429
        %1481 = vst.msk [vmem:[#allocation3 + $0x8] sm:$0xff] %vm1479, %v1431
        %1482 = vst.msk [vmem:[#allocation3 + $0x10] sm:$0xff] %vm1479, %v1433
        %1483 = vst.msk [vmem:[#allocation3 + $0x18] sm:$0xff] %vm1479, %v1435
        %1484 = vst.msk [vmem:[#allocation3 + $0x20] sm:$0xff] %vm1479, %v1437
        %1485 = vst.msk [vmem:[#allocation3 + $0x28] sm:$0xff] %vm1479, %v1439
        %1486 = vst.msk [vmem:[#allocation3 + $0x30] sm:$0xff] %vm1479, %v1441
        %1487 = vst.msk [vmem:[#allocation3 + $0x38] sm:$0xff] %vm1479, %v1443
        %1488 = vst.msk [vmem:[#allocation3 + $0x40] sm:$0xff] %vm1479, %v1445
        %1489 = vst.msk [vmem:[#allocation3 + $0x48] sm:$0xff] %vm1479, %v1447
        %1490 = vst.msk [vmem:[#allocation3 + $0x50] sm:$0xff] %vm1479, %v1449
        %1491 = vst.msk [vmem:[#allocation3 + $0x58] sm:$0xff] %vm1479, %v1451
        %1492 = vst.msk [vmem:[#allocation3 + $0x60] sm:$0xff] %vm1479, %v1453
        %1493 = vst.msk [vmem:[#allocation3 + $0x68] sm:$0xff] %vm1479, %v1455
        %1494 = vst.msk [vmem:[#allocation3 + $0x70] sm:$0xff] %vm1479, %v1457
        %1495 = vst.msk [vmem:[#allocation3 + $0x78] sm:$0xff] %vm1479, %v1459
        %1496 = vst.msk [vmem:[#allocation3 + $0x80] sm:$0xff] %vm1479, %v1461
        %v1497 = vld [vmem:[#allocation2] sm:$0xff]
        %v1498 = vld [vmem:[#allocation2 + $0x8] sm:$0xff]
        %v1499 = vld [vmem:[#allocation2 + $0x10] sm:$0xff]
        %v1500 = vld [vmem:[#allocation2 + $0x18] sm:$0xff]
        %v1501 = vld [vmem:[#allocation2 + $0x20] sm:$0xff]
        %v1502 = vld [vmem:[#allocation2 + $0x28] sm:$0xff]
        %v1503 = vld [vmem:[#allocation2 + $0x30] sm:$0xff]
        %v1504 = vld [vmem:[#allocation2 + $0x38] sm:$0xff]
        %v1505 = vld [vmem:[#allocation2 + $0x40] sm:$0xff]
        %v1506 = vld [vmem:[#allocation2 + $0x48] sm:$0xff]
        %v1507 = vld [vmem:[#allocation2 + $0x50] sm:$0xff]
        %v1508 = vld [vmem:[#allocation2 + $0x58] sm:$0xff]
        %v1509 = vld [vmem:[#allocation2 + $0x60] sm:$0xff]
        %v1510 = vld [vmem:[#allocation2 + $0x68] sm:$0xff]
        %v1511 = vld [vmem:[#allocation2 + $0x70] sm:$0xff]
        %v1512 = vld [vmem:[#allocation2 + $0x78] sm:$0xff]
        %v1513 = vld [vmem:[#allocation2 + $0x80] sm:$0xff]
        %v1514 = vld [vmem:[#allocation2 + $0x88] sm:$0x1]
        %vm1515 = vsmask.f32 7424
        %v1517 = vshrl.u32 %v1497, 16
        %v1519 = vshll.u32 %v1497, 16
        %v1521 = vrot.slane %v1519, 1
        %v1522 = vor.u32 %v1517, %v1521
        %v1524 = vshll.u32 %v1498, 16
        %v1526 = vrot.slane %v1524, 1
        %v1527 = vsel %vm1515, %v1522, %v1526
        %v1528 = vshrl.u32 %v1498, 16
        %v1530 = vor.u32 %v1528, %v1526
        %v1532 = vshll.u32 %v1499, 16
        %v1534 = vrot.slane %v1532, 1
        %v1535 = vsel %vm1515, %v1530, %v1534
        %v1536 = vshrl.u32 %v1499, 16
        %v1538 = vor.u32 %v1536, %v1534
        %v1540 = vshll.u32 %v1500, 16
        %v1542 = vrot.slane %v1540, 1
        %v1543 = vsel %vm1515, %v1538, %v1542
        %v1544 = vshrl.u32 %v1500, 16
        %v1546 = vor.u32 %v1544, %v1542
        %v1548 = vshll.u32 %v1501, 16
        %v1550 = vrot.slane %v1548, 1
        %v1551 = vsel %vm1515, %v1546, %v1550
        %v1552 = vshrl.u32 %v1501, 16
        %v1554 = vor.u32 %v1552, %v1550
        %v1556 = vshll.u32 %v1502, 16
        %v1558 = vrot.slane %v1556, 1
        %v1559 = vsel %vm1515, %v1554, %v1558
        %v1560 = vshrl.u32 %v1502, 16
        %v1562 = vor.u32 %v1560, %v1558
        %v1564 = vshll.u32 %v1503, 16
        %v1566 = vrot.slane %v1564, 1
        %v1567 = vsel %vm1515, %v1562, %v1566
        %v1568 = vshrl.u32 %v1503, 16
        %v1570 = vor.u32 %v1568, %v1566
        %v1572 = vshll.u32 %v1504, 16
        %v1574 = vrot.slane %v1572, 1
        %v1575 = vsel %vm1515, %v1570, %v1574
        %v1576 = vshrl.u32 %v1504, 16
        %v1578 = vor.u32 %v1576, %v1574
        %v1580 = vshll.u32 %v1505, 16
        %v1582 = vrot.slane %v1580, 1
        %v1583 = vsel %vm1515, %v1578, %v1582
        %v1584 = vshrl.u32 %v1505, 16
        %v1586 = vor.u32 %v1584, %v1582
        %v1588 = vshll.u32 %v1506, 16
        %v1590 = vrot.slane %v1588, 1
        %v1591 = vsel %vm1515, %v1586, %v1590
        %v1592 = vshrl.u32 %v1506, 16
        %v1594 = vor.u32 %v1592, %v1590
        %v1596 = vshll.u32 %v1507, 16
        %v1598 = vrot.slane %v1596, 1
        %v1599 = vsel %vm1515, %v1594, %v1598
        %v1600 = vshrl.u32 %v1507, 16
        %v1602 = vor.u32 %v1600, %v1598
        %v1604 = vshll.u32 %v1508, 16
        %v1606 = vrot.slane %v1604, 1
        %v1607 = vsel %vm1515, %v1602, %v1606
        %v1608 = vshrl.u32 %v1508, 16
        %v1610 = vor.u32 %v1608, %v1606
        %v1612 = vshll.u32 %v1509, 16
        %v1614 = vrot.slane %v1612, 1
        %v1615 = vsel %vm1515, %v1610, %v1614
        %v1616 = vshrl.u32 %v1509, 16
        %v1618 = vor.u32 %v1616, %v1614
        %v1620 = vshll.u32 %v1510, 16
        %v1622 = vrot.slane %v1620, 1
        %v1623 = vsel %vm1515, %v1618, %v1622
        %v1624 = vshrl.u32 %v1510, 16
        %v1626 = vor.u32 %v1624, %v1622
        %v1628 = vshll.u32 %v1511, 16
        %v1630 = vrot.slane %v1628, 1
        %v1631 = vsel %vm1515, %v1626, %v1630
        %v1632 = vshrl.u32 %v1511, 16
        %v1634 = vor.u32 %v1632, %v1630
        %v1636 = vshll.u32 %v1512, 16
        %v1638 = vrot.slane %v1636, 1
        %v1639 = vsel %vm1515, %v1634, %v1638
        %v1640 = vshrl.u32 %v1512, 16
        %v1642 = vor.u32 %v1640, %v1638
        %v1644 = vshll.u32 %v1513, 16
        %v1646 = vrot.slane %v1644, 1
        %v1647 = vsel %vm1515, %v1642, %v1646
        %v1648 = vshrl.u32 %v1513, 16
        %v1650 = vor.u32 %v1648, %v1646
        %v1652 = vshll.u32 %v1514, 16
        %v1654 = vrot.slane %v1652, 1
        %v1655 = vsel %vm1515, %v1650, %v1654
        %1656 = vrot.lane.b32.xlu0 %v1527, 3
        %v1657 = vpop.permute.xlu0 %1656
        %1658 = vrot.lane.b32.xlu0 %v1535, 3
        %v1659 = vpop.permute.xlu0 %1658
        %1660 = vrot.lane.b32.xlu0 %v1543, 3
        %v1661 = vpop.permute.xlu0 %1660
        %1662 = vrot.lane.b32.xlu0 %v1551, 3
        %v1663 = vpop.permute.xlu0 %1662
        %1664 = vrot.lane.b32.xlu0 %v1559, 3
        %v1665 = vpop.permute.xlu0 %1664
        %1666 = vrot.lane.b32.xlu0 %v1567, 3
        %v1667 = vpop.permute.xlu0 %1666
        %1668 = vrot.lane.b32.xlu0 %v1575, 3
        %v1669 = vpop.permute.xlu0 %1668
        %1670 = vrot.lane.b32.xlu0 %v1583, 3
        %v1671 = vpop.permute.xlu0 %1670
        %1672 = vrot.lane.b32.xlu0 %v1591, 3
        %v1673 = vpop.permute.xlu0 %1672
        %1674 = vrot.lane.b32.xlu0 %v1599, 3
        %v1675 = vpop.permute.xlu0 %1674
        %1676 = vrot.lane.b32.xlu0 %v1607, 3
        %v1677 = vpop.permute.xlu0 %1676
        %1678 = vrot.lane.b32.xlu0 %v1615, 3
        %v1679 = vpop.permute.xlu0 %1678
        %1680 = vrot.lane.b32.xlu0 %v1623, 3
        %v1681 = vpop.permute.xlu0 %1680
        %1682 = vrot.lane.b32.xlu0 %v1631, 3
        %v1683 = vpop.permute.xlu0 %1682
        %1684 = vrot.lane.b32.xlu0 %v1639, 3
        %v1685 = vpop.permute.xlu0 %1684
        %1686 = vrot.lane.b32.xlu0 %v1647, 3
        %v1687 = vpop.permute.xlu0 %1686
        %1688 = vrot.lane.b32.xlu0 %v1655, 3
        %v1689 = vpop.permute.xlu0 %1688
        %vm1707 = vcmask 31768
        %1708 = vst.msk [vmem:[#allocation3] sm:$0xff] %vm1707, %v1657
        %1709 = vst.msk [vmem:[#allocation3 + $0x8] sm:$0xff] %vm1707, %v1659
        %1710 = vst.msk [vmem:[#allocation3 + $0x10] sm:$0xff] %vm1707, %v1661
        %1711 = vst.msk [vmem:[#allocation3 + $0x18] sm:$0xff] %vm1707, %v1663
        %1712 = vst.msk [vmem:[#allocation3 + $0x20] sm:$0xff] %vm1707, %v1665
        %1713 = vst.msk [vmem:[#allocation3 + $0x28] sm:$0xff] %vm1707, %v1667
        %1714 = vst.msk [vmem:[#allocation3 + $0x30] sm:$0xff] %vm1707, %v1669
        %1715 = vst.msk [vmem:[#allocation3 + $0x38] sm:$0xff] %vm1707, %v1671
        %1716 = vst.msk [vmem:[#allocation3 + $0x40] sm:$0xff] %vm1707, %v1673
        %1717 = vst.msk [vmem:[#allocation3 + $0x48] sm:$0xff] %vm1707, %v1675
        %1718 = vst.msk [vmem:[#allocation3 + $0x50] sm:$0xff] %vm1707, %v1677
        %1719 = vst.msk [vmem:[#allocation3 + $0x58] sm:$0xff] %vm1707, %v1679
        %1720 = vst.msk [vmem:[#allocation3 + $0x60] sm:$0xff] %vm1707, %v1681
        %1721 = vst.msk [vmem:[#allocation3 + $0x68] sm:$0xff] %vm1707, %v1683
        %1722 = vst.msk [vmem:[#allocation3 + $0x70] sm:$0xff] %vm1707, %v1685
        %1723 = vst.msk [vmem:[#allocation3 + $0x78] sm:$0xff] %vm1707, %v1687
        %1724 = vst.msk [vmem:[#allocation3 + $0x80] sm:$0xff] %vm1707, %v1689
        %v1725 = vld [vmem:[%s1289] sm:$0xff]
        %v1726 = vld [vmem:[%s1289 + $0x8] sm:$0xff]
        %v1727 = vld [vmem:[%s1289 + $0x10] sm:$0xff]
        %v1728 = vld [vmem:[%s1289 + $0x18] sm:$0xff]
        %v1729 = vld [vmem:[%s1289 + $0x20] sm:$0xff]
        %v1730 = vld [vmem:[%s1289 + $0x28] sm:$0xff]
        %v1731 = vld [vmem:[%s1289 + $0x30] sm:$0xff]
        %v1732 = vld [vmem:[%s1289 + $0x38] sm:$0xff]
        %v1733 = vld [vmem:[%s1289 + $0x40] sm:$0xff]
        %v1734 = vld [vmem:[%s1289 + $0x48] sm:$0xff]
        %v1735 = vld [vmem:[%s1289 + $0x50] sm:$0xff]
        %v1736 = vld [vmem:[%s1289 + $0x58] sm:$0xff]
        %v1737 = vld [vmem:[%s1289 + $0x60] sm:$0xff]
        %v1738 = vld [vmem:[%s1289 + $0x68] sm:$0xff]
        %v1739 = vld [vmem:[%s1289 + $0x70] sm:$0xff]
        %v1740 = vld [vmem:[%s1289 + $0x78] sm:$0xff]
        %v1741 = vld [vmem:[%s1289 + $0x80] sm:$0xff]
        %v1742 = vld [vmem:[%s1289 + $0x88] sm:$0x1]
        %v1744 = vshrl.u32 %v1725, 16
        %v1746 = vshll.u32 %v1725, 16
        %v1748 = vrot.slane %v1746, 1
        %v1749 = vor.u32 %v1744, %v1748
        %v1751 = vshll.u32 %v1726, 16
        %v1753 = vrot.slane %v1751, 1
        %v1754 = vsel %vm1515, %v1749, %v1753
        %v1755 = vshrl.u32 %v1726, 16
        %v1757 = vor.u32 %v1755, %v1753
        %v1759 = vshll.u32 %v1727, 16
        %v1761 = vrot.slane %v1759, 1
        %v1762 = vsel %vm1515, %v1757, %v1761
        %v1763 = vshrl.u32 %v1727, 16
        %v1765 = vor.u32 %v1763, %v1761
        %v1767 = vshll.u32 %v1728, 16
        %v1769 = vrot.slane %v1767, 1
        %v1770 = vsel %vm1515, %v1765, %v1769
        %v1771 = vshrl.u32 %v1728, 16
        %v1773 = vor.u32 %v1771, %v1769
        %v1775 = vshll.u32 %v1729, 16
        %v1777 = vrot.slane %v1775, 1
        %v1778 = vsel %vm1515, %v1773, %v1777
        %v1779 = vshrl.u32 %v1729, 16
        %v1781 = vor.u32 %v1779, %v1777
        %v1783 = vshll.u32 %v1730, 16
        %v1785 = vrot.slane %v1783, 1
        %v1786 = vsel %vm1515, %v1781, %v1785
        %v1787 = vshrl.u32 %v1730, 16
        %v1789 = vor.u32 %v1787, %v1785
        %v1791 = vshll.u32 %v1731, 16
        %v1793 = vrot.slane %v1791, 1
        %v1794 = vsel %vm1515, %v1789, %v1793
        %v1795 = vshrl.u32 %v1731, 16
        %v1797 = vor.u32 %v1795, %v1793
        %v1799 = vshll.u32 %v1732, 16
        %v1801 = vrot.slane %v1799, 1
        %v1802 = vsel %vm1515, %v1797, %v1801
        %v1803 = vshrl.u32 %v1732, 16
        %v1805 = vor.u32 %v1803, %v1801
        %v1807 = vshll.u32 %v1733, 16
        %v1809 = vrot.slane %v1807, 1
        %v1810 = vsel %vm1515, %v1805, %v1809
        %v1811 = vshrl.u32 %v1733, 16
        %v1813 = vor.u32 %v1811, %v1809
        %v1815 = vshll.u32 %v1734, 16
        %v1817 = vrot.slane %v1815, 1
        %v1818 = vsel %vm1515, %v1813, %v1817
        %v1819 = vshrl.u32 %v1734, 16
        %v1821 = vor.u32 %v1819, %v1817
        %v1823 = vshll.u32 %v1735, 16
        %v1825 = vrot.slane %v1823, 1
        %v1826 = vsel %vm1515, %v1821, %v1825
        %v1827 = vshrl.u32 %v1735, 16
        %v1829 = vor.u32 %v1827, %v1825
        %v1831 = vshll.u32 %v1736, 16
        %v1833 = vrot.slane %v1831, 1
        %v1834 = vsel %vm1515, %v1829, %v1833
        %v1835 = vshrl.u32 %v1736, 16
        %v1837 = vor.u32 %v1835, %v1833
        %v1839 = vshll.u32 %v1737, 16
        %v1841 = vrot.slane %v1839, 1
        %v1842 = vsel %vm1515, %v1837, %v1841
        %v1843 = vshrl.u32 %v1737, 16
        %v1845 = vor.u32 %v1843, %v1841
        %v1847 = vshll.u32 %v1738, 16
        %v1849 = vrot.slane %v1847, 1
        %v1850 = vsel %vm1515, %v1845, %v1849
        %v1851 = vshrl.u32 %v1738, 16
        %v1853 = vor.u32 %v1851, %v1849
        %v1855 = vshll.u32 %v1739, 16
        %v1857 = vrot.slane %v1855, 1
        %v1858 = vsel %vm1515, %v1853, %v1857
        %v1859 = vshrl.u32 %v1739, 16
        %v1861 = vor.u32 %v1859, %v1857
        %v1863 = vshll.u32 %v1740, 16
        %v1865 = vrot.slane %v1863, 1
        %v1866 = vsel %vm1515, %v1861, %v1865
        %v1867 = vshrl.u32 %v1740, 16
        %v1869 = vor.u32 %v1867, %v1865
        %v1871 = vshll.u32 %v1741, 16
        %v1873 = vrot.slane %v1871, 1
        %v1874 = vsel %vm1515, %v1869, %v1873
        %v1875 = vshrl.u32 %v1741, 16
        %v1877 = vor.u32 %v1875, %v1873
        %v1879 = vshll.u32 %v1742, 16
        %v1881 = vrot.slane %v1879, 1
        %v1882 = vsel %vm1515, %v1877, %v1881
        %1883 = vrot.lane.b32.xlu0 %v1754, 4
        %v1884 = vpop.permute.xlu0 %1883
        %1885 = vrot.lane.b32.xlu0 %v1762, 4
        %v1886 = vpop.permute.xlu0 %1885
        %1887 = vrot.lane.b32.xlu0 %v1770, 4
        %v1888 = vpop.permute.xlu0 %1887
        %1889 = vrot.lane.b32.xlu0 %v1778, 4
        %v1890 = vpop.permute.xlu0 %1889
        %1891 = vrot.lane.b32.xlu0 %v1786, 4
        %v1892 = vpop.permute.xlu0 %1891
        %1893 = vrot.lane.b32.xlu0 %v1794, 4
        %v1894 = vpop.permute.xlu0 %1893
        %1895 = vrot.lane.b32.xlu0 %v1802, 4
        %v1896 = vpop.permute.xlu0 %1895
        %1897 = vrot.lane.b32.xlu0 %v1810, 4
        %v1898 = vpop.permute.xlu0 %1897
        %1899 = vrot.lane.b32.xlu0 %v1818, 4
        %v1900 = vpop.permute.xlu0 %1899
        %1901 = vrot.lane.b32.xlu0 %v1826, 4
        %v1902 = vpop.permute.xlu0 %1901
        %1903 = vrot.lane.b32.xlu0 %v1834, 4
        %v1904 = vpop.permute.xlu0 %1903
        %1905 = vrot.lane.b32.xlu0 %v1842, 4
        %v1906 = vpop.permute.xlu0 %1905
        %1907 = vrot.lane.b32.xlu0 %v1850, 4
        %v1908 = vpop.permute.xlu0 %1907
        %1909 = vrot.lane.b32.xlu0 %v1858, 4
        %v1910 = vpop.permute.xlu0 %1909
        %1911 = vrot.lane.b32.xlu0 %v1866, 4
        %v1912 = vpop.permute.xlu0 %1911
        %1913 = vrot.lane.b32.xlu0 %v1874, 4
        %v1914 = vpop.permute.xlu0 %1913
        %1915 = vrot.lane.b32.xlu0 %v1882, 4
        %v1916 = vpop.permute.xlu0 %1915
        %vm1934 = vcmask 39968
        %1935 = vst.msk [vmem:[#allocation3] sm:$0xff] %vm1934, %v1884
        %1936 = vst.msk [vmem:[#allocation3 + $0x8] sm:$0xff] %vm1934, %v1886
        %1937 = vst.msk [vmem:[#allocation3 + $0x10] sm:$0xff] %vm1934, %v1888
        %1938 = vst.msk [vmem:[#allocation3 + $0x18] sm:$0xff] %vm1934, %v1890
        %1939 = vst.msk [vmem:[#allocation3 + $0x20] sm:$0xff] %vm1934, %v1892
        %1940 = vst.msk [vmem:[#allocation3 + $0x28] sm:$0xff] %vm1934, %v1894
        %1941 = vst.msk [vmem:[#allocation3 + $0x30] sm:$0xff] %vm1934, %v1896
        %1942 = vst.msk [vmem:[#allocation3 + $0x38] sm:$0xff] %vm1934, %v1898
        %1943 = vst.msk [vmem:[#allocation3 + $0x40] sm:$0xff] %vm1934, %v1900
        %1944 = vst.msk [vmem:[#allocation3 + $0x48] sm:$0xff] %vm1934, %v1902
        %1945 = vst.msk [vmem:[#allocation3 + $0x50] sm:$0xff] %vm1934, %v1904
        %1946 = vst.msk [vmem:[#allocation3 + $0x58] sm:$0xff] %vm1934, %v1906
        %1947 = vst.msk [vmem:[#allocation3 + $0x60] sm:$0xff] %vm1934, %v1908
        %1948 = vst.msk [vmem:[#allocation3 + $0x68] sm:$0xff] %vm1934, %v1910
        %1949 = vst.msk [vmem:[#allocation3 + $0x70] sm:$0xff] %vm1934, %v1912
        %1950 = vst.msk [vmem:[#allocation3 + $0x78] sm:$0xff] %vm1934, %v1914
        %1951 = vst.msk [vmem:[#allocation3 + $0x80] sm:$0xff] %vm1934, %v1916
        %v1952 = vld [vmem:[%s1393] sm:$0xff]
        %v1953 = vld [vmem:[%s1393 + $0x8] sm:$0xff]
        %v1954 = vld [vmem:[%s1393 + $0x10] sm:$0xff]
        %v1955 = vld [vmem:[%s1393 + $0x18] sm:$0xff]
        %v1956 = vld [vmem:[%s1393 + $0x20] sm:$0xff]
        %v1957 = vld [vmem:[%s1393 + $0x28] sm:$0xff]
        %v1958 = vld [vmem:[%s1393 + $0x30] sm:$0xff]
        %v1959 = vld [vmem:[%s1393 + $0x38] sm:$0xff]
        %v1960 = vld [vmem:[%s1393 + $0x40] sm:$0xff]
        %v1961 = vld [vmem:[%s1393 + $0x48] sm:$0xff]
        %v1962 = vld [vmem:[%s1393 + $0x50] sm:$0xff]
        %v1963 = vld [vmem:[%s1393 + $0x58] sm:$0xff]
        %v1964 = vld [vmem:[%s1393 + $0x60] sm:$0xff]
        %v1965 = vld [vmem:[%s1393 + $0x68] sm:$0xff]
        %v1966 = vld [vmem:[%s1393 + $0x70] sm:$0xff]
        %v1967 = vld [vmem:[%s1393 + $0x78] sm:$0xff]
        %v1968 = vld [vmem:[%s1393 + $0x80] sm:$0xff]
        %v1969 = vld [vmem:[%s1393 + $0x88] sm:$0x1]
        %v1971 = vshrl.u32 %v1952, 16
        %v1973 = vshll.u32 %v1952, 16
        %v1975 = vrot.slane %v1973, 1
        %v1976 = vor.u32 %v1971, %v1975
        %v1978 = vshll.u32 %v1953, 16
        %v1980 = vrot.slane %v1978, 1
        %v1981 = vsel %vm1515, %v1976, %v1980
        %v1982 = vshrl.u32 %v1953, 16
        %v1984 = vor.u32 %v1982, %v1980
        %v1986 = vshll.u32 %v1954, 16
        %v1988 = vrot.slane %v1986, 1
        %v1989 = vsel %vm1515, %v1984, %v1988
        %v1990 = vshrl.u32 %v1954, 16
        %v1992 = vor.u32 %v1990, %v1988
        %v1994 = vshll.u32 %v1955, 16
        %v1996 = vrot.slane %v1994, 1
        %v1997 = vsel %vm1515, %v1992, %v1996
        %v1998 = vshrl.u32 %v1955, 16
        %v2000 = vor.u32 %v1998, %v1996
        %v2002 = vshll.u32 %v1956, 16
        %v2004 = vrot.slane %v2002, 1
        %v2005 = vsel %vm1515, %v2000, %v2004
        %v2006 = vshrl.u32 %v1956, 16
        %v2008 = vor.u32 %v2006, %v2004
        %v2010 = vshll.u32 %v1957, 16
        %v2012 = vrot.slane %v2010, 1
        %v2013 = vsel %vm1515, %v2008, %v2012
        %v2014 = vshrl.u32 %v1957, 16
        %v2016 = vor.u32 %v2014, %v2012
        %v2018 = vshll.u32 %v1958, 16
        %v2020 = vrot.slane %v2018, 1
        %v2021 = vsel %vm1515, %v2016, %v2020
        %v2022 = vshrl.u32 %v1958, 16
        %v2024 = vor.u32 %v2022, %v2020
        %v2026 = vshll.u32 %v1959, 16
        %v2028 = vrot.slane %v2026, 1
        %v2029 = vsel %vm1515, %v2024, %v2028
        %v2030 = vshrl.u32 %v1959, 16
        %v2032 = vor.u32 %v2030, %v2028
        %v2034 = vshll.u32 %v1960, 16
        %v2036 = vrot.slane %v2034, 1
        %v2037 = vsel %vm1515, %v2032, %v2036
        %v2038 = vshrl.u32 %v1960, 16
        %v2040 = vor.u32 %v2038, %v2036
        %v2042 = vshll.u32 %v1961, 16
        %v2044 = vrot.slane %v2042, 1
        %v2045 = vsel %vm1515, %v2040, %v2044
        %v2046 = vshrl.u32 %v1961, 16
        %v2048 = vor.u32 %v2046, %v2044
        %v2050 = vshll.u32 %v1962, 16
        %v2052 = vrot.slane %v2050, 1
        %v2053 = vsel %vm1515, %v2048, %v2052
        %v2054 = vshrl.u32 %v1962, 16
        %v2056 = vor.u32 %v2054, %v2052
        %v2058 = vshll.u32 %v1963, 16
        %v2060 = vrot.slane %v2058, 1
        %v2061 = vsel %vm1515, %v2056, %v2060
        %v2062 = vshrl.u32 %v1963, 16
        %v2064 = vor.u32 %v2062, %v2060
        %v2066 = vshll.u32 %v1964, 16
        %v2068 = vrot.slane %v2066, 1
        %v2069 = vsel %vm1515, %v2064, %v2068
        %v2070 = vshrl.u32 %v1964, 16
        %v2072 = vor.u32 %v2070, %v2068
        %v2074 = vshll.u32 %v1965, 16
        %v2076 = vrot.slane %v2074, 1
        %v2077 = vsel %vm1515, %v2072, %v2076
        %v2078 = vshrl.u32 %v1965, 16
        %v2080 = vor.u32 %v2078, %v2076
        %v2082 = vshll.u32 %v1966, 16
        %v2084 = vrot.slane %v2082, 1
        %v2085 = vsel %vm1515, %v2080, %v2084
        %v2086 = vshrl.u32 %v1966, 16
        %v2088 = vor.u32 %v2086, %v2084
        %v2090 = vshll.u32 %v1967, 16
        %v2092 = vrot.slane %v2090, 1
        %v2093 = vsel %vm1515, %v2088, %v2092
        %v2094 = vshrl.u32 %v1967, 16
        %v2096 = vor.u32 %v2094, %v2092
        %v2098 = vshll.u32 %v1968, 16
        %v2100 = vrot.slane %v2098, 1
        %v2101 = vsel %vm1515, %v2096, %v2100
        %v2102 = vshrl.u32 %v1968, 16
        %v2104 = vor.u32 %v2102, %v2100
        %v2106 = vshll.u32 %v1969, 16
        %v2108 = vrot.slane %v2106, 1
        %v2109 = vsel %vm1515, %v2104, %v2108
        %2110 = vrot.lane.b32.xlu0 %v1981, 5
        %v2111 = vpop.permute.xlu0 %2110
        %2112 = vrot.lane.b32.xlu0 %v1989, 5
        %v2113 = vpop.permute.xlu0 %2112
        %2114 = vrot.lane.b32.xlu0 %v1997, 5
        %v2115 = vpop.permute.xlu0 %2114
        %2116 = vrot.lane.b32.xlu0 %v2005, 5
        %v2117 = vpop.permute.xlu0 %2116
        %2118 = vrot.lane.b32.xlu0 %v2013, 5
        %v2119 = vpop.permute.xlu0 %2118
        %2120 = vrot.lane.b32.xlu0 %v2021, 5
        %v2121 = vpop.permute.xlu0 %2120
        %2122 = vrot.lane.b32.xlu0 %v2029, 5
        %v2123 = vpop.permute.xlu0 %2122
        %2124 = vrot.lane.b32.xlu0 %v2037, 5
        %v2125 = vpop.permute.xlu0 %2124
        %2126 = vrot.lane.b32.xlu0 %v2045, 5
        %v2127 = vpop.permute.xlu0 %2126
        %2128 = vrot.lane.b32.xlu0 %v2053, 5
        %v2129 = vpop.permute.xlu0 %2128
        %2130 = vrot.lane.b32.xlu0 %v2061, 5
        %v2131 = vpop.permute.xlu0 %2130
        %2132 = vrot.lane.b32.xlu0 %v2069, 5
        %v2133 = vpop.permute.xlu0 %2132
        %2134 = vrot.lane.b32.xlu0 %v2077, 5
        %v2135 = vpop.permute.xlu0 %2134
        %2136 = vrot.lane.b32.xlu0 %v2085, 5
        %v2137 = vpop.permute.xlu0 %2136
        %2138 = vrot.lane.b32.xlu0 %v2093, 5
        %v2139 = vpop.permute.xlu0 %2138
        %2140 = vrot.lane.b32.xlu0 %v2101, 5
        %v2141 = vpop.permute.xlu0 %2140
        %2142 = vrot.lane.b32.xlu0 %v2109, 5
        %v2143 = vpop.permute.xlu0 %2142
        %vm2161 = vcmask 48168
        %2162 = vst.msk [vmem:[#allocation3] sm:$0xff] %vm2161, %v2111
        %2163 = vst.msk [vmem:[#allocation3 + $0x8] sm:$0xff] %vm2161, %v2113
        %2164 = vst.msk [vmem:[#allocation3 + $0x10] sm:$0xff] %vm2161, %v2115
        %2165 = vst.msk [vmem:[#allocation3 + $0x18] sm:$0xff] %vm2161, %v2117
        %2166 = vst.msk [vmem:[#allocation3 + $0x20] sm:$0xff] %vm2161, %v2119
        %2167 = vst.msk [vmem:[#allocation3 + $0x28] sm:$0xff] %vm2161, %v2121
        %2168 = vst.msk [vmem:[#allocation3 + $0x30] sm:$0xff] %vm2161, %v2123
        %2169 = vst.msk [vmem:[#allocation3 + $0x38] sm:$0xff] %vm2161, %v2125
        %2170 = vst.msk [vmem:[#allocation3 + $0x40] sm:$0xff] %vm2161, %v2127
        %2171 = vst.msk [vmem:[#allocation3 + $0x48] sm:$0xff] %vm2161, %v2129
        %2172 = vst.msk [vmem:[#allocation3 + $0x50] sm:$0xff] %vm2161, %v2131
        %2173 = vst.msk [vmem:[#allocation3 + $0x58] sm:$0xff] %vm2161, %v2133
        %2174 = vst.msk [vmem:[#allocation3 + $0x60] sm:$0xff] %vm2161, %v2135
        %2175 = vst.msk [vmem:[#allocation3 + $0x68] sm:$0xff] %vm2161, %v2137
        %2176 = vst.msk [vmem:[#allocation3 + $0x70] sm:$0xff] %vm2161, %v2139
        %2177 = vst.msk [vmem:[#allocation3 + $0x78] sm:$0xff] %vm2161, %v2141
        %2178 = vst.msk [vmem:[#allocation3 + $0x80] sm:$0xff] %vm2161, %v2143
        %v2179 = vld [vmem:[#allocation2] sm:$0xfe]
        %v2180 = vld [vmem:[#allocation2 + $0x8] sm:$0xff]
        %v2181 = vld [vmem:[#allocation2 + $0x10] sm:$0xff]
        %v2182 = vld [vmem:[#allocation2 + $0x18] sm:$0xff]
        %v2183 = vld [vmem:[#allocation2 + $0x20] sm:$0xff]
        %v2184 = vld [vmem:[#allocation2 + $0x28] sm:$0xff]
        %v2185 = vld [vmem:[#allocation2 + $0x30] sm:$0xff]
        %v2186 = vld [vmem:[#allocation2 + $0x38] sm:$0xff]
        %v2187 = vld [vmem:[#allocation2 + $0x40] sm:$0xff]
        %v2188 = vld [vmem:[#allocation2 + $0x48] sm:$0xff]
        %v2189 = vld [vmem:[#allocation2 + $0x50] sm:$0xff]
        %v2190 = vld [vmem:[#allocation2 + $0x58] sm:$0xff]
        %v2191 = vld [vmem:[#allocation2 + $0x60] sm:$0xff]
        %v2192 = vld [vmem:[#allocation2 + $0x68] sm:$0xff]
        %v2193 = vld [vmem:[#allocation2 + $0x70] sm:$0xff]
        %v2194 = vld [vmem:[#allocation2 + $0x78] sm:$0xff]
        %v2195 = vld [vmem:[#allocation2 + $0x80] sm:$0xff]
        %v2196 = vld [vmem:[#allocation2 + $0x88] sm:$0x1]
        %vm2215 = vcmask 1046528
        %v2216 = vrot.slane %v2179, 1
        %v2217 = vrot.slane %v2180, 1
        %v2218 = vsel %vm2215, %v2216, %v2217
        %v2219 = vrot.slane %v2181, 1
        %v2220 = vsel %vm2215, %v2217, %v2219
        %v2221 = vrot.slane %v2182, 1
        %v2222 = vsel %vm2215, %v2219, %v2221
        %v2223 = vrot.slane %v2183, 1
        %v2224 = vsel %vm2215, %v2221, %v2223
        %v2225 = vrot.slane %v2184, 1
        %v2226 = vsel %vm2215, %v2223, %v2225
        %v2227 = vrot.slane %v2185, 1
        %v2228 = vsel %vm2215, %v2225, %v2227
        %v2229 = vrot.slane %v2186, 1
        %v2230 = vsel %vm2215, %v2227, %v2229
        %v2231 = vrot.slane %v2187, 1
        %v2232 = vsel %vm2215, %v2229, %v2231
        %v2233 = vrot.slane %v2188, 1
        %v2234 = vsel %vm2215, %v2231, %v2233
        %v2235 = vrot.slane %v2189, 1
        %v2236 = vsel %vm2215, %v2233, %v2235
        %v2237 = vrot.slane %v2190, 1
        %v2238 = vsel %vm2215, %v2235, %v2237
        %v2239 = vrot.slane %v2191, 1
        %v2240 = vsel %vm2215, %v2237, %v2239
        %v2241 = vrot.slane %v2192, 1
        %v2242 = vsel %vm2215, %v2239, %v2241
        %v2243 = vrot.slane %v2193, 1
        %v2244 = vsel %vm2215, %v2241, %v2243
        %v2245 = vrot.slane %v2194, 1
        %v2246 = vsel %vm2215, %v2243, %v2245
        %v2247 = vrot.slane %v2195, 1
        %v2248 = vsel %vm2215, %v2245, %v2247
        %v2249 = vrot.slane %v2196, 1
        %v2250 = vsel %vm2215, %v2247, %v2249
        %2251 = vrot.lane.b32.xlu0 %v2218, 6
        %v2252 = vpop.permute.xlu0 %2251
        %2253 = vrot.lane.b32.xlu0 %v2220, 6
        %v2254 = vpop.permute.xlu0 %2253
        %2255 = vrot.lane.b32.xlu0 %v2222, 6
        %v2256 = vpop.permute.xlu0 %2255
        %2257 = vrot.lane.b32.xlu0 %v2224, 6
        %v2258 = vpop.permute.xlu0 %2257
        %2259 = vrot.lane.b32.xlu0 %v2226, 6
        %v2260 = vpop.permute.xlu0 %2259
        %2261 = vrot.lane.b32.xlu0 %v2228, 6
        %v2262 = vpop.permute.xlu0 %2261
        %2263 = vrot.lane.b32.xlu0 %v2230, 6
        %v2264 = vpop.permute.xlu0 %2263
        %2265 = vrot.lane.b32.xlu0 %v2232, 6
        %v2266 = vpop.permute.xlu0 %2265
        %2267 = vrot.lane.b32.xlu0 %v2234, 6
        %v2268 = vpop.permute.xlu0 %2267
        %2269 = vrot.lane.b32.xlu0 %v2236, 6
        %v2270 = vpop.permute.xlu0 %2269
        %2271 = vrot.lane.b32.xlu0 %v2238, 6
        %v2272 = vpop.permute.xlu0 %2271
        %2273 = vrot.lane.b32.xlu0 %v2240, 6
        %v2274 = vpop.permute.xlu0 %2273
        %2275 = vrot.lane.b32.xlu0 %v2242, 6
        %v2276 = vpop.permute.xlu0 %2275
        %2277 = vrot.lane.b32.xlu0 %v2244, 6
        %v2278 = vpop.permute.xlu0 %2277
        %2279 = vrot.lane.b32.xlu0 %v2246, 6
        %v2280 = vpop.permute.xlu0 %2279
        %2281 = vrot.lane.b32.xlu0 %v2248, 6
        %v2282 = vpop.permute.xlu0 %2281
        %2283 = vrot.lane.b32.xlu0 %v2250, 6
        %v2284 = vpop.permute.xlu0 %2283
        %vm2302 = vcmask 56368
        %2303 = vst.msk [vmem:[#allocation3] sm:$0xff] %vm2302, %v2252
        %2304 = vst.msk [vmem:[#allocation3 + $0x8] sm:$0xff] %vm2302, %v2254
        %2305 = vst.msk [vmem:[#allocation3 + $0x10] sm:$0xff] %vm2302, %v2256
        %2306 = vst.msk [vmem:[#allocation3 + $0x18] sm:$0xff] %vm2302, %v2258
        %2307 = vst.msk [vmem:[#allocation3 + $0x20] sm:$0xff] %vm2302, %v2260
        %2308 = vst.msk [vmem:[#allocation3 + $0x28] sm:$0xff] %vm2302, %v2262
        %2309 = vst.msk [vmem:[#allocation3 + $0x30] sm:$0xff] %vm2302, %v2264
        %2310 = vst.msk [vmem:[#allocation3 + $0x38] sm:$0xff] %vm2302, %v2266
        %2311 = vst.msk [vmem:[#allocation3 + $0x40] sm:$0xff] %vm2302, %v2268
        %2312 = vst.msk [vmem:[#allocation3 + $0x48] sm:$0xff] %vm2302, %v2270
        %2313 = vst.msk [vmem:[#allocation3 + $0x50] sm:$0xff] %vm2302, %v2272
        %2314 = vst.msk [vmem:[#allocation3 + $0x58] sm:$0xff] %vm2302, %v2274
        %2315 = vst.msk [vmem:[#allocation3 + $0x60] sm:$0xff] %vm2302, %v2276
        %2316 = vst.msk [vmem:[#allocation3 + $0x68] sm:$0xff] %vm2302, %v2278
        %2317 = vst.msk [vmem:[#allocation3 + $0x70] sm:$0xff] %vm2302, %v2280
        %2318 = vst.msk [vmem:[#allocation3 + $0x78] sm:$0xff] %vm2302, %v2282
        %2319 = vst.msk [vmem:[#allocation3 + $0x80] sm:$0xff] %vm2302, %v2284
        %v2320 = vld [vmem:[%s1289] sm:$0xfe]
        %v2321 = vld [vmem:[%s1289 + $0x8] sm:$0xff]
        %v2322 = vld [vmem:[%s1289 + $0x10] sm:$0xff]
        %v2323 = vld [vmem:[%s1289 + $0x18] sm:$0xff]
        %v2324 = vld [vmem:[%s1289 + $0x20] sm:$0xff]
        %v2325 = vld [vmem:[%s1289 + $0x28] sm:$0xff]
        %v2326 = vld [vmem:[%s1289 + $0x30] sm:$0xff]
        %v2327 = vld [vmem:[%s1289 + $0x38] sm:$0xff]
        %v2328 = vld [vmem:[%s1289 + $0x40] sm:$0xff]
        %v2329 = vld [vmem:[%s1289 + $0x48] sm:$0xff]
        %v2330 = vld [vmem:[%s1289 + $0x50] sm:$0xff]
        %v2331 = vld [vmem:[%s1289 + $0x58] sm:$0xff]
        %v2332 = vld [vmem:[%s1289 + $0x60] sm:$0xff]
        %v2333 = vld [vmem:[%s1289 + $0x68] sm:$0xff]
        %v2334 = vld [vmem:[%s1289 + $0x70] sm:$0xff]
        %v2335 = vld [vmem:[%s1289 + $0x78] sm:$0xff]
        %v2336 = vld [vmem:[%s1289 + $0x80] sm:$0xff]
        %v2337 = vld [vmem:[%s1289 + $0x88] sm:$0x1]
        %v2356 = vrot.slane %v2320, 1
        %v2357 = vrot.slane %v2321, 1
        %v2358 = vsel %vm2215, %v2356, %v2357
        %v2359 = vrot.slane %v2322, 1
        %v2360 = vsel %vm2215, %v2357, %v2359
        %v2361 = vrot.slane %v2323, 1
        %v2362 = vsel %vm2215, %v2359, %v2361
        %v2363 = vrot.slane %v2324, 1
        %v2364 = vsel %vm2215, %v2361, %v2363
        %v2365 = vrot.slane %v2325, 1
        %v2366 = vsel %vm2215, %v2363, %v2365
        %v2367 = vrot.slane %v2326, 1
        %v2368 = vsel %vm2215, %v2365, %v2367
        %v2369 = vrot.slane %v2327, 1
        %v2370 = vsel %vm2215, %v2367, %v2369
        %v2371 = vrot.slane %v2328, 1
        %v2372 = vsel %vm2215, %v2369, %v2371
        %v2373 = vrot.slane %v2329, 1
        %v2374 = vsel %vm2215, %v2371, %v2373
        %v2375 = vrot.slane %v2330, 1
        %v2376 = vsel %vm2215, %v2373, %v2375
        %v2377 = vrot.slane %v2331, 1
        %v2378 = vsel %vm2215, %v2375, %v2377
        %v2379 = vrot.slane %v2332, 1
        %v2380 = vsel %vm2215, %v2377, %v2379
        %v2381 = vrot.slane %v2333, 1
        %v2382 = vsel %vm2215, %v2379, %v2381
        %v2383 = vrot.slane %v2334, 1
        %v2384 = vsel %vm2215, %v2381, %v2383
        %v2385 = vrot.slane %v2335, 1
        %v2386 = vsel %vm2215, %v2383, %v2385
        %v2387 = vrot.slane %v2336, 1
        %v2388 = vsel %vm2215, %v2385, %v2387
        %v2389 = vrot.slane %v2337, 1
        %v2390 = vsel %vm2215, %v2387, %v2389
        %2391 = vrot.lane.b32.xlu0 %v2358, 7
        %v2392 = vpop.permute.xlu0 %2391
        %2393 = vrot.lane.b32.xlu0 %v2360, 7
        %v2394 = vpop.permute.xlu0 %2393
        %2395 = vrot.lane.b32.xlu0 %v2362, 7
        %v2396 = vpop.permute.xlu0 %2395
        %2397 = vrot.lane.b32.xlu0 %v2364, 7
        %v2398 = vpop.permute.xlu0 %2397
        %2399 = vrot.lane.b32.xlu0 %v2366, 7
        %v2400 = vpop.permute.xlu0 %2399
        %2401 = vrot.lane.b32.xlu0 %v2368, 7
        %v2402 = vpop.permute.xlu0 %2401
        %2403 = vrot.lane.b32.xlu0 %v2370, 7
        %v2404 = vpop.permute.xlu0 %2403
        %2405 = vrot.lane.b32.xlu0 %v2372, 7
        %v2406 = vpop.permute.xlu0 %2405
        %2407 = vrot.lane.b32.xlu0 %v2374, 7
        %v2408 = vpop.permute.xlu0 %2407
        %2409 = vrot.lane.b32.xlu0 %v2376, 7
        %v2410 = vpop.permute.xlu0 %2409
        %2411 = vrot.lane.b32.xlu0 %v2378, 7
        %v2412 = vpop.permute.xlu0 %2411
        %2413 = vrot.lane.b32.xlu0 %v2380, 7
        %v2414 = vpop.permute.xlu0 %2413
        %2415 = vrot.lane.b32.xlu0 %v2382, 7
        %v2416 = vpop.permute.xlu0 %2415
        %2417 = vrot.lane.b32.xlu0 %v2384, 7
        %v2418 = vpop.permute.xlu0 %2417
        %2419 = vrot.lane.b32.xlu0 %v2386, 7
        %v2420 = vpop.permute.xlu0 %2419
        %2421 = vrot.lane.b32.xlu0 %v2388, 7
        %v2422 = vpop.permute.xlu0 %2421
        %2423 = vrot.lane.b32.xlu0 %v2390, 7
        %v2424 = vpop.permute.xlu0 %2423
        %vm2442 = vcmask 64568
        %2443 = vst.msk [vmem:[#allocation3] sm:$0xff] %vm2442, %v2392
        %2444 = vst.msk [vmem:[#allocation3 + $0x8] sm:$0xff] %vm2442, %v2394
        %2445 = vst.msk [vmem:[#allocation3 + $0x10] sm:$0xff] %vm2442, %v2396
        %2446 = vst.msk [vmem:[#allocation3 + $0x18] sm:$0xff] %vm2442, %v2398
        %2447 = vst.msk [vmem:[#allocation3 + $0x20] sm:$0xff] %vm2442, %v2400
        %2448 = vst.msk [vmem:[#allocation3 + $0x28] sm:$0xff] %vm2442, %v2402
        %2449 = vst.msk [vmem:[#allocation3 + $0x30] sm:$0xff] %vm2442, %v2404
        %2450 = vst.msk [vmem:[#allocation3 + $0x38] sm:$0xff] %vm2442, %v2406
        %2451 = vst.msk [vmem:[#allocation3 + $0x40] sm:$0xff] %vm2442, %v2408
        %2452 = vst.msk [vmem:[#allocation3 + $0x48] sm:$0xff] %vm2442, %v2410
        %2453 = vst.msk [vmem:[#allocation3 + $0x50] sm:$0xff] %vm2442, %v2412
        %2454 = vst.msk [vmem:[#allocation3 + $0x58] sm:$0xff] %vm2442, %v2414
        %2455 = vst.msk [vmem:[#allocation3 + $0x60] sm:$0xff] %vm2442, %v2416
        %2456 = vst.msk [vmem:[#allocation3 + $0x68] sm:$0xff] %vm2442, %v2418
        %2457 = vst.msk [vmem:[#allocation3 + $0x70] sm:$0xff] %vm2442, %v2420
        %2458 = vst.msk [vmem:[#allocation3 + $0x78] sm:$0xff] %vm2442, %v2422
        %2459 = vst.msk [vmem:[#allocation3 + $0x80] sm:$0xff] %vm2442, %v2424
        %v2460 = vld [vmem:[%s1393] sm:$0xfe]
        %v2461 = vld [vmem:[%s1393 + $0x8] sm:$0xff]
        %v2462 = vld [vmem:[%s1393 + $0x10] sm:$0xff]
        %v2463 = vld [vmem:[%s1393 + $0x18] sm:$0xff]
        %v2464 = vld [vmem:[%s1393 + $0x20] sm:$0xff]
        %v2465 = vld [vmem:[%s1393 + $0x28] sm:$0xff]
        %v2466 = vld [vmem:[%s1393 + $0x30] sm:$0xff]
        %v2467 = vld [vmem:[%s1393 + $0x38] sm:$0xff]
        %v2468 = vld [vmem:[%s1393 + $0x40] sm:$0xff]
        %v2469 = vld [vmem:[%s1393 + $0x48] sm:$0xff]
        %v2470 = vld [vmem:[%s1393 + $0x50] sm:$0xff]
        %v2471 = vld [vmem:[%s1393 + $0x58] sm:$0xff]
        %v2472 = vld [vmem:[%s1393 + $0x60] sm:$0xff]
        %v2473 = vld [vmem:[%s1393 + $0x68] sm:$0xff]
        %v2474 = vld [vmem:[%s1393 + $0x70] sm:$0xff]
        %v2475 = vld [vmem:[%s1393 + $0x78] sm:$0xff]
        %v2476 = vld [vmem:[%s1393 + $0x80] sm:$0xff]
        %v2477 = vld [vmem:[%s1393 + $0x88] sm:$0x1]
        %v2496 = vrot.slane %v2460, 1
        %v2497 = vrot.slane %v2461, 1
        %v2498 = vsel %vm2215, %v2496, %v2497
        %v2499 = vrot.slane %v2462, 1
        %v2500 = vsel %vm2215, %v2497, %v2499
        %v2501 = vrot.slane %v2463, 1
        %v2502 = vsel %vm2215, %v2499, %v2501
        %v2503 = vrot.slane %v2464, 1
        %v2504 = vsel %vm2215, %v2501, %v2503
        %v2505 = vrot.slane %v2465, 1
        %v2506 = vsel %vm2215, %v2503, %v2505
        %v2507 = vrot.slane %v2466, 1
        %v2508 = vsel %vm2215, %v2505, %v2507
        %v2509 = vrot.slane %v2467, 1
        %v2510 = vsel %vm2215, %v2507, %v2509
        %v2511 = vrot.slane %v2468, 1
        %v2512 = vsel %vm2215, %v2509, %v2511
        %v2513 = vrot.slane %v2469, 1
        %v2514 = vsel %vm2215, %v2511, %v2513
        %v2515 = vrot.slane %v2470, 1
        %v2516 = vsel %vm2215, %v2513, %v2515
        %v2517 = vrot.slane %v2471, 1
        %v2518 = vsel %vm2215, %v2515, %v2517
        %v2519 = vrot.slane %v2472, 1
        %v2520 = vsel %vm2215, %v2517, %v2519
        %v2521 = vrot.slane %v2473, 1
        %v2522 = vsel %vm2215, %v2519, %v2521
        %v2523 = vrot.slane %v2474, 1
        %v2524 = vsel %vm2215, %v2521, %v2523
        %v2525 = vrot.slane %v2475, 1
        %v2526 = vsel %vm2215, %v2523, %v2525
        %v2527 = vrot.slane %v2476, 1
        %v2528 = vsel %vm2215, %v2525, %v2527
        %v2529 = vrot.slane %v2477, 1
        %v2530 = vsel %vm2215, %v2527, %v2529
        %2531 = vrot.lane.b32.xlu0 %v2498, 8
        %v2532 = vpop.permute.xlu0 %2531
        %2533 = vrot.lane.b32.xlu0 %v2500, 8
        %v2534 = vpop.permute.xlu0 %2533
        %2535 = vrot.lane.b32.xlu0 %v2502, 8
        %v2536 = vpop.permute.xlu0 %2535
        %2537 = vrot.lane.b32.xlu0 %v2504, 8
        %v2538 = vpop.permute.xlu0 %2537
        %2539 = vrot.lane.b32.xlu0 %v2506, 8
        %v2540 = vpop.permute.xlu0 %2539
        %2541 = vrot.lane.b32.xlu0 %v2508, 8
        %v2542 = vpop.permute.xlu0 %2541
        %2543 = vrot.lane.b32.xlu0 %v2510, 8
        %v2544 = vpop.permute.xlu0 %2543
        %2545 = vrot.lane.b32.xlu0 %v2512, 8
        %v2546 = vpop.permute.xlu0 %2545
        %2547 = vrot.lane.b32.xlu0 %v2514, 8
        %v2548 = vpop.permute.xlu0 %2547
        %2549 = vrot.lane.b32.xlu0 %v2516, 8
        %v2550 = vpop.permute.xlu0 %2549
        %2551 = vrot.lane.b32.xlu0 %v2518, 8
        %v2552 = vpop.permute.xlu0 %2551
        %2553 = vrot.lane.b32.xlu0 %v2520, 8
        %v2554 = vpop.permute.xlu0 %2553
        %2555 = vrot.lane.b32.xlu0 %v2522, 8
        %v2556 = vpop.permute.xlu0 %2555
        %2557 = vrot.lane.b32.xlu0 %v2524, 8
        %v2558 = vpop.permute.xlu0 %2557
        %2559 = vrot.lane.b32.xlu0 %v2526, 8
        %v2560 = vpop.permute.xlu0 %2559
        %2561 = vrot.lane.b32.xlu0 %v2528, 8
        %v2562 = vpop.permute.xlu0 %2561
        %2563 = vrot.lane.b32.xlu0 %v2530, 8
        %v2564 = vpop.permute.xlu0 %2563
        %vm2582 = vcmask 72768
        %2583 = vst.msk [vmem:[#allocation3] sm:$0xff] %vm2582, %v2532
        %2584 = vst.msk [vmem:[#allocation3 + $0x8] sm:$0xff] %vm2582, %v2534
        %2585 = vst.msk [vmem:[#allocation3 + $0x10] sm:$0xff] %vm2582, %v2536
        %2586 = vst.msk [vmem:[#allocation3 + $0x18] sm:$0xff] %vm2582, %v2538
        %2587 = vst.msk [vmem:[#allocation3 + $0x20] sm:$0xff] %vm2582, %v2540
        %2588 = vst.msk [vmem:[#allocation3 + $0x28] sm:$0xff] %vm2582, %v2542
        %2589 = vst.msk [vmem:[#allocation3 + $0x30] sm:$0xff] %vm2582, %v2544
        %2590 = vst.msk [vmem:[#allocation3 + $0x38] sm:$0xff] %vm2582, %v2546
        %2591 = vst.msk [vmem:[#allocation3 + $0x40] sm:$0xff] %vm2582, %v2548
        %2592 = vst.msk [vmem:[#allocation3 + $0x48] sm:$0xff] %vm2582, %v2550
        %2593 = vst.msk [vmem:[#allocation3 + $0x50] sm:$0xff] %vm2582, %v2552
        %2594 = vst.msk [vmem:[#allocation3 + $0x58] sm:$0xff] %vm2582, %v2554
        %2595 = vst.msk [vmem:[#allocation3 + $0x60] sm:$0xff] %vm2582, %v2556
        %2596 = vst.msk [vmem:[#allocation3 + $0x68] sm:$0xff] %vm2582, %v2558
        %2597 = vst.msk [vmem:[#allocation3 + $0x70] sm:$0xff] %vm2582, %v2560
        %2598 = vst.msk [vmem:[#allocation3 + $0x78] sm:$0xff] %vm2582, %v2562
        %2599 = vst.msk [vmem:[#allocation3 + $0x80] sm:$0xff] %vm2582, %v2564
        %v2600 = vld [vmem:[#allocation2] sm:$0xfe]
        %v2601 = vld [vmem:[#allocation2 + $0x8] sm:$0xff]
        %v2602 = vld [vmem:[#allocation2 + $0x10] sm:$0xff]
        %v2603 = vld [vmem:[#allocation2 + $0x18] sm:$0xff]
        %v2604 = vld [vmem:[#allocation2 + $0x20] sm:$0xff]
        %v2605 = vld [vmem:[#allocation2 + $0x28] sm:$0xff]
        %v2606 = vld [vmem:[#allocation2 + $0x30] sm:$0xff]
        %v2607 = vld [vmem:[#allocation2 + $0x38] sm:$0xff]
        %v2608 = vld [vmem:[#allocation2 + $0x40] sm:$0xff]
        %v2609 = vld [vmem:[#allocation2 + $0x48] sm:$0xff]
        %v2610 = vld [vmem:[#allocation2 + $0x50] sm:$0xff]
        %v2611 = vld [vmem:[#allocation2 + $0x58] sm:$0xff]
        %v2612 = vld [vmem:[#allocation2 + $0x60] sm:$0xff]
        %v2613 = vld [vmem:[#allocation2 + $0x68] sm:$0xff]
        %v2614 = vld [vmem:[#allocation2 + $0x70] sm:$0xff]
        %v2615 = vld [vmem:[#allocation2 + $0x78] sm:$0xff]
        %v2616 = vld [vmem:[#allocation2 + $0x80] sm:$0xff]
        %v2617 = vld [vmem:[#allocation2 + $0x88] sm:$0x3]
        %vm2618 = vsmask.f32 6400
        %v2620 = vshrl.u32 %v2600, 16
        %v2622 = vrot.slane %v2620, 1
        %v2623 = vshll.u32 %v2600, 16
        %v2625 = vrot.slane %v2623, 2
        %v2626 = vor.u32 %v2622, %v2625
        %v2628 = vshrl.u32 %v2601, 16
        %v2630 = vrot.slane %v2628, 1
        %v2631 = vshll.u32 %v2601, 16
        %v2633 = vrot.slane %v2631, 2
        %v2634 = vor.u32 %v2630, %v2633
        %v2635 = vsel %vm2618, %v2626, %v2634
        %v2637 = vshrl.u32 %v2602, 16
        %v2639 = vrot.slane %v2637, 1
        %v2640 = vshll.u32 %v2602, 16
        %v2642 = vrot.slane %v2640, 2
        %v2643 = vor.u32 %v2639, %v2642
        %v2644 = vsel %vm2618, %v2634, %v2643
        %v2646 = vshrl.u32 %v2603, 16
        %v2648 = vrot.slane %v2646, 1
        %v2649 = vshll.u32 %v2603, 16
        %v2651 = vrot.slane %v2649, 2
        %v2652 = vor.u32 %v2648, %v2651
        %v2653 = vsel %vm2618, %v2643, %v2652
        %v2655 = vshrl.u32 %v2604, 16
        %v2657 = vrot.slane %v2655, 1
        %v2658 = vshll.u32 %v2604, 16
        %v2660 = vrot.slane %v2658, 2
        %v2661 = vor.u32 %v2657, %v2660
        %v2662 = vsel %vm2618, %v2652, %v2661
        %v2664 = vshrl.u32 %v2605, 16
        %v2666 = vrot.slane %v2664, 1
        %v2667 = vshll.u32 %v2605, 16
        %v2669 = vrot.slane %v2667, 2
        %v2670 = vor.u32 %v2666, %v2669
        %v2671 = vsel %vm2618, %v2661, %v2670
        %v2673 = vshrl.u32 %v2606, 16
        %v2675 = vrot.slane %v2673, 1
        %v2676 = vshll.u32 %v2606, 16
        %v2678 = vrot.slane %v2676, 2
        %v2679 = vor.u32 %v2675, %v2678
        %v2680 = vsel %vm2618, %v2670, %v2679
        %v2682 = vshrl.u32 %v2607, 16
        %v2684 = vrot.slane %v2682, 1
        %v2685 = vshll.u32 %v2607, 16
        %v2687 = vrot.slane %v2685, 2
        %v2688 = vor.u32 %v2684, %v2687
        %v2689 = vsel %vm2618, %v2679, %v2688
        %v2691 = vshrl.u32 %v2608, 16
        %v2693 = vrot.slane %v2691, 1
        %v2694 = vshll.u32 %v2608, 16
        %v2696 = vrot.slane %v2694, 2
        %v2697 = vor.u32 %v2693, %v2696
        %v2698 = vsel %vm2618, %v2688, %v2697
        %v2700 = vshrl.u32 %v2609, 16
        %v2702 = vrot.slane %v2700, 1
        %v2703 = vshll.u32 %v2609, 16
        %v2705 = vrot.slane %v2703, 2
        %v2706 = vor.u32 %v2702, %v2705
        %v2707 = vsel %vm2618, %v2697, %v2706
        %v2709 = vshrl.u32 %v2610, 16
        %v2711 = vrot.slane %v2709, 1
        %v2712 = vshll.u32 %v2610, 16
        %v2714 = vrot.slane %v2712, 2
        %v2715 = vor.u32 %v2711, %v2714
        %v2716 = vsel %vm2618, %v2706, %v2715
        %v2718 = vshrl.u32 %v2611, 16
        %v2720 = vrot.slane %v2718, 1
        %v2721 = vshll.u32 %v2611, 16
        %v2723 = vrot.slane %v2721, 2
        %v2724 = vor.u32 %v2720, %v2723
        %v2725 = vsel %vm2618, %v2715, %v2724
        %v2727 = vshrl.u32 %v2612, 16
        %v2729 = vrot.slane %v2727, 1
        %v2730 = vshll.u32 %v2612, 16
        %v2732 = vrot.slane %v2730, 2
        %v2733 = vor.u32 %v2729, %v2732
        %v2734 = vsel %vm2618, %v2724, %v2733
        %v2736 = vshrl.u32 %v2613, 16
        %v2738 = vrot.slane %v2736, 1
        %v2739 = vshll.u32 %v2613, 16
        %v2741 = vrot.slane %v2739, 2
        %v2742 = vor.u32 %v2738, %v2741
        %v2743 = vsel %vm2618, %v2733, %v2742
        %v2745 = vshrl.u32 %v2614, 16
        %v2747 = vrot.slane %v2745, 1
        %v2748 = vshll.u32 %v2614, 16
        %v2750 = vrot.slane %v2748, 2
        %v2751 = vor.u32 %v2747, %v2750
        %v2752 = vsel %vm2618, %v2742, %v2751
        %v2754 = vshrl.u32 %v2615, 16
        %v2756 = vrot.slane %v2754, 1
        %v2757 = vshll.u32 %v2615, 16
        %v2759 = vrot.slane %v2757, 2
        %v2760 = vor.u32 %v2756, %v2759
        %v2761 = vsel %vm2618, %v2751, %v2760
        %v2763 = vshrl.u32 %v2616, 16
        %v2765 = vrot.slane %v2763, 1
        %v2766 = vshll.u32 %v2616, 16
        %v2768 = vrot.slane %v2766, 2
        %v2769 = vor.u32 %v2765, %v2768
        %v2770 = vsel %vm2618, %v2760, %v2769
        %v2772 = vshrl.u32 %v2617, 16
        %v2774 = vrot.slane %v2772, 1
        %v2775 = vshll.u32 %v2617, 16
        %v2777 = vrot.slane %v2775, 2
        %v2778 = vor.u32 %v2774, %v2777
        %v2779 = vsel %vm2618, %v2769, %v2778
        %2780 = vrot.lane.b32.xlu0 %v2635, 9
        %v2781 = vpop.permute.xlu0 %2780
        %2782 = vrot.lane.b32.xlu0 %v2644, 9
        %v2783 = vpop.permute.xlu0 %2782
        %2784 = vrot.lane.b32.xlu0 %v2653, 9
        %v2785 = vpop.permute.xlu0 %2784
        %2786 = vrot.lane.b32.xlu0 %v2662, 9
        %v2787 = vpop.permute.xlu0 %2786
        %2788 = vrot.lane.b32.xlu0 %v2671, 9
        %v2789 = vpop.permute.xlu0 %2788
        %2790 = vrot.lane.b32.xlu0 %v2680, 9
        %v2791 = vpop.permute.xlu0 %2790
        %2792 = vrot.lane.b32.xlu0 %v2689, 9
        %v2793 = vpop.permute.xlu0 %2792
        %2794 = vrot.lane.b32.xlu0 %v2698, 9
        %v2795 = vpop.permute.xlu0 %2794
        %2796 = vrot.lane.b32.xlu0 %v2707, 9
        %v2797 = vpop.permute.xlu0 %2796
        %2798 = vrot.lane.b32.xlu0 %v2716, 9
        %v2799 = vpop.permute.xlu0 %2798
        %2800 = vrot.lane.b32.xlu0 %v2725, 9
        %v2801 = vpop.permute.xlu0 %2800
        %2802 = vrot.lane.b32.xlu0 %v2734, 9
        %v2803 = vpop.permute.xlu0 %2802
        %2804 = vrot.lane.b32.xlu0 %v2743, 9
        %v2805 = vpop.permute.xlu0 %2804
        %2806 = vrot.lane.b32.xlu0 %v2752, 9
        %v2807 = vpop.permute.xlu0 %2806
        %2808 = vrot.lane.b32.xlu0 %v2761, 9
        %v2809 = vpop.permute.xlu0 %2808
        %2810 = vrot.lane.b32.xlu0 %v2770, 9
        %v2811 = vpop.permute.xlu0 %2810
        %2812 = vrot.lane.b32.xlu0 %v2779, 9
        %v2813 = vpop.permute.xlu0 %2812
        %vm2831 = vcmask 80968
        %2832 = vst.msk [vmem:[#allocation3] sm:$0xff] %vm2831, %v2781
        %2833 = vst.msk [vmem:[#allocation3 + $0x8] sm:$0xff] %vm2831, %v2783
        %2834 = vst.msk [vmem:[#allocation3 + $0x10] sm:$0xff] %vm2831, %v2785
        %2835 = vst.msk [vmem:[#allocation3 + $0x18] sm:$0xff] %vm2831, %v2787
        %2836 = vst.msk [vmem:[#allocation3 + $0x20] sm:$0xff] %vm2831, %v2789
        %2837 = vst.msk [vmem:[#allocation3 + $0x28] sm:$0xff] %vm2831, %v2791
        %2838 = vst.msk [vmem:[#allocation3 + $0x30] sm:$0xff] %vm2831, %v2793
        %2839 = vst.msk [vmem:[#allocation3 + $0x38] sm:$0xff] %vm2831, %v2795
        %2840 = vst.msk [vmem:[#allocation3 + $0x40] sm:$0xff] %vm2831, %v2797
        %2841 = vst.msk [vmem:[#allocation3 + $0x48] sm:$0xff] %vm2831, %v2799
        %2842 = vst.msk [vmem:[#allocation3 + $0x50] sm:$0xff] %vm2831, %v2801
        %2843 = vst.msk [vmem:[#allocation3 + $0x58] sm:$0xff] %vm2831, %v2803
        %2844 = vst.msk [vmem:[#allocation3 + $0x60] sm:$0xff] %vm2831, %v2805
        %2845 = vst.msk [vmem:[#allocation3 + $0x68] sm:$0xff] %vm2831, %v2807
        %2846 = vst.msk [vmem:[#allocation3 + $0x70] sm:$0xff] %vm2831, %v2809
        %2847 = vst.msk [vmem:[#allocation3 + $0x78] sm:$0xff] %vm2831, %v2811
        %2848 = vst.msk [vmem:[#allocation3 + $0x80] sm:$0xff] %vm2831, %v2813
        %v2849 = vld [vmem:[%s1289] sm:$0xfe]
        %v2850 = vld [vmem:[%s1289 + $0x8] sm:$0xff]
        %v2851 = vld [vmem:[%s1289 + $0x10] sm:$0xff]
        %v2852 = vld [vmem:[%s1289 + $0x18] sm:$0xff]
        %v2853 = vld [vmem:[%s1289 + $0x20] sm:$0xff]
        %v2854 = vld [vmem:[%s1289 + $0x28] sm:$0xff]
        %v2855 = vld [vmem:[%s1289 + $0x30] sm:$0xff]
        %v2856 = vld [vmem:[%s1289 + $0x38] sm:$0xff]
        %v2857 = vld [vmem:[%s1289 + $0x40] sm:$0xff]
        %v2858 = vld [vmem:[%s1289 + $0x48] sm:$0xff]
        %v2859 = vld [vmem:[%s1289 + $0x50] sm:$0xff]
        %v2860 = vld [vmem:[%s1289 + $0x58] sm:$0xff]
        %v2861 = vld [vmem:[%s1289 + $0x60] sm:$0xff]
        %v2862 = vld [vmem:[%s1289 + $0x68] sm:$0xff]
        %v2863 = vld [vmem:[%s1289 + $0x70] sm:$0xff]
        %v2864 = vld [vmem:[%s1289 + $0x78] sm:$0xff]
        %v2865 = vld [vmem:[%s1289 + $0x80] sm:$0xff]
        %v2866 = vld [vmem:[%s1289 + $0x88] sm:$0x3]
        %v2868 = vshrl.u32 %v2849, 16
        %v2870 = vrot.slane %v2868, 1
        %v2871 = vshll.u32 %v2849, 16
        %v2873 = vrot.slane %v2871, 2
        %v2874 = vor.u32 %v2870, %v2873
        %v2876 = vshrl.u32 %v2850, 16
        %v2878 = vrot.slane %v2876, 1
        %v2879 = vshll.u32 %v2850, 16
        %v2881 = vrot.slane %v2879, 2
        %v2882 = vor.u32 %v2878, %v2881
        %v2883 = vsel %vm2618, %v2874, %v2882
        %v2885 = vshrl.u32 %v2851, 16
        %v2887 = vrot.slane %v2885, 1
        %v2888 = vshll.u32 %v2851, 16
        %v2890 = vrot.slane %v2888, 2
        %v2891 = vor.u32 %v2887, %v2890
        %v2892 = vsel %vm2618, %v2882, %v2891
        %v2894 = vshrl.u32 %v2852, 16
        %v2896 = vrot.slane %v2894, 1
        %v2897 = vshll.u32 %v2852, 16
        %v2899 = vrot.slane %v2897, 2
        %v2900 = vor.u32 %v2896, %v2899
        %v2901 = vsel %vm2618, %v2891, %v2900
        %v2903 = vshrl.u32 %v2853, 16
        %v2905 = vrot.slane %v2903, 1
        %v2906 = vshll.u32 %v2853, 16
        %v2908 = vrot.slane %v2906, 2
        %v2909 = vor.u32 %v2905, %v2908
        %v2910 = vsel %vm2618, %v2900, %v2909
        %v2912 = vshrl.u32 %v2854, 16
        %v2914 = vrot.slane %v2912, 1
        %v2915 = vshll.u32 %v2854, 16
        %v2917 = vrot.slane %v2915, 2
        %v2918 = vor.u32 %v2914, %v2917
        %v2919 = vsel %vm2618, %v2909, %v2918
        %v2921 = vshrl.u32 %v2855, 16
        %v2923 = vrot.slane %v2921, 1
        %v2924 = vshll.u32 %v2855, 16
        %v2926 = vrot.slane %v2924, 2
        %v2927 = vor.u32 %v2923, %v2926
        %v2928 = vsel %vm2618, %v2918, %v2927
        %v2930 = vshrl.u32 %v2856, 16
        %v2932 = vrot.slane %v2930, 1
        %v2933 = vshll.u32 %v2856, 16
        %v2935 = vrot.slane %v2933, 2
        %v2936 = vor.u32 %v2932, %v2935
        %v2937 = vsel %vm2618, %v2927, %v2936
        %v2939 = vshrl.u32 %v2857, 16
        %v2941 = vrot.slane %v2939, 1
        %v2942 = vshll.u32 %v2857, 16
        %v2944 = vrot.slane %v2942, 2
        %v2945 = vor.u32 %v2941, %v2944
        %v2946 = vsel %vm2618, %v2936, %v2945
        %v2948 = vshrl.u32 %v2858, 16
        %v2950 = vrot.slane %v2948, 1
        %v2951 = vshll.u32 %v2858, 16
        %v2953 = vrot.slane %v2951, 2
        %v2954 = vor.u32 %v2950, %v2953
        %v2955 = vsel %vm2618, %v2945, %v2954
        %v2957 = vshrl.u32 %v2859, 16
        %v2959 = vrot.slane %v2957, 1
        %v2960 = vshll.u32 %v2859, 16
        %v2962 = vrot.slane %v2960, 2
        %v2963 = vor.u32 %v2959, %v2962
        %v2964 = vsel %vm2618, %v2954, %v2963
        %v2966 = vshrl.u32 %v2860, 16
        %v2968 = vrot.slane %v2966, 1
        %v2969 = vshll.u32 %v2860, 16
        %v2971 = vrot.slane %v2969, 2
        %v2972 = vor.u32 %v2968, %v2971
        %v2973 = vsel %vm2618, %v2963, %v2972
        %v2975 = vshrl.u32 %v2861, 16
        %v2977 = vrot.slane %v2975, 1
        %v2978 = vshll.u32 %v2861, 16
        %v2980 = vrot.slane %v2978, 2
        %v2981 = vor.u32 %v2977, %v2980
        %v2982 = vsel %vm2618, %v2972, %v2981
        %v2984 = vshrl.u32 %v2862, 16
        %v2986 = vrot.slane %v2984, 1
        %v2987 = vshll.u32 %v2862, 16
        %v2989 = vrot.slane %v2987, 2
        %v2990 = vor.u32 %v2986, %v2989
        %v2991 = vsel %vm2618, %v2981, %v2990
        %v2993 = vshrl.u32 %v2863, 16
        %v2995 = vrot.slane %v2993, 1
        %v2996 = vshll.u32 %v2863, 16
        %v2998 = vrot.slane %v2996, 2
        %v2999 = vor.u32 %v2995, %v2998
        %v3000 = vsel %vm2618, %v2990, %v2999
        %v3002 = vshrl.u32 %v2864, 16
        %v3004 = vrot.slane %v3002, 1
        %v3005 = vshll.u32 %v2864, 16
        %v3007 = vrot.slane %v3005, 2
        %v3008 = vor.u32 %v3004, %v3007
        %v3009 = vsel %vm2618, %v2999, %v3008
        %v3011 = vshrl.u32 %v2865, 16
        %v3013 = vrot.slane %v3011, 1
        %v3014 = vshll.u32 %v2865, 16
        %v3016 = vrot.slane %v3014, 2
        %v3017 = vor.u32 %v3013, %v3016
        %v3018 = vsel %vm2618, %v3008, %v3017
        %v3020 = vshrl.u32 %v2866, 16
        %v3022 = vrot.slane %v3020, 1
        %v3023 = vshll.u32 %v2866, 16
        %v3025 = vrot.slane %v3023, 2
        %v3026 = vor.u32 %v3022, %v3025
        %v3027 = vsel %vm2618, %v3017, %v3026
        %3028 = vrot.lane.b32.xlu0 %v2883, 10
        %v3029 = vpop.permute.xlu0 %3028
        %3030 = vrot.lane.b32.xlu0 %v2892, 10
        %v3031 = vpop.permute.xlu0 %3030
        %3032 = vrot.lane.b32.xlu0 %v2901, 10
        %v3033 = vpop.permute.xlu0 %3032
        %3034 = vrot.lane.b32.xlu0 %v2910, 10
        %v3035 = vpop.permute.xlu0 %3034
        %3036 = vrot.lane.b32.xlu0 %v2919, 10
        %v3037 = vpop.permute.xlu0 %3036
        %3038 = vrot.lane.b32.xlu0 %v2928, 10
        %v3039 = vpop.permute.xlu0 %3038
        %3040 = vrot.lane.b32.xlu0 %v2937, 10
        %v3041 = vpop.permute.xlu0 %3040
        %3042 = vrot.lane.b32.xlu0 %v2946, 10
        %v3043 = vpop.permute.xlu0 %3042
        %3044 = vrot.lane.b32.xlu0 %v2955, 10
        %v3045 = vpop.permute.xlu0 %3044
        %3046 = vrot.lane.b32.xlu0 %v2964, 10
        %v3047 = vpop.permute.xlu0 %3046
        %3048 = vrot.lane.b32.xlu0 %v2973, 10
        %v3049 = vpop.permute.xlu0 %3048
        %3050 = vrot.lane.b32.xlu0 %v2982, 10
        %v3051 = vpop.permute.xlu0 %3050
        %3052 = vrot.lane.b32.xlu0 %v2991, 10
        %v3053 = vpop.permute.xlu0 %3052
        %3054 = vrot.lane.b32.xlu0 %v3000, 10
        %v3055 = vpop.permute.xlu0 %3054
        %3056 = vrot.lane.b32.xlu0 %v3009, 10
        %v3057 = vpop.permute.xlu0 %3056
        %3058 = vrot.lane.b32.xlu0 %v3018, 10
        %v3059 = vpop.permute.xlu0 %3058
        %3060 = vrot.lane.b32.xlu0 %v3027, 10
        %v3061 = vpop.permute.xlu0 %3060
        %vm3079 = vcmask 89168
        %3080 = vst.msk [vmem:[#allocation3] sm:$0xff] %vm3079, %v3029
        %3081 = vst.msk [vmem:[#allocation3 + $0x8] sm:$0xff] %vm3079, %v3031
        %3082 = vst.msk [vmem:[#allocation3 + $0x10] sm:$0xff] %vm3079, %v3033
        %3083 = vst.msk [vmem:[#allocation3 + $0x18] sm:$0xff] %vm3079, %v3035
        %3084 = vst.msk [vmem:[#allocation3 + $0x20] sm:$0xff] %vm3079, %v3037
        %3085 = vst.msk [vmem:[#allocation3 + $0x28] sm:$0xff] %vm3079, %v3039
        %3086 = vst.msk [vmem:[#allocation3 + $0x30] sm:$0xff] %vm3079, %v3041
        %3087 = vst.msk [vmem:[#allocation3 + $0x38] sm:$0xff] %vm3079, %v3043
        %3088 = vst.msk [vmem:[#allocation3 + $0x40] sm:$0xff] %vm3079, %v3045
        %3089 = vst.msk [vmem:[#allocation3 + $0x48] sm:$0xff] %vm3079, %v3047
        %3090 = vst.msk [vmem:[#allocation3 + $0x50] sm:$0xff] %vm3079, %v3049
        %3091 = vst.msk [vmem:[#allocation3 + $0x58] sm:$0xff] %vm3079, %v3051
        %3092 = vst.msk [vmem:[#allocation3 + $0x60] sm:$0xff] %vm3079, %v3053
        %3093 = vst.msk [vmem:[#allocation3 + $0x68] sm:$0xff] %vm3079, %v3055
        %3094 = vst.msk [vmem:[#allocation3 + $0x70] sm:$0xff] %vm3079, %v3057
        %3095 = vst.msk [vmem:[#allocation3 + $0x78] sm:$0xff] %vm3079, %v3059
        %3096 = vst.msk [vmem:[#allocation3 + $0x80] sm:$0xff] %vm3079, %v3061
        %v3097 = vld [vmem:[%s1393] sm:$0xfe]
        %v3098 = vld [vmem:[%s1393 + $0x8] sm:$0xff]
        %v3099 = vld [vmem:[%s1393 + $0x10] sm:$0xff]
        %v3100 = vld [vmem:[%s1393 + $0x18] sm:$0xff]
        %v3101 = vld [vmem:[%s1393 + $0x20] sm:$0xff]
        %v3102 = vld [vmem:[%s1393 + $0x28] sm:$0xff]
        %v3103 = vld [vmem:[%s1393 + $0x30] sm:$0xff]
        %v3104 = vld [vmem:[%s1393 + $0x38] sm:$0xff]
        %v3105 = vld [vmem:[%s1393 + $0x40] sm:$0xff]
        %v3106 = vld [vmem:[%s1393 + $0x48] sm:$0xff]
        %v3107 = vld [vmem:[%s1393 + $0x50] sm:$0xff]
        %v3108 = vld [vmem:[%s1393 + $0x58] sm:$0xff]
        %v3109 = vld [vmem:[%s1393 + $0x60] sm:$0xff]
        %v3110 = vld [vmem:[%s1393 + $0x68] sm:$0xff]
        %v3111 = vld [vmem:[%s1393 + $0x70] sm:$0xff]
        %v3112 = vld [vmem:[%s1393 + $0x78] sm:$0xff]
        %v3113 = vld [vmem:[%s1393 + $0x80] sm:$0xff]
        %v3114 = vld [vmem:[%s1393 + $0x88] sm:$0x3]
        %v3116 = vshrl.u32 %v3097, 16
        %v3118 = vrot.slane %v3116, 1
        %v3119 = vshll.u32 %v3097, 16
        %v3121 = vrot.slane %v3119, 2
        %v3122 = vor.u32 %v3118, %v3121
        %v3124 = vshrl.u32 %v3098, 16
        %v3126 = vrot.slane %v3124, 1
        %v3127 = vshll.u32 %v3098, 16
        %v3129 = vrot.slane %v3127, 2
        %v3130 = vor.u32 %v3126, %v3129
        %v3131 = vsel %vm2618, %v3122, %v3130
        %v3133 = vshrl.u32 %v3099, 16
        %v3135 = vrot.slane %v3133, 1
        %v3136 = vshll.u32 %v3099, 16
        %v3138 = vrot.slane %v3136, 2
        %v3139 = vor.u32 %v3135, %v3138
        %v3140 = vsel %vm2618, %v3130, %v3139
        %v3142 = vshrl.u32 %v3100, 16
        %v3144 = vrot.slane %v3142, 1
        %v3145 = vshll.u32 %v3100, 16
        %v3147 = vrot.slane %v3145, 2
        %v3148 = vor.u32 %v3144, %v3147
        %v3149 = vsel %vm2618, %v3139, %v3148
        %v3151 = vshrl.u32 %v3101, 16
        %v3153 = vrot.slane %v3151, 1
        %v3154 = vshll.u32 %v3101, 16
        %v3156 = vrot.slane %v3154, 2
        %v3157 = vor.u32 %v3153, %v3156
        %v3158 = vsel %vm2618, %v3148, %v3157
        %v3160 = vshrl.u32 %v3102, 16
        %v3162 = vrot.slane %v3160, 1
        %v3163 = vshll.u32 %v3102, 16
        %v3165 = vrot.slane %v3163, 2
        %v3166 = vor.u32 %v3162, %v3165
        %v3167 = vsel %vm2618, %v3157, %v3166
        %v3169 = vshrl.u32 %v3103, 16
        %v3171 = vrot.slane %v3169, 1
        %v3172 = vshll.u32 %v3103, 16
        %v3174 = vrot.slane %v3172, 2
        %v3175 = vor.u32 %v3171, %v3174
        %v3176 = vsel %vm2618, %v3166, %v3175
        %v3178 = vshrl.u32 %v3104, 16
        %v3180 = vrot.slane %v3178, 1
        %v3181 = vshll.u32 %v3104, 16
        %v3183 = vrot.slane %v3181, 2
        %v3184 = vor.u32 %v3180, %v3183
        %v3185 = vsel %vm2618, %v3175, %v3184
        %v3187 = vshrl.u32 %v3105, 16
        %v3189 = vrot.slane %v3187, 1
        %v3190 = vshll.u32 %v3105, 16
        %v3192 = vrot.slane %v3190, 2
        %v3193 = vor.u32 %v3189, %v3192
        %v3194 = vsel %vm2618, %v3184, %v3193
        %v3196 = vshrl.u32 %v3106, 16
        %v3198 = vrot.slane %v3196, 1
        %v3199 = vshll.u32 %v3106, 16
        %v3201 = vrot.slane %v3199, 2
        %v3202 = vor.u32 %v3198, %v3201
        %v3203 = vsel %vm2618, %v3193, %v3202
        %v3205 = vshrl.u32 %v3107, 16
        %v3207 = vrot.slane %v3205, 1
        %v3208 = vshll.u32 %v3107, 16
        %v3210 = vrot.slane %v3208, 2
        %v3211 = vor.u32 %v3207, %v3210
        %v3212 = vsel %vm2618, %v3202, %v3211
        %v3214 = vshrl.u32 %v3108, 16
        %v3216 = vrot.slane %v3214, 1
        %v3217 = vshll.u32 %v3108, 16
        %v3219 = vrot.slane %v3217, 2
        %v3220 = vor.u32 %v3216, %v3219
        %v3221 = vsel %vm2618, %v3211, %v3220
        %v3223 = vshrl.u32 %v3109, 16
        %v3225 = vrot.slane %v3223, 1
        %v3226 = vshll.u32 %v3109, 16
        %v3228 = vrot.slane %v3226, 2
        %v3229 = vor.u32 %v3225, %v3228
        %v3230 = vsel %vm2618, %v3220, %v3229
        %v3232 = vshrl.u32 %v3110, 16
        %v3234 = vrot.slane %v3232, 1
        %v3235 = vshll.u32 %v3110, 16
        %v3237 = vrot.slane %v3235, 2
        %v3238 = vor.u32 %v3234, %v3237
        %v3239 = vsel %vm2618, %v3229, %v3238
        %v3241 = vshrl.u32 %v3111, 16
        %v3243 = vrot.slane %v3241, 1
        %v3244 = vshll.u32 %v3111, 16
        %v3246 = vrot.slane %v3244, 2
        %v3247 = vor.u32 %v3243, %v3246
        %v3248 = vsel %vm2618, %v3238, %v3247
        %v3250 = vshrl.u32 %v3112, 16
        %v3252 = vrot.slane %v3250, 1
        %v3253 = vshll.u32 %v3112, 16
        %v3255 = vrot.slane %v3253, 2
        %v3256 = vor.u32 %v3252, %v3255
        %v3257 = vsel %vm2618, %v3247, %v3256
        %v3259 = vshrl.u32 %v3113, 16
        %v3261 = vrot.slane %v3259, 1
        %v3262 = vshll.u32 %v3113, 16
        %v3264 = vrot.slane %v3262, 2
        %v3265 = vor.u32 %v3261, %v3264
        %v3266 = vsel %vm2618, %v3256, %v3265
        %v3268 = vshrl.u32 %v3114, 16
        %v3270 = vrot.slane %v3268, 1
        %v3271 = vshll.u32 %v3114, 16
        %v3273 = vrot.slane %v3271, 2
        %v3274 = vor.u32 %v3270, %v3273
        %v3275 = vsel %vm2618, %v3265, %v3274
        %3276 = vrot.lane.b32.xlu0 %v3131, 11
        %v3277 = vpop.permute.xlu0 %3276
        %3278 = vrot.lane.b32.xlu0 %v3140, 11
        %v3279 = vpop.permute.xlu0 %3278
        %3280 = vrot.lane.b32.xlu0 %v3149, 11
        %v3281 = vpop.permute.xlu0 %3280
        %3282 = vrot.lane.b32.xlu0 %v3158, 11
        %v3283 = vpop.permute.xlu0 %3282
        %3284 = vrot.lane.b32.xlu0 %v3167, 11
        %v3285 = vpop.permute.xlu0 %3284
        %3286 = vrot.lane.b32.xlu0 %v3176, 11
        %v3287 = vpop.permute.xlu0 %3286
        %3288 = vrot.lane.b32.xlu0 %v3185, 11
        %v3289 = vpop.permute.xlu0 %3288
        %3290 = vrot.lane.b32.xlu0 %v3194, 11
        %v3291 = vpop.permute.xlu0 %3290
        %3292 = vrot.lane.b32.xlu0 %v3203, 11
        %v3293 = vpop.permute.xlu0 %3292
        %3294 = vrot.lane.b32.xlu0 %v3212, 11
        %v3295 = vpop.permute.xlu0 %3294
        %3296 = vrot.lane.b32.xlu0 %v3221, 11
        %v3297 = vpop.permute.xlu0 %3296
        %3298 = vrot.lane.b32.xlu0 %v3230, 11
        %v3299 = vpop.permute.xlu0 %3298
        %3300 = vrot.lane.b32.xlu0 %v3239, 11
        %v3301 = vpop.permute.xlu0 %3300
        %3302 = vrot.lane.b32.xlu0 %v3248, 11
        %v3303 = vpop.permute.xlu0 %3302
        %3304 = vrot.lane.b32.xlu0 %v3257, 11
        %v3305 = vpop.permute.xlu0 %3304
        %3306 = vrot.lane.b32.xlu0 %v3266, 11
        %v3307 = vpop.permute.xlu0 %3306
        %3308 = vrot.lane.b32.xlu0 %v3275, 11
        %v3309 = vpop.permute.xlu0 %3308
        %vm3327 = vcmask 97368
        %3328 = vst.msk [vmem:[#allocation3] sm:$0xff] %vm3327, %v3277
        %3329 = vst.msk [vmem:[#allocation3 + $0x8] sm:$0xff] %vm3327, %v3279
        %3330 = vst.msk [vmem:[#allocation3 + $0x10] sm:$0xff] %vm3327, %v3281
        %3331 = vst.msk [vmem:[#allocation3 + $0x18] sm:$0xff] %vm3327, %v3283
        %3332 = vst.msk [vmem:[#allocation3 + $0x20] sm:$0xff] %vm3327, %v3285
        %3333 = vst.msk [vmem:[#allocation3 + $0x28] sm:$0xff] %vm3327, %v3287
        %3334 = vst.msk [vmem:[#allocation3 + $0x30] sm:$0xff] %vm3327, %v3289
        %3335 = vst.msk [vmem:[#allocation3 + $0x38] sm:$0xff] %vm3327, %v3291
        %3336 = vst.msk [vmem:[#allocation3 + $0x40] sm:$0xff] %vm3327, %v3293
        %3337 = vst.msk [vmem:[#allocation3 + $0x48] sm:$0xff] %vm3327, %v3295
        %3338 = vst.msk [vmem:[#allocation3 + $0x50] sm:$0xff] %vm3327, %v3297
        %3339 = vst.msk [vmem:[#allocation3 + $0x58] sm:$0xff] %vm3327, %v3299
        %3340 = vst.msk [vmem:[#allocation3 + $0x60] sm:$0xff] %vm3327, %v3301
        %3341 = vst.msk [vmem:[#allocation3 + $0x68] sm:$0xff] %vm3327, %v3303
        %3342 = vst.msk [vmem:[#allocation3 + $0x70] sm:$0xff] %vm3327, %v3305
        %3343 = vst.msk [vmem:[#allocation3 + $0x78] sm:$0xff] %vm3327, %v3307
        %3344 = vst.msk [vmem:[#allocation3 + $0x80] sm:$0xff] %vm3327, %v3309
        %v3345 = vld [vmem:[#allocation2] sm:$0xfc]
        %v3346 = vld [vmem:[#allocation2 + $0x8] sm:$0xff]
        %v3347 = vld [vmem:[#allocation2 + $0x10] sm:$0xff]
        %v3348 = vld [vmem:[#allocation2 + $0x18] sm:$0xff]
        %v3349 = vld [vmem:[#allocation2 + $0x20] sm:$0xff]
        %v3350 = vld [vmem:[#allocation2 + $0x28] sm:$0xff]
        %v3351 = vld [vmem:[#allocation2 + $0x30] sm:$0xff]
        %v3352 = vld [vmem:[#allocation2 + $0x38] sm:$0xff]
        %v3353 = vld [vmem:[#allocation2 + $0x40] sm:$0xff]
        %v3354 = vld [vmem:[#allocation2 + $0x48] sm:$0xff]
        %v3355 = vld [vmem:[#allocation2 + $0x50] sm:$0xff]
        %v3356 = vld [vmem:[#allocation2 + $0x58] sm:$0xff]
        %v3357 = vld [vmem:[#allocation2 + $0x60] sm:$0xff]
        %v3358 = vld [vmem:[#allocation2 + $0x68] sm:$0xff]
        %v3359 = vld [vmem:[#allocation2 + $0x70] sm:$0xff]
        %v3360 = vld [vmem:[#allocation2 + $0x78] sm:$0xff]
        %v3361 = vld [vmem:[#allocation2 + $0x80] sm:$0xff]
        %v3362 = vld [vmem:[#allocation2 + $0x88] sm:$0x3]
        %vm3381 = vcmask 1045504
        %v3382 = vrot.slane %v3345, 2
        %v3383 = vrot.slane %v3346, 2
        %v3384 = vsel %vm3381, %v3382, %v3383
        %v3385 = vrot.slane %v3347, 2
        %v3386 = vsel %vm3381, %v3383, %v3385
        %v3387 = vrot.slane %v3348, 2
        %v3388 = vsel %vm3381, %v3385, %v3387
        %v3389 = vrot.slane %v3349, 2
        %v3390 = vsel %vm3381, %v3387, %v3389
        %v3391 = vrot.slane %v3350, 2
        %v3392 = vsel %vm3381, %v3389, %v3391
        %v3393 = vrot.slane %v3351, 2
        %v3394 = vsel %vm3381, %v3391, %v3393
        %v3395 = vrot.slane %v3352, 2
        %v3396 = vsel %vm3381, %v3393, %v3395
        %v3397 = vrot.slane %v3353, 2
        %v3398 = vsel %vm3381, %v3395, %v3397
        %v3399 = vrot.slane %v3354, 2
        %v3400 = vsel %vm3381, %v3397, %v3399
        %v3401 = vrot.slane %v3355, 2
        %v3402 = vsel %vm3381, %v3399, %v3401
        %v3403 = vrot.slane %v3356, 2
        %v3404 = vsel %vm3381, %v3401, %v3403
        %v3405 = vrot.slane %v3357, 2
        %v3406 = vsel %vm3381, %v3403, %v3405
        %v3407 = vrot.slane %v3358, 2
        %v3408 = vsel %vm3381, %v3405, %v3407
        %v3409 = vrot.slane %v3359, 2
        %v3410 = vsel %vm3381, %v3407, %v3409
        %v3411 = vrot.slane %v3360, 2
        %v3412 = vsel %vm3381, %v3409, %v3411
        %v3413 = vrot.slane %v3361, 2
        %v3414 = vsel %vm3381, %v3411, %v3413
        %v3415 = vrot.slane %v3362, 2
        %v3416 = vsel %vm3381, %v3413, %v3415
        %3417 = vrot.lane.b32.xlu0 %v3384, 12
        %v3418 = vpop.permute.xlu0 %3417
        %3419 = vrot.lane.b32.xlu0 %v3386, 12
        %v3420 = vpop.permute.xlu0 %3419
        %3421 = vrot.lane.b32.xlu0 %v3388, 12
        %v3422 = vpop.permute.xlu0 %3421
        %3423 = vrot.lane.b32.xlu0 %v3390, 12
        %v3424 = vpop.permute.xlu0 %3423
        %3425 = vrot.lane.b32.xlu0 %v3392, 12
        %v3426 = vpop.permute.xlu0 %3425
        %3427 = vrot.lane.b32.xlu0 %v3394, 12
        %v3428 = vpop.permute.xlu0 %3427
        %3429 = vrot.lane.b32.xlu0 %v3396, 12
        %v3430 = vpop.permute.xlu0 %3429
        %3431 = vrot.lane.b32.xlu0 %v3398, 12
        %v3432 = vpop.permute.xlu0 %3431
        %3433 = vrot.lane.b32.xlu0 %v3400, 12
        %v3434 = vpop.permute.xlu0 %3433
        %3435 = vrot.lane.b32.xlu0 %v3402, 12
        %v3436 = vpop.permute.xlu0 %3435
        %3437 = vrot.lane.b32.xlu0 %v3404, 12
        %v3438 = vpop.permute.xlu0 %3437
        %3439 = vrot.lane.b32.xlu0 %v3406, 12
        %v3440 = vpop.permute.xlu0 %3439
        %3441 = vrot.lane.b32.xlu0 %v3408, 12
        %v3442 = vpop.permute.xlu0 %3441
        %3443 = vrot.lane.b32.xlu0 %v3410, 12
        %v3444 = vpop.permute.xlu0 %3443
        %3445 = vrot.lane.b32.xlu0 %v3412, 12
        %v3446 = vpop.permute.xlu0 %3445
        %3447 = vrot.lane.b32.xlu0 %v3414, 12
        %v3448 = vpop.permute.xlu0 %3447
        %3449 = vrot.lane.b32.xlu0 %v3416, 12
        %v3450 = vpop.permute.xlu0 %3449
        %vm3468 = vcmask 105568
        %3469 = vst.msk [vmem:[#allocation3] sm:$0xff] %vm3468, %v3418
        %3470 = vst.msk [vmem:[#allocation3 + $0x8] sm:$0xff] %vm3468, %v3420
        %3471 = vst.msk [vmem:[#allocation3 + $0x10] sm:$0xff] %vm3468, %v3422
        %3472 = vst.msk [vmem:[#allocation3 + $0x18] sm:$0xff] %vm3468, %v3424
        %3473 = vst.msk [vmem:[#allocation3 + $0x20] sm:$0xff] %vm3468, %v3426
        %3474 = vst.msk [vmem:[#allocation3 + $0x28] sm:$0xff] %vm3468, %v3428
        %3475 = vst.msk [vmem:[#allocation3 + $0x30] sm:$0xff] %vm3468, %v3430
        %3476 = vst.msk [vmem:[#allocation3 + $0x38] sm:$0xff] %vm3468, %v3432
        %3477 = vst.msk [vmem:[#allocation3 + $0x40] sm:$0xff] %vm3468, %v3434
        %3478 = vst.msk [vmem:[#allocation3 + $0x48] sm:$0xff] %vm3468, %v3436
        %3479 = vst.msk [vmem:[#allocation3 + $0x50] sm:$0xff] %vm3468, %v3438
        %3480 = vst.msk [vmem:[#allocation3 + $0x58] sm:$0xff] %vm3468, %v3440
        %3481 = vst.msk [vmem:[#allocation3 + $0x60] sm:$0xff] %vm3468, %v3442
        %3482 = vst.msk [vmem:[#allocation3 + $0x68] sm:$0xff] %vm3468, %v3444
        %3483 = vst.msk [vmem:[#allocation3 + $0x70] sm:$0xff] %vm3468, %v3446
        %3484 = vst.msk [vmem:[#allocation3 + $0x78] sm:$0xff] %vm3468, %v3448
        %3485 = vst.msk [vmem:[#allocation3 + $0x80] sm:$0xff] %vm3468, %v3450
        %v3486 = vld [vmem:[%s1289] sm:$0xfc]
        %v3487 = vld [vmem:[%s1289 + $0x8] sm:$0xff]
        %v3488 = vld [vmem:[%s1289 + $0x10] sm:$0xff]
        %v3489 = vld [vmem:[%s1289 + $0x18] sm:$0xff]
        %v3490 = vld [vmem:[%s1289 + $0x20] sm:$0xff]
        %v3491 = vld [vmem:[%s1289 + $0x28] sm:$0xff]
        %v3492 = vld [vmem:[%s1289 + $0x30] sm:$0xff]
        %v3493 = vld [vmem:[%s1289 + $0x38] sm:$0xff]
        %v3494 = vld [vmem:[%s1289 + $0x40] sm:$0xff]
        %v3495 = vld [vmem:[%s1289 + $0x48] sm:$0xff]
        %v3496 = vld [vmem:[%s1289 + $0x50] sm:$0xff]
        %v3497 = vld [vmem:[%s1289 + $0x58] sm:$0xff]
        %v3498 = vld [vmem:[%s1289 + $0x60] sm:$0xff]
        %v3499 = vld [vmem:[%s1289 + $0x68] sm:$0xff]
        %v3500 = vld [vmem:[%s1289 + $0x70] sm:$0xff]
        %v3501 = vld [vmem:[%s1289 + $0x78] sm:$0xff]
        %v3502 = vld [vmem:[%s1289 + $0x80] sm:$0xff]
        %v3503 = vld [vmem:[%s1289 + $0x88] sm:$0x3]
        %v3522 = vrot.slane %v3486, 2
        %v3523 = vrot.slane %v3487, 2
        %v3524 = vsel %vm3381, %v3522, %v3523
        %v3525 = vrot.slane %v3488, 2
        %v3526 = vsel %vm3381, %v3523, %v3525
        %v3527 = vrot.slane %v3489, 2
        %v3528 = vsel %vm3381, %v3525, %v3527
        %v3529 = vrot.slane %v3490, 2
        %v3530 = vsel %vm3381, %v3527, %v3529
        %v3531 = vrot.slane %v3491, 2
        %v3532 = vsel %vm3381, %v3529, %v3531
        %v3533 = vrot.slane %v3492, 2
        %v3534 = vsel %vm3381, %v3531, %v3533
        %v3535 = vrot.slane %v3493, 2
        %v3536 = vsel %vm3381, %v3533, %v3535
        %v3537 = vrot.slane %v3494, 2
        %v3538 = vsel %vm3381, %v3535, %v3537
        %v3539 = vrot.slane %v3495, 2
        %v3540 = vsel %vm3381, %v3537, %v3539
        %v3541 = vrot.slane %v3496, 2
        %v3542 = vsel %vm3381, %v3539, %v3541
        %v3543 = vrot.slane %v3497, 2
        %v3544 = vsel %vm3381, %v3541, %v3543
        %v3545 = vrot.slane %v3498, 2
        %v3546 = vsel %vm3381, %v3543, %v3545
        %v3547 = vrot.slane %v3499, 2
        %v3548 = vsel %vm3381, %v3545, %v3547
        %v3549 = vrot.slane %v3500, 2
        %v3550 = vsel %vm3381, %v3547, %v3549
        %v3551 = vrot.slane %v3501, 2
        %v3552 = vsel %vm3381, %v3549, %v3551
        %v3553 = vrot.slane %v3502, 2
        %v3554 = vsel %vm3381, %v3551, %v3553
        %v3555 = vrot.slane %v3503, 2
        %v3556 = vsel %vm3381, %v3553, %v3555
        %3557 = vrot.lane.b32.xlu0 %v3524, 13
        %v3558 = vpop.permute.xlu0 %3557
        %3559 = vrot.lane.b32.xlu0 %v3526, 13
        %v3560 = vpop.permute.xlu0 %3559
        %3561 = vrot.lane.b32.xlu0 %v3528, 13
        %v3562 = vpop.permute.xlu0 %3561
        %3563 = vrot.lane.b32.xlu0 %v3530, 13
        %v3564 = vpop.permute.xlu0 %3563
        %3565 = vrot.lane.b32.xlu0 %v3532, 13
        %v3566 = vpop.permute.xlu0 %3565
        %3567 = vrot.lane.b32.xlu0 %v3534, 13
        %v3568 = vpop.permute.xlu0 %3567
        %3569 = vrot.lane.b32.xlu0 %v3536, 13
        %v3570 = vpop.permute.xlu0 %3569
        %3571 = vrot.lane.b32.xlu0 %v3538, 13
        %v3572 = vpop.permute.xlu0 %3571
        %3573 = vrot.lane.b32.xlu0 %v3540, 13
        %v3574 = vpop.permute.xlu0 %3573
        %3575 = vrot.lane.b32.xlu0 %v3542, 13
        %v3576 = vpop.permute.xlu0 %3575
        %3577 = vrot.lane.b32.xlu0 %v3544, 13
        %v3578 = vpop.permute.xlu0 %3577
        %3579 = vrot.lane.b32.xlu0 %v3546, 13
        %v3580 = vpop.permute.xlu0 %3579
        %3581 = vrot.lane.b32.xlu0 %v3548, 13
        %v3582 = vpop.permute.xlu0 %3581
        %3583 = vrot.lane.b32.xlu0 %v3550, 13
        %v3584 = vpop.permute.xlu0 %3583
        %3585 = vrot.lane.b32.xlu0 %v3552, 13
        %v3586 = vpop.permute.xlu0 %3585
        %3587 = vrot.lane.b32.xlu0 %v3554, 13
        %v3588 = vpop.permute.xlu0 %3587
        %3589 = vrot.lane.b32.xlu0 %v3556, 13
        %v3590 = vpop.permute.xlu0 %3589
        %vm3608 = vcmask 113768
        %3609 = vst.msk [vmem:[#allocation3] sm:$0xff] %vm3608, %v3558
        %3610 = vst.msk [vmem:[#allocation3 + $0x8] sm:$0xff] %vm3608, %v3560
        %3611 = vst.msk [vmem:[#allocation3 + $0x10] sm:$0xff] %vm3608, %v3562
        %3612 = vst.msk [vmem:[#allocation3 + $0x18] sm:$0xff] %vm3608, %v3564
        %3613 = vst.msk [vmem:[#allocation3 + $0x20] sm:$0xff] %vm3608, %v3566
        %3614 = vst.msk [vmem:[#allocation3 + $0x28] sm:$0xff] %vm3608, %v3568
        %3615 = vst.msk [vmem:[#allocation3 + $0x30] sm:$0xff] %vm3608, %v3570
        %3616 = vst.msk [vmem:[#allocation3 + $0x38] sm:$0xff] %vm3608, %v3572
        %3617 = vst.msk [vmem:[#allocation3 + $0x40] sm:$0xff] %vm3608, %v3574
        %3618 = vst.msk [vmem:[#allocation3 + $0x48] sm:$0xff] %vm3608, %v3576
        %3619 = vst.msk [vmem:[#allocation3 + $0x50] sm:$0xff] %vm3608, %v3578
        %3620 = vst.msk [vmem:[#allocation3 + $0x58] sm:$0xff] %vm3608, %v3580
        %3621 = vst.msk [vmem:[#allocation3 + $0x60] sm:$0xff] %vm3608, %v3582
        %3622 = vst.msk [vmem:[#allocation3 + $0x68] sm:$0xff] %vm3608, %v3584
        %3623 = vst.msk [vmem:[#allocation3 + $0x70] sm:$0xff] %vm3608, %v3586
        %3624 = vst.msk [vmem:[#allocation3 + $0x78] sm:$0xff] %vm3608, %v3588
        %3625 = vst.msk [vmem:[#allocation3 + $0x80] sm:$0xff] %vm3608, %v3590
        %v3626 = vld [vmem:[%s1393] sm:$0xfc]
        %v3627 = vld [vmem:[%s1393 + $0x8] sm:$0xff]
        %v3628 = vld [vmem:[%s1393 + $0x10] sm:$0xff]
        %v3629 = vld [vmem:[%s1393 + $0x18] sm:$0xff]
        %v3630 = vld [vmem:[%s1393 + $0x20] sm:$0xff]
        %v3631 = vld [vmem:[%s1393 + $0x28] sm:$0xff]
        %v3632 = vld [vmem:[%s1393 + $0x30] sm:$0xff]
        %v3633 = vld [vmem:[%s1393 + $0x38] sm:$0xff]
        %v3634 = vld [vmem:[%s1393 + $0x40] sm:$0xff]
        %v3635 = vld [vmem:[%s1393 + $0x48] sm:$0xff]
        %v3636 = vld [vmem:[%s1393 + $0x50] sm:$0xff]
        %v3637 = vld [vmem:[%s1393 + $0x58] sm:$0xff]
        %v3638 = vld [vmem:[%s1393 + $0x60] sm:$0xff]
        %v3639 = vld [vmem:[%s1393 + $0x68] sm:$0xff]
        %v3640 = vld [vmem:[%s1393 + $0x70] sm:$0xff]
        %v3641 = vld [vmem:[%s1393 + $0x78] sm:$0xff]
        %v3642 = vld [vmem:[%s1393 + $0x80] sm:$0xff]
        %v3643 = vld [vmem:[%s1393 + $0x88] sm:$0x3]
        %v3662 = vrot.slane %v3626, 2
        %v3663 = vrot.slane %v3627, 2
        %v3664 = vsel %vm3381, %v3662, %v3663
        %v3665 = vrot.slane %v3628, 2
        %v3666 = vsel %vm3381, %v3663, %v3665
        %v3667 = vrot.slane %v3629, 2
        %v3668 = vsel %vm3381, %v3665, %v3667
        %v3669 = vrot.slane %v3630, 2
        %v3670 = vsel %vm3381, %v3667, %v3669
        %v3671 = vrot.slane %v3631, 2
        %v3672 = vsel %vm3381, %v3669, %v3671
        %v3673 = vrot.slane %v3632, 2
        %v3674 = vsel %vm3381, %v3671, %v3673
        %v3675 = vrot.slane %v3633, 2
        %v3676 = vsel %vm3381, %v3673, %v3675
        %v3677 = vrot.slane %v3634, 2
        %v3678 = vsel %vm3381, %v3675, %v3677
        %v3679 = vrot.slane %v3635, 2
        %v3680 = vsel %vm3381, %v3677, %v3679
        %v3681 = vrot.slane %v3636, 2
        %v3682 = vsel %vm3381, %v3679, %v3681
        %v3683 = vrot.slane %v3637, 2
        %v3684 = vsel %vm3381, %v3681, %v3683
        %v3685 = vrot.slane %v3638, 2
        %v3686 = vsel %vm3381, %v3683, %v3685
        %v3687 = vrot.slane %v3639, 2
        %v3688 = vsel %vm3381, %v3685, %v3687
        %v3689 = vrot.slane %v3640, 2
        %v3690 = vsel %vm3381, %v3687, %v3689
        %v3691 = vrot.slane %v3641, 2
        %v3692 = vsel %vm3381, %v3689, %v3691
        %v3693 = vrot.slane %v3642, 2
        %v3694 = vsel %vm3381, %v3691, %v3693
        %v3695 = vrot.slane %v3643, 2
        %v3696 = vsel %vm3381, %v3693, %v3695
        %3697 = vrot.lane.b32.xlu0 %v3664, 14
        %v3698 = vpop.permute.xlu0 %3697
        %3699 = vrot.lane.b32.xlu0 %v3666, 14
        %v3700 = vpop.permute.xlu0 %3699
        %3701 = vrot.lane.b32.xlu0 %v3668, 14
        %v3702 = vpop.permute.xlu0 %3701
        %3703 = vrot.lane.b32.xlu0 %v3670, 14
        %v3704 = vpop.permute.xlu0 %3703
        %3705 = vrot.lane.b32.xlu0 %v3672, 14
        %v3706 = vpop.permute.xlu0 %3705
        %3707 = vrot.lane.b32.xlu0 %v3674, 14
        %v3708 = vpop.permute.xlu0 %3707
        %3709 = vrot.lane.b32.xlu0 %v3676, 14
        %v3710 = vpop.permute.xlu0 %3709
        %3711 = vrot.lane.b32.xlu0 %v3678, 14
        %v3712 = vpop.permute.xlu0 %3711
        %3713 = vrot.lane.b32.xlu0 %v3680, 14
        %v3714 = vpop.permute.xlu0 %3713
        %3715 = vrot.lane.b32.xlu0 %v3682, 14
        %v3716 = vpop.permute.xlu0 %3715
        %3717 = vrot.lane.b32.xlu0 %v3684, 14
        %v3718 = vpop.permute.xlu0 %3717
        %3719 = vrot.lane.b32.xlu0 %v3686, 14
        %v3720 = vpop.permute.xlu0 %3719
        %3721 = vrot.lane.b32.xlu0 %v3688, 14
        %v3722 = vpop.permute.xlu0 %3721
        %3723 = vrot.lane.b32.xlu0 %v3690, 14
        %v3724 = vpop.permute.xlu0 %3723
        %3725 = vrot.lane.b32.xlu0 %v3692, 14
        %v3726 = vpop.permute.xlu0 %3725
        %3727 = vrot.lane.b32.xlu0 %v3694, 14
        %v3728 = vpop.permute.xlu0 %3727
        %3729 = vrot.lane.b32.xlu0 %v3696, 14
        %v3730 = vpop.permute.xlu0 %3729
        %vm3748 = vcmask 121968
        %3749 = vst.msk [vmem:[#allocation3] sm:$0xff] %vm3748, %v3698
        %3750 = vst.msk [vmem:[#allocation3 + $0x8] sm:$0xff] %vm3748, %v3700
        %3751 = vst.msk [vmem:[#allocation3 + $0x10] sm:$0xff] %vm3748, %v3702
        %3752 = vst.msk [vmem:[#allocation3 + $0x18] sm:$0xff] %vm3748, %v3704
        %3753 = vst.msk [vmem:[#allocation3 + $0x20] sm:$0xff] %vm3748, %v3706
        %3754 = vst.msk [vmem:[#allocation3 + $0x28] sm:$0xff] %vm3748, %v3708
        %3755 = vst.msk [vmem:[#allocation3 + $0x30] sm:$0xff] %vm3748, %v3710
        %3756 = vst.msk [vmem:[#allocation3 + $0x38] sm:$0xff] %vm3748, %v3712
        %3757 = vst.msk [vmem:[#allocation3 + $0x40] sm:$0xff] %vm3748, %v3714
        %3758 = vst.msk [vmem:[#allocation3 + $0x48] sm:$0xff] %vm3748, %v3716
        %3759 = vst.msk [vmem:[#allocation3 + $0x50] sm:$0xff] %vm3748, %v3718
        %3760 = vst.msk [vmem:[#allocation3 + $0x58] sm:$0xff] %vm3748, %v3720
        %3761 = vst.msk [vmem:[#allocation3 + $0x60] sm:$0xff] %vm3748, %v3722
        %3762 = vst.msk [vmem:[#allocation3 + $0x68] sm:$0xff] %vm3748, %v3724
        %3763 = vst.msk [vmem:[#allocation3 + $0x70] sm:$0xff] %vm3748, %v3726
        %3764 = vst.msk [vmem:[#allocation3 + $0x78] sm:$0xff] %vm3748, %v3728
        %3765 = vst.msk [vmem:[#allocation3 + $0x80] sm:$0xff] %vm3748, %v3730
        %v3766 = vld [vmem:[#allocation2] sm:$0xfc]
        %v3767 = vld [vmem:[#allocation2 + $0x8] sm:$0xff]
        %v3768 = vld [vmem:[#allocation2 + $0x10] sm:$0xff]
        %v3769 = vld [vmem:[#allocation2 + $0x18] sm:$0xff]
        %v3770 = vld [vmem:[#allocation2 + $0x20] sm:$0xff]
        %v3771 = vld [vmem:[#allocation2 + $0x28] sm:$0xff]
        %v3772 = vld [vmem:[#allocation2 + $0x30] sm:$0xff]
        %v3773 = vld [vmem:[#allocation2 + $0x38] sm:$0xff]
        %v3774 = vld [vmem:[#allocation2 + $0x40] sm:$0xff]
        %v3775 = vld [vmem:[#allocation2 + $0x48] sm:$0xff]
        %v3776 = vld [vmem:[#allocation2 + $0x50] sm:$0xff]
        %v3777 = vld [vmem:[#allocation2 + $0x58] sm:$0xff]
        %v3778 = vld [vmem:[#allocation2 + $0x60] sm:$0xff]
        %v3779 = vld [vmem:[#allocation2 + $0x68] sm:$0xff]
        %v3780 = vld [vmem:[#allocation2 + $0x70] sm:$0xff]
        %v3781 = vld [vmem:[#allocation2 + $0x78] sm:$0xff]
        %v3782 = vld [vmem:[#allocation2 + $0x80] sm:$0xff]
        %v3783 = vld [vmem:[#allocation2 + $0x88] sm:$0x7]
        %vm3784 = vsmask.f32 5376
        %v3786 = vshrl.u32 %v3766, 16
        %v3788 = vrot.slane %v3786, 2
        %v3789 = vshll.u32 %v3766, 16
        %v3791 = vrot.slane %v3789, 3
        %v3792 = vor.u32 %v3788, %v3791
        %v3794 = vshrl.u32 %v3767, 16
        %v3796 = vrot.slane %v3794, 2
        %v3797 = vshll.u32 %v3767, 16
        %v3799 = vrot.slane %v3797, 3
        %v3800 = vor.u32 %v3796, %v3799
        %v3801 = vsel %vm3784, %v3792, %v3800
        %v3803 = vshrl.u32 %v3768, 16
        %v3805 = vrot.slane %v3803, 2
        %v3806 = vshll.u32 %v3768, 16
        %v3808 = vrot.slane %v3806, 3
        %v3809 = vor.u32 %v3805, %v3808
        %v3810 = vsel %vm3784, %v3800, %v3809
        %v3812 = vshrl.u32 %v3769, 16
        %v3814 = vrot.slane %v3812, 2
        %v3815 = vshll.u32 %v3769, 16
        %v3817 = vrot.slane %v3815, 3
        %v3818 = vor.u32 %v3814, %v3817
        %v3819 = vsel %vm3784, %v3809, %v3818
        %v3821 = vshrl.u32 %v3770, 16
        %v3823 = vrot.slane %v3821, 2
        %v3824 = vshll.u32 %v3770, 16
        %v3826 = vrot.slane %v3824, 3
        %v3827 = vor.u32 %v3823, %v3826
        %v3828 = vsel %vm3784, %v3818, %v3827
        %v3830 = vshrl.u32 %v3771, 16
        %v3832 = vrot.slane %v3830, 2
        %v3833 = vshll.u32 %v3771, 16
        %v3835 = vrot.slane %v3833, 3
        %v3836 = vor.u32 %v3832, %v3835
        %v3837 = vsel %vm3784, %v3827, %v3836
        %v3839 = vshrl.u32 %v3772, 16
        %v3841 = vrot.slane %v3839, 2
        %v3842 = vshll.u32 %v3772, 16
        %v3844 = vrot.slane %v3842, 3
        %v3845 = vor.u32 %v3841, %v3844
        %v3846 = vsel %vm3784, %v3836, %v3845
        %v3848 = vshrl.u32 %v3773, 16
        %v3850 = vrot.slane %v3848, 2
        %v3851 = vshll.u32 %v3773, 16
        %v3853 = vrot.slane %v3851, 3
        %v3854 = vor.u32 %v3850, %v3853
        %v3855 = vsel %vm3784, %v3845, %v3854
        %v3857 = vshrl.u32 %v3774, 16
        %v3859 = vrot.slane %v3857, 2
        %v3860 = vshll.u32 %v3774, 16
        %v3862 = vrot.slane %v3860, 3
        %v3863 = vor.u32 %v3859, %v3862
        %v3864 = vsel %vm3784, %v3854, %v3863
        %v3866 = vshrl.u32 %v3775, 16
        %v3868 = vrot.slane %v3866, 2
        %v3869 = vshll.u32 %v3775, 16
        %v3871 = vrot.slane %v3869, 3
        %v3872 = vor.u32 %v3868, %v3871
        %v3873 = vsel %vm3784, %v3863, %v3872
        %v3875 = vshrl.u32 %v3776, 16
        %v3877 = vrot.slane %v3875, 2
        %v3878 = vshll.u32 %v3776, 16
        %v3880 = vrot.slane %v3878, 3
        %v3881 = vor.u32 %v3877, %v3880
        %v3882 = vsel %vm3784, %v3872, %v3881
        %v3884 = vshrl.u32 %v3777, 16
        %v3886 = vrot.slane %v3884, 2
        %v3887 = vshll.u32 %v3777, 16
        %v3889 = vrot.slane %v3887, 3
        %v3890 = vor.u32 %v3886, %v3889
        %v3891 = vsel %vm3784, %v3881, %v3890
        %v3893 = vshrl.u32 %v3778, 16
        %v3895 = vrot.slane %v3893, 2
        %v3896 = vshll.u32 %v3778, 16
        %v3898 = vrot.slane %v3896, 3
        %v3899 = vor.u32 %v3895, %v3898
        %v3900 = vsel %vm3784, %v3890, %v3899
        %v3902 = vshrl.u32 %v3779, 16
        %v3904 = vrot.slane %v3902, 2
        %v3905 = vshll.u32 %v3779, 16
        %v3907 = vrot.slane %v3905, 3
        %v3908 = vor.u32 %v3904, %v3907
        %v3909 = vsel %vm3784, %v3899, %v3908
        %v3911 = vshrl.u32 %v3780, 16
        %v3913 = vrot.slane %v3911, 2
        %v3914 = vshll.u32 %v3780, 16
        %v3916 = vrot.slane %v3914, 3
        %v3917 = vor.u32 %v3913, %v3916
        %v3918 = vsel %vm3784, %v3908, %v3917
        %v3920 = vshrl.u32 %v3781, 16
        %v3922 = vrot.slane %v3920, 2
        %v3923 = vshll.u32 %v3781, 16
        %v3925 = vrot.slane %v3923, 3
        %v3926 = vor.u32 %v3922, %v3925
        %v3927 = vsel %vm3784, %v3917, %v3926
        %v3929 = vshrl.u32 %v3782, 16
        %v3931 = vrot.slane %v3929, 2
        %v3932 = vshll.u32 %v3782, 16
        %v3934 = vrot.slane %v3932, 3
        %v3935 = vor.u32 %v3931, %v3934
        %v3936 = vsel %vm3784, %v3926, %v3935
        %v3938 = vshrl.u32 %v3783, 16
        %v3940 = vrot.slane %v3938, 2
        %v3941 = vshll.u32 %v3783, 16
        %v3943 = vrot.slane %v3941, 3
        %v3944 = vor.u32 %v3940, %v3943
        %v3945 = vsel %vm3784, %v3935, %v3944
        %3946 = vrot.lane.b32.xlu0 %v3801, 15
        %v3947 = vpop.permute.xlu0 %3946
        %3948 = vrot.lane.b32.xlu0 %v3810, 15
        %v3949 = vpop.permute.xlu0 %3948
        %3950 = vrot.lane.b32.xlu0 %v3819, 15
        %v3951 = vpop.permute.xlu0 %3950
        %3952 = vrot.lane.b32.xlu0 %v3828, 15
        %v3953 = vpop.permute.xlu0 %3952
        %3954 = vrot.lane.b32.xlu0 %v3837, 15
        %v3955 = vpop.permute.xlu0 %3954
        %3956 = vrot.lane.b32.xlu0 %v3846, 15
        %v3957 = vpop.permute.xlu0 %3956
        %3958 = vrot.lane.b32.xlu0 %v3855, 15
        %v3959 = vpop.permute.xlu0 %3958
        %3960 = vrot.lane.b32.xlu0 %v3864, 15
        %v3961 = vpop.permute.xlu0 %3960
        %3962 = vrot.lane.b32.xlu0 %v3873, 15
        %v3963 = vpop.permute.xlu0 %3962
        %3964 = vrot.lane.b32.xlu0 %v3882, 15
        %v3965 = vpop.permute.xlu0 %3964
        %3966 = vrot.lane.b32.xlu0 %v3891, 15
        %v3967 = vpop.permute.xlu0 %3966
        %3968 = vrot.lane.b32.xlu0 %v3900, 15
        %v3969 = vpop.permute.xlu0 %3968
        %3970 = vrot.lane.b32.xlu0 %v3909, 15
        %v3971 = vpop.permute.xlu0 %3970
        %3972 = vrot.lane.b32.xlu0 %v3918, 15
        %v3973 = vpop.permute.xlu0 %3972
        %3974 = vrot.lane.b32.xlu0 %v3927, 15
        %v3975 = vpop.permute.xlu0 %3974
        %3976 = vrot.lane.b32.xlu0 %v3936, 15
        %v3977 = vpop.permute.xlu0 %3976
        %3978 = vrot.lane.b32.xlu0 %v3945, 15
        %v3979 = vpop.permute.xlu0 %3978
        %vm3997 = vcmask 130168
        %3998 = vst.msk [vmem:[#allocation3] sm:$0xff] %vm3997, %v3947
        %3999 = vst.msk [vmem:[#allocation3 + $0x8] sm:$0xff] %vm3997, %v3949
        %4000 = vst.msk [vmem:[#allocation3 + $0x10] sm:$0xff] %vm3997, %v3951
        %4001 = vst.msk [vmem:[#allocation3 + $0x18] sm:$0xff] %vm3997, %v3953
        %4002 = vst.msk [vmem:[#allocation3 + $0x20] sm:$0xff] %vm3997, %v3955
        %4003 = vst.msk [vmem:[#allocation3 + $0x28] sm:$0xff] %vm3997, %v3957
        %4004 = vst.msk [vmem:[#allocation3 + $0x30] sm:$0xff] %vm3997, %v3959
        %4005 = vst.msk [vmem:[#allocation3 + $0x38] sm:$0xff] %vm3997, %v3961
        %4006 = vst.msk [vmem:[#allocation3 + $0x40] sm:$0xff] %vm3997, %v3963
        %4007 = vst.msk [vmem:[#allocation3 + $0x48] sm:$0xff] %vm3997, %v3965
        %4008 = vst.msk [vmem:[#allocation3 + $0x50] sm:$0xff] %vm3997, %v3967
        %4009 = vst.msk [vmem:[#allocation3 + $0x58] sm:$0xff] %vm3997, %v3969
        %4010 = vst.msk [vmem:[#allocation3 + $0x60] sm:$0xff] %vm3997, %v3971
        %4011 = vst.msk [vmem:[#allocation3 + $0x68] sm:$0xff] %vm3997, %v3973
        %4012 = vst.msk [vmem:[#allocation3 + $0x70] sm:$0xff] %vm3997, %v3975
        %4013 = vst.msk [vmem:[#allocation3 + $0x78] sm:$0xff] %vm3997, %v3977
        %4014 = vst.msk [vmem:[#allocation3 + $0x80] sm:$0xff] %vm3997, %v3979
        %v4015 = vld [vmem:[%s1289] sm:$0xfc]
        %v4016 = vld [vmem:[%s1289 + $0x8] sm:$0xff]
        %v4017 = vld [vmem:[%s1289 + $0x10] sm:$0xff]
        %v4018 = vld [vmem:[%s1289 + $0x18] sm:$0xff]
        %v4019 = vld [vmem:[%s1289 + $0x20] sm:$0xff]
        %v4020 = vld [vmem:[%s1289 + $0x28] sm:$0xff]
        %v4021 = vld [vmem:[%s1289 + $0x30] sm:$0xff]
        %v4022 = vld [vmem:[%s1289 + $0x38] sm:$0xff]
        %v4023 = vld [vmem:[%s1289 + $0x40] sm:$0xff]
        %v4024 = vld [vmem:[%s1289 + $0x48] sm:$0xff]
        %v4025 = vld [vmem:[%s1289 + $0x50] sm:$0xff]
        %v4026 = vld [vmem:[%s1289 + $0x58] sm:$0xff]
        %v4027 = vld [vmem:[%s1289 + $0x60] sm:$0xff]
        %v4028 = vld [vmem:[%s1289 + $0x68] sm:$0xff]
        %v4029 = vld [vmem:[%s1289 + $0x70] sm:$0xff]
        %v4030 = vld [vmem:[%s1289 + $0x78] sm:$0xff]
        %v4031 = vld [vmem:[%s1289 + $0x80] sm:$0xff]
        %v4032 = vld [vmem:[%s1289 + $0x88] sm:$0x7]
        %v4034 = vshrl.u32 %v4015, 16
        %v4036 = vrot.slane %v4034, 2
        %v4037 = vshll.u32 %v4015, 16
        %v4039 = vrot.slane %v4037, 3
        %v4040 = vor.u32 %v4036, %v4039
        %v4042 = vshrl.u32 %v4016, 16
        %v4044 = vrot.slane %v4042, 2
        %v4045 = vshll.u32 %v4016, 16
        %v4047 = vrot.slane %v4045, 3
        %v4048 = vor.u32 %v4044, %v4047
        %v4049 = vsel %vm3784, %v4040, %v4048
        %v4051 = vshrl.u32 %v4017, 16
        %v4053 = vrot.slane %v4051, 2
        %v4054 = vshll.u32 %v4017, 16
        %v4056 = vrot.slane %v4054, 3
        %v4057 = vor.u32 %v4053, %v4056
        %v4058 = vsel %vm3784, %v4048, %v4057
        %v4060 = vshrl.u32 %v4018, 16
        %v4062 = vrot.slane %v4060, 2
        %v4063 = vshll.u32 %v4018, 16
        %v4065 = vrot.slane %v4063, 3
        %v4066 = vor.u32 %v4062, %v4065
        %v4067 = vsel %vm3784, %v4057, %v4066
        %v4069 = vshrl.u32 %v4019, 16
        %v4071 = vrot.slane %v4069, 2
        %v4072 = vshll.u32 %v4019, 16
        %v4074 = vrot.slane %v4072, 3
        %v4075 = vor.u32 %v4071, %v4074
        %v4076 = vsel %vm3784, %v4066, %v4075
        %v4078 = vshrl.u32 %v4020, 16
        %v4080 = vrot.slane %v4078, 2
        %v4081 = vshll.u32 %v4020, 16
        %v4083 = vrot.slane %v4081, 3
        %v4084 = vor.u32 %v4080, %v4083
        %v4085 = vsel %vm3784, %v4075, %v4084
        %v4087 = vshrl.u32 %v4021, 16
        %v4089 = vrot.slane %v4087, 2
        %v4090 = vshll.u32 %v4021, 16
        %v4092 = vrot.slane %v4090, 3
        %v4093 = vor.u32 %v4089, %v4092
        %v4094 = vsel %vm3784, %v4084, %v4093
        %v4096 = vshrl.u32 %v4022, 16
        %v4098 = vrot.slane %v4096, 2
        %v4099 = vshll.u32 %v4022, 16
        %v4101 = vrot.slane %v4099, 3
        %v4102 = vor.u32 %v4098, %v4101
        %v4103 = vsel %vm3784, %v4093, %v4102
        %v4105 = vshrl.u32 %v4023, 16
        %v4107 = vrot.slane %v4105, 2
        %v4108 = vshll.u32 %v4023, 16
        %v4110 = vrot.slane %v4108, 3
        %v4111 = vor.u32 %v4107, %v4110
        %v4112 = vsel %vm3784, %v4102, %v4111
        %v4114 = vshrl.u32 %v4024, 16
        %v4116 = vrot.slane %v4114, 2
        %v4117 = vshll.u32 %v4024, 16
        %v4119 = vrot.slane %v4117, 3
        %v4120 = vor.u32 %v4116, %v4119
        %v4121 = vsel %vm3784, %v4111, %v4120
        %v4123 = vshrl.u32 %v4025, 16
        %v4125 = vrot.slane %v4123, 2
        %v4126 = vshll.u32 %v4025, 16
        %v4128 = vrot.slane %v4126, 3
        %v4129 = vor.u32 %v4125, %v4128
        %v4130 = vsel %vm3784, %v4120, %v4129
        %v4132 = vshrl.u32 %v4026, 16
        %v4134 = vrot.slane %v4132, 2
        %v4135 = vshll.u32 %v4026, 16
        %v4137 = vrot.slane %v4135, 3
        %v4138 = vor.u32 %v4134, %v4137
        %v4139 = vsel %vm3784, %v4129, %v4138
        %v4141 = vshrl.u32 %v4027, 16
        %v4143 = vrot.slane %v4141, 2
        %v4144 = vshll.u32 %v4027, 16
        %v4146 = vrot.slane %v4144, 3
        %v4147 = vor.u32 %v4143, %v4146
        %v4148 = vsel %vm3784, %v4138, %v4147
        %v4150 = vshrl.u32 %v4028, 16
        %v4152 = vrot.slane %v4150, 2
        %v4153 = vshll.u32 %v4028, 16
        %v4155 = vrot.slane %v4153, 3
        %v4156 = vor.u32 %v4152, %v4155
        %v4157 = vsel %vm3784, %v4147, %v4156
        %v4159 = vshrl.u32 %v4029, 16
        %v4161 = vrot.slane %v4159, 2
        %v4162 = vshll.u32 %v4029, 16
        %v4164 = vrot.slane %v4162, 3
        %v4165 = vor.u32 %v4161, %v4164
        %v4166 = vsel %vm3784, %v4156, %v4165
        %v4168 = vshrl.u32 %v4030, 16
        %v4170 = vrot.slane %v4168, 2
        %v4171 = vshll.u32 %v4030, 16
        %v4173 = vrot.slane %v4171, 3
        %v4174 = vor.u32 %v4170, %v4173
        %v4175 = vsel %vm3784, %v4165, %v4174
        %v4177 = vshrl.u32 %v4031, 16
        %v4179 = vrot.slane %v4177, 2
        %v4180 = vshll.u32 %v4031, 16
        %v4182 = vrot.slane %v4180, 3
        %v4183 = vor.u32 %v4179, %v4182
        %v4184 = vsel %vm3784, %v4174, %v4183
        %v4186 = vshrl.u32 %v4032, 16
        %v4188 = vrot.slane %v4186, 2
        %v4189 = vshll.u32 %v4032, 16
        %v4191 = vrot.slane %v4189, 3
        %v4192 = vor.u32 %v4188, %v4191
        %v4193 = vsel %vm3784, %v4183, %v4192
        %4194 = vrot.lane.b32.xlu0 %v4049, 16
        %v4195 = vpop.permute.xlu0 %4194
        %4196 = vrot.lane.b32.xlu0 %v4058, 16
        %v4197 = vpop.permute.xlu0 %4196
        %4198 = vrot.lane.b32.xlu0 %v4067, 16
        %v4199 = vpop.permute.xlu0 %4198
        %4200 = vrot.lane.b32.xlu0 %v4076, 16
        %v4201 = vpop.permute.xlu0 %4200
        %4202 = vrot.lane.b32.xlu0 %v4085, 16
        %v4203 = vpop.permute.xlu0 %4202
        %4204 = vrot.lane.b32.xlu0 %v4094, 16
        %v4205 = vpop.permute.xlu0 %4204
        %4206 = vrot.lane.b32.xlu0 %v4103, 16
        %v4207 = vpop.permute.xlu0 %4206
        %4208 = vrot.lane.b32.xlu0 %v4112, 16
        %v4209 = vpop.permute.xlu0 %4208
        %4210 = vrot.lane.b32.xlu0 %v4121, 16
        %v4211 = vpop.permute.xlu0 %4210
        %4212 = vrot.lane.b32.xlu0 %v4130, 16
        %v4213 = vpop.permute.xlu0 %4212
        %4214 = vrot.lane.b32.xlu0 %v4139, 16
        %v4215 = vpop.permute.xlu0 %4214
        %4216 = vrot.lane.b32.xlu0 %v4148, 16
        %v4217 = vpop.permute.xlu0 %4216
        %4218 = vrot.lane.b32.xlu0 %v4157, 16
        %v4219 = vpop.permute.xlu0 %4218
        %4220 = vrot.lane.b32.xlu0 %v4166, 16
        %v4221 = vpop.permute.xlu0 %4220
        %4222 = vrot.lane.b32.xlu0 %v4175, 16
        %v4223 = vpop.permute.xlu0 %4222
        %4224 = vrot.lane.b32.xlu0 %v4184, 16
        %v4225 = vpop.permute.xlu0 %4224
        %4226 = vrot.lane.b32.xlu0 %v4193, 16
        %v4227 = vpop.permute.xlu0 %4226
        %vm4245 = vcmask 138368
        %4246 = vst.msk [vmem:[#allocation3] sm:$0xff] %vm4245, %v4195
        %4247 = vst.msk [vmem:[#allocation3 + $0x8] sm:$0xff] %vm4245, %v4197
        %4248 = vst.msk [vmem:[#allocation3 + $0x10] sm:$0xff] %vm4245, %v4199
        %4249 = vst.msk [vmem:[#allocation3 + $0x18] sm:$0xff] %vm4245, %v4201
        %4250 = vst.msk [vmem:[#allocation3 + $0x20] sm:$0xff] %vm4245, %v4203
        %4251 = vst.msk [vmem:[#allocation3 + $0x28] sm:$0xff] %vm4245, %v4205
        %4252 = vst.msk [vmem:[#allocation3 + $0x30] sm:$0xff] %vm4245, %v4207
        %4253 = vst.msk [vmem:[#allocation3 + $0x38] sm:$0xff] %vm4245, %v4209
        %4254 = vst.msk [vmem:[#allocation3 + $0x40] sm:$0xff] %vm4245, %v4211
        %4255 = vst.msk [vmem:[#allocation3 + $0x48] sm:$0xff] %vm4245, %v4213
        %4256 = vst.msk [vmem:[#allocation3 + $0x50] sm:$0xff] %vm4245, %v4215
        %4257 = vst.msk [vmem:[#allocation3 + $0x58] sm:$0xff] %vm4245, %v4217
        %4258 = vst.msk [vmem:[#allocation3 + $0x60] sm:$0xff] %vm4245, %v4219
        %4259 = vst.msk [vmem:[#allocation3 + $0x68] sm:$0xff] %vm4245, %v4221
        %4260 = vst.msk [vmem:[#allocation3 + $0x70] sm:$0xff] %vm4245, %v4223
        %4261 = vst.msk [vmem:[#allocation3 + $0x78] sm:$0xff] %vm4245, %v4225
        %4262 = vst.msk [vmem:[#allocation3 + $0x80] sm:$0xff] %vm4245, %v4227
        %v4263 = vld [vmem:[%s1393] sm:$0xfc]
        %v4264 = vld [vmem:[%s1393 + $0x8] sm:$0xff]
        %v4265 = vld [vmem:[%s1393 + $0x10] sm:$0xff]
        %v4266 = vld [vmem:[%s1393 + $0x18] sm:$0xff]
        %v4267 = vld [vmem:[%s1393 + $0x20] sm:$0xff]
        %v4268 = vld [vmem:[%s1393 + $0x28] sm:$0xff]
        %v4269 = vld [vmem:[%s1393 + $0x30] sm:$0xff]
        %v4270 = vld [vmem:[%s1393 + $0x38] sm:$0xff]
        %v4271 = vld [vmem:[%s1393 + $0x40] sm:$0xff]
        %v4272 = vld [vmem:[%s1393 + $0x48] sm:$0xff]
        %v4273 = vld [vmem:[%s1393 + $0x50] sm:$0xff]
        %v4274 = vld [vmem:[%s1393 + $0x58] sm:$0xff]
        %v4275 = vld [vmem:[%s1393 + $0x60] sm:$0xff]
        %v4276 = vld [vmem:[%s1393 + $0x68] sm:$0xff]
        %v4277 = vld [vmem:[%s1393 + $0x70] sm:$0xff]
        %v4278 = vld [vmem:[%s1393 + $0x78] sm:$0xff]
        %v4279 = vld [vmem:[%s1393 + $0x80] sm:$0xff]
        %v4280 = vld [vmem:[%s1393 + $0x88] sm:$0x7]
        %v4282 = vshrl.u32 %v4263, 16
        %v4284 = vrot.slane %v4282, 2
        %v4285 = vshll.u32 %v4263, 16
        %v4287 = vrot.slane %v4285, 3
        %v4288 = vor.u32 %v4284, %v4287
        %v4290 = vshrl.u32 %v4264, 16
        %v4292 = vrot.slane %v4290, 2
        %v4293 = vshll.u32 %v4264, 16
        %v4295 = vrot.slane %v4293, 3
        %v4296 = vor.u32 %v4292, %v4295
        %v4297 = vsel %vm3784, %v4288, %v4296
        %v4299 = vshrl.u32 %v4265, 16
        %v4301 = vrot.slane %v4299, 2
        %v4302 = vshll.u32 %v4265, 16
        %v4304 = vrot.slane %v4302, 3
        %v4305 = vor.u32 %v4301, %v4304
        %v4306 = vsel %vm3784, %v4296, %v4305
        %v4308 = vshrl.u32 %v4266, 16
        %v4310 = vrot.slane %v4308, 2
        %v4311 = vshll.u32 %v4266, 16
        %v4313 = vrot.slane %v4311, 3
        %v4314 = vor.u32 %v4310, %v4313
        %v4315 = vsel %vm3784, %v4305, %v4314
        %v4317 = vshrl.u32 %v4267, 16
        %v4319 = vrot.slane %v4317, 2
        %v4320 = vshll.u32 %v4267, 16
        %v4322 = vrot.slane %v4320, 3
        %v4323 = vor.u32 %v4319, %v4322
        %v4324 = vsel %vm3784, %v4314, %v4323
        %v4326 = vshrl.u32 %v4268, 16
        %v4328 = vrot.slane %v4326, 2
        %v4329 = vshll.u32 %v4268, 16
        %v4331 = vrot.slane %v4329, 3
        %v4332 = vor.u32 %v4328, %v4331
        %v4333 = vsel %vm3784, %v4323, %v4332
        %v4335 = vshrl.u32 %v4269, 16
        %v4337 = vrot.slane %v4335, 2
        %v4338 = vshll.u32 %v4269, 16
        %v4340 = vrot.slane %v4338, 3
        %v4341 = vor.u32 %v4337, %v4340
        %v4342 = vsel %vm3784, %v4332, %v4341
        %v4344 = vshrl.u32 %v4270, 16
        %v4346 = vrot.slane %v4344, 2
        %v4347 = vshll.u32 %v4270, 16
        %v4349 = vrot.slane %v4347, 3
        %v4350 = vor.u32 %v4346, %v4349
        %v4351 = vsel %vm3784, %v4341, %v4350
        %v4353 = vshrl.u32 %v4271, 16
        %v4355 = vrot.slane %v4353, 2
        %v4356 = vshll.u32 %v4271, 16
        %v4358 = vrot.slane %v4356, 3
        %v4359 = vor.u32 %v4355, %v4358
        %v4360 = vsel %vm3784, %v4350, %v4359
        %v4362 = vshrl.u32 %v4272, 16
        %v4364 = vrot.slane %v4362, 2
        %v4365 = vshll.u32 %v4272, 16
        %v4367 = vrot.slane %v4365, 3
        %v4368 = vor.u32 %v4364, %v4367
        %v4369 = vsel %vm3784, %v4359, %v4368
        %v4371 = vshrl.u32 %v4273, 16
        %v4373 = vrot.slane %v4371, 2
        %v4374 = vshll.u32 %v4273, 16
        %v4376 = vrot.slane %v4374, 3
        %v4377 = vor.u32 %v4373, %v4376
        %v4378 = vsel %vm3784, %v4368, %v4377
        %v4380 = vshrl.u32 %v4274, 16
        %v4382 = vrot.slane %v4380, 2
        %v4383 = vshll.u32 %v4274, 16
        %v4385 = vrot.slane %v4383, 3
        %v4386 = vor.u32 %v4382, %v4385
        %v4387 = vsel %vm3784, %v4377, %v4386
        %v4389 = vshrl.u32 %v4275, 16
        %v4391 = vrot.slane %v4389, 2
        %v4392 = vshll.u32 %v4275, 16
        %v4394 = vrot.slane %v4392, 3
        %v4395 = vor.u32 %v4391, %v4394
        %v4396 = vsel %vm3784, %v4386, %v4395
        %v4398 = vshrl.u32 %v4276, 16
        %v4400 = vrot.slane %v4398, 2
        %v4401 = vshll.u32 %v4276, 16
        %v4403 = vrot.slane %v4401, 3
        %v4404 = vor.u32 %v4400, %v4403
        %v4405 = vsel %vm3784, %v4395, %v4404
        %v4407 = vshrl.u32 %v4277, 16
        %v4409 = vrot.slane %v4407, 2
        %v4410 = vshll.u32 %v4277, 16
        %v4412 = vrot.slane %v4410, 3
        %v4413 = vor.u32 %v4409, %v4412
        %v4414 = vsel %vm3784, %v4404, %v4413
        %v4416 = vshrl.u32 %v4278, 16
        %v4418 = vrot.slane %v4416, 2
        %v4419 = vshll.u32 %v4278, 16
        %v4421 = vrot.slane %v4419, 3
        %v4422 = vor.u32 %v4418, %v4421
        %v4423 = vsel %vm3784, %v4413, %v4422
        %v4425 = vshrl.u32 %v4279, 16
        %v4427 = vrot.slane %v4425, 2
        %v4428 = vshll.u32 %v4279, 16
        %v4430 = vrot.slane %v4428, 3
        %v4431 = vor.u32 %v4427, %v4430
        %v4432 = vsel %vm3784, %v4422, %v4431
        %v4434 = vshrl.u32 %v4280, 16
        %v4436 = vrot.slane %v4434, 2
        %v4437 = vshll.u32 %v4280, 16
        %v4439 = vrot.slane %v4437, 3
        %v4440 = vor.u32 %v4436, %v4439
        %v4441 = vsel %vm3784, %v4431, %v4440
        %4442 = vrot.lane.b32.xlu0 %v4297, 17
        %v4443 = vpop.permute.xlu0 %4442
        %4444 = vrot.lane.b32.xlu0 %v4306, 17
        %v4445 = vpop.permute.xlu0 %4444
        %4446 = vrot.lane.b32.xlu0 %v4315, 17
        %v4447 = vpop.permute.xlu0 %4446
        %4448 = vrot.lane.b32.xlu0 %v4324, 17
        %v4449 = vpop.permute.xlu0 %4448
        %4450 = vrot.lane.b32.xlu0 %v4333, 17
        %v4451 = vpop.permute.xlu0 %4450
        %4452 = vrot.lane.b32.xlu0 %v4342, 17
        %v4453 = vpop.permute.xlu0 %4452
        %4454 = vrot.lane.b32.xlu0 %v4351, 17
        %v4455 = vpop.permute.xlu0 %4454
        %4456 = vrot.lane.b32.xlu0 %v4360, 17
        %v4457 = vpop.permute.xlu0 %4456
        %4458 = vrot.lane.b32.xlu0 %v4369, 17
        %v4459 = vpop.permute.xlu0 %4458
        %4460 = vrot.lane.b32.xlu0 %v4378, 17
        %v4461 = vpop.permute.xlu0 %4460
        %4462 = vrot.lane.b32.xlu0 %v4387, 17
        %v4463 = vpop.permute.xlu0 %4462
        %4464 = vrot.lane.b32.xlu0 %v4396, 17
        %v4465 = vpop.permute.xlu0 %4464
        %4466 = vrot.lane.b32.xlu0 %v4405, 17
        %v4467 = vpop.permute.xlu0 %4466
        %4468 = vrot.lane.b32.xlu0 %v4414, 17
        %v4469 = vpop.permute.xlu0 %4468
        %4470 = vrot.lane.b32.xlu0 %v4423, 17
        %v4471 = vpop.permute.xlu0 %4470
        %4472 = vrot.lane.b32.xlu0 %v4432, 17
        %v4473 = vpop.permute.xlu0 %4472
        %4474 = vrot.lane.b32.xlu0 %v4441, 17
        %v4475 = vpop.permute.xlu0 %4474
        %vm4493 = vcmask 146568
        %4494 = vst.msk [vmem:[#allocation3] sm:$0xff] %vm4493, %v4443
        %4495 = vst.msk [vmem:[#allocation3 + $0x8] sm:$0xff] %vm4493, %v4445
        %4496 = vst.msk [vmem:[#allocation3 + $0x10] sm:$0xff] %vm4493, %v4447
        %4497 = vst.msk [vmem:[#allocation3 + $0x18] sm:$0xff] %vm4493, %v4449
        %4498 = vst.msk [vmem:[#allocation3 + $0x20] sm:$0xff] %vm4493, %v4451
        %4499 = vst.msk [vmem:[#allocation3 + $0x28] sm:$0xff] %vm4493, %v4453
        %4500 = vst.msk [vmem:[#allocation3 + $0x30] sm:$0xff] %vm4493, %v4455
        %4501 = vst.msk [vmem:[#allocation3 + $0x38] sm:$0xff] %vm4493, %v4457
        %4502 = vst.msk [vmem:[#allocation3 + $0x40] sm:$0xff] %vm4493, %v4459
        %4503 = vst.msk [vmem:[#allocation3 + $0x48] sm:$0xff] %vm4493, %v4461
        %4504 = vst.msk [vmem:[#allocation3 + $0x50] sm:$0xff] %vm4493, %v4463
        %4505 = vst.msk [vmem:[#allocation3 + $0x58] sm:$0xff] %vm4493, %v4465
        %4506 = vst.msk [vmem:[#allocation3 + $0x60] sm:$0xff] %vm4493, %v4467
        %4507 = vst.msk [vmem:[#allocation3 + $0x68] sm:$0xff] %vm4493, %v4469
        %4508 = vst.msk [vmem:[#allocation3 + $0x70] sm:$0xff] %vm4493, %v4471
        %4509 = vst.msk [vmem:[#allocation3 + $0x78] sm:$0xff] %vm4493, %v4473
        %4510 = vst.msk [vmem:[#allocation3 + $0x80] sm:$0xff] %vm4493, %v4475
        %v4511 = vld [vmem:[#allocation2] sm:$0xf8]
        %v4512 = vld [vmem:[#allocation2 + $0x8] sm:$0xff]
        %v4513 = vld [vmem:[#allocation2 + $0x10] sm:$0xff]
        %v4514 = vld [vmem:[#allocation2 + $0x18] sm:$0xff]
        %v4515 = vld [vmem:[#allocation2 + $0x20] sm:$0xff]
        %v4516 = vld [vmem:[#allocation2 + $0x28] sm:$0xff]
        %v4517 = vld [vmem:[#allocation2 + $0x30] sm:$0xff]
        %v4518 = vld [vmem:[#allocation2 + $0x38] sm:$0xff]
        %v4519 = vld [vmem:[#allocation2 + $0x40] sm:$0xff]
        %v4520 = vld [vmem:[#allocation2 + $0x48] sm:$0xff]
        %v4521 = vld [vmem:[#allocation2 + $0x50] sm:$0xff]
        %v4522 = vld [vmem:[#allocation2 + $0x58] sm:$0xff]
        %v4523 = vld [vmem:[#allocation2 + $0x60] sm:$0xff]
        %v4524 = vld [vmem:[#allocation2 + $0x68] sm:$0xff]
        %v4525 = vld [vmem:[#allocation2 + $0x70] sm:$0xff]
        %v4526 = vld [vmem:[#allocation2 + $0x78] sm:$0xff]
        %v4527 = vld [vmem:[#allocation2 + $0x80] sm:$0xff]
        %v4528 = vld [vmem:[#allocation2 + $0x88] sm:$0x7]
        %vm4547 = vcmask 1044480
        %v4548 = vrot.slane %v4511, 3
        %v4549 = vrot.slane %v4512, 3
        %v4550 = vsel %vm4547, %v4548, %v4549
        %v4551 = vrot.slane %v4513, 3
        %v4552 = vsel %vm4547, %v4549, %v4551
        %v4553 = vrot.slane %v4514, 3
        %v4554 = vsel %vm4547, %v4551, %v4553
        %v4555 = vrot.slane %v4515, 3
        %v4556 = vsel %vm4547, %v4553, %v4555
        %v4557 = vrot.slane %v4516, 3
        %v4558 = vsel %vm4547, %v4555, %v4557
        %v4559 = vrot.slane %v4517, 3
        %v4560 = vsel %vm4547, %v4557, %v4559
        %v4561 = vrot.slane %v4518, 3
        %v4562 = vsel %vm4547, %v4559, %v4561
        %v4563 = vrot.slane %v4519, 3
        %v4564 = vsel %vm4547, %v4561, %v4563
        %v4565 = vrot.slane %v4520, 3
        %v4566 = vsel %vm4547, %v4563, %v4565
        %v4567 = vrot.slane %v4521, 3
        %v4568 = vsel %vm4547, %v4565, %v4567
        %v4569 = vrot.slane %v4522, 3
        %v4570 = vsel %vm4547, %v4567, %v4569
        %v4571 = vrot.slane %v4523, 3
        %v4572 = vsel %vm4547, %v4569, %v4571
        %v4573 = vrot.slane %v4524, 3
        %v4574 = vsel %vm4547, %v4571, %v4573
        %v4575 = vrot.slane %v4525, 3
        %v4576 = vsel %vm4547, %v4573, %v4575
        %v4577 = vrot.slane %v4526, 3
        %v4578 = vsel %vm4547, %v4575, %v4577
        %v4579 = vrot.slane %v4527, 3
        %v4580 = vsel %vm4547, %v4577, %v4579
        %v4581 = vrot.slane %v4528, 3
        %v4582 = vsel %vm4547, %v4579, %v4581
        %4583 = vrot.lane.b32.xlu0 %v4550, 18
        %v4584 = vpop.permute.xlu0 %4583
        %4585 = vrot.lane.b32.xlu0 %v4552, 18
        %v4586 = vpop.permute.xlu0 %4585
        %4587 = vrot.lane.b32.xlu0 %v4554, 18
        %v4588 = vpop.permute.xlu0 %4587
        %4589 = vrot.lane.b32.xlu0 %v4556, 18
        %v4590 = vpop.permute.xlu0 %4589
        %4591 = vrot.lane.b32.xlu0 %v4558, 18
        %v4592 = vpop.permute.xlu0 %4591
        %4593 = vrot.lane.b32.xlu0 %v4560, 18
        %v4594 = vpop.permute.xlu0 %4593
        %4595 = vrot.lane.b32.xlu0 %v4562, 18
        %v4596 = vpop.permute.xlu0 %4595
        %4597 = vrot.lane.b32.xlu0 %v4564, 18
        %v4598 = vpop.permute.xlu0 %4597
        %4599 = vrot.lane.b32.xlu0 %v4566, 18
        %v4600 = vpop.permute.xlu0 %4599
        %4601 = vrot.lane.b32.xlu0 %v4568, 18
        %v4602 = vpop.permute.xlu0 %4601
        %4603 = vrot.lane.b32.xlu0 %v4570, 18
        %v4604 = vpop.permute.xlu0 %4603
        %4605 = vrot.lane.b32.xlu0 %v4572, 18
        %v4606 = vpop.permute.xlu0 %4605
        %4607 = vrot.lane.b32.xlu0 %v4574, 18
        %v4608 = vpop.permute.xlu0 %4607
        %4609 = vrot.lane.b32.xlu0 %v4576, 18
        %v4610 = vpop.permute.xlu0 %4609
        %4611 = vrot.lane.b32.xlu0 %v4578, 18
        %v4612 = vpop.permute.xlu0 %4611
        %4613 = vrot.lane.b32.xlu0 %v4580, 18
        %v4614 = vpop.permute.xlu0 %4613
        %4615 = vrot.lane.b32.xlu0 %v4582, 18
        %v4616 = vpop.permute.xlu0 %4615
        %vm4634 = vcmask 154768
        %4635 = vst.msk [vmem:[#allocation3] sm:$0xff] %vm4634, %v4584
        %4636 = vst.msk [vmem:[#allocation3 + $0x8] sm:$0xff] %vm4634, %v4586
        %4637 = vst.msk [vmem:[#allocation3 + $0x10] sm:$0xff] %vm4634, %v4588
        %4638 = vst.msk [vmem:[#allocation3 + $0x18] sm:$0xff] %vm4634, %v4590
        %4639 = vst.msk [vmem:[#allocation3 + $0x20] sm:$0xff] %vm4634, %v4592
        %4640 = vst.msk [vmem:[#allocation3 + $0x28] sm:$0xff] %vm4634, %v4594
        %4641 = vst.msk [vmem:[#allocation3 + $0x30] sm:$0xff] %vm4634, %v4596
        %4642 = vst.msk [vmem:[#allocation3 + $0x38] sm:$0xff] %vm4634, %v4598
        %4643 = vst.msk [vmem:[#allocation3 + $0x40] sm:$0xff] %vm4634, %v4600
        %4644 = vst.msk [vmem:[#allocation3 + $0x48] sm:$0xff] %vm4634, %v4602
        %4645 = vst.msk [vmem:[#allocation3 + $0x50] sm:$0xff] %vm4634, %v4604
        %4646 = vst.msk [vmem:[#allocation3 + $0x58] sm:$0xff] %vm4634, %v4606
        %4647 = vst.msk [vmem:[#allocation3 + $0x60] sm:$0xff] %vm4634, %v4608
        %4648 = vst.msk [vmem:[#allocation3 + $0x68] sm:$0xff] %vm4634, %v4610
        %4649 = vst.msk [vmem:[#allocation3 + $0x70] sm:$0xff] %vm4634, %v4612
        %4650 = vst.msk [vmem:[#allocation3 + $0x78] sm:$0xff] %vm4634, %v4614
        %4651 = vst.msk [vmem:[#allocation3 + $0x80] sm:$0xff] %vm4634, %v4616
        %v4652 = vld [vmem:[%s1289] sm:$0xf8]
        %v4653 = vld [vmem:[%s1289 + $0x8] sm:$0xff]
        %v4654 = vld [vmem:[%s1289 + $0x10] sm:$0xff]
        %v4655 = vld [vmem:[%s1289 + $0x18] sm:$0xff]
        %v4656 = vld [vmem:[%s1289 + $0x20] sm:$0xff]
        %v4657 = vld [vmem:[%s1289 + $0x28] sm:$0xff]
        %v4658 = vld [vmem:[%s1289 + $0x30] sm:$0xff]
        %v4659 = vld [vmem:[%s1289 + $0x38] sm:$0xff]
        %v4660 = vld [vmem:[%s1289 + $0x40] sm:$0xff]
        %v4661 = vld [vmem:[%s1289 + $0x48] sm:$0xff]
        %v4662 = vld [vmem:[%s1289 + $0x50] sm:$0xff]
        %v4663 = vld [vmem:[%s1289 + $0x58] sm:$0xff]
        %v4664 = vld [vmem:[%s1289 + $0x60] sm:$0xff]
        %v4665 = vld [vmem:[%s1289 + $0x68] sm:$0xff]
        %v4666 = vld [vmem:[%s1289 + $0x70] sm:$0xff]
        %v4667 = vld [vmem:[%s1289 + $0x78] sm:$0xff]
        %v4668 = vld [vmem:[%s1289 + $0x80] sm:$0xff]
        %v4669 = vld [vmem:[%s1289 + $0x88] sm:$0x7]
        %v4688 = vrot.slane %v4652, 3
        %v4689 = vrot.slane %v4653, 3
        %v4690 = vsel %vm4547, %v4688, %v4689
        %v4691 = vrot.slane %v4654, 3
        %v4692 = vsel %vm4547, %v4689, %v4691
        %v4693 = vrot.slane %v4655, 3
        %v4694 = vsel %vm4547, %v4691, %v4693
        %v4695 = vrot.slane %v4656, 3
        %v4696 = vsel %vm4547, %v4693, %v4695
        %v4697 = vrot.slane %v4657, 3
        %v4698 = vsel %vm4547, %v4695, %v4697
        %v4699 = vrot.slane %v4658, 3
        %v4700 = vsel %vm4547, %v4697, %v4699
        %v4701 = vrot.slane %v4659, 3
        %v4702 = vsel %vm4547, %v4699, %v4701
        %v4703 = vrot.slane %v4660, 3
        %v4704 = vsel %vm4547, %v4701, %v4703
        %v4705 = vrot.slane %v4661, 3
        %v4706 = vsel %vm4547, %v4703, %v4705
        %v4707 = vrot.slane %v4662, 3
        %v4708 = vsel %vm4547, %v4705, %v4707
        %v4709 = vrot.slane %v4663, 3
        %v4710 = vsel %vm4547, %v4707, %v4709
        %v4711 = vrot.slane %v4664, 3
        %v4712 = vsel %vm4547, %v4709, %v4711
        %v4713 = vrot.slane %v4665, 3
        %v4714 = vsel %vm4547, %v4711, %v4713
        %v4715 = vrot.slane %v4666, 3
        %v4716 = vsel %vm4547, %v4713, %v4715
        %v4717 = vrot.slane %v4667, 3
        %v4718 = vsel %vm4547, %v4715, %v4717
        %v4719 = vrot.slane %v4668, 3
        %v4720 = vsel %vm4547, %v4717, %v4719
        %v4721 = vrot.slane %v4669, 3
        %v4722 = vsel %vm4547, %v4719, %v4721
        %4723 = vrot.lane.b32.xlu0 %v4690, 19
        %v4724 = vpop.permute.xlu0 %4723
        %4725 = vrot.lane.b32.xlu0 %v4692, 19
        %v4726 = vpop.permute.xlu0 %4725
        %4727 = vrot.lane.b32.xlu0 %v4694, 19
        %v4728 = vpop.permute.xlu0 %4727
        %4729 = vrot.lane.b32.xlu0 %v4696, 19
        %v4730 = vpop.permute.xlu0 %4729
        %4731 = vrot.lane.b32.xlu0 %v4698, 19
        %v4732 = vpop.permute.xlu0 %4731
        %4733 = vrot.lane.b32.xlu0 %v4700, 19
        %v4734 = vpop.permute.xlu0 %4733
        %4735 = vrot.lane.b32.xlu0 %v4702, 19
        %v4736 = vpop.permute.xlu0 %4735
        %4737 = vrot.lane.b32.xlu0 %v4704, 19
        %v4738 = vpop.permute.xlu0 %4737
        %4739 = vrot.lane.b32.xlu0 %v4706, 19
        %v4740 = vpop.permute.xlu0 %4739
        %4741 = vrot.lane.b32.xlu0 %v4708, 19
        %v4742 = vpop.permute.xlu0 %4741
        %4743 = vrot.lane.b32.xlu0 %v4710, 19
        %v4744 = vpop.permute.xlu0 %4743
        %4745 = vrot.lane.b32.xlu0 %v4712, 19
        %v4746 = vpop.permute.xlu0 %4745
        %4747 = vrot.lane.b32.xlu0 %v4714, 19
        %v4748 = vpop.permute.xlu0 %4747
        %4749 = vrot.lane.b32.xlu0 %v4716, 19
        %v4750 = vpop.permute.xlu0 %4749
        %4751 = vrot.lane.b32.xlu0 %v4718, 19
        %v4752 = vpop.permute.xlu0 %4751
        %4753 = vrot.lane.b32.xlu0 %v4720, 19
        %v4754 = vpop.permute.xlu0 %4753
        %4755 = vrot.lane.b32.xlu0 %v4722, 19
        %v4756 = vpop.permute.xlu0 %4755
        %vm4774 = vcmask 162968
        %4775 = vst.msk [vmem:[#allocation3] sm:$0xff] %vm4774, %v4724
        %4776 = vst.msk [vmem:[#allocation3 + $0x8] sm:$0xff] %vm4774, %v4726
        %4777 = vst.msk [vmem:[#allocation3 + $0x10] sm:$0xff] %vm4774, %v4728
        %4778 = vst.msk [vmem:[#allocation3 + $0x18] sm:$0xff] %vm4774, %v4730
        %4779 = vst.msk [vmem:[#allocation3 + $0x20] sm:$0xff] %vm4774, %v4732
        %4780 = vst.msk [vmem:[#allocation3 + $0x28] sm:$0xff] %vm4774, %v4734
        %4781 = vst.msk [vmem:[#allocation3 + $0x30] sm:$0xff] %vm4774, %v4736
        %4782 = vst.msk [vmem:[#allocation3 + $0x38] sm:$0xff] %vm4774, %v4738
        %4783 = vst.msk [vmem:[#allocation3 + $0x40] sm:$0xff] %vm4774, %v4740
        %4784 = vst.msk [vmem:[#allocation3 + $0x48] sm:$0xff] %vm4774, %v4742
        %4785 = vst.msk [vmem:[#allocation3 + $0x50] sm:$0xff] %vm4774, %v4744
        %4786 = vst.msk [vmem:[#allocation3 + $0x58] sm:$0xff] %vm4774, %v4746
        %4787 = vst.msk [vmem:[#allocation3 + $0x60] sm:$0xff] %vm4774, %v4748
        %4788 = vst.msk [vmem:[#allocation3 + $0x68] sm:$0xff] %vm4774, %v4750
        %4789 = vst.msk [vmem:[#allocation3 + $0x70] sm:$0xff] %vm4774, %v4752
        %4790 = vst.msk [vmem:[#allocation3 + $0x78] sm:$0xff] %vm4774, %v4754
        %4791 = vst.msk [vmem:[#allocation3 + $0x80] sm:$0xff] %vm4774, %v4756
        %v4792 = vld [vmem:[%s1393] sm:$0xf8]
        %v4793 = vld [vmem:[%s1393 + $0x8] sm:$0xff]
        %v4794 = vld [vmem:[%s1393 + $0x10] sm:$0xff]
        %v4795 = vld [vmem:[%s1393 + $0x18] sm:$0xff]
        %v4796 = vld [vmem:[%s1393 + $0x20] sm:$0xff]
        %v4797 = vld [vmem:[%s1393 + $0x28] sm:$0xff]
        %v4798 = vld [vmem:[%s1393 + $0x30] sm:$0xff]
        %v4799 = vld [vmem:[%s1393 + $0x38] sm:$0xff]
        %v4800 = vld [vmem:[%s1393 + $0x40] sm:$0xff]
        %v4801 = vld [vmem:[%s1393 + $0x48] sm:$0xff]
        %v4802 = vld [vmem:[%s1393 + $0x50] sm:$0xff]
        %v4803 = vld [vmem:[%s1393 + $0x58] sm:$0xff]
        %v4804 = vld [vmem:[%s1393 + $0x60] sm:$0xff]
        %v4805 = vld [vmem:[%s1393 + $0x68] sm:$0xff]
        %v4806 = vld [vmem:[%s1393 + $0x70] sm:$0xff]
        %v4807 = vld [vmem:[%s1393 + $0x78] sm:$0xff]
        %v4808 = vld [vmem:[%s1393 + $0x80] sm:$0xff]
        %v4809 = vld [vmem:[%s1393 + $0x88] sm:$0x7]
        %v4828 = vrot.slane %v4792, 3
        %v4829 = vrot.slane %v4793, 3
        %v4830 = vsel %vm4547, %v4828, %v4829
        %v4831 = vrot.slane %v4794, 3
        %v4832 = vsel %vm4547, %v4829, %v4831
        %v4833 = vrot.slane %v4795, 3
        %v4834 = vsel %vm4547, %v4831, %v4833
        %v4835 = vrot.slane %v4796, 3
        %v4836 = vsel %vm4547, %v4833, %v4835
        %v4837 = vrot.slane %v4797, 3
        %v4838 = vsel %vm4547, %v4835, %v4837
        %v4839 = vrot.slane %v4798, 3
        %v4840 = vsel %vm4547, %v4837, %v4839
        %v4841 = vrot.slane %v4799, 3
        %v4842 = vsel %vm4547, %v4839, %v4841
        %v4843 = vrot.slane %v4800, 3
        %v4844 = vsel %vm4547, %v4841, %v4843
        %v4845 = vrot.slane %v4801, 3
        %v4846 = vsel %vm4547, %v4843, %v4845
        %v4847 = vrot.slane %v4802, 3
        %v4848 = vsel %vm4547, %v4845, %v4847
        %v4849 = vrot.slane %v4803, 3
        %v4850 = vsel %vm4547, %v4847, %v4849
        %v4851 = vrot.slane %v4804, 3
        %v4852 = vsel %vm4547, %v4849, %v4851
        %v4853 = vrot.slane %v4805, 3
        %v4854 = vsel %vm4547, %v4851, %v4853
        %v4855 = vrot.slane %v4806, 3
        %v4856 = vsel %vm4547, %v4853, %v4855
        %v4857 = vrot.slane %v4807, 3
        %v4858 = vsel %vm4547, %v4855, %v4857
        %v4859 = vrot.slane %v4808, 3
        %v4860 = vsel %vm4547, %v4857, %v4859
        %v4861 = vrot.slane %v4809, 3
        %v4862 = vsel %vm4547, %v4859, %v4861
        %4863 = vrot.lane.b32.xlu0 %v4830, 20
        %v4864 = vpop.permute.xlu0 %4863
        %4865 = vrot.lane.b32.xlu0 %v4832, 20
        %v4866 = vpop.permute.xlu0 %4865
        %4867 = vrot.lane.b32.xlu0 %v4834, 20
        %v4868 = vpop.permute.xlu0 %4867
        %4869 = vrot.lane.b32.xlu0 %v4836, 20
        %v4870 = vpop.permute.xlu0 %4869
        %4871 = vrot.lane.b32.xlu0 %v4838, 20
        %v4872 = vpop.permute.xlu0 %4871
        %4873 = vrot.lane.b32.xlu0 %v4840, 20
        %v4874 = vpop.permute.xlu0 %4873
        %4875 = vrot.lane.b32.xlu0 %v4842, 20
        %v4876 = vpop.permute.xlu0 %4875
        %4877 = vrot.lane.b32.xlu0 %v4844, 20
        %v4878 = vpop.permute.xlu0 %4877
        %4879 = vrot.lane.b32.xlu0 %v4846, 20
        %v4880 = vpop.permute.xlu0 %4879
        %4881 = vrot.lane.b32.xlu0 %v4848, 20
        %v4882 = vpop.permute.xlu0 %4881
        %4883 = vrot.lane.b32.xlu0 %v4850, 20
        %v4884 = vpop.permute.xlu0 %4883
        %4885 = vrot.lane.b32.xlu0 %v4852, 20
        %v4886 = vpop.permute.xlu0 %4885
        %4887 = vrot.lane.b32.xlu0 %v4854, 20
        %v4888 = vpop.permute.xlu0 %4887
        %4889 = vrot.lane.b32.xlu0 %v4856, 20
        %v4890 = vpop.permute.xlu0 %4889
        %4891 = vrot.lane.b32.xlu0 %v4858, 20
        %v4892 = vpop.permute.xlu0 %4891
        %4893 = vrot.lane.b32.xlu0 %v4860, 20
        %v4894 = vpop.permute.xlu0 %4893
        %4895 = vrot.lane.b32.xlu0 %v4862, 20
        %v4896 = vpop.permute.xlu0 %4895
        %vm4914 = vcmask 171168
        %4915 = vst.msk [vmem:[#allocation3] sm:$0xff] %vm4914, %v4864
        %4916 = vst.msk [vmem:[#allocation3 + $0x8] sm:$0xff] %vm4914, %v4866
        %4917 = vst.msk [vmem:[#allocation3 + $0x10] sm:$0xff] %vm4914, %v4868
        %4918 = vst.msk [vmem:[#allocation3 + $0x18] sm:$0xff] %vm4914, %v4870
        %4919 = vst.msk [vmem:[#allocation3 + $0x20] sm:$0xff] %vm4914, %v4872
        %4920 = vst.msk [vmem:[#allocation3 + $0x28] sm:$0xff] %vm4914, %v4874
        %4921 = vst.msk [vmem:[#allocation3 + $0x30] sm:$0xff] %vm4914, %v4876
        %4922 = vst.msk [vmem:[#allocation3 + $0x38] sm:$0xff] %vm4914, %v4878
        %4923 = vst.msk [vmem:[#allocation3 + $0x40] sm:$0xff] %vm4914, %v4880
        %4924 = vst.msk [vmem:[#allocation3 + $0x48] sm:$0xff] %vm4914, %v4882
        %4925 = vst.msk [vmem:[#allocation3 + $0x50] sm:$0xff] %vm4914, %v4884
        %4926 = vst.msk [vmem:[#allocation3 + $0x58] sm:$0xff] %vm4914, %v4886
        %4927 = vst.msk [vmem:[#allocation3 + $0x60] sm:$0xff] %vm4914, %v4888
        %4928 = vst.msk [vmem:[#allocation3 + $0x68] sm:$0xff] %vm4914, %v4890
        %4929 = vst.msk [vmem:[#allocation3 + $0x70] sm:$0xff] %vm4914, %v4892
        %4930 = vst.msk [vmem:[#allocation3 + $0x78] sm:$0xff] %vm4914, %v4894
        %4931 = vst.msk [vmem:[#allocation3 + $0x80] sm:$0xff] %vm4914, %v4896
        %v4932 = vld [vmem:[#allocation2] sm:$0xf8]
        %v4933 = vld [vmem:[#allocation2 + $0x8] sm:$0xff]
        %v4934 = vld [vmem:[#allocation2 + $0x10] sm:$0xff]
        %v4935 = vld [vmem:[#allocation2 + $0x18] sm:$0xff]
        %v4936 = vld [vmem:[#allocation2 + $0x20] sm:$0xff]
        %v4937 = vld [vmem:[#allocation2 + $0x28] sm:$0xff]
        %v4938 = vld [vmem:[#allocation2 + $0x30] sm:$0xff]
        %v4939 = vld [vmem:[#allocation2 + $0x38] sm:$0xff]
        %v4940 = vld [vmem:[#allocation2 + $0x40] sm:$0xff]
        %v4941 = vld [vmem:[#allocation2 + $0x48] sm:$0xff]
        %v4942 = vld [vmem:[#allocation2 + $0x50] sm:$0xff]
        %v4943 = vld [vmem:[#allocation2 + $0x58] sm:$0xff]
        %v4944 = vld [vmem:[#allocation2 + $0x60] sm:$0xff]
        %v4945 = vld [vmem:[#allocation2 + $0x68] sm:$0xff]
        %v4946 = vld [vmem:[#allocation2 + $0x70] sm:$0xff]
        %v4947 = vld [vmem:[#allocation2 + $0x78] sm:$0xff]
        %v4948 = vld [vmem:[#allocation2 + $0x80] sm:$0xff]
        %v4949 = vld [vmem:[#allocation2 + $0x88] sm:$0xf]
        %vm4950 = vsmask.f32 4352
        %v4952 = vshrl.u32 %v4932, 16
        %v4954 = vrot.slane %v4952, 3
        %v4955 = vshll.u32 %v4932, 16
        %v4957 = vrot.slane %v4955, 4
        %v4958 = vor.u32 %v4954, %v4957
        %v4960 = vshrl.u32 %v4933, 16
        %v4962 = vrot.slane %v4960, 3
        %v4963 = vshll.u32 %v4933, 16
        %v4965 = vrot.slane %v4963, 4
        %v4966 = vor.u32 %v4962, %v4965
        %v4967 = vsel %vm4950, %v4958, %v4966
        %v4969 = vshrl.u32 %v4934, 16
        %v4971 = vrot.slane %v4969, 3
        %v4972 = vshll.u32 %v4934, 16
        %v4974 = vrot.slane %v4972, 4
        %v4975 = vor.u32 %v4971, %v4974
        %v4976 = vsel %vm4950, %v4966, %v4975
        %v4978 = vshrl.u32 %v4935, 16
        %v4980 = vrot.slane %v4978, 3
        %v4981 = vshll.u32 %v4935, 16
        %v4983 = vrot.slane %v4981, 4
        %v4984 = vor.u32 %v4980, %v4983
        %v4985 = vsel %vm4950, %v4975, %v4984
        %v4987 = vshrl.u32 %v4936, 16
        %v4989 = vrot.slane %v4987, 3
        %v4990 = vshll.u32 %v4936, 16
        %v4992 = vrot.slane %v4990, 4
        %v4993 = vor.u32 %v4989, %v4992
        %v4994 = vsel %vm4950, %v4984, %v4993
        %v4996 = vshrl.u32 %v4937, 16
        %v4998 = vrot.slane %v4996, 3
        %v4999 = vshll.u32 %v4937, 16
        %v5001 = vrot.slane %v4999, 4
        %v5002 = vor.u32 %v4998, %v5001
        %v5003 = vsel %vm4950, %v4993, %v5002
        %v5005 = vshrl.u32 %v4938, 16
        %v5007 = vrot.slane %v5005, 3
        %v5008 = vshll.u32 %v4938, 16
        %v5010 = vrot.slane %v5008, 4
        %v5011 = vor.u32 %v5007, %v5010
        %v5012 = vsel %vm4950, %v5002, %v5011
        %v5014 = vshrl.u32 %v4939, 16
        %v5016 = vrot.slane %v5014, 3
        %v5017 = vshll.u32 %v4939, 16
        %v5019 = vrot.slane %v5017, 4
        %v5020 = vor.u32 %v5016, %v5019
        %v5021 = vsel %vm4950, %v5011, %v5020
        %v5023 = vshrl.u32 %v4940, 16
        %v5025 = vrot.slane %v5023, 3
        %v5026 = vshll.u32 %v4940, 16
        %v5028 = vrot.slane %v5026, 4
        %v5029 = vor.u32 %v5025, %v5028
        %v5030 = vsel %vm4950, %v5020, %v5029
        %v5032 = vshrl.u32 %v4941, 16
        %v5034 = vrot.slane %v5032, 3
        %v5035 = vshll.u32 %v4941, 16
        %v5037 = vrot.slane %v5035, 4
        %v5038 = vor.u32 %v5034, %v5037
        %v5039 = vsel %vm4950, %v5029, %v5038
        %v5041 = vshrl.u32 %v4942, 16
        %v5043 = vrot.slane %v5041, 3
        %v5044 = vshll.u32 %v4942, 16
        %v5046 = vrot.slane %v5044, 4
        %v5047 = vor.u32 %v5043, %v5046
        %v5048 = vsel %vm4950, %v5038, %v5047
        %v5050 = vshrl.u32 %v4943, 16
        %v5052 = vrot.slane %v5050, 3
        %v5053 = vshll.u32 %v4943, 16
        %v5055 = vrot.slane %v5053, 4
        %v5056 = vor.u32 %v5052, %v5055
        %v5057 = vsel %vm4950, %v5047, %v5056
        %v5059 = vshrl.u32 %v4944, 16
        %v5061 = vrot.slane %v5059, 3
        %v5062 = vshll.u32 %v4944, 16
        %v5064 = vrot.slane %v5062, 4
        %v5065 = vor.u32 %v5061, %v5064
        %v5066 = vsel %vm4950, %v5056, %v5065
        %v5068 = vshrl.u32 %v4945, 16
        %v5070 = vrot.slane %v5068, 3
        %v5071 = vshll.u32 %v4945, 16
        %v5073 = vrot.slane %v5071, 4
        %v5074 = vor.u32 %v5070, %v5073
        %v5075 = vsel %vm4950, %v5065, %v5074
        %v5077 = vshrl.u32 %v4946, 16
        %v5079 = vrot.slane %v5077, 3
        %v5080 = vshll.u32 %v4946, 16
        %v5082 = vrot.slane %v5080, 4
        %v5083 = vor.u32 %v5079, %v5082
        %v5084 = vsel %vm4950, %v5074, %v5083
        %v5086 = vshrl.u32 %v4947, 16
        %v5088 = vrot.slane %v5086, 3
        %v5089 = vshll.u32 %v4947, 16
        %v5091 = vrot.slane %v5089, 4
        %v5092 = vor.u32 %v5088, %v5091
        %v5093 = vsel %vm4950, %v5083, %v5092
        %v5095 = vshrl.u32 %v4948, 16
        %v5097 = vrot.slane %v5095, 3
        %v5098 = vshll.u32 %v4948, 16
        %v5100 = vrot.slane %v5098, 4
        %v5101 = vor.u32 %v5097, %v5100
        %v5102 = vsel %vm4950, %v5092, %v5101
        %v5104 = vshrl.u32 %v4949, 16
        %v5106 = vrot.slane %v5104, 3
        %v5107 = vshll.u32 %v4949, 16
        %v5109 = vrot.slane %v5107, 4
        %v5110 = vor.u32 %v5106, %v5109
        %v5111 = vsel %vm4950, %v5101, %v5110
        %5112 = vrot.lane.b32.xlu0 %v4967, 21
        %v5113 = vpop.permute.xlu0 %5112
        %5114 = vrot.lane.b32.xlu0 %v4976, 21
        %v5115 = vpop.permute.xlu0 %5114
        %5116 = vrot.lane.b32.xlu0 %v4985, 21
        %v5117 = vpop.permute.xlu0 %5116
        %5118 = vrot.lane.b32.xlu0 %v4994, 21
        %v5119 = vpop.permute.xlu0 %5118
        %5120 = vrot.lane.b32.xlu0 %v5003, 21
        %v5121 = vpop.permute.xlu0 %5120
        %5122 = vrot.lane.b32.xlu0 %v5012, 21
        %v5123 = vpop.permute.xlu0 %5122
        %5124 = vrot.lane.b32.xlu0 %v5021, 21
        %v5125 = vpop.permute.xlu0 %5124
        %5126 = vrot.lane.b32.xlu0 %v5030, 21
        %v5127 = vpop.permute.xlu0 %5126
        %5128 = vrot.lane.b32.xlu0 %v5039, 21
        %v5129 = vpop.permute.xlu0 %5128
        %5130 = vrot.lane.b32.xlu0 %v5048, 21
        %v5131 = vpop.permute.xlu0 %5130
        %5132 = vrot.lane.b32.xlu0 %v5057, 21
        %v5133 = vpop.permute.xlu0 %5132
        %5134 = vrot.lane.b32.xlu0 %v5066, 21
        %v5135 = vpop.permute.xlu0 %5134
        %5136 = vrot.lane.b32.xlu0 %v5075, 21
        %v5137 = vpop.permute.xlu0 %5136
        %5138 = vrot.lane.b32.xlu0 %v5084, 21
        %v5139 = vpop.permute.xlu0 %5138
        %5140 = vrot.lane.b32.xlu0 %v5093, 21
        %v5141 = vpop.permute.xlu0 %5140
        %5142 = vrot.lane.b32.xlu0 %v5102, 21
        %v5143 = vpop.permute.xlu0 %5142
        %5144 = vrot.lane.b32.xlu0 %v5111, 21
        %v5145 = vpop.permute.xlu0 %5144
        %vm5163 = vcmask 179368
        %5164 = vst.msk [vmem:[#allocation3] sm:$0xff] %vm5163, %v5113
        %5165 = vst.msk [vmem:[#allocation3 + $0x8] sm:$0xff] %vm5163, %v5115
        %5166 = vst.msk [vmem:[#allocation3 + $0x10] sm:$0xff] %vm5163, %v5117
        %5167 = vst.msk [vmem:[#allocation3 + $0x18] sm:$0xff] %vm5163, %v5119
        %5168 = vst.msk [vmem:[#allocation3 + $0x20] sm:$0xff] %vm5163, %v5121
        %5169 = vst.msk [vmem:[#allocation3 + $0x28] sm:$0xff] %vm5163, %v5123
        %5170 = vst.msk [vmem:[#allocation3 + $0x30] sm:$0xff] %vm5163, %v5125
        %5171 = vst.msk [vmem:[#allocation3 + $0x38] sm:$0xff] %vm5163, %v5127
        %5172 = vst.msk [vmem:[#allocation3 + $0x40] sm:$0xff] %vm5163, %v5129
        %5173 = vst.msk [vmem:[#allocation3 + $0x48] sm:$0xff] %vm5163, %v5131
        %5174 = vst.msk [vmem:[#allocation3 + $0x50] sm:$0xff] %vm5163, %v5133
        %5175 = vst.msk [vmem:[#allocation3 + $0x58] sm:$0xff] %vm5163, %v5135
        %5176 = vst.msk [vmem:[#allocation3 + $0x60] sm:$0xff] %vm5163, %v5137
        %5177 = vst.msk [vmem:[#allocation3 + $0x68] sm:$0xff] %vm5163, %v5139
        %5178 = vst.msk [vmem:[#allocation3 + $0x70] sm:$0xff] %vm5163, %v5141
        %5179 = vst.msk [vmem:[#allocation3 + $0x78] sm:$0xff] %vm5163, %v5143
        %5180 = vst.msk [vmem:[#allocation3 + $0x80] sm:$0xff] %vm5163, %v5145
        %v5181 = vld [vmem:[%s1289] sm:$0xf8]
        %v5182 = vld [vmem:[%s1289 + $0x8] sm:$0xff]
        %v5183 = vld [vmem:[%s1289 + $0x10] sm:$0xff]
        %v5184 = vld [vmem:[%s1289 + $0x18] sm:$0xff]
        %v5185 = vld [vmem:[%s1289 + $0x20] sm:$0xff]
        %v5186 = vld [vmem:[%s1289 + $0x28] sm:$0xff]
        %v5187 = vld [vmem:[%s1289 + $0x30] sm:$0xff]
        %v5188 = vld [vmem:[%s1289 + $0x38] sm:$0xff]
        %v5189 = vld [vmem:[%s1289 + $0x40] sm:$0xff]
        %v5190 = vld [vmem:[%s1289 + $0x48] sm:$0xff]
        %v5191 = vld [vmem:[%s1289 + $0x50] sm:$0xff]
        %v5192 = vld [vmem:[%s1289 + $0x58] sm:$0xff]
        %v5193 = vld [vmem:[%s1289 + $0x60] sm:$0xff]
        %v5194 = vld [vmem:[%s1289 + $0x68] sm:$0xff]
        %v5195 = vld [vmem:[%s1289 + $0x70] sm:$0xff]
        %v5196 = vld [vmem:[%s1289 + $0x78] sm:$0xff]
        %v5197 = vld [vmem:[%s1289 + $0x80] sm:$0xff]
        %v5198 = vld [vmem:[%s1289 + $0x88] sm:$0xf]
        %v5200 = vshrl.u32 %v5181, 16
        %v5202 = vrot.slane %v5200, 3
        %v5203 = vshll.u32 %v5181, 16
        %v5205 = vrot.slane %v5203, 4
        %v5206 = vor.u32 %v5202, %v5205
        %v5208 = vshrl.u32 %v5182, 16
        %v5210 = vrot.slane %v5208, 3
        %v5211 = vshll.u32 %v5182, 16
        %v5213 = vrot.slane %v5211, 4
        %v5214 = vor.u32 %v5210, %v5213
        %v5215 = vsel %vm4950, %v5206, %v5214
        %v5217 = vshrl.u32 %v5183, 16
        %v5219 = vrot.slane %v5217, 3
        %v5220 = vshll.u32 %v5183, 16
        %v5222 = vrot.slane %v5220, 4
        %v5223 = vor.u32 %v5219, %v5222
        %v5224 = vsel %vm4950, %v5214, %v5223
        %v5226 = vshrl.u32 %v5184, 16
        %v5228 = vrot.slane %v5226, 3
        %v5229 = vshll.u32 %v5184, 16
        %v5231 = vrot.slane %v5229, 4
        %v5232 = vor.u32 %v5228, %v5231
        %v5233 = vsel %vm4950, %v5223, %v5232
        %v5235 = vshrl.u32 %v5185, 16
        %v5237 = vrot.slane %v5235, 3
        %v5238 = vshll.u32 %v5185, 16
        %v5240 = vrot.slane %v5238, 4
        %v5241 = vor.u32 %v5237, %v5240
        %v5242 = vsel %vm4950, %v5232, %v5241
        %v5244 = vshrl.u32 %v5186, 16
        %v5246 = vrot.slane %v5244, 3
        %v5247 = vshll.u32 %v5186, 16
        %v5249 = vrot.slane %v5247, 4
        %v5250 = vor.u32 %v5246, %v5249
        %v5251 = vsel %vm4950, %v5241, %v5250
        %v5253 = vshrl.u32 %v5187, 16
        %v5255 = vrot.slane %v5253, 3
        %v5256 = vshll.u32 %v5187, 16
        %v5258 = vrot.slane %v5256, 4
        %v5259 = vor.u32 %v5255, %v5258
        %v5260 = vsel %vm4950, %v5250, %v5259
        %v5262 = vshrl.u32 %v5188, 16
        %v5264 = vrot.slane %v5262, 3
        %v5265 = vshll.u32 %v5188, 16
        %v5267 = vrot.slane %v5265, 4
        %v5268 = vor.u32 %v5264, %v5267
        %v5269 = vsel %vm4950, %v5259, %v5268
        %v5271 = vshrl.u32 %v5189, 16
        %v5273 = vrot.slane %v5271, 3
        %v5274 = vshll.u32 %v5189, 16
        %v5276 = vrot.slane %v5274, 4
        %v5277 = vor.u32 %v5273, %v5276
        %v5278 = vsel %vm4950, %v5268, %v5277
        %v5280 = vshrl.u32 %v5190, 16
        %v5282 = vrot.slane %v5280, 3
        %v5283 = vshll.u32 %v5190, 16
        %v5285 = vrot.slane %v5283, 4
        %v5286 = vor.u32 %v5282, %v5285
        %v5287 = vsel %vm4950, %v5277, %v5286
        %v5289 = vshrl.u32 %v5191, 16
        %v5291 = vrot.slane %v5289, 3
        %v5292 = vshll.u32 %v5191, 16
        %v5294 = vrot.slane %v5292, 4
        %v5295 = vor.u32 %v5291, %v5294
        %v5296 = vsel %vm4950, %v5286, %v5295
        %v5298 = vshrl.u32 %v5192, 16
        %v5300 = vrot.slane %v5298, 3
        %v5301 = vshll.u32 %v5192, 16
        %v5303 = vrot.slane %v5301, 4
        %v5304 = vor.u32 %v5300, %v5303
        %v5305 = vsel %vm4950, %v5295, %v5304
        %v5307 = vshrl.u32 %v5193, 16
        %v5309 = vrot.slane %v5307, 3
        %v5310 = vshll.u32 %v5193, 16
        %v5312 = vrot.slane %v5310, 4
        %v5313 = vor.u32 %v5309, %v5312
        %v5314 = vsel %vm4950, %v5304, %v5313
        %v5316 = vshrl.u32 %v5194, 16
        %v5318 = vrot.slane %v5316, 3
        %v5319 = vshll.u32 %v5194, 16
        %v5321 = vrot.slane %v5319, 4
        %v5322 = vor.u32 %v5318, %v5321
        %v5323 = vsel %vm4950, %v5313, %v5322
        %v5325 = vshrl.u32 %v5195, 16
        %v5327 = vrot.slane %v5325, 3
        %v5328 = vshll.u32 %v5195, 16
        %v5330 = vrot.slane %v5328, 4
        %v5331 = vor.u32 %v5327, %v5330
        %v5332 = vsel %vm4950, %v5322, %v5331
        %v5334 = vshrl.u32 %v5196, 16
        %v5336 = vrot.slane %v5334, 3
        %v5337 = vshll.u32 %v5196, 16
        %v5339 = vrot.slane %v5337, 4
        %v5340 = vor.u32 %v5336, %v5339
        %v5341 = vsel %vm4950, %v5331, %v5340
        %v5343 = vshrl.u32 %v5197, 16
        %v5345 = vrot.slane %v5343, 3
        %v5346 = vshll.u32 %v5197, 16
        %v5348 = vrot.slane %v5346, 4
        %v5349 = vor.u32 %v5345, %v5348
        %v5350 = vsel %vm4950, %v5340, %v5349
        %v5352 = vshrl.u32 %v5198, 16
        %v5354 = vrot.slane %v5352, 3
        %v5355 = vshll.u32 %v5198, 16
        %v5357 = vrot.slane %v5355, 4
        %v5358 = vor.u32 %v5354, %v5357
        %v5359 = vsel %vm4950, %v5349, %v5358
        %5360 = vrot.lane.b32.xlu0 %v5215, 22
        %v5361 = vpop.permute.xlu0 %5360
        %5362 = vrot.lane.b32.xlu0 %v5224, 22
        %v5363 = vpop.permute.xlu0 %5362
        %5364 = vrot.lane.b32.xlu0 %v5233, 22
        %v5365 = vpop.permute.xlu0 %5364
        %5366 = vrot.lane.b32.xlu0 %v5242, 22
        %v5367 = vpop.permute.xlu0 %5366
        %5368 = vrot.lane.b32.xlu0 %v5251, 22
        %v5369 = vpop.permute.xlu0 %5368
        %5370 = vrot.lane.b32.xlu0 %v5260, 22
        %v5371 = vpop.permute.xlu0 %5370
        %5372 = vrot.lane.b32.xlu0 %v5269, 22
        %v5373 = vpop.permute.xlu0 %5372
        %5374 = vrot.lane.b32.xlu0 %v5278, 22
        %v5375 = vpop.permute.xlu0 %5374
        %5376 = vrot.lane.b32.xlu0 %v5287, 22
        %v5377 = vpop.permute.xlu0 %5376
        %5378 = vrot.lane.b32.xlu0 %v5296, 22
        %v5379 = vpop.permute.xlu0 %5378
        %5380 = vrot.lane.b32.xlu0 %v5305, 22
        %v5381 = vpop.permute.xlu0 %5380
        %5382 = vrot.lane.b32.xlu0 %v5314, 22
        %v5383 = vpop.permute.xlu0 %5382
        %5384 = vrot.lane.b32.xlu0 %v5323, 22
        %v5385 = vpop.permute.xlu0 %5384
        %5386 = vrot.lane.b32.xlu0 %v5332, 22
        %v5387 = vpop.permute.xlu0 %5386
        %5388 = vrot.lane.b32.xlu0 %v5341, 22
        %v5389 = vpop.permute.xlu0 %5388
        %5390 = vrot.lane.b32.xlu0 %v5350, 22
        %v5391 = vpop.permute.xlu0 %5390
        %5392 = vrot.lane.b32.xlu0 %v5359, 22
        %v5393 = vpop.permute.xlu0 %5392
        %vm5411 = vcmask 187568
        %5412 = vst.msk [vmem:[#allocation3] sm:$0xff] %vm5411, %v5361
        %5413 = vst.msk [vmem:[#allocation3 + $0x8] sm:$0xff] %vm5411, %v5363
        %5414 = vst.msk [vmem:[#allocation3 + $0x10] sm:$0xff] %vm5411, %v5365
        %5415 = vst.msk [vmem:[#allocation3 + $0x18] sm:$0xff] %vm5411, %v5367
        %5416 = vst.msk [vmem:[#allocation3 + $0x20] sm:$0xff] %vm5411, %v5369
        %5417 = vst.msk [vmem:[#allocation3 + $0x28] sm:$0xff] %vm5411, %v5371
        %5418 = vst.msk [vmem:[#allocation3 + $0x30] sm:$0xff] %vm5411, %v5373
        %5419 = vst.msk [vmem:[#allocation3 + $0x38] sm:$0xff] %vm5411, %v5375
        %5420 = vst.msk [vmem:[#allocation3 + $0x40] sm:$0xff] %vm5411, %v5377
        %5421 = vst.msk [vmem:[#allocation3 + $0x48] sm:$0xff] %vm5411, %v5379
        %5422 = vst.msk [vmem:[#allocation3 + $0x50] sm:$0xff] %vm5411, %v5381
        %5423 = vst.msk [vmem:[#allocation3 + $0x58] sm:$0xff] %vm5411, %v5383
        %5424 = vst.msk [vmem:[#allocation3 + $0x60] sm:$0xff] %vm5411, %v5385
        %5425 = vst.msk [vmem:[#allocation3 + $0x68] sm:$0xff] %vm5411, %v5387
        %5426 = vst.msk [vmem:[#allocation3 + $0x70] sm:$0xff] %vm5411, %v5389
        %5427 = vst.msk [vmem:[#allocation3 + $0x78] sm:$0xff] %vm5411, %v5391
        %5428 = vst.msk [vmem:[#allocation3 + $0x80] sm:$0xff] %vm5411, %v5393
        %v5429 = vld [vmem:[%s1393] sm:$0xf8]
        %v5430 = vld [vmem:[%s1393 + $0x8] sm:$0xff]
        %v5431 = vld [vmem:[%s1393 + $0x10] sm:$0xff]
        %v5432 = vld [vmem:[%s1393 + $0x18] sm:$0xff]
        %v5433 = vld [vmem:[%s1393 + $0x20] sm:$0xff]
        %v5434 = vld [vmem:[%s1393 + $0x28] sm:$0xff]
        %v5435 = vld [vmem:[%s1393 + $0x30] sm:$0xff]
        %v5436 = vld [vmem:[%s1393 + $0x38] sm:$0xff]
        %v5437 = vld [vmem:[%s1393 + $0x40] sm:$0xff]
        %v5438 = vld [vmem:[%s1393 + $0x48] sm:$0xff]
        %v5439 = vld [vmem:[%s1393 + $0x50] sm:$0xff]
        %v5440 = vld [vmem:[%s1393 + $0x58] sm:$0xff]
        %v5441 = vld [vmem:[%s1393 + $0x60] sm:$0xff]
        %v5442 = vld [vmem:[%s1393 + $0x68] sm:$0xff]
        %v5443 = vld [vmem:[%s1393 + $0x70] sm:$0xff]
        %v5444 = vld [vmem:[%s1393 + $0x78] sm:$0xff]
        %v5445 = vld [vmem:[%s1393 + $0x80] sm:$0xff]
        %v5446 = vld [vmem:[%s1393 + $0x88] sm:$0xf]
        %v5448 = vshrl.u32 %v5429, 16
        %v5450 = vrot.slane %v5448, 3
        %v5451 = vshll.u32 %v5429, 16
        %v5453 = vrot.slane %v5451, 4
        %v5454 = vor.u32 %v5450, %v5453
        %v5456 = vshrl.u32 %v5430, 16
        %v5458 = vrot.slane %v5456, 3
        %v5459 = vshll.u32 %v5430, 16
        %v5461 = vrot.slane %v5459, 4
        %v5462 = vor.u32 %v5458, %v5461
        %v5463 = vsel %vm4950, %v5454, %v5462
        %v5465 = vshrl.u32 %v5431, 16
        %v5467 = vrot.slane %v5465, 3
        %v5468 = vshll.u32 %v5431, 16
        %v5470 = vrot.slane %v5468, 4
        %v5471 = vor.u32 %v5467, %v5470
        %v5472 = vsel %vm4950, %v5462, %v5471
        %v5474 = vshrl.u32 %v5432, 16
        %v5476 = vrot.slane %v5474, 3
        %v5477 = vshll.u32 %v5432, 16
        %v5479 = vrot.slane %v5477, 4
        %v5480 = vor.u32 %v5476, %v5479
        %v5481 = vsel %vm4950, %v5471, %v5480
        %v5483 = vshrl.u32 %v5433, 16
        %v5485 = vrot.slane %v5483, 3
        %v5486 = vshll.u32 %v5433, 16
        %v5488 = vrot.slane %v5486, 4
        %v5489 = vor.u32 %v5485, %v5488
        %v5490 = vsel %vm4950, %v5480, %v5489
        %v5492 = vshrl.u32 %v5434, 16
        %v5494 = vrot.slane %v5492, 3
        %v5495 = vshll.u32 %v5434, 16
        %v5497 = vrot.slane %v5495, 4
        %v5498 = vor.u32 %v5494, %v5497
        %v5499 = vsel %vm4950, %v5489, %v5498
        %v5501 = vshrl.u32 %v5435, 16
        %v5503 = vrot.slane %v5501, 3
        %v5504 = vshll.u32 %v5435, 16
        %v5506 = vrot.slane %v5504, 4
        %v5507 = vor.u32 %v5503, %v5506
        %v5508 = vsel %vm4950, %v5498, %v5507
        %v5510 = vshrl.u32 %v5436, 16
        %v5512 = vrot.slane %v5510, 3
        %v5513 = vshll.u32 %v5436, 16
        %v5515 = vrot.slane %v5513, 4
        %v5516 = vor.u32 %v5512, %v5515
        %v5517 = vsel %vm4950, %v5507, %v5516
        %v5519 = vshrl.u32 %v5437, 16
        %v5521 = vrot.slane %v5519, 3
        %v5522 = vshll.u32 %v5437, 16
        %v5524 = vrot.slane %v5522, 4
        %v5525 = vor.u32 %v5521, %v5524
        %v5526 = vsel %vm4950, %v5516, %v5525
        %v5528 = vshrl.u32 %v5438, 16
        %v5530 = vrot.slane %v5528, 3
        %v5531 = vshll.u32 %v5438, 16
        %v5533 = vrot.slane %v5531, 4
        %v5534 = vor.u32 %v5530, %v5533
        %v5535 = vsel %vm4950, %v5525, %v5534
        %v5537 = vshrl.u32 %v5439, 16
        %v5539 = vrot.slane %v5537, 3
        %v5540 = vshll.u32 %v5439, 16
        %v5542 = vrot.slane %v5540, 4
        %v5543 = vor.u32 %v5539, %v5542
        %v5544 = vsel %vm4950, %v5534, %v5543
        %v5546 = vshrl.u32 %v5440, 16
        %v5548 = vrot.slane %v5546, 3
        %v5549 = vshll.u32 %v5440, 16
        %v5551 = vrot.slane %v5549, 4
        %v5552 = vor.u32 %v5548, %v5551
        %v5553 = vsel %vm4950, %v5543, %v5552
        %v5555 = vshrl.u32 %v5441, 16
        %v5557 = vrot.slane %v5555, 3
        %v5558 = vshll.u32 %v5441, 16
        %v5560 = vrot.slane %v5558, 4
        %v5561 = vor.u32 %v5557, %v5560
        %v5562 = vsel %vm4950, %v5552, %v5561
        %v5564 = vshrl.u32 %v5442, 16
        %v5566 = vrot.slane %v5564, 3
        %v5567 = vshll.u32 %v5442, 16
        %v5569 = vrot.slane %v5567, 4
        %v5570 = vor.u32 %v5566, %v5569
        %v5571 = vsel %vm4950, %v5561, %v5570
        %v5573 = vshrl.u32 %v5443, 16
        %v5575 = vrot.slane %v5573, 3
        %v5576 = vshll.u32 %v5443, 16
        %v5578 = vrot.slane %v5576, 4
        %v5579 = vor.u32 %v5575, %v5578
        %v5580 = vsel %vm4950, %v5570, %v5579
        %v5582 = vshrl.u32 %v5444, 16
        %v5584 = vrot.slane %v5582, 3
        %v5585 = vshll.u32 %v5444, 16
        %v5587 = vrot.slane %v5585, 4
        %v5588 = vor.u32 %v5584, %v5587
        %v5589 = vsel %vm4950, %v5579, %v5588
        %v5591 = vshrl.u32 %v5445, 16
        %v5593 = vrot.slane %v5591, 3
        %v5594 = vshll.u32 %v5445, 16
        %v5596 = vrot.slane %v5594, 4
        %v5597 = vor.u32 %v5593, %v5596
        %v5598 = vsel %vm4950, %v5588, %v5597
        %v5600 = vshrl.u32 %v5446, 16
        %v5602 = vrot.slane %v5600, 3
        %v5603 = vshll.u32 %v5446, 16
        %v5605 = vrot.slane %v5603, 4
        %v5606 = vor.u32 %v5602, %v5605
        %v5607 = vsel %vm4950, %v5597, %v5606
        %5608 = vrot.lane.b32.xlu0 %v5463, 23
        %v5609 = vpop.permute.xlu0 %5608
        %5610 = vrot.lane.b32.xlu0 %v5472, 23
        %v5611 = vpop.permute.xlu0 %5610
        %5612 = vrot.lane.b32.xlu0 %v5481, 23
        %v5613 = vpop.permute.xlu0 %5612
        %5614 = vrot.lane.b32.xlu0 %v5490, 23
        %v5615 = vpop.permute.xlu0 %5614
        %5616 = vrot.lane.b32.xlu0 %v5499, 23
        %v5617 = vpop.permute.xlu0 %5616
        %5618 = vrot.lane.b32.xlu0 %v5508, 23
        %v5619 = vpop.permute.xlu0 %5618
        %5620 = vrot.lane.b32.xlu0 %v5517, 23
        %v5621 = vpop.permute.xlu0 %5620
        %5622 = vrot.lane.b32.xlu0 %v5526, 23
        %v5623 = vpop.permute.xlu0 %5622
        %5624 = vrot.lane.b32.xlu0 %v5535, 23
        %v5625 = vpop.permute.xlu0 %5624
        %5626 = vrot.lane.b32.xlu0 %v5544, 23
        %v5627 = vpop.permute.xlu0 %5626
        %5628 = vrot.lane.b32.xlu0 %v5553, 23
        %v5629 = vpop.permute.xlu0 %5628
        %5630 = vrot.lane.b32.xlu0 %v5562, 23
        %v5631 = vpop.permute.xlu0 %5630
        %5632 = vrot.lane.b32.xlu0 %v5571, 23
        %v5633 = vpop.permute.xlu0 %5632
        %5634 = vrot.lane.b32.xlu0 %v5580, 23
        %v5635 = vpop.permute.xlu0 %5634
        %5636 = vrot.lane.b32.xlu0 %v5589, 23
        %v5637 = vpop.permute.xlu0 %5636
        %5638 = vrot.lane.b32.xlu0 %v5598, 23
        %v5639 = vpop.permute.xlu0 %5638
        %5640 = vrot.lane.b32.xlu0 %v5607, 23
        %v5641 = vpop.permute.xlu0 %5640
        %vm5659 = vcmask 195768
        %5660 = vst.msk [vmem:[#allocation3] sm:$0xff] %vm5659, %v5609
        %5661 = vst.msk [vmem:[#allocation3 + $0x8] sm:$0xff] %vm5659, %v5611
        %5662 = vst.msk [vmem:[#allocation3 + $0x10] sm:$0xff] %vm5659, %v5613
        %5663 = vst.msk [vmem:[#allocation3 + $0x18] sm:$0xff] %vm5659, %v5615
        %5664 = vst.msk [vmem:[#allocation3 + $0x20] sm:$0xff] %vm5659, %v5617
        %5665 = vst.msk [vmem:[#allocation3 + $0x28] sm:$0xff] %vm5659, %v5619
        %5666 = vst.msk [vmem:[#allocation3 + $0x30] sm:$0xff] %vm5659, %v5621
        %5667 = vst.msk [vmem:[#allocation3 + $0x38] sm:$0xff] %vm5659, %v5623
        %5668 = vst.msk [vmem:[#allocation3 + $0x40] sm:$0xff] %vm5659, %v5625
        %5669 = vst.msk [vmem:[#allocation3 + $0x48] sm:$0xff] %vm5659, %v5627
        %5670 = vst.msk [vmem:[#allocation3 + $0x50] sm:$0xff] %vm5659, %v5629
        %5671 = vst.msk [vmem:[#allocation3 + $0x58] sm:$0xff] %vm5659, %v5631
        %5672 = vst.msk [vmem:[#allocation3 + $0x60] sm:$0xff] %vm5659, %v5633
        %5673 = vst.msk [vmem:[#allocation3 + $0x68] sm:$0xff] %vm5659, %v5635
        %5674 = vst.msk [vmem:[#allocation3 + $0x70] sm:$0xff] %vm5659, %v5637
        %5675 = vst.msk [vmem:[#allocation3 + $0x78] sm:$0xff] %vm5659, %v5639
        %5676 = vst.msk [vmem:[#allocation3 + $0x80] sm:$0xff] %vm5659, %v5641
        %v5677 = vld [vmem:[#allocation2] sm:$0xf0]
        %v5678 = vld [vmem:[#allocation2 + $0x8] sm:$0xff]
        %v5679 = vld [vmem:[#allocation2 + $0x10] sm:$0xff]
        %v5680 = vld [vmem:[#allocation2 + $0x18] sm:$0xff]
        %v5681 = vld [vmem:[#allocation2 + $0x20] sm:$0xff]
        %v5682 = vld [vmem:[#allocation2 + $0x28] sm:$0xff]
        %v5683 = vld [vmem:[#allocation2 + $0x30] sm:$0xff]
        %v5684 = vld [vmem:[#allocation2 + $0x38] sm:$0xff]
        %v5685 = vld [vmem:[#allocation2 + $0x40] sm:$0xff]
        %v5686 = vld [vmem:[#allocation2 + $0x48] sm:$0xff]
        %v5687 = vld [vmem:[#allocation2 + $0x50] sm:$0xff]
        %v5688 = vld [vmem:[#allocation2 + $0x58] sm:$0xff]
        %v5689 = vld [vmem:[#allocation2 + $0x60] sm:$0xff]
        %v5690 = vld [vmem:[#allocation2 + $0x68] sm:$0xff]
        %v5691 = vld [vmem:[#allocation2 + $0x70] sm:$0xff]
        %v5692 = vld [vmem:[#allocation2 + $0x78] sm:$0xff]
        %v5693 = vld [vmem:[#allocation2 + $0x80] sm:$0xff]
        %v5694 = vld [vmem:[#allocation2 + $0x88] sm:$0xf]
        %vm5713 = vcmask 1043456
        %v5714 = vrot.slane %v5677, 4
        %v5715 = vrot.slane %v5678, 4
        %v5716 = vsel %vm5713, %v5714, %v5715
        %v5717 = vrot.slane %v5679, 4
        %v5718 = vsel %vm5713, %v5715, %v5717
        %v5719 = vrot.slane %v5680, 4
        %v5720 = vsel %vm5713, %v5717, %v5719
        %v5721 = vrot.slane %v5681, 4
        %v5722 = vsel %vm5713, %v5719, %v5721
        %v5723 = vrot.slane %v5682, 4
        %v5724 = vsel %vm5713, %v5721, %v5723
        %v5725 = vrot.slane %v5683, 4
        %v5726 = vsel %vm5713, %v5723, %v5725
        %v5727 = vrot.slane %v5684, 4
        %v5728 = vsel %vm5713, %v5725, %v5727
        %v5729 = vrot.slane %v5685, 4
        %v5730 = vsel %vm5713, %v5727, %v5729
        %v5731 = vrot.slane %v5686, 4
        %v5732 = vsel %vm5713, %v5729, %v5731
        %v5733 = vrot.slane %v5687, 4
        %v5734 = vsel %vm5713, %v5731, %v5733
        %v5735 = vrot.slane %v5688, 4
        %v5736 = vsel %vm5713, %v5733, %v5735
        %v5737 = vrot.slane %v5689, 4
        %v5738 = vsel %vm5713, %v5735, %v5737
        %v5739 = vrot.slane %v5690, 4
        %v5740 = vsel %vm5713, %v5737, %v5739
        %v5741 = vrot.slane %v5691, 4
        %v5742 = vsel %vm5713, %v5739, %v5741
        %v5743 = vrot.slane %v5692, 4
        %v5744 = vsel %vm5713, %v5741, %v5743
        %v5745 = vrot.slane %v5693, 4
        %v5746 = vsel %vm5713, %v5743, %v5745
        %v5747 = vrot.slane %v5694, 4
        %v5748 = vsel %vm5713, %v5745, %v5747
        %5749 = vrot.lane.b32.xlu0 %v5716, 24
        %v5750 = vpop.permute.xlu0 %5749
        %5751 = vrot.lane.b32.xlu0 %v5718, 24
        %v5752 = vpop.permute.xlu0 %5751
        %5753 = vrot.lane.b32.xlu0 %v5720, 24
        %v5754 = vpop.permute.xlu0 %5753
        %5755 = vrot.lane.b32.xlu0 %v5722, 24
        %v5756 = vpop.permute.xlu0 %5755
        %5757 = vrot.lane.b32.xlu0 %v5724, 24
        %v5758 = vpop.permute.xlu0 %5757
        %5759 = vrot.lane.b32.xlu0 %v5726, 24
        %v5760 = vpop.permute.xlu0 %5759
        %5761 = vrot.lane.b32.xlu0 %v5728, 24
        %v5762 = vpop.permute.xlu0 %5761
        %5763 = vrot.lane.b32.xlu0 %v5730, 24
        %v5764 = vpop.permute.xlu0 %5763
        %5765 = vrot.lane.b32.xlu0 %v5732, 24
        %v5766 = vpop.permute.xlu0 %5765
        %5767 = vrot.lane.b32.xlu0 %v5734, 24
        %v5768 = vpop.permute.xlu0 %5767
        %5769 = vrot.lane.b32.xlu0 %v5736, 24
        %v5770 = vpop.permute.xlu0 %5769
        %5771 = vrot.lane.b32.xlu0 %v5738, 24
        %v5772 = vpop.permute.xlu0 %5771
        %5773 = vrot.lane.b32.xlu0 %v5740, 24
        %v5774 = vpop.permute.xlu0 %5773
        %5775 = vrot.lane.b32.xlu0 %v5742, 24
        %v5776 = vpop.permute.xlu0 %5775
        %5777 = vrot.lane.b32.xlu0 %v5744, 24
        %v5778 = vpop.permute.xlu0 %5777
        %5779 = vrot.lane.b32.xlu0 %v5746, 24
        %v5780 = vpop.permute.xlu0 %5779
        %5781 = vrot.lane.b32.xlu0 %v5748, 24
        %v5782 = vpop.permute.xlu0 %5781
        %vm5800 = vcmask 203968
        %5801 = vst.msk [vmem:[#allocation3] sm:$0xff] %vm5800, %v5750
        %5802 = vst.msk [vmem:[#allocation3 + $0x8] sm:$0xff] %vm5800, %v5752
        %5803 = vst.msk [vmem:[#allocation3 + $0x10] sm:$0xff] %vm5800, %v5754
        %5804 = vst.msk [vmem:[#allocation3 + $0x18] sm:$0xff] %vm5800, %v5756
        %5805 = vst.msk [vmem:[#allocation3 + $0x20] sm:$0xff] %vm5800, %v5758
        %5806 = vst.msk [vmem:[#allocation3 + $0x28] sm:$0xff] %vm5800, %v5760
        %5807 = vst.msk [vmem:[#allocation3 + $0x30] sm:$0xff] %vm5800, %v5762
        %5808 = vst.msk [vmem:[#allocation3 + $0x38] sm:$0xff] %vm5800, %v5764
        %5809 = vst.msk [vmem:[#allocation3 + $0x40] sm:$0xff] %vm5800, %v5766
        %5810 = vst.msk [vmem:[#allocation3 + $0x48] sm:$0xff] %vm5800, %v5768
        %5811 = vst.msk [vmem:[#allocation3 + $0x50] sm:$0xff] %vm5800, %v5770
        %5812 = vst.msk [vmem:[#allocation3 + $0x58] sm:$0xff] %vm5800, %v5772
        %5813 = vst.msk [vmem:[#allocation3 + $0x60] sm:$0xff] %vm5800, %v5774
        %5814 = vst.msk [vmem:[#allocation3 + $0x68] sm:$0xff] %vm5800, %v5776
        %5815 = vst.msk [vmem:[#allocation3 + $0x70] sm:$0xff] %vm5800, %v5778
        %5816 = vst.msk [vmem:[#allocation3 + $0x78] sm:$0xff] %vm5800, %v5780
        %5817 = vst.msk [vmem:[#allocation3 + $0x80] sm:$0xff] %vm5800, %v5782
        %v5818 = vld [vmem:[%s1289] sm:$0xf0]
        %v5819 = vld [vmem:[%s1289 + $0x8] sm:$0xff]
        %v5820 = vld [vmem:[%s1289 + $0x10] sm:$0xff]
        %v5821 = vld [vmem:[%s1289 + $0x18] sm:$0xff]
        %v5822 = vld [vmem:[%s1289 + $0x20] sm:$0xff]
        %v5823 = vld [vmem:[%s1289 + $0x28] sm:$0xff]
        %v5824 = vld [vmem:[%s1289 + $0x30] sm:$0xff]
        %v5825 = vld [vmem:[%s1289 + $0x38] sm:$0xff]
        %v5826 = vld [vmem:[%s1289 + $0x40] sm:$0xff]
        %v5827 = vld [vmem:[%s1289 + $0x48] sm:$0xff]
        %v5828 = vld [vmem:[%s1289 + $0x50] sm:$0xff]
        %v5829 = vld [vmem:[%s1289 + $0x58] sm:$0xff]
        %v5830 = vld [vmem:[%s1289 + $0x60] sm:$0xff]
        %v5831 = vld [vmem:[%s1289 + $0x68] sm:$0xff]
        %v5832 = vld [vmem:[%s1289 + $0x70] sm:$0xff]
        %v5833 = vld [vmem:[%s1289 + $0x78] sm:$0xff]
        %v5834 = vld [vmem:[%s1289 + $0x80] sm:$0xff]
        %v5835 = vld [vmem:[%s1289 + $0x88] sm:$0xf]
        %v5854 = vrot.slane %v5818, 4
        %v5855 = vrot.slane %v5819, 4
        %v5856 = vsel %vm5713, %v5854, %v5855
        %v5857 = vrot.slane %v5820, 4
        %v5858 = vsel %vm5713, %v5855, %v5857
        %v5859 = vrot.slane %v5821, 4
        %v5860 = vsel %vm5713, %v5857, %v5859
        %v5861 = vrot.slane %v5822, 4
        %v5862 = vsel %vm5713, %v5859, %v5861
        %v5863 = vrot.slane %v5823, 4
        %v5864 = vsel %vm5713, %v5861, %v5863
        %v5865 = vrot.slane %v5824, 4
        %v5866 = vsel %vm5713, %v5863, %v5865
        %v5867 = vrot.slane %v5825, 4
        %v5868 = vsel %vm5713, %v5865, %v5867
        %v5869 = vrot.slane %v5826, 4
        %v5870 = vsel %vm5713, %v5867, %v5869
        %v5871 = vrot.slane %v5827, 4
        %v5872 = vsel %vm5713, %v5869, %v5871
        %v5873 = vrot.slane %v5828, 4
        %v5874 = vsel %vm5713, %v5871, %v5873
        %v5875 = vrot.slane %v5829, 4
        %v5876 = vsel %vm5713, %v5873, %v5875
        %v5877 = vrot.slane %v5830, 4
        %v5878 = vsel %vm5713, %v5875, %v5877
        %v5879 = vrot.slane %v5831, 4
        %v5880 = vsel %vm5713, %v5877, %v5879
        %v5881 = vrot.slane %v5832, 4
        %v5882 = vsel %vm5713, %v5879, %v5881
        %v5883 = vrot.slane %v5833, 4
        %v5884 = vsel %vm5713, %v5881, %v5883
        %v5885 = vrot.slane %v5834, 4
        %v5886 = vsel %vm5713, %v5883, %v5885
        %v5887 = vrot.slane %v5835, 4
        %v5888 = vsel %vm5713, %v5885, %v5887
        %5889 = vrot.lane.b32.xlu0 %v5856, 25
        %v5890 = vpop.permute.xlu0 %5889
        %5891 = vrot.lane.b32.xlu0 %v5858, 25
        %v5892 = vpop.permute.xlu0 %5891
        %5893 = vrot.lane.b32.xlu0 %v5860, 25
        %v5894 = vpop.permute.xlu0 %5893
        %5895 = vrot.lane.b32.xlu0 %v5862, 25
        %v5896 = vpop.permute.xlu0 %5895
        %5897 = vrot.lane.b32.xlu0 %v5864, 25
        %v5898 = vpop.permute.xlu0 %5897
        %5899 = vrot.lane.b32.xlu0 %v5866, 25
        %v5900 = vpop.permute.xlu0 %5899
        %5901 = vrot.lane.b32.xlu0 %v5868, 25
        %v5902 = vpop.permute.xlu0 %5901
        %5903 = vrot.lane.b32.xlu0 %v5870, 25
        %v5904 = vpop.permute.xlu0 %5903
        %5905 = vrot.lane.b32.xlu0 %v5872, 25
        %v5906 = vpop.permute.xlu0 %5905
        %5907 = vrot.lane.b32.xlu0 %v5874, 25
        %v5908 = vpop.permute.xlu0 %5907
        %5909 = vrot.lane.b32.xlu0 %v5876, 25
        %v5910 = vpop.permute.xlu0 %5909
        %5911 = vrot.lane.b32.xlu0 %v5878, 25
        %v5912 = vpop.permute.xlu0 %5911
        %5913 = vrot.lane.b32.xlu0 %v5880, 25
        %v5914 = vpop.permute.xlu0 %5913
        %5915 = vrot.lane.b32.xlu0 %v5882, 25
        %v5916 = vpop.permute.xlu0 %5915
        %5917 = vrot.lane.b32.xlu0 %v5884, 25
        %v5918 = vpop.permute.xlu0 %5917
        %5919 = vrot.lane.b32.xlu0 %v5886, 25
        %v5920 = vpop.permute.xlu0 %5919
        %5921 = vrot.lane.b32.xlu0 %v5888, 25
        %v5922 = vpop.permute.xlu0 %5921
        %vm5940 = vcmask 212168
        %5941 = vst.msk [vmem:[#allocation3] sm:$0xff] %vm5940, %v5890
        %5942 = vst.msk [vmem:[#allocation3 + $0x8] sm:$0xff] %vm5940, %v5892
        %5943 = vst.msk [vmem:[#allocation3 + $0x10] sm:$0xff] %vm5940, %v5894
        %5944 = vst.msk [vmem:[#allocation3 + $0x18] sm:$0xff] %vm5940, %v5896
        %5945 = vst.msk [vmem:[#allocation3 + $0x20] sm:$0xff] %vm5940, %v5898
        %5946 = vst.msk [vmem:[#allocation3 + $0x28] sm:$0xff] %vm5940, %v5900
        %5947 = vst.msk [vmem:[#allocation3 + $0x30] sm:$0xff] %vm5940, %v5902
        %5948 = vst.msk [vmem:[#allocation3 + $0x38] sm:$0xff] %vm5940, %v5904
        %5949 = vst.msk [vmem:[#allocation3 + $0x40] sm:$0xff] %vm5940, %v5906
        %5950 = vst.msk [vmem:[#allocation3 + $0x48] sm:$0xff] %vm5940, %v5908
        %5951 = vst.msk [vmem:[#allocation3 + $0x50] sm:$0xff] %vm5940, %v5910
        %5952 = vst.msk [vmem:[#allocation3 + $0x58] sm:$0xff] %vm5940, %v5912
        %5953 = vst.msk [vmem:[#allocation3 + $0x60] sm:$0xff] %vm5940, %v5914
        %5954 = vst.msk [vmem:[#allocation3 + $0x68] sm:$0xff] %vm5940, %v5916
        %5955 = vst.msk [vmem:[#allocation3 + $0x70] sm:$0xff] %vm5940, %v5918
        %5956 = vst.msk [vmem:[#allocation3 + $0x78] sm:$0xff] %vm5940, %v5920
        %5957 = vst.msk [vmem:[#allocation3 + $0x80] sm:$0xff] %vm5940, %v5922
        %v5958 = vld [vmem:[%s1393] sm:$0xf0]
        %v5959 = vld [vmem:[%s1393 + $0x8] sm:$0xff]
        %v5960 = vld [vmem:[%s1393 + $0x10] sm:$0xff]
        %v5961 = vld [vmem:[%s1393 + $0x18] sm:$0xff]
        %v5962 = vld [vmem:[%s1393 + $0x20] sm:$0xff]
        %v5963 = vld [vmem:[%s1393 + $0x28] sm:$0xff]
        %v5964 = vld [vmem:[%s1393 + $0x30] sm:$0xff]
        %v5965 = vld [vmem:[%s1393 + $0x38] sm:$0xff]
        %v5966 = vld [vmem:[%s1393 + $0x40] sm:$0xff]
        %v5967 = vld [vmem:[%s1393 + $0x48] sm:$0xff]
        %v5968 = vld [vmem:[%s1393 + $0x50] sm:$0xff]
        %v5969 = vld [vmem:[%s1393 + $0x58] sm:$0xff]
        %v5970 = vld [vmem:[%s1393 + $0x60] sm:$0xff]
        %v5971 = vld [vmem:[%s1393 + $0x68] sm:$0xff]
        %v5972 = vld [vmem:[%s1393 + $0x70] sm:$0xff]
        %v5973 = vld [vmem:[%s1393 + $0x78] sm:$0xff]
        %v5974 = vld [vmem:[%s1393 + $0x80] sm:$0xff]
        %v5975 = vld [vmem:[%s1393 + $0x88] sm:$0xf]
        %v5994 = vrot.slane %v5958, 4
        %v5995 = vrot.slane %v5959, 4
        %v5996 = vsel %vm5713, %v5994, %v5995
        %v5997 = vrot.slane %v5960, 4
        %v5998 = vsel %vm5713, %v5995, %v5997
        %v5999 = vrot.slane %v5961, 4
        %v6000 = vsel %vm5713, %v5997, %v5999
        %v6001 = vrot.slane %v5962, 4
        %v6002 = vsel %vm5713, %v5999, %v6001
        %v6003 = vrot.slane %v5963, 4
        %v6004 = vsel %vm5713, %v6001, %v6003
        %v6005 = vrot.slane %v5964, 4
        %v6006 = vsel %vm5713, %v6003, %v6005
        %v6007 = vrot.slane %v5965, 4
        %v6008 = vsel %vm5713, %v6005, %v6007
        %v6009 = vrot.slane %v5966, 4
        %v6010 = vsel %vm5713, %v6007, %v6009
        %v6011 = vrot.slane %v5967, 4
        %v6012 = vsel %vm5713, %v6009, %v6011
        %v6013 = vrot.slane %v5968, 4
        %v6014 = vsel %vm5713, %v6011, %v6013
        %v6015 = vrot.slane %v5969, 4
        %v6016 = vsel %vm5713, %v6013, %v6015
        %v6017 = vrot.slane %v5970, 4
        %v6018 = vsel %vm5713, %v6015, %v6017
        %v6019 = vrot.slane %v5971, 4
        %v6020 = vsel %vm5713, %v6017, %v6019
        %v6021 = vrot.slane %v5972, 4
        %v6022 = vsel %vm5713, %v6019, %v6021
        %v6023 = vrot.slane %v5973, 4
        %v6024 = vsel %vm5713, %v6021, %v6023
        %v6025 = vrot.slane %v5974, 4
        %v6026 = vsel %vm5713, %v6023, %v6025
        %v6027 = vrot.slane %v5975, 4
        %v6028 = vsel %vm5713, %v6025, %v6027
        %6029 = vrot.lane.b32.xlu0 %v5996, 26
        %v6030 = vpop.permute.xlu0 %6029
        %6031 = vrot.lane.b32.xlu0 %v5998, 26
        %v6032 = vpop.permute.xlu0 %6031
        %6033 = vrot.lane.b32.xlu0 %v6000, 26
        %v6034 = vpop.permute.xlu0 %6033
        %6035 = vrot.lane.b32.xlu0 %v6002, 26
        %v6036 = vpop.permute.xlu0 %6035
        %6037 = vrot.lane.b32.xlu0 %v6004, 26
        %v6038 = vpop.permute.xlu0 %6037
        %6039 = vrot.lane.b32.xlu0 %v6006, 26
        %v6040 = vpop.permute.xlu0 %6039
        %6041 = vrot.lane.b32.xlu0 %v6008, 26
        %v6042 = vpop.permute.xlu0 %6041
        %6043 = vrot.lane.b32.xlu0 %v6010, 26
        %v6044 = vpop.permute.xlu0 %6043
        %6045 = vrot.lane.b32.xlu0 %v6012, 26
        %v6046 = vpop.permute.xlu0 %6045
        %6047 = vrot.lane.b32.xlu0 %v6014, 26
        %v6048 = vpop.permute.xlu0 %6047
        %6049 = vrot.lane.b32.xlu0 %v6016, 26
        %v6050 = vpop.permute.xlu0 %6049
        %6051 = vrot.lane.b32.xlu0 %v6018, 26
        %v6052 = vpop.permute.xlu0 %6051
        %6053 = vrot.lane.b32.xlu0 %v6020, 26
        %v6054 = vpop.permute.xlu0 %6053
        %6055 = vrot.lane.b32.xlu0 %v6022, 26
        %v6056 = vpop.permute.xlu0 %6055
        %6057 = vrot.lane.b32.xlu0 %v6024, 26
        %v6058 = vpop.permute.xlu0 %6057
        %6059 = vrot.lane.b32.xlu0 %v6026, 26
        %v6060 = vpop.permute.xlu0 %6059
        %6061 = vrot.lane.b32.xlu0 %v6028, 26
        %v6062 = vpop.permute.xlu0 %6061
        %vm6080 = vcmask 220368
        %6081 = vst.msk [vmem:[#allocation3] sm:$0xff] %vm6080, %v6030
        %6082 = vst.msk [vmem:[#allocation3 + $0x8] sm:$0xff] %vm6080, %v6032
        %6083 = vst.msk [vmem:[#allocation3 + $0x10] sm:$0xff] %vm6080, %v6034
        %6084 = vst.msk [vmem:[#allocation3 + $0x18] sm:$0xff] %vm6080, %v6036
        %6085 = vst.msk [vmem:[#allocation3 + $0x20] sm:$0xff] %vm6080, %v6038
        %6086 = vst.msk [vmem:[#allocation3 + $0x28] sm:$0xff] %vm6080, %v6040
        %6087 = vst.msk [vmem:[#allocation3 + $0x30] sm:$0xff] %vm6080, %v6042
        %6088 = vst.msk [vmem:[#allocation3 + $0x38] sm:$0xff] %vm6080, %v6044
        %6089 = vst.msk [vmem:[#allocation3 + $0x40] sm:$0xff] %vm6080, %v6046
        %6090 = vst.msk [vmem:[#allocation3 + $0x48] sm:$0xff] %vm6080, %v6048
        %6091 = vst.msk [vmem:[#allocation3 + $0x50] sm:$0xff] %vm6080, %v6050
        %6092 = vst.msk [vmem:[#allocation3 + $0x58] sm:$0xff] %vm6080, %v6052
        %6093 = vst.msk [vmem:[#allocation3 + $0x60] sm:$0xff] %vm6080, %v6054
        %6094 = vst.msk [vmem:[#allocation3 + $0x68] sm:$0xff] %vm6080, %v6056
        %6095 = vst.msk [vmem:[#allocation3 + $0x70] sm:$0xff] %vm6080, %v6058
        %6096 = vst.msk [vmem:[#allocation3 + $0x78] sm:$0xff] %vm6080, %v6060
        %6097 = vst.msk [vmem:[#allocation3 + $0x80] sm:$0xff] %vm6080, %v6062
        %v6098 = vld [vmem:[#allocation2] sm:$0xf0]
        %v6099 = vld [vmem:[#allocation2 + $0x8] sm:$0xff]
        %v6100 = vld [vmem:[#allocation2 + $0x10] sm:$0xff]
        %v6101 = vld [vmem:[#allocation2 + $0x18] sm:$0xff]
        %v6102 = vld [vmem:[#allocation2 + $0x20] sm:$0xff]
        %v6103 = vld [vmem:[#allocation2 + $0x28] sm:$0xff]
        %v6104 = vld [vmem:[#allocation2 + $0x30] sm:$0xff]
        %v6105 = vld [vmem:[#allocation2 + $0x38] sm:$0xff]
        %v6106 = vld [vmem:[#allocation2 + $0x40] sm:$0xff]
        %v6107 = vld [vmem:[#allocation2 + $0x48] sm:$0xff]
        %v6108 = vld [vmem:[#allocation2 + $0x50] sm:$0xff]
        %v6109 = vld [vmem:[#allocation2 + $0x58] sm:$0xff]
        %v6110 = vld [vmem:[#allocation2 + $0x60] sm:$0xff]
        %v6111 = vld [vmem:[#allocation2 + $0x68] sm:$0xff]
        %v6112 = vld [vmem:[#allocation2 + $0x70] sm:$0xff]
        %v6113 = vld [vmem:[#allocation2 + $0x78] sm:$0xff]
        %v6114 = vld [vmem:[#allocation2 + $0x80] sm:$0xff]
        %v6115 = vld [vmem:[#allocation2 + $0x88] sm:$0x1f]
        %vm6116 = vsmask.f32 3328
        %v6118 = vshrl.u32 %v6098, 16
        %v6120 = vrot.slane %v6118, 4
        %v6121 = vshll.u32 %v6098, 16
        %v6123 = vrot.slane %v6121, 5
        %v6124 = vor.u32 %v6120, %v6123
        %v6126 = vshrl.u32 %v6099, 16
        %v6128 = vrot.slane %v6126, 4
        %v6129 = vshll.u32 %v6099, 16
        %v6131 = vrot.slane %v6129, 5
        %v6132 = vor.u32 %v6128, %v6131
        %v6133 = vsel %vm6116, %v6124, %v6132
        %v6135 = vshrl.u32 %v6100, 16
        %v6137 = vrot.slane %v6135, 4
        %v6138 = vshll.u32 %v6100, 16
        %v6140 = vrot.slane %v6138, 5
        %v6141 = vor.u32 %v6137, %v6140
        %v6142 = vsel %vm6116, %v6132, %v6141
        %v6144 = vshrl.u32 %v6101, 16
        %v6146 = vrot.slane %v6144, 4
        %v6147 = vshll.u32 %v6101, 16
        %v6149 = vrot.slane %v6147, 5
        %v6150 = vor.u32 %v6146, %v6149
        %v6151 = vsel %vm6116, %v6141, %v6150
        %v6153 = vshrl.u32 %v6102, 16
        %v6155 = vrot.slane %v6153, 4
        %v6156 = vshll.u32 %v6102, 16
        %v6158 = vrot.slane %v6156, 5
        %v6159 = vor.u32 %v6155, %v6158
        %v6160 = vsel %vm6116, %v6150, %v6159
        %v6162 = vshrl.u32 %v6103, 16
        %v6164 = vrot.slane %v6162, 4
        %v6165 = vshll.u32 %v6103, 16
        %v6167 = vrot.slane %v6165, 5
        %v6168 = vor.u32 %v6164, %v6167
        %v6169 = vsel %vm6116, %v6159, %v6168
        %v6171 = vshrl.u32 %v6104, 16
        %v6173 = vrot.slane %v6171, 4
        %v6174 = vshll.u32 %v6104, 16
        %v6176 = vrot.slane %v6174, 5
        %v6177 = vor.u32 %v6173, %v6176
        %v6178 = vsel %vm6116, %v6168, %v6177
        %v6180 = vshrl.u32 %v6105, 16
        %v6182 = vrot.slane %v6180, 4
        %v6183 = vshll.u32 %v6105, 16
        %v6185 = vrot.slane %v6183, 5
        %v6186 = vor.u32 %v6182, %v6185
        %v6187 = vsel %vm6116, %v6177, %v6186
        %v6189 = vshrl.u32 %v6106, 16
        %v6191 = vrot.slane %v6189, 4
        %v6192 = vshll.u32 %v6106, 16
        %v6194 = vrot.slane %v6192, 5
        %v6195 = vor.u32 %v6191, %v6194
        %v6196 = vsel %vm6116, %v6186, %v6195
        %v6198 = vshrl.u32 %v6107, 16
        %v6200 = vrot.slane %v6198, 4
        %v6201 = vshll.u32 %v6107, 16
        %v6203 = vrot.slane %v6201, 5
        %v6204 = vor.u32 %v6200, %v6203
        %v6205 = vsel %vm6116, %v6195, %v6204
        %v6207 = vshrl.u32 %v6108, 16
        %v6209 = vrot.slane %v6207, 4
        %v6210 = vshll.u32 %v6108, 16
        %v6212 = vrot.slane %v6210, 5
        %v6213 = vor.u32 %v6209, %v6212
        %v6214 = vsel %vm6116, %v6204, %v6213
        %v6216 = vshrl.u32 %v6109, 16
        %v6218 = vrot.slane %v6216, 4
        %v6219 = vshll.u32 %v6109, 16
        %v6221 = vrot.slane %v6219, 5
        %v6222 = vor.u32 %v6218, %v6221
        %v6223 = vsel %vm6116, %v6213, %v6222
        %v6225 = vshrl.u32 %v6110, 16
        %v6227 = vrot.slane %v6225, 4
        %v6228 = vshll.u32 %v6110, 16
        %v6230 = vrot.slane %v6228, 5
        %v6231 = vor.u32 %v6227, %v6230
        %v6232 = vsel %vm6116, %v6222, %v6231
        %v6234 = vshrl.u32 %v6111, 16
        %v6236 = vrot.slane %v6234, 4
        %v6237 = vshll.u32 %v6111, 16
        %v6239 = vrot.slane %v6237, 5
        %v6240 = vor.u32 %v6236, %v6239
        %v6241 = vsel %vm6116, %v6231, %v6240
        %v6243 = vshrl.u32 %v6112, 16
        %v6245 = vrot.slane %v6243, 4
        %v6246 = vshll.u32 %v6112, 16
        %v6248 = vrot.slane %v6246, 5
        %v6249 = vor.u32 %v6245, %v6248
        %v6250 = vsel %vm6116, %v6240, %v6249
        %v6252 = vshrl.u32 %v6113, 16
        %v6254 = vrot.slane %v6252, 4
        %v6255 = vshll.u32 %v6113, 16
        %v6257 = vrot.slane %v6255, 5
        %v6258 = vor.u32 %v6254, %v6257
        %v6259 = vsel %vm6116, %v6249, %v6258
        %v6261 = vshrl.u32 %v6114, 16
        %v6263 = vrot.slane %v6261, 4
        %v6264 = vshll.u32 %v6114, 16
        %v6266 = vrot.slane %v6264, 5
        %v6267 = vor.u32 %v6263, %v6266
        %v6268 = vsel %vm6116, %v6258, %v6267
        %v6270 = vshrl.u32 %v6115, 16
        %v6272 = vrot.slane %v6270, 4
        %v6273 = vshll.u32 %v6115, 16
        %v6275 = vrot.slane %v6273, 5
        %v6276 = vor.u32 %v6272, %v6275
        %v6277 = vsel %vm6116, %v6267, %v6276
        %6278 = vrot.lane.b32.xlu0 %v6133, 27
        %v6279 = vpop.permute.xlu0 %6278
        %6280 = vrot.lane.b32.xlu0 %v6142, 27
        %v6281 = vpop.permute.xlu0 %6280
        %6282 = vrot.lane.b32.xlu0 %v6151, 27
        %v6283 = vpop.permute.xlu0 %6282
        %6284 = vrot.lane.b32.xlu0 %v6160, 27
        %v6285 = vpop.permute.xlu0 %6284
        %6286 = vrot.lane.b32.xlu0 %v6169, 27
        %v6287 = vpop.permute.xlu0 %6286
        %6288 = vrot.lane.b32.xlu0 %v6178, 27
        %v6289 = vpop.permute.xlu0 %6288
        %6290 = vrot.lane.b32.xlu0 %v6187, 27
        %v6291 = vpop.permute.xlu0 %6290
        %6292 = vrot.lane.b32.xlu0 %v6196, 27
        %v6293 = vpop.permute.xlu0 %6292
        %6294 = vrot.lane.b32.xlu0 %v6205, 27
        %v6295 = vpop.permute.xlu0 %6294
        %6296 = vrot.lane.b32.xlu0 %v6214, 27
        %v6297 = vpop.permute.xlu0 %6296
        %6298 = vrot.lane.b32.xlu0 %v6223, 27
        %v6299 = vpop.permute.xlu0 %6298
        %6300 = vrot.lane.b32.xlu0 %v6232, 27
        %v6301 = vpop.permute.xlu0 %6300
        %6302 = vrot.lane.b32.xlu0 %v6241, 27
        %v6303 = vpop.permute.xlu0 %6302
        %6304 = vrot.lane.b32.xlu0 %v6250, 27
        %v6305 = vpop.permute.xlu0 %6304
        %6306 = vrot.lane.b32.xlu0 %v6259, 27
        %v6307 = vpop.permute.xlu0 %6306
        %6308 = vrot.lane.b32.xlu0 %v6268, 27
        %v6309 = vpop.permute.xlu0 %6308
        %6310 = vrot.lane.b32.xlu0 %v6277, 27
        %v6311 = vpop.permute.xlu0 %6310
        %vm6329 = vcmask 228568
        %6330 = vst.msk [vmem:[#allocation3] sm:$0xff] %vm6329, %v6279
        %6331 = vst.msk [vmem:[#allocation3 + $0x8] sm:$0xff] %vm6329, %v6281
        %6332 = vst.msk [vmem:[#allocation3 + $0x10] sm:$0xff] %vm6329, %v6283
        %6333 = vst.msk [vmem:[#allocation3 + $0x18] sm:$0xff] %vm6329, %v6285
        %6334 = vst.msk [vmem:[#allocation3 + $0x20] sm:$0xff] %vm6329, %v6287
        %6335 = vst.msk [vmem:[#allocation3 + $0x28] sm:$0xff] %vm6329, %v6289
        %6336 = vst.msk [vmem:[#allocation3 + $0x30] sm:$0xff] %vm6329, %v6291
        %6337 = vst.msk [vmem:[#allocation3 + $0x38] sm:$0xff] %vm6329, %v6293
        %6338 = vst.msk [vmem:[#allocation3 + $0x40] sm:$0xff] %vm6329, %v6295
        %6339 = vst.msk [vmem:[#allocation3 + $0x48] sm:$0xff] %vm6329, %v6297
        %6340 = vst.msk [vmem:[#allocation3 + $0x50] sm:$0xff] %vm6329, %v6299
        %6341 = vst.msk [vmem:[#allocation3 + $0x58] sm:$0xff] %vm6329, %v6301
        %6342 = vst.msk [vmem:[#allocation3 + $0x60] sm:$0xff] %vm6329, %v6303
        %6343 = vst.msk [vmem:[#allocation3 + $0x68] sm:$0xff] %vm6329, %v6305
        %6344 = vst.msk [vmem:[#allocation3 + $0x70] sm:$0xff] %vm6329, %v6307
        %6345 = vst.msk [vmem:[#allocation3 + $0x78] sm:$0xff] %vm6329, %v6309
        %6346 = vst.msk [vmem:[#allocation3 + $0x80] sm:$0xff] %vm6329, %v6311
        %v6347 = vld [vmem:[%s1289] sm:$0xf0]
        %v6348 = vld [vmem:[%s1289 + $0x8] sm:$0xff]
        %v6349 = vld [vmem:[%s1289 + $0x10] sm:$0xff]
        %v6350 = vld [vmem:[%s1289 + $0x18] sm:$0xff]
        %v6351 = vld [vmem:[%s1289 + $0x20] sm:$0xff]
        %v6352 = vld [vmem:[%s1289 + $0x28] sm:$0xff]
        %v6353 = vld [vmem:[%s1289 + $0x30] sm:$0xff]
        %v6354 = vld [vmem:[%s1289 + $0x38] sm:$0xff]
        %v6355 = vld [vmem:[%s1289 + $0x40] sm:$0xff]
        %v6356 = vld [vmem:[%s1289 + $0x48] sm:$0xff]
        %v6357 = vld [vmem:[%s1289 + $0x50] sm:$0xff]
        %v6358 = vld [vmem:[%s1289 + $0x58] sm:$0xff]
        %v6359 = vld [vmem:[%s1289 + $0x60] sm:$0xff]
        %v6360 = vld [vmem:[%s1289 + $0x68] sm:$0xff]
        %v6361 = vld [vmem:[%s1289 + $0x70] sm:$0xff]
        %v6362 = vld [vmem:[%s1289 + $0x78] sm:$0xff]
        %v6363 = vld [vmem:[%s1289 + $0x80] sm:$0xff]
        %v6364 = vld [vmem:[%s1289 + $0x88] sm:$0x1f]
        %v6366 = vshrl.u32 %v6347, 16
        %v6368 = vrot.slane %v6366, 4
        %v6369 = vshll.u32 %v6347, 16
        %v6371 = vrot.slane %v6369, 5
        %v6372 = vor.u32 %v6368, %v6371
        %v6374 = vshrl.u32 %v6348, 16
        %v6376 = vrot.slane %v6374, 4
        %v6377 = vshll.u32 %v6348, 16
        %v6379 = vrot.slane %v6377, 5
        %v6380 = vor.u32 %v6376, %v6379
        %v6381 = vsel %vm6116, %v6372, %v6380
        %v6383 = vshrl.u32 %v6349, 16
        %v6385 = vrot.slane %v6383, 4
        %v6386 = vshll.u32 %v6349, 16
        %v6388 = vrot.slane %v6386, 5
        %v6389 = vor.u32 %v6385, %v6388
        %v6390 = vsel %vm6116, %v6380, %v6389
        %v6392 = vshrl.u32 %v6350, 16
        %v6394 = vrot.slane %v6392, 4
        %v6395 = vshll.u32 %v6350, 16
        %v6397 = vrot.slane %v6395, 5
        %v6398 = vor.u32 %v6394, %v6397
        %v6399 = vsel %vm6116, %v6389, %v6398
        %v6401 = vshrl.u32 %v6351, 16
        %v6403 = vrot.slane %v6401, 4
        %v6404 = vshll.u32 %v6351, 16
        %v6406 = vrot.slane %v6404, 5
        %v6407 = vor.u32 %v6403, %v6406
        %v6408 = vsel %vm6116, %v6398, %v6407
        %v6410 = vshrl.u32 %v6352, 16
        %v6412 = vrot.slane %v6410, 4
        %v6413 = vshll.u32 %v6352, 16
        %v6415 = vrot.slane %v6413, 5
        %v6416 = vor.u32 %v6412, %v6415
        %v6417 = vsel %vm6116, %v6407, %v6416
        %v6419 = vshrl.u32 %v6353, 16
        %v6421 = vrot.slane %v6419, 4
        %v6422 = vshll.u32 %v6353, 16
        %v6424 = vrot.slane %v6422, 5
        %v6425 = vor.u32 %v6421, %v6424
        %v6426 = vsel %vm6116, %v6416, %v6425
        %v6428 = vshrl.u32 %v6354, 16
        %v6430 = vrot.slane %v6428, 4
        %v6431 = vshll.u32 %v6354, 16
        %v6433 = vrot.slane %v6431, 5
        %v6434 = vor.u32 %v6430, %v6433
        %v6435 = vsel %vm6116, %v6425, %v6434
        %v6437 = vshrl.u32 %v6355, 16
        %v6439 = vrot.slane %v6437, 4
        %v6440 = vshll.u32 %v6355, 16
        %v6442 = vrot.slane %v6440, 5
        %v6443 = vor.u32 %v6439, %v6442
        %v6444 = vsel %vm6116, %v6434, %v6443
        %v6446 = vshrl.u32 %v6356, 16
        %v6448 = vrot.slane %v6446, 4
        %v6449 = vshll.u32 %v6356, 16
        %v6451 = vrot.slane %v6449, 5
        %v6452 = vor.u32 %v6448, %v6451
        %v6453 = vsel %vm6116, %v6443, %v6452
        %v6455 = vshrl.u32 %v6357, 16
        %v6457 = vrot.slane %v6455, 4
        %v6458 = vshll.u32 %v6357, 16
        %v6460 = vrot.slane %v6458, 5
        %v6461 = vor.u32 %v6457, %v6460
        %v6462 = vsel %vm6116, %v6452, %v6461
        %v6464 = vshrl.u32 %v6358, 16
        %v6466 = vrot.slane %v6464, 4
        %v6467 = vshll.u32 %v6358, 16
        %v6469 = vrot.slane %v6467, 5
        %v6470 = vor.u32 %v6466, %v6469
        %v6471 = vsel %vm6116, %v6461, %v6470
        %v6473 = vshrl.u32 %v6359, 16
        %v6475 = vrot.slane %v6473, 4
        %v6476 = vshll.u32 %v6359, 16
        %v6478 = vrot.slane %v6476, 5
        %v6479 = vor.u32 %v6475, %v6478
        %v6480 = vsel %vm6116, %v6470, %v6479
        %v6482 = vshrl.u32 %v6360, 16
        %v6484 = vrot.slane %v6482, 4
        %v6485 = vshll.u32 %v6360, 16
        %v6487 = vrot.slane %v6485, 5
        %v6488 = vor.u32 %v6484, %v6487
        %v6489 = vsel %vm6116, %v6479, %v6488
        %v6491 = vshrl.u32 %v6361, 16
        %v6493 = vrot.slane %v6491, 4
        %v6494 = vshll.u32 %v6361, 16
        %v6496 = vrot.slane %v6494, 5
        %v6497 = vor.u32 %v6493, %v6496
        %v6498 = vsel %vm6116, %v6488, %v6497
        %v6500 = vshrl.u32 %v6362, 16
        %v6502 = vrot.slane %v6500, 4
        %v6503 = vshll.u32 %v6362, 16
        %v6505 = vrot.slane %v6503, 5
        %v6506 = vor.u32 %v6502, %v6505
        %v6507 = vsel %vm6116, %v6497, %v6506
        %v6509 = vshrl.u32 %v6363, 16
        %v6511 = vrot.slane %v6509, 4
        %v6512 = vshll.u32 %v6363, 16
        %v6514 = vrot.slane %v6512, 5
        %v6515 = vor.u32 %v6511, %v6514
        %v6516 = vsel %vm6116, %v6506, %v6515
        %v6518 = vshrl.u32 %v6364, 16
        %v6520 = vrot.slane %v6518, 4
        %v6521 = vshll.u32 %v6364, 16
        %v6523 = vrot.slane %v6521, 5
        %v6524 = vor.u32 %v6520, %v6523
        %v6525 = vsel %vm6116, %v6515, %v6524
        %6526 = vrot.lane.b32.xlu0 %v6381, 28
        %v6527 = vpop.permute.xlu0 %6526
        %6528 = vrot.lane.b32.xlu0 %v6390, 28
        %v6529 = vpop.permute.xlu0 %6528
        %6530 = vrot.lane.b32.xlu0 %v6399, 28
        %v6531 = vpop.permute.xlu0 %6530
        %6532 = vrot.lane.b32.xlu0 %v6408, 28
        %v6533 = vpop.permute.xlu0 %6532
        %6534 = vrot.lane.b32.xlu0 %v6417, 28
        %v6535 = vpop.permute.xlu0 %6534
        %6536 = vrot.lane.b32.xlu0 %v6426, 28
        %v6537 = vpop.permute.xlu0 %6536
        %6538 = vrot.lane.b32.xlu0 %v6435, 28
        %v6539 = vpop.permute.xlu0 %6538
        %6540 = vrot.lane.b32.xlu0 %v6444, 28
        %v6541 = vpop.permute.xlu0 %6540
        %6542 = vrot.lane.b32.xlu0 %v6453, 28
        %v6543 = vpop.permute.xlu0 %6542
        %6544 = vrot.lane.b32.xlu0 %v6462, 28
        %v6545 = vpop.permute.xlu0 %6544
        %6546 = vrot.lane.b32.xlu0 %v6471, 28
        %v6547 = vpop.permute.xlu0 %6546
        %6548 = vrot.lane.b32.xlu0 %v6480, 28
        %v6549 = vpop.permute.xlu0 %6548
        %6550 = vrot.lane.b32.xlu0 %v6489, 28
        %v6551 = vpop.permute.xlu0 %6550
        %6552 = vrot.lane.b32.xlu0 %v6498, 28
        %v6553 = vpop.permute.xlu0 %6552
        %6554 = vrot.lane.b32.xlu0 %v6507, 28
        %v6555 = vpop.permute.xlu0 %6554
        %6556 = vrot.lane.b32.xlu0 %v6516, 28
        %v6557 = vpop.permute.xlu0 %6556
        %6558 = vrot.lane.b32.xlu0 %v6525, 28
        %v6559 = vpop.permute.xlu0 %6558
        %vm6577 = vcmask 236768
        %6578 = vst.msk [vmem:[#allocation3] sm:$0xff] %vm6577, %v6527
        %6579 = vst.msk [vmem:[#allocation3 + $0x8] sm:$0xff] %vm6577, %v6529
        %6580 = vst.msk [vmem:[#allocation3 + $0x10] sm:$0xff] %vm6577, %v6531
        %6581 = vst.msk [vmem:[#allocation3 + $0x18] sm:$0xff] %vm6577, %v6533
        %6582 = vst.msk [vmem:[#allocation3 + $0x20] sm:$0xff] %vm6577, %v6535
        %6583 = vst.msk [vmem:[#allocation3 + $0x28] sm:$0xff] %vm6577, %v6537
        %6584 = vst.msk [vmem:[#allocation3 + $0x30] sm:$0xff] %vm6577, %v6539
        %6585 = vst.msk [vmem:[#allocation3 + $0x38] sm:$0xff] %vm6577, %v6541
        %6586 = vst.msk [vmem:[#allocation3 + $0x40] sm:$0xff] %vm6577, %v6543
        %6587 = vst.msk [vmem:[#allocation3 + $0x48] sm:$0xff] %vm6577, %v6545
        %6588 = vst.msk [vmem:[#allocation3 + $0x50] sm:$0xff] %vm6577, %v6547
        %6589 = vst.msk [vmem:[#allocation3 + $0x58] sm:$0xff] %vm6577, %v6549
        %6590 = vst.msk [vmem:[#allocation3 + $0x60] sm:$0xff] %vm6577, %v6551
        %6591 = vst.msk [vmem:[#allocation3 + $0x68] sm:$0xff] %vm6577, %v6553
        %6592 = vst.msk [vmem:[#allocation3 + $0x70] sm:$0xff] %vm6577, %v6555
        %6593 = vst.msk [vmem:[#allocation3 + $0x78] sm:$0xff] %vm6577, %v6557
        %6594 = vst.msk [vmem:[#allocation3 + $0x80] sm:$0xff] %vm6577, %v6559
        %v6595 = vld [vmem:[%s1393] sm:$0xf0]
        %v6596 = vld [vmem:[%s1393 + $0x8] sm:$0xff]
        %v6597 = vld [vmem:[%s1393 + $0x10] sm:$0xff]
        %v6598 = vld [vmem:[%s1393 + $0x18] sm:$0xff]
        %v6599 = vld [vmem:[%s1393 + $0x20] sm:$0xff]
        %v6600 = vld [vmem:[%s1393 + $0x28] sm:$0xff]
        %v6601 = vld [vmem:[%s1393 + $0x30] sm:$0xff]
        %v6602 = vld [vmem:[%s1393 + $0x38] sm:$0xff]
        %v6603 = vld [vmem:[%s1393 + $0x40] sm:$0xff]
        %v6604 = vld [vmem:[%s1393 + $0x48] sm:$0xff]
        %v6605 = vld [vmem:[%s1393 + $0x50] sm:$0xff]
        %v6606 = vld [vmem:[%s1393 + $0x58] sm:$0xff]
        %v6607 = vld [vmem:[%s1393 + $0x60] sm:$0xff]
        %v6608 = vld [vmem:[%s1393 + $0x68] sm:$0xff]
        %v6609 = vld [vmem:[%s1393 + $0x70] sm:$0xff]
        %v6610 = vld [vmem:[%s1393 + $0x78] sm:$0xff]
        %v6611 = vld [vmem:[%s1393 + $0x80] sm:$0xff]
        %v6612 = vld [vmem:[%s1393 + $0x88] sm:$0x1f]
        %v6614 = vshrl.u32 %v6595, 16
        %v6616 = vrot.slane %v6614, 4
        %v6617 = vshll.u32 %v6595, 16
        %v6619 = vrot.slane %v6617, 5
        %v6620 = vor.u32 %v6616, %v6619
        %v6622 = vshrl.u32 %v6596, 16
        %v6624 = vrot.slane %v6622, 4
        %v6625 = vshll.u32 %v6596, 16
        %v6627 = vrot.slane %v6625, 5
        %v6628 = vor.u32 %v6624, %v6627
        %v6629 = vsel %vm6116, %v6620, %v6628
        %v6631 = vshrl.u32 %v6597, 16
        %v6633 = vrot.slane %v6631, 4
        %v6634 = vshll.u32 %v6597, 16
        %v6636 = vrot.slane %v6634, 5
        %v6637 = vor.u32 %v6633, %v6636
        %v6638 = vsel %vm6116, %v6628, %v6637
        %v6640 = vshrl.u32 %v6598, 16
        %v6642 = vrot.slane %v6640, 4
        %v6643 = vshll.u32 %v6598, 16
        %v6645 = vrot.slane %v6643, 5
        %v6646 = vor.u32 %v6642, %v6645
        %v6647 = vsel %vm6116, %v6637, %v6646
        %v6649 = vshrl.u32 %v6599, 16
        %v6651 = vrot.slane %v6649, 4
        %v6652 = vshll.u32 %v6599, 16
        %v6654 = vrot.slane %v6652, 5
        %v6655 = vor.u32 %v6651, %v6654
        %v6656 = vsel %vm6116, %v6646, %v6655
        %v6658 = vshrl.u32 %v6600, 16
        %v6660 = vrot.slane %v6658, 4
        %v6661 = vshll.u32 %v6600, 16
        %v6663 = vrot.slane %v6661, 5
        %v6664 = vor.u32 %v6660, %v6663
        %v6665 = vsel %vm6116, %v6655, %v6664
        %v6667 = vshrl.u32 %v6601, 16
        %v6669 = vrot.slane %v6667, 4
        %v6670 = vshll.u32 %v6601, 16
        %v6672 = vrot.slane %v6670, 5
        %v6673 = vor.u32 %v6669, %v6672
        %v6674 = vsel %vm6116, %v6664, %v6673
        %v6676 = vshrl.u32 %v6602, 16
        %v6678 = vrot.slane %v6676, 4
        %v6679 = vshll.u32 %v6602, 16
        %v6681 = vrot.slane %v6679, 5
        %v6682 = vor.u32 %v6678, %v6681
        %v6683 = vsel %vm6116, %v6673, %v6682
        %v6685 = vshrl.u32 %v6603, 16
        %v6687 = vrot.slane %v6685, 4
        %v6688 = vshll.u32 %v6603, 16
        %v6690 = vrot.slane %v6688, 5
        %v6691 = vor.u32 %v6687, %v6690
        %v6692 = vsel %vm6116, %v6682, %v6691
        %v6694 = vshrl.u32 %v6604, 16
        %v6696 = vrot.slane %v6694, 4
        %v6697 = vshll.u32 %v6604, 16
        %v6699 = vrot.slane %v6697, 5
        %v6700 = vor.u32 %v6696, %v6699
        %v6701 = vsel %vm6116, %v6691, %v6700
        %v6703 = vshrl.u32 %v6605, 16
        %v6705 = vrot.slane %v6703, 4
        %v6706 = vshll.u32 %v6605, 16
        %v6708 = vrot.slane %v6706, 5
        %v6709 = vor.u32 %v6705, %v6708
        %v6710 = vsel %vm6116, %v6700, %v6709
        %v6712 = vshrl.u32 %v6606, 16
        %v6714 = vrot.slane %v6712, 4
        %v6715 = vshll.u32 %v6606, 16
        %v6717 = vrot.slane %v6715, 5
        %v6718 = vor.u32 %v6714, %v6717
        %v6719 = vsel %vm6116, %v6709, %v6718
        %v6721 = vshrl.u32 %v6607, 16
        %v6723 = vrot.slane %v6721, 4
        %v6724 = vshll.u32 %v6607, 16
        %v6726 = vrot.slane %v6724, 5
        %v6727 = vor.u32 %v6723, %v6726
        %v6728 = vsel %vm6116, %v6718, %v6727
        %v6730 = vshrl.u32 %v6608, 16
        %v6732 = vrot.slane %v6730, 4
        %v6733 = vshll.u32 %v6608, 16
        %v6735 = vrot.slane %v6733, 5
        %v6736 = vor.u32 %v6732, %v6735
        %v6737 = vsel %vm6116, %v6727, %v6736
        %v6739 = vshrl.u32 %v6609, 16
        %v6741 = vrot.slane %v6739, 4
        %v6742 = vshll.u32 %v6609, 16
        %v6744 = vrot.slane %v6742, 5
        %v6745 = vor.u32 %v6741, %v6744
        %v6746 = vsel %vm6116, %v6736, %v6745
        %v6748 = vshrl.u32 %v6610, 16
        %v6750 = vrot.slane %v6748, 4
        %v6751 = vshll.u32 %v6610, 16
        %v6753 = vrot.slane %v6751, 5
        %v6754 = vor.u32 %v6750, %v6753
        %v6755 = vsel %vm6116, %v6745, %v6754
        %v6757 = vshrl.u32 %v6611, 16
        %v6759 = vrot.slane %v6757, 4
        %v6760 = vshll.u32 %v6611, 16
        %v6762 = vrot.slane %v6760, 5
        %v6763 = vor.u32 %v6759, %v6762
        %v6764 = vsel %vm6116, %v6754, %v6763
        %v6766 = vshrl.u32 %v6612, 16
        %v6768 = vrot.slane %v6766, 4
        %v6769 = vshll.u32 %v6612, 16
        %v6771 = vrot.slane %v6769, 5
        %v6772 = vor.u32 %v6768, %v6771
        %v6773 = vsel %vm6116, %v6763, %v6772
        %6774 = vrot.lane.b32.xlu0 %v6629, 29
        %v6775 = vpop.permute.xlu0 %6774
        %6776 = vrot.lane.b32.xlu0 %v6638, 29
        %v6777 = vpop.permute.xlu0 %6776
        %6778 = vrot.lane.b32.xlu0 %v6647, 29
        %v6779 = vpop.permute.xlu0 %6778
        %6780 = vrot.lane.b32.xlu0 %v6656, 29
        %v6781 = vpop.permute.xlu0 %6780
        %6782 = vrot.lane.b32.xlu0 %v6665, 29
        %v6783 = vpop.permute.xlu0 %6782
        %6784 = vrot.lane.b32.xlu0 %v6674, 29
        %v6785 = vpop.permute.xlu0 %6784
        %6786 = vrot.lane.b32.xlu0 %v6683, 29
        %v6787 = vpop.permute.xlu0 %6786
        %6788 = vrot.lane.b32.xlu0 %v6692, 29
        %v6789 = vpop.permute.xlu0 %6788
        %6790 = vrot.lane.b32.xlu0 %v6701, 29
        %v6791 = vpop.permute.xlu0 %6790
        %6792 = vrot.lane.b32.xlu0 %v6710, 29
        %v6793 = vpop.permute.xlu0 %6792
        %6794 = vrot.lane.b32.xlu0 %v6719, 29
        %v6795 = vpop.permute.xlu0 %6794
        %6796 = vrot.lane.b32.xlu0 %v6728, 29
        %v6797 = vpop.permute.xlu0 %6796
        %6798 = vrot.lane.b32.xlu0 %v6737, 29
        %v6799 = vpop.permute.xlu0 %6798
        %6800 = vrot.lane.b32.xlu0 %v6746, 29
        %v6801 = vpop.permute.xlu0 %6800
        %6802 = vrot.lane.b32.xlu0 %v6755, 29
        %v6803 = vpop.permute.xlu0 %6802
        %6804 = vrot.lane.b32.xlu0 %v6764, 29
        %v6805 = vpop.permute.xlu0 %6804
        %6806 = vrot.lane.b32.xlu0 %v6773, 29
        %v6807 = vpop.permute.xlu0 %6806
        %vm6825 = vcmask 244968
        %6826 = vst.msk [vmem:[#allocation3] sm:$0xff] %vm6825, %v6775
        %6827 = vst.msk [vmem:[#allocation3 + $0x8] sm:$0xff] %vm6825, %v6777
        %6828 = vst.msk [vmem:[#allocation3 + $0x10] sm:$0xff] %vm6825, %v6779
        %6829 = vst.msk [vmem:[#allocation3 + $0x18] sm:$0xff] %vm6825, %v6781
        %6830 = vst.msk [vmem:[#allocation3 + $0x20] sm:$0xff] %vm6825, %v6783
        %6831 = vst.msk [vmem:[#allocation3 + $0x28] sm:$0xff] %vm6825, %v6785
        %6832 = vst.msk [vmem:[#allocation3 + $0x30] sm:$0xff] %vm6825, %v6787
        %6833 = vst.msk [vmem:[#allocation3 + $0x38] sm:$0xff] %vm6825, %v6789
        %6834 = vst.msk [vmem:[#allocation3 + $0x40] sm:$0xff] %vm6825, %v6791
        %6835 = vst.msk [vmem:[#allocation3 + $0x48] sm:$0xff] %vm6825, %v6793
        %6836 = vst.msk [vmem:[#allocation3 + $0x50] sm:$0xff] %vm6825, %v6795
        %6837 = vst.msk [vmem:[#allocation3 + $0x58] sm:$0xff] %vm6825, %v6797
        %6838 = vst.msk [vmem:[#allocation3 + $0x60] sm:$0xff] %vm6825, %v6799
        %6839 = vst.msk [vmem:[#allocation3 + $0x68] sm:$0xff] %vm6825, %v6801
        %6840 = vst.msk [vmem:[#allocation3 + $0x70] sm:$0xff] %vm6825, %v6803
        %6841 = vst.msk [vmem:[#allocation3 + $0x78] sm:$0xff] %vm6825, %v6805
        %6842 = vst.msk [vmem:[#allocation3 + $0x80] sm:$0xff] %vm6825, %v6807
        %v6843 = vld [vmem:[#allocation2] sm:$0xe0]
        %v6844 = vld [vmem:[#allocation2 + $0x8] sm:$0xff]
        %v6845 = vld [vmem:[#allocation2 + $0x10] sm:$0xff]
        %v6846 = vld [vmem:[#allocation2 + $0x18] sm:$0xff]
        %v6847 = vld [vmem:[#allocation2 + $0x20] sm:$0xff]
        %v6848 = vld [vmem:[#allocation2 + $0x28] sm:$0xff]
        %v6849 = vld [vmem:[#allocation2 + $0x30] sm:$0xff]
        %v6850 = vld [vmem:[#allocation2 + $0x38] sm:$0xff]
        %v6851 = vld [vmem:[#allocation2 + $0x40] sm:$0xff]
        %v6852 = vld [vmem:[#allocation2 + $0x48] sm:$0xff]
        %v6853 = vld [vmem:[#allocation2 + $0x50] sm:$0xff]
        %v6854 = vld [vmem:[#allocation2 + $0x58] sm:$0xff]
        %v6855 = vld [vmem:[#allocation2 + $0x60] sm:$0xff]
        %v6856 = vld [vmem:[#allocation2 + $0x68] sm:$0xff]
        %v6857 = vld [vmem:[#allocation2 + $0x70] sm:$0xff]
        %v6858 = vld [vmem:[#allocation2 + $0x78] sm:$0xff]
        %v6859 = vld [vmem:[#allocation2 + $0x80] sm:$0xff]
        %v6860 = vld [vmem:[#allocation2 + $0x88] sm:$0x1f]
        %vm6879 = vcmask 1042432
        %v6880 = vrot.slane %v6843, 5
        %v6881 = vrot.slane %v6844, 5
        %v6882 = vsel %vm6879, %v6880, %v6881
        %v6883 = vrot.slane %v6845, 5
        %v6884 = vsel %vm6879, %v6881, %v6883
        %v6885 = vrot.slane %v6846, 5
        %v6886 = vsel %vm6879, %v6883, %v6885
        %v6887 = vrot.slane %v6847, 5
        %v6888 = vsel %vm6879, %v6885, %v6887
        %v6889 = vrot.slane %v6848, 5
        %v6890 = vsel %vm6879, %v6887, %v6889
        %v6891 = vrot.slane %v6849, 5
        %v6892 = vsel %vm6879, %v6889, %v6891
        %v6893 = vrot.slane %v6850, 5
        %v6894 = vsel %vm6879, %v6891, %v6893
        %v6895 = vrot.slane %v6851, 5
        %v6896 = vsel %vm6879, %v6893, %v6895
        %v6897 = vrot.slane %v6852, 5
        %v6898 = vsel %vm6879, %v6895, %v6897
        %v6899 = vrot.slane %v6853, 5
        %v6900 = vsel %vm6879, %v6897, %v6899
        %v6901 = vrot.slane %v6854, 5
        %v6902 = vsel %vm6879, %v6899, %v6901
        %v6903 = vrot.slane %v6855, 5
        %v6904 = vsel %vm6879, %v6901, %v6903
        %v6905 = vrot.slane %v6856, 5
        %v6906 = vsel %vm6879, %v6903, %v6905
        %v6907 = vrot.slane %v6857, 5
        %v6908 = vsel %vm6879, %v6905, %v6907
        %v6909 = vrot.slane %v6858, 5
        %v6910 = vsel %vm6879, %v6907, %v6909
        %v6911 = vrot.slane %v6859, 5
        %v6912 = vsel %vm6879, %v6909, %v6911
        %v6913 = vrot.slane %v6860, 5
        %v6914 = vsel %vm6879, %v6911, %v6913
        %6915 = vrot.lane.b32.xlu0 %v6882, 30
        %v6916 = vpop.permute.xlu0 %6915
        %6917 = vrot.lane.b32.xlu0 %v6884, 30
        %v6918 = vpop.permute.xlu0 %6917
        %6919 = vrot.lane.b32.xlu0 %v6886, 30
        %v6920 = vpop.permute.xlu0 %6919
        %6921 = vrot.lane.b32.xlu0 %v6888, 30
        %v6922 = vpop.permute.xlu0 %6921
        %6923 = vrot.lane.b32.xlu0 %v6890, 30
        %v6924 = vpop.permute.xlu0 %6923
        %6925 = vrot.lane.b32.xlu0 %v6892, 30
        %v6926 = vpop.permute.xlu0 %6925
        %6927 = vrot.lane.b32.xlu0 %v6894, 30
        %v6928 = vpop.permute.xlu0 %6927
        %6929 = vrot.lane.b32.xlu0 %v6896, 30
        %v6930 = vpop.permute.xlu0 %6929
        %6931 = vrot.lane.b32.xlu0 %v6898, 30
        %v6932 = vpop.permute.xlu0 %6931
        %6933 = vrot.lane.b32.xlu0 %v6900, 30
        %v6934 = vpop.permute.xlu0 %6933
        %6935 = vrot.lane.b32.xlu0 %v6902, 30
        %v6936 = vpop.permute.xlu0 %6935
        %6937 = vrot.lane.b32.xlu0 %v6904, 30
        %v6938 = vpop.permute.xlu0 %6937
        %6939 = vrot.lane.b32.xlu0 %v6906, 30
        %v6940 = vpop.permute.xlu0 %6939
        %6941 = vrot.lane.b32.xlu0 %v6908, 30
        %v6942 = vpop.permute.xlu0 %6941
        %6943 = vrot.lane.b32.xlu0 %v6910, 30
        %v6944 = vpop.permute.xlu0 %6943
        %6945 = vrot.lane.b32.xlu0 %v6912, 30
        %v6946 = vpop.permute.xlu0 %6945
        %6947 = vrot.lane.b32.xlu0 %v6914, 30
        %v6948 = vpop.permute.xlu0 %6947
        %vm6966 = vcmask 253168
        %6967 = vst.msk [vmem:[#allocation3] sm:$0xff] %vm6966, %v6916
        %6968 = vst.msk [vmem:[#allocation3 + $0x8] sm:$0xff] %vm6966, %v6918
        %6969 = vst.msk [vmem:[#allocation3 + $0x10] sm:$0xff] %vm6966, %v6920
        %6970 = vst.msk [vmem:[#allocation3 + $0x18] sm:$0xff] %vm6966, %v6922
        %6971 = vst.msk [vmem:[#allocation3 + $0x20] sm:$0xff] %vm6966, %v6924
        %6972 = vst.msk [vmem:[#allocation3 + $0x28] sm:$0xff] %vm6966, %v6926
        %6973 = vst.msk [vmem:[#allocation3 + $0x30] sm:$0xff] %vm6966, %v6928
        %6974 = vst.msk [vmem:[#allocation3 + $0x38] sm:$0xff] %vm6966, %v6930
        %6975 = vst.msk [vmem:[#allocation3 + $0x40] sm:$0xff] %vm6966, %v6932
        %6976 = vst.msk [vmem:[#allocation3 + $0x48] sm:$0xff] %vm6966, %v6934
        %6977 = vst.msk [vmem:[#allocation3 + $0x50] sm:$0xff] %vm6966, %v6936
        %6978 = vst.msk [vmem:[#allocation3 + $0x58] sm:$0xff] %vm6966, %v6938
        %6979 = vst.msk [vmem:[#allocation3 + $0x60] sm:$0xff] %vm6966, %v6940
        %6980 = vst.msk [vmem:[#allocation3 + $0x68] sm:$0xff] %vm6966, %v6942
        %6981 = vst.msk [vmem:[#allocation3 + $0x70] sm:$0xff] %vm6966, %v6944
        %6982 = vst.msk [vmem:[#allocation3 + $0x78] sm:$0xff] %vm6966, %v6946
        %6983 = vst.msk [vmem:[#allocation3 + $0x80] sm:$0xff] %vm6966, %v6948
        %v6984 = vld [vmem:[%s1289] sm:$0xe0]
        %v6985 = vld [vmem:[%s1289 + $0x8] sm:$0xff]
        %v6986 = vld [vmem:[%s1289 + $0x10] sm:$0xff]
        %v6987 = vld [vmem:[%s1289 + $0x18] sm:$0xff]
        %v6988 = vld [vmem:[%s1289 + $0x20] sm:$0xff]
        %v6989 = vld [vmem:[%s1289 + $0x28] sm:$0xff]
        %v6990 = vld [vmem:[%s1289 + $0x30] sm:$0xff]
        %v6991 = vld [vmem:[%s1289 + $0x38] sm:$0xff]
        %v6992 = vld [vmem:[%s1289 + $0x40] sm:$0xff]
        %v6993 = vld [vmem:[%s1289 + $0x48] sm:$0xff]
        %v6994 = vld [vmem:[%s1289 + $0x50] sm:$0xff]
        %v6995 = vld [vmem:[%s1289 + $0x58] sm:$0xff]
        %v6996 = vld [vmem:[%s1289 + $0x60] sm:$0xff]
        %v6997 = vld [vmem:[%s1289 + $0x68] sm:$0xff]
        %v6998 = vld [vmem:[%s1289 + $0x70] sm:$0xff]
        %v6999 = vld [vmem:[%s1289 + $0x78] sm:$0xff]
        %v7000 = vld [vmem:[%s1289 + $0x80] sm:$0xff]
        %v7001 = vld [vmem:[%s1289 + $0x88] sm:$0x1f]
        %v7020 = vrot.slane %v6984, 5
        %v7021 = vrot.slane %v6985, 5
        %v7022 = vsel %vm6879, %v7020, %v7021
        %v7023 = vrot.slane %v6986, 5
        %v7024 = vsel %vm6879, %v7021, %v7023
        %v7025 = vrot.slane %v6987, 5
        %v7026 = vsel %vm6879, %v7023, %v7025
        %v7027 = vrot.slane %v6988, 5
        %v7028 = vsel %vm6879, %v7025, %v7027
        %v7029 = vrot.slane %v6989, 5
        %v7030 = vsel %vm6879, %v7027, %v7029
        %v7031 = vrot.slane %v6990, 5
        %v7032 = vsel %vm6879, %v7029, %v7031
        %v7033 = vrot.slane %v6991, 5
        %v7034 = vsel %vm6879, %v7031, %v7033
        %v7035 = vrot.slane %v6992, 5
        %v7036 = vsel %vm6879, %v7033, %v7035
        %v7037 = vrot.slane %v6993, 5
        %v7038 = vsel %vm6879, %v7035, %v7037
        %v7039 = vrot.slane %v6994, 5
        %v7040 = vsel %vm6879, %v7037, %v7039
        %v7041 = vrot.slane %v6995, 5
        %v7042 = vsel %vm6879, %v7039, %v7041
        %v7043 = vrot.slane %v6996, 5
        %v7044 = vsel %vm6879, %v7041, %v7043
        %v7045 = vrot.slane %v6997, 5
        %v7046 = vsel %vm6879, %v7043, %v7045
        %v7047 = vrot.slane %v6998, 5
        %v7048 = vsel %vm6879, %v7045, %v7047
        %v7049 = vrot.slane %v6999, 5
        %v7050 = vsel %vm6879, %v7047, %v7049
        %v7051 = vrot.slane %v7000, 5
        %v7052 = vsel %vm6879, %v7049, %v7051
        %v7053 = vrot.slane %v7001, 5
        %v7054 = vsel %vm6879, %v7051, %v7053
        %7055 = vrot.lane.b32.xlu0 %v7022, 31
        %v7056 = vpop.permute.xlu0 %7055
        %7057 = vrot.lane.b32.xlu0 %v7024, 31
        %v7058 = vpop.permute.xlu0 %7057
        %7059 = vrot.lane.b32.xlu0 %v7026, 31
        %v7060 = vpop.permute.xlu0 %7059
        %7061 = vrot.lane.b32.xlu0 %v7028, 31
        %v7062 = vpop.permute.xlu0 %7061
        %7063 = vrot.lane.b32.xlu0 %v7030, 31
        %v7064 = vpop.permute.xlu0 %7063
        %7065 = vrot.lane.b32.xlu0 %v7032, 31
        %v7066 = vpop.permute.xlu0 %7065
        %7067 = vrot.lane.b32.xlu0 %v7034, 31
        %v7068 = vpop.permute.xlu0 %7067
        %7069 = vrot.lane.b32.xlu0 %v7036, 31
        %v7070 = vpop.permute.xlu0 %7069
        %7071 = vrot.lane.b32.xlu0 %v7038, 31
        %v7072 = vpop.permute.xlu0 %7071
        %7073 = vrot.lane.b32.xlu0 %v7040, 31
        %v7074 = vpop.permute.xlu0 %7073
        %7075 = vrot.lane.b32.xlu0 %v7042, 31
        %v7076 = vpop.permute.xlu0 %7075
        %7077 = vrot.lane.b32.xlu0 %v7044, 31
        %v7078 = vpop.permute.xlu0 %7077
        %7079 = vrot.lane.b32.xlu0 %v7046, 31
        %v7080 = vpop.permute.xlu0 %7079
        %7081 = vrot.lane.b32.xlu0 %v7048, 31
        %v7082 = vpop.permute.xlu0 %7081
        %7083 = vrot.lane.b32.xlu0 %v7050, 31
        %v7084 = vpop.permute.xlu0 %7083
        %7085 = vrot.lane.b32.xlu0 %v7052, 31
        %v7086 = vpop.permute.xlu0 %7085
        %7087 = vrot.lane.b32.xlu0 %v7054, 31
        %v7088 = vpop.permute.xlu0 %7087
        %vm7106 = vcmask 261368
        %7107 = vst.msk [vmem:[#allocation3] sm:$0xff] %vm7106, %v7056
        %7108 = vst.msk [vmem:[#allocation3 + $0x8] sm:$0xff] %vm7106, %v7058
        %7109 = vst.msk [vmem:[#allocation3 + $0x10] sm:$0xff] %vm7106, %v7060
        %7110 = vst.msk [vmem:[#allocation3 + $0x18] sm:$0xff] %vm7106, %v7062
        %7111 = vst.msk [vmem:[#allocation3 + $0x20] sm:$0xff] %vm7106, %v7064
        %7112 = vst.msk [vmem:[#allocation3 + $0x28] sm:$0xff] %vm7106, %v7066
        %7113 = vst.msk [vmem:[#allocation3 + $0x30] sm:$0xff] %vm7106, %v7068
        %7114 = vst.msk [vmem:[#allocation3 + $0x38] sm:$0xff] %vm7106, %v7070
        %7115 = vst.msk [vmem:[#allocation3 + $0x40] sm:$0xff] %vm7106, %v7072
        %7116 = vst.msk [vmem:[#allocation3 + $0x48] sm:$0xff] %vm7106, %v7074
        %7117 = vst.msk [vmem:[#allocation3 + $0x50] sm:$0xff] %vm7106, %v7076
        %7118 = vst.msk [vmem:[#allocation3 + $0x58] sm:$0xff] %vm7106, %v7078
        %7119 = vst.msk [vmem:[#allocation3 + $0x60] sm:$0xff] %vm7106, %v7080
        %7120 = vst.msk [vmem:[#allocation3 + $0x68] sm:$0xff] %vm7106, %v7082
        %7121 = vst.msk [vmem:[#allocation3 + $0x70] sm:$0xff] %vm7106, %v7084
        %7122 = vst.msk [vmem:[#allocation3 + $0x78] sm:$0xff] %vm7106, %v7086
        %7123 = vst.msk [vmem:[#allocation3 + $0x80] sm:$0xff] %vm7106, %v7088
        %v7124 = vld [vmem:[%s1393] sm:$0xe0]
        %v7125 = vld [vmem:[%s1393 + $0x8] sm:$0xff]
        %v7126 = vld [vmem:[%s1393 + $0x10] sm:$0xff]
        %v7127 = vld [vmem:[%s1393 + $0x18] sm:$0xff]
        %v7128 = vld [vmem:[%s1393 + $0x20] sm:$0xff]
        %v7129 = vld [vmem:[%s1393 + $0x28] sm:$0xff]
        %v7130 = vld [vmem:[%s1393 + $0x30] sm:$0xff]
        %v7131 = vld [vmem:[%s1393 + $0x38] sm:$0xff]
        %v7132 = vld [vmem:[%s1393 + $0x40] sm:$0xff]
        %v7133 = vld [vmem:[%s1393 + $0x48] sm:$0xff]
        %v7134 = vld [vmem:[%s1393 + $0x50] sm:$0xff]
        %v7135 = vld [vmem:[%s1393 + $0x58] sm:$0xff]
        %v7136 = vld [vmem:[%s1393 + $0x60] sm:$0xff]
        %v7137 = vld [vmem:[%s1393 + $0x68] sm:$0xff]
        %v7138 = vld [vmem:[%s1393 + $0x70] sm:$0xff]
        %v7139 = vld [vmem:[%s1393 + $0x78] sm:$0xff]
        %v7140 = vld [vmem:[%s1393 + $0x80] sm:$0xff]
        %v7141 = vld [vmem:[%s1393 + $0x88] sm:$0x1f]
        %v7160 = vrot.slane %v7124, 5
        %v7161 = vrot.slane %v7125, 5
        %v7162 = vsel %vm6879, %v7160, %v7161
        %v7163 = vrot.slane %v7126, 5
        %v7164 = vsel %vm6879, %v7161, %v7163
        %v7165 = vrot.slane %v7127, 5
        %v7166 = vsel %vm6879, %v7163, %v7165
        %v7167 = vrot.slane %v7128, 5
        %v7168 = vsel %vm6879, %v7165, %v7167
        %v7169 = vrot.slane %v7129, 5
        %v7170 = vsel %vm6879, %v7167, %v7169
        %v7171 = vrot.slane %v7130, 5
        %v7172 = vsel %vm6879, %v7169, %v7171
        %v7173 = vrot.slane %v7131, 5
        %v7174 = vsel %vm6879, %v7171, %v7173
        %v7175 = vrot.slane %v7132, 5
        %v7176 = vsel %vm6879, %v7173, %v7175
        %v7177 = vrot.slane %v7133, 5
        %v7178 = vsel %vm6879, %v7175, %v7177
        %v7179 = vrot.slane %v7134, 5
        %v7180 = vsel %vm6879, %v7177, %v7179
        %v7181 = vrot.slane %v7135, 5
        %v7182 = vsel %vm6879, %v7179, %v7181
        %v7183 = vrot.slane %v7136, 5
        %v7184 = vsel %vm6879, %v7181, %v7183
        %v7185 = vrot.slane %v7137, 5
        %v7186 = vsel %vm6879, %v7183, %v7185
        %v7187 = vrot.slane %v7138, 5
        %v7188 = vsel %vm6879, %v7185, %v7187
        %v7189 = vrot.slane %v7139, 5
        %v7190 = vsel %vm6879, %v7187, %v7189
        %v7191 = vrot.slane %v7140, 5
        %v7192 = vsel %vm6879, %v7189, %v7191
        %v7193 = vrot.slane %v7141, 5
        %v7194 = vsel %vm6879, %v7191, %v7193
        %7195 = vrot.lane.b32.xlu0 %v7162, 32
        %v7196 = vpop.permute.xlu0 %7195
        %7197 = vrot.lane.b32.xlu0 %v7164, 32
        %v7198 = vpop.permute.xlu0 %7197
        %7199 = vrot.lane.b32.xlu0 %v7166, 32
        %v7200 = vpop.permute.xlu0 %7199
        %7201 = vrot.lane.b32.xlu0 %v7168, 32
        %v7202 = vpop.permute.xlu0 %7201
        %7203 = vrot.lane.b32.xlu0 %v7170, 32
        %v7204 = vpop.permute.xlu0 %7203
        %7205 = vrot.lane.b32.xlu0 %v7172, 32
        %v7206 = vpop.permute.xlu0 %7205
        %7207 = vrot.lane.b32.xlu0 %v7174, 32
        %v7208 = vpop.permute.xlu0 %7207
        %7209 = vrot.lane.b32.xlu0 %v7176, 32
        %v7210 = vpop.permute.xlu0 %7209
        %7211 = vrot.lane.b32.xlu0 %v7178, 32
        %v7212 = vpop.permute.xlu0 %7211
        %7213 = vrot.lane.b32.xlu0 %v7180, 32
        %v7214 = vpop.permute.xlu0 %7213
        %7215 = vrot.lane.b32.xlu0 %v7182, 32
        %v7216 = vpop.permute.xlu0 %7215
        %7217 = vrot.lane.b32.xlu0 %v7184, 32
        %v7218 = vpop.permute.xlu0 %7217
        %7219 = vrot.lane.b32.xlu0 %v7186, 32
        %v7220 = vpop.permute.xlu0 %7219
        %7221 = vrot.lane.b32.xlu0 %v7188, 32
        %v7222 = vpop.permute.xlu0 %7221
        %7223 = vrot.lane.b32.xlu0 %v7190, 32
        %v7224 = vpop.permute.xlu0 %7223
        %7225 = vrot.lane.b32.xlu0 %v7192, 32
        %v7226 = vpop.permute.xlu0 %7225
        %7227 = vrot.lane.b32.xlu0 %v7194, 32
        %v7228 = vpop.permute.xlu0 %7227
        %vm7246 = vcmask 269568
        %7247 = vst.msk [vmem:[#allocation3] sm:$0xff] %vm7246, %v7196
        %7248 = vst.msk [vmem:[#allocation3 + $0x8] sm:$0xff] %vm7246, %v7198
        %7249 = vst.msk [vmem:[#allocation3 + $0x10] sm:$0xff] %vm7246, %v7200
        %7250 = vst.msk [vmem:[#allocation3 + $0x18] sm:$0xff] %vm7246, %v7202
        %7251 = vst.msk [vmem:[#allocation3 + $0x20] sm:$0xff] %vm7246, %v7204
        %7252 = vst.msk [vmem:[#allocation3 + $0x28] sm:$0xff] %vm7246, %v7206
        %7253 = vst.msk [vmem:[#allocation3 + $0x30] sm:$0xff] %vm7246, %v7208
        %7254 = vst.msk [vmem:[#allocation3 + $0x38] sm:$0xff] %vm7246, %v7210
        %7255 = vst.msk [vmem:[#allocation3 + $0x40] sm:$0xff] %vm7246, %v7212
        %7256 = vst.msk [vmem:[#allocation3 + $0x48] sm:$0xff] %vm7246, %v7214
        %7257 = vst.msk [vmem:[#allocation3 + $0x50] sm:$0xff] %vm7246, %v7216
        %7258 = vst.msk [vmem:[#allocation3 + $0x58] sm:$0xff] %vm7246, %v7218
        %7259 = vst.msk [vmem:[#allocation3 + $0x60] sm:$0xff] %vm7246, %v7220
        %7260 = vst.msk [vmem:[#allocation3 + $0x68] sm:$0xff] %vm7246, %v7222
        %7261 = vst.msk [vmem:[#allocation3 + $0x70] sm:$0xff] %vm7246, %v7224
        %7262 = vst.msk [vmem:[#allocation3 + $0x78] sm:$0xff] %vm7246, %v7226
        %7263 = vst.msk [vmem:[#allocation3 + $0x80] sm:$0xff] %vm7246, %v7228
        %v7264 = vld [vmem:[#allocation2] sm:$0xe0]
        %v7265 = vld [vmem:[#allocation2 + $0x8] sm:$0xff]
        %v7266 = vld [vmem:[#allocation2 + $0x10] sm:$0xff]
        %v7267 = vld [vmem:[#allocation2 + $0x18] sm:$0xff]
        %v7268 = vld [vmem:[#allocation2 + $0x20] sm:$0xff]
        %v7269 = vld [vmem:[#allocation2 + $0x28] sm:$0xff]
        %v7270 = vld [vmem:[#allocation2 + $0x30] sm:$0xff]
        %v7271 = vld [vmem:[#allocation2 + $0x38] sm:$0xff]
        %v7272 = vld [vmem:[#allocation2 + $0x40] sm:$0xff]
        %v7273 = vld [vmem:[#allocation2 + $0x48] sm:$0xff]
        %v7274 = vld [vmem:[#allocation2 + $0x50] sm:$0xff]
        %v7275 = vld [vmem:[#allocation2 + $0x58] sm:$0xff]
        %v7276 = vld [vmem:[#allocation2 + $0x60] sm:$0xff]
        %v7277 = vld [vmem:[#allocation2 + $0x68] sm:$0xff]
        %v7278 = vld [vmem:[#allocation2 + $0x70] sm:$0xff]
        %v7279 = vld [vmem:[#allocation2 + $0x78] sm:$0xff]
        %v7280 = vld [vmem:[#allocation2 + $0x80] sm:$0xff]
        %v7281 = vld [vmem:[#allocation2 + $0x88] sm:$0x3f]
        %vm7282 = vsmask.f32 2304
        %v7284 = vshrl.u32 %v7264, 16
        %v7286 = vrot.slane %v7284, 5
        %v7287 = vshll.u32 %v7264, 16
        %v7289 = vrot.slane %v7287, 6
        %v7290 = vor.u32 %v7286, %v7289
        %v7292 = vshrl.u32 %v7265, 16
        %v7294 = vrot.slane %v7292, 5
        %v7295 = vshll.u32 %v7265, 16
        %v7297 = vrot.slane %v7295, 6
        %v7298 = vor.u32 %v7294, %v7297
        %v7299 = vsel %vm7282, %v7290, %v7298
        %v7301 = vshrl.u32 %v7266, 16
        %v7303 = vrot.slane %v7301, 5
        %v7304 = vshll.u32 %v7266, 16
        %v7306 = vrot.slane %v7304, 6
        %v7307 = vor.u32 %v7303, %v7306
        %v7308 = vsel %vm7282, %v7298, %v7307
        %v7310 = vshrl.u32 %v7267, 16
        %v7312 = vrot.slane %v7310, 5
        %v7313 = vshll.u32 %v7267, 16
        %v7315 = vrot.slane %v7313, 6
        %v7316 = vor.u32 %v7312, %v7315
        %v7317 = vsel %vm7282, %v7307, %v7316
        %v7319 = vshrl.u32 %v7268, 16
        %v7321 = vrot.slane %v7319, 5
        %v7322 = vshll.u32 %v7268, 16
        %v7324 = vrot.slane %v7322, 6
        %v7325 = vor.u32 %v7321, %v7324
        %v7326 = vsel %vm7282, %v7316, %v7325
        %v7328 = vshrl.u32 %v7269, 16
        %v7330 = vrot.slane %v7328, 5
        %v7331 = vshll.u32 %v7269, 16
        %v7333 = vrot.slane %v7331, 6
        %v7334 = vor.u32 %v7330, %v7333
        %v7335 = vsel %vm7282, %v7325, %v7334
        %v7337 = vshrl.u32 %v7270, 16
        %v7339 = vrot.slane %v7337, 5
        %v7340 = vshll.u32 %v7270, 16
        %v7342 = vrot.slane %v7340, 6
        %v7343 = vor.u32 %v7339, %v7342
        %v7344 = vsel %vm7282, %v7334, %v7343
        %v7346 = vshrl.u32 %v7271, 16
        %v7348 = vrot.slane %v7346, 5
        %v7349 = vshll.u32 %v7271, 16
        %v7351 = vrot.slane %v7349, 6
        %v7352 = vor.u32 %v7348, %v7351
        %v7353 = vsel %vm7282, %v7343, %v7352
        %v7355 = vshrl.u32 %v7272, 16
        %v7357 = vrot.slane %v7355, 5
        %v7358 = vshll.u32 %v7272, 16
        %v7360 = vrot.slane %v7358, 6
        %v7361 = vor.u32 %v7357, %v7360
        %v7362 = vsel %vm7282, %v7352, %v7361
        %v7364 = vshrl.u32 %v7273, 16
        %v7366 = vrot.slane %v7364, 5
        %v7367 = vshll.u32 %v7273, 16
        %v7369 = vrot.slane %v7367, 6
        %v7370 = vor.u32 %v7366, %v7369
        %v7371 = vsel %vm7282, %v7361, %v7370
        %v7373 = vshrl.u32 %v7274, 16
        %v7375 = vrot.slane %v7373, 5
        %v7376 = vshll.u32 %v7274, 16
        %v7378 = vrot.slane %v7376, 6
        %v7379 = vor.u32 %v7375, %v7378
        %v7380 = vsel %vm7282, %v7370, %v7379
        %v7382 = vshrl.u32 %v7275, 16
        %v7384 = vrot.slane %v7382, 5
        %v7385 = vshll.u32 %v7275, 16
        %v7387 = vrot.slane %v7385, 6
        %v7388 = vor.u32 %v7384, %v7387
        %v7389 = vsel %vm7282, %v7379, %v7388
        %v7391 = vshrl.u32 %v7276, 16
        %v7393 = vrot.slane %v7391, 5
        %v7394 = vshll.u32 %v7276, 16
        %v7396 = vrot.slane %v7394, 6
        %v7397 = vor.u32 %v7393, %v7396
        %v7398 = vsel %vm7282, %v7388, %v7397
        %v7400 = vshrl.u32 %v7277, 16
        %v7402 = vrot.slane %v7400, 5
        %v7403 = vshll.u32 %v7277, 16
        %v7405 = vrot.slane %v7403, 6
        %v7406 = vor.u32 %v7402, %v7405
        %v7407 = vsel %vm7282, %v7397, %v7406
        %v7409 = vshrl.u32 %v7278, 16
        %v7411 = vrot.slane %v7409, 5
        %v7412 = vshll.u32 %v7278, 16
        %v7414 = vrot.slane %v7412, 6
        %v7415 = vor.u32 %v7411, %v7414
        %v7416 = vsel %vm7282, %v7406, %v7415
        %v7418 = vshrl.u32 %v7279, 16
        %v7420 = vrot.slane %v7418, 5
        %v7421 = vshll.u32 %v7279, 16
        %v7423 = vrot.slane %v7421, 6
        %v7424 = vor.u32 %v7420, %v7423
        %v7425 = vsel %vm7282, %v7415, %v7424
        %v7427 = vshrl.u32 %v7280, 16
        %v7429 = vrot.slane %v7427, 5
        %v7430 = vshll.u32 %v7280, 16
        %v7432 = vrot.slane %v7430, 6
        %v7433 = vor.u32 %v7429, %v7432
        %v7434 = vsel %vm7282, %v7424, %v7433
        %v7436 = vshrl.u32 %v7281, 16
        %v7438 = vrot.slane %v7436, 5
        %v7439 = vshll.u32 %v7281, 16
        %v7441 = vrot.slane %v7439, 6
        %v7442 = vor.u32 %v7438, %v7441
        %v7443 = vsel %vm7282, %v7433, %v7442
        %7444 = vrot.lane.b32.xlu0 %v7299, 33
        %v7445 = vpop.permute.xlu0 %7444
        %7446 = vrot.lane.b32.xlu0 %v7308, 33
        %v7447 = vpop.permute.xlu0 %7446
        %7448 = vrot.lane.b32.xlu0 %v7317, 33
        %v7449 = vpop.permute.xlu0 %7448
        %7450 = vrot.lane.b32.xlu0 %v7326, 33
        %v7451 = vpop.permute.xlu0 %7450
        %7452 = vrot.lane.b32.xlu0 %v7335, 33
        %v7453 = vpop.permute.xlu0 %7452
        %7454 = vrot.lane.b32.xlu0 %v7344, 33
        %v7455 = vpop.permute.xlu0 %7454
        %7456 = vrot.lane.b32.xlu0 %v7353, 33
        %v7457 = vpop.permute.xlu0 %7456
        %7458 = vrot.lane.b32.xlu0 %v7362, 33
        %v7459 = vpop.permute.xlu0 %7458
        %7460 = vrot.lane.b32.xlu0 %v7371, 33
        %v7461 = vpop.permute.xlu0 %7460
        %7462 = vrot.lane.b32.xlu0 %v7380, 33
        %v7463 = vpop.permute.xlu0 %7462
        %7464 = vrot.lane.b32.xlu0 %v7389, 33
        %v7465 = vpop.permute.xlu0 %7464
        %7466 = vrot.lane.b32.xlu0 %v7398, 33
        %v7467 = vpop.permute.xlu0 %7466
        %7468 = vrot.lane.b32.xlu0 %v7407, 33
        %v7469 = vpop.permute.xlu0 %7468
        %7470 = vrot.lane.b32.xlu0 %v7416, 33
        %v7471 = vpop.permute.xlu0 %7470
        %7472 = vrot.lane.b32.xlu0 %v7425, 33
        %v7473 = vpop.permute.xlu0 %7472
        %7474 = vrot.lane.b32.xlu0 %v7434, 33
        %v7475 = vpop.permute.xlu0 %7474
        %7476 = vrot.lane.b32.xlu0 %v7443, 33
        %v7477 = vpop.permute.xlu0 %7476
        %vm7495 = vcmask 277768
        %7496 = vst.msk [vmem:[#allocation3] sm:$0xff] %vm7495, %v7445
        %7497 = vst.msk [vmem:[#allocation3 + $0x8] sm:$0xff] %vm7495, %v7447
        %7498 = vst.msk [vmem:[#allocation3 + $0x10] sm:$0xff] %vm7495, %v7449
        %7499 = vst.msk [vmem:[#allocation3 + $0x18] sm:$0xff] %vm7495, %v7451
        %7500 = vst.msk [vmem:[#allocation3 + $0x20] sm:$0xff] %vm7495, %v7453
        %7501 = vst.msk [vmem:[#allocation3 + $0x28] sm:$0xff] %vm7495, %v7455
        %7502 = vst.msk [vmem:[#allocation3 + $0x30] sm:$0xff] %vm7495, %v7457
        %7503 = vst.msk [vmem:[#allocation3 + $0x38] sm:$0xff] %vm7495, %v7459
        %7504 = vst.msk [vmem:[#allocation3 + $0x40] sm:$0xff] %vm7495, %v7461
        %7505 = vst.msk [vmem:[#allocation3 + $0x48] sm:$0xff] %vm7495, %v7463
        %7506 = vst.msk [vmem:[#allocation3 + $0x50] sm:$0xff] %vm7495, %v7465
        %7507 = vst.msk [vmem:[#allocation3 + $0x58] sm:$0xff] %vm7495, %v7467
        %7508 = vst.msk [vmem:[#allocation3 + $0x60] sm:$0xff] %vm7495, %v7469
        %7509 = vst.msk [vmem:[#allocation3 + $0x68] sm:$0xff] %vm7495, %v7471
        %7510 = vst.msk [vmem:[#allocation3 + $0x70] sm:$0xff] %vm7495, %v7473
        %7511 = vst.msk [vmem:[#allocation3 + $0x78] sm:$0xff] %vm7495, %v7475
        %7512 = vst.msk [vmem:[#allocation3 + $0x80] sm:$0xff] %vm7495, %v7477
        %v7513 = vld [vmem:[%s1289] sm:$0xe0]
        %v7514 = vld [vmem:[%s1289 + $0x8] sm:$0xff]
        %v7515 = vld [vmem:[%s1289 + $0x10] sm:$0xff]
        %v7516 = vld [vmem:[%s1289 + $0x18] sm:$0xff]
        %v7517 = vld [vmem:[%s1289 + $0x20] sm:$0xff]
        %v7518 = vld [vmem:[%s1289 + $0x28] sm:$0xff]
        %v7519 = vld [vmem:[%s1289 + $0x30] sm:$0xff]
        %v7520 = vld [vmem:[%s1289 + $0x38] sm:$0xff]
        %v7521 = vld [vmem:[%s1289 + $0x40] sm:$0xff]
        %v7522 = vld [vmem:[%s1289 + $0x48] sm:$0xff]
        %v7523 = vld [vmem:[%s1289 + $0x50] sm:$0xff]
        %v7524 = vld [vmem:[%s1289 + $0x58] sm:$0xff]
        %v7525 = vld [vmem:[%s1289 + $0x60] sm:$0xff]
        %v7526 = vld [vmem:[%s1289 + $0x68] sm:$0xff]
        %v7527 = vld [vmem:[%s1289 + $0x70] sm:$0xff]
        %v7528 = vld [vmem:[%s1289 + $0x78] sm:$0xff]
        %v7529 = vld [vmem:[%s1289 + $0x80] sm:$0xff]
        %v7530 = vld [vmem:[%s1289 + $0x88] sm:$0x3f]
        %v7532 = vshrl.u32 %v7513, 16
        %v7534 = vrot.slane %v7532, 5
        %v7535 = vshll.u32 %v7513, 16
        %v7537 = vrot.slane %v7535, 6
        %v7538 = vor.u32 %v7534, %v7537
        %v7540 = vshrl.u32 %v7514, 16
        %v7542 = vrot.slane %v7540, 5
        %v7543 = vshll.u32 %v7514, 16
        %v7545 = vrot.slane %v7543, 6
        %v7546 = vor.u32 %v7542, %v7545
        %v7547 = vsel %vm7282, %v7538, %v7546
        %v7549 = vshrl.u32 %v7515, 16
        %v7551 = vrot.slane %v7549, 5
        %v7552 = vshll.u32 %v7515, 16
        %v7554 = vrot.slane %v7552, 6
        %v7555 = vor.u32 %v7551, %v7554
        %v7556 = vsel %vm7282, %v7546, %v7555
        %v7558 = vshrl.u32 %v7516, 16
        %v7560 = vrot.slane %v7558, 5
        %v7561 = vshll.u32 %v7516, 16
        %v7563 = vrot.slane %v7561, 6
        %v7564 = vor.u32 %v7560, %v7563
        %v7565 = vsel %vm7282, %v7555, %v7564
        %v7567 = vshrl.u32 %v7517, 16
        %v7569 = vrot.slane %v7567, 5
        %v7570 = vshll.u32 %v7517, 16
        %v7572 = vrot.slane %v7570, 6
        %v7573 = vor.u32 %v7569, %v7572
        %v7574 = vsel %vm7282, %v7564, %v7573
        %v7576 = vshrl.u32 %v7518, 16
        %v7578 = vrot.slane %v7576, 5
        %v7579 = vshll.u32 %v7518, 16
        %v7581 = vrot.slane %v7579, 6
        %v7582 = vor.u32 %v7578, %v7581
        %v7583 = vsel %vm7282, %v7573, %v7582
        %v7585 = vshrl.u32 %v7519, 16
        %v7587 = vrot.slane %v7585, 5
        %v7588 = vshll.u32 %v7519, 16
        %v7590 = vrot.slane %v7588, 6
        %v7591 = vor.u32 %v7587, %v7590
        %v7592 = vsel %vm7282, %v7582, %v7591
        %v7594 = vshrl.u32 %v7520, 16
        %v7596 = vrot.slane %v7594, 5
        %v7597 = vshll.u32 %v7520, 16
        %v7599 = vrot.slane %v7597, 6
        %v7600 = vor.u32 %v7596, %v7599
        %v7601 = vsel %vm7282, %v7591, %v7600
        %v7603 = vshrl.u32 %v7521, 16
        %v7605 = vrot.slane %v7603, 5
        %v7606 = vshll.u32 %v7521, 16
        %v7608 = vrot.slane %v7606, 6
        %v7609 = vor.u32 %v7605, %v7608
        %v7610 = vsel %vm7282, %v7600, %v7609
        %v7612 = vshrl.u32 %v7522, 16
        %v7614 = vrot.slane %v7612, 5
        %v7615 = vshll.u32 %v7522, 16
        %v7617 = vrot.slane %v7615, 6
        %v7618 = vor.u32 %v7614, %v7617
        %v7619 = vsel %vm7282, %v7609, %v7618
        %v7621 = vshrl.u32 %v7523, 16
        %v7623 = vrot.slane %v7621, 5
        %v7624 = vshll.u32 %v7523, 16
        %v7626 = vrot.slane %v7624, 6
        %v7627 = vor.u32 %v7623, %v7626
        %v7628 = vsel %vm7282, %v7618, %v7627
        %v7630 = vshrl.u32 %v7524, 16
        %v7632 = vrot.slane %v7630, 5
        %v7633 = vshll.u32 %v7524, 16
        %v7635 = vrot.slane %v7633, 6
        %v7636 = vor.u32 %v7632, %v7635
        %v7637 = vsel %vm7282, %v7627, %v7636
        %v7639 = vshrl.u32 %v7525, 16
        %v7641 = vrot.slane %v7639, 5
        %v7642 = vshll.u32 %v7525, 16
        %v7644 = vrot.slane %v7642, 6
        %v7645 = vor.u32 %v7641, %v7644
        %v7646 = vsel %vm7282, %v7636, %v7645
        %v7648 = vshrl.u32 %v7526, 16
        %v7650 = vrot.slane %v7648, 5
        %v7651 = vshll.u32 %v7526, 16
        %v7653 = vrot.slane %v7651, 6
        %v7654 = vor.u32 %v7650, %v7653
        %v7655 = vsel %vm7282, %v7645, %v7654
        %v7657 = vshrl.u32 %v7527, 16
        %v7659 = vrot.slane %v7657, 5
        %v7660 = vshll.u32 %v7527, 16
        %v7662 = vrot.slane %v7660, 6
        %v7663 = vor.u32 %v7659, %v7662
        %v7664 = vsel %vm7282, %v7654, %v7663
        %v7666 = vshrl.u32 %v7528, 16
        %v7668 = vrot.slane %v7666, 5
        %v7669 = vshll.u32 %v7528, 16
        %v7671 = vrot.slane %v7669, 6
        %v7672 = vor.u32 %v7668, %v7671
        %v7673 = vsel %vm7282, %v7663, %v7672
        %v7675 = vshrl.u32 %v7529, 16
        %v7677 = vrot.slane %v7675, 5
        %v7678 = vshll.u32 %v7529, 16
        %v7680 = vrot.slane %v7678, 6
        %v7681 = vor.u32 %v7677, %v7680
        %v7682 = vsel %vm7282, %v7672, %v7681
        %v7684 = vshrl.u32 %v7530, 16
        %v7686 = vrot.slane %v7684, 5
        %v7687 = vshll.u32 %v7530, 16
        %v7689 = vrot.slane %v7687, 6
        %v7690 = vor.u32 %v7686, %v7689
        %v7691 = vsel %vm7282, %v7681, %v7690
        %7692 = vrot.lane.b32.xlu0 %v7547, 34
        %v7693 = vpop.permute.xlu0 %7692
        %7694 = vrot.lane.b32.xlu0 %v7556, 34
        %v7695 = vpop.permute.xlu0 %7694
        %7696 = vrot.lane.b32.xlu0 %v7565, 34
        %v7697 = vpop.permute.xlu0 %7696
        %7698 = vrot.lane.b32.xlu0 %v7574, 34
        %v7699 = vpop.permute.xlu0 %7698
        %7700 = vrot.lane.b32.xlu0 %v7583, 34
        %v7701 = vpop.permute.xlu0 %7700
        %7702 = vrot.lane.b32.xlu0 %v7592, 34
        %v7703 = vpop.permute.xlu0 %7702
        %7704 = vrot.lane.b32.xlu0 %v7601, 34
        %v7705 = vpop.permute.xlu0 %7704
        %7706 = vrot.lane.b32.xlu0 %v7610, 34
        %v7707 = vpop.permute.xlu0 %7706
        %7708 = vrot.lane.b32.xlu0 %v7619, 34
        %v7709 = vpop.permute.xlu0 %7708
        %7710 = vrot.lane.b32.xlu0 %v7628, 34
        %v7711 = vpop.permute.xlu0 %7710
        %7712 = vrot.lane.b32.xlu0 %v7637, 34
        %v7713 = vpop.permute.xlu0 %7712
        %7714 = vrot.lane.b32.xlu0 %v7646, 34
        %v7715 = vpop.permute.xlu0 %7714
        %7716 = vrot.lane.b32.xlu0 %v7655, 34
        %v7717 = vpop.permute.xlu0 %7716
        %7718 = vrot.lane.b32.xlu0 %v7664, 34
        %v7719 = vpop.permute.xlu0 %7718
        %7720 = vrot.lane.b32.xlu0 %v7673, 34
        %v7721 = vpop.permute.xlu0 %7720
        %7722 = vrot.lane.b32.xlu0 %v7682, 34
        %v7723 = vpop.permute.xlu0 %7722
        %7724 = vrot.lane.b32.xlu0 %v7691, 34
        %v7725 = vpop.permute.xlu0 %7724
        %vm7743 = vcmask 285968
        %7744 = vst.msk [vmem:[#allocation3] sm:$0xff] %vm7743, %v7693
        %7745 = vst.msk [vmem:[#allocation3 + $0x8] sm:$0xff] %vm7743, %v7695
        %7746 = vst.msk [vmem:[#allocation3 + $0x10] sm:$0xff] %vm7743, %v7697
        %7747 = vst.msk [vmem:[#allocation3 + $0x18] sm:$0xff] %vm7743, %v7699
        %7748 = vst.msk [vmem:[#allocation3 + $0x20] sm:$0xff] %vm7743, %v7701
        %7749 = vst.msk [vmem:[#allocation3 + $0x28] sm:$0xff] %vm7743, %v7703
        %7750 = vst.msk [vmem:[#allocation3 + $0x30] sm:$0xff] %vm7743, %v7705
        %7751 = vst.msk [vmem:[#allocation3 + $0x38] sm:$0xff] %vm7743, %v7707
        %7752 = vst.msk [vmem:[#allocation3 + $0x40] sm:$0xff] %vm7743, %v7709
        %7753 = vst.msk [vmem:[#allocation3 + $0x48] sm:$0xff] %vm7743, %v7711
        %7754 = vst.msk [vmem:[#allocation3 + $0x50] sm:$0xff] %vm7743, %v7713
        %7755 = vst.msk [vmem:[#allocation3 + $0x58] sm:$0xff] %vm7743, %v7715
        %7756 = vst.msk [vmem:[#allocation3 + $0x60] sm:$0xff] %vm7743, %v7717
        %7757 = vst.msk [vmem:[#allocation3 + $0x68] sm:$0xff] %vm7743, %v7719
        %7758 = vst.msk [vmem:[#allocation3 + $0x70] sm:$0xff] %vm7743, %v7721
        %7759 = vst.msk [vmem:[#allocation3 + $0x78] sm:$0xff] %vm7743, %v7723
        %7760 = vst.msk [vmem:[#allocation3 + $0x80] sm:$0xff] %vm7743, %v7725
        %v7761 = vld [vmem:[%s1393] sm:$0xe0]
        %v7762 = vld [vmem:[%s1393 + $0x8] sm:$0xff]
        %v7763 = vld [vmem:[%s1393 + $0x10] sm:$0xff]
        %v7764 = vld [vmem:[%s1393 + $0x18] sm:$0xff]
        %v7765 = vld [vmem:[%s1393 + $0x20] sm:$0xff]
        %v7766 = vld [vmem:[%s1393 + $0x28] sm:$0xff]
        %v7767 = vld [vmem:[%s1393 + $0x30] sm:$0xff]
        %v7768 = vld [vmem:[%s1393 + $0x38] sm:$0xff]
        %v7769 = vld [vmem:[%s1393 + $0x40] sm:$0xff]
        %v7770 = vld [vmem:[%s1393 + $0x48] sm:$0xff]
        %v7771 = vld [vmem:[%s1393 + $0x50] sm:$0xff]
        %v7772 = vld [vmem:[%s1393 + $0x58] sm:$0xff]
        %v7773 = vld [vmem:[%s1393 + $0x60] sm:$0xff]
        %v7774 = vld [vmem:[%s1393 + $0x68] sm:$0xff]
        %v7775 = vld [vmem:[%s1393 + $0x70] sm:$0xff]
        %v7776 = vld [vmem:[%s1393 + $0x78] sm:$0xff]
        %v7777 = vld [vmem:[%s1393 + $0x80] sm:$0xff]
        %v7778 = vld [vmem:[%s1393 + $0x88] sm:$0x3f]
        %v7780 = vshrl.u32 %v7761, 16
        %v7782 = vrot.slane %v7780, 5
        %v7783 = vshll.u32 %v7761, 16
        %v7785 = vrot.slane %v7783, 6
        %v7786 = vor.u32 %v7782, %v7785
        %v7788 = vshrl.u32 %v7762, 16
        %v7790 = vrot.slane %v7788, 5
        %v7791 = vshll.u32 %v7762, 16
        %v7793 = vrot.slane %v7791, 6
        %v7794 = vor.u32 %v7790, %v7793
        %v7795 = vsel %vm7282, %v7786, %v7794
        %v7797 = vshrl.u32 %v7763, 16
        %v7799 = vrot.slane %v7797, 5
        %v7800 = vshll.u32 %v7763, 16
        %v7802 = vrot.slane %v7800, 6
        %v7803 = vor.u32 %v7799, %v7802
        %v7804 = vsel %vm7282, %v7794, %v7803
        %v7806 = vshrl.u32 %v7764, 16
        %v7808 = vrot.slane %v7806, 5
        %v7809 = vshll.u32 %v7764, 16
        %v7811 = vrot.slane %v7809, 6
        %v7812 = vor.u32 %v7808, %v7811
        %v7813 = vsel %vm7282, %v7803, %v7812
        %v7815 = vshrl.u32 %v7765, 16
        %v7817 = vrot.slane %v7815, 5
        %v7818 = vshll.u32 %v7765, 16
        %v7820 = vrot.slane %v7818, 6
        %v7821 = vor.u32 %v7817, %v7820
        %v7822 = vsel %vm7282, %v7812, %v7821
        %v7824 = vshrl.u32 %v7766, 16
        %v7826 = vrot.slane %v7824, 5
        %v7827 = vshll.u32 %v7766, 16
        %v7829 = vrot.slane %v7827, 6
        %v7830 = vor.u32 %v7826, %v7829
        %v7831 = vsel %vm7282, %v7821, %v7830
        %v7833 = vshrl.u32 %v7767, 16
        %v7835 = vrot.slane %v7833, 5
        %v7836 = vshll.u32 %v7767, 16
        %v7838 = vrot.slane %v7836, 6
        %v7839 = vor.u32 %v7835, %v7838
        %v7840 = vsel %vm7282, %v7830, %v7839
        %v7842 = vshrl.u32 %v7768, 16
        %v7844 = vrot.slane %v7842, 5
        %v7845 = vshll.u32 %v7768, 16
        %v7847 = vrot.slane %v7845, 6
        %v7848 = vor.u32 %v7844, %v7847
        %v7849 = vsel %vm7282, %v7839, %v7848
        %v7851 = vshrl.u32 %v7769, 16
        %v7853 = vrot.slane %v7851, 5
        %v7854 = vshll.u32 %v7769, 16
        %v7856 = vrot.slane %v7854, 6
        %v7857 = vor.u32 %v7853, %v7856
        %v7858 = vsel %vm7282, %v7848, %v7857
        %v7860 = vshrl.u32 %v7770, 16
        %v7862 = vrot.slane %v7860, 5
        %v7863 = vshll.u32 %v7770, 16
        %v7865 = vrot.slane %v7863, 6
        %v7866 = vor.u32 %v7862, %v7865
        %v7867 = vsel %vm7282, %v7857, %v7866
        %v7869 = vshrl.u32 %v7771, 16
        %v7871 = vrot.slane %v7869, 5
        %v7872 = vshll.u32 %v7771, 16
        %v7874 = vrot.slane %v7872, 6
        %v7875 = vor.u32 %v7871, %v7874
        %v7876 = vsel %vm7282, %v7866, %v7875
        %v7878 = vshrl.u32 %v7772, 16
        %v7880 = vrot.slane %v7878, 5
        %v7881 = vshll.u32 %v7772, 16
        %v7883 = vrot.slane %v7881, 6
        %v7884 = vor.u32 %v7880, %v7883
        %v7885 = vsel %vm7282, %v7875, %v7884
        %v7887 = vshrl.u32 %v7773, 16
        %v7889 = vrot.slane %v7887, 5
        %v7890 = vshll.u32 %v7773, 16
        %v7892 = vrot.slane %v7890, 6
        %v7893 = vor.u32 %v7889, %v7892
        %v7894 = vsel %vm7282, %v7884, %v7893
        %v7896 = vshrl.u32 %v7774, 16
        %v7898 = vrot.slane %v7896, 5
        %v7899 = vshll.u32 %v7774, 16
        %v7901 = vrot.slane %v7899, 6
        %v7902 = vor.u32 %v7898, %v7901
        %v7903 = vsel %vm7282, %v7893, %v7902
        %v7905 = vshrl.u32 %v7775, 16
        %v7907 = vrot.slane %v7905, 5
        %v7908 = vshll.u32 %v7775, 16
        %v7910 = vrot.slane %v7908, 6
        %v7911 = vor.u32 %v7907, %v7910
        %v7912 = vsel %vm7282, %v7902, %v7911
        %v7914 = vshrl.u32 %v7776, 16
        %v7916 = vrot.slane %v7914, 5
        %v7917 = vshll.u32 %v7776, 16
        %v7919 = vrot.slane %v7917, 6
        %v7920 = vor.u32 %v7916, %v7919
        %v7921 = vsel %vm7282, %v7911, %v7920
        %v7923 = vshrl.u32 %v7777, 16
        %v7925 = vrot.slane %v7923, 5
        %v7926 = vshll.u32 %v7777, 16
        %v7928 = vrot.slane %v7926, 6
        %v7929 = vor.u32 %v7925, %v7928
        %v7930 = vsel %vm7282, %v7920, %v7929
        %v7932 = vshrl.u32 %v7778, 16
        %v7934 = vrot.slane %v7932, 5
        %v7935 = vshll.u32 %v7778, 16
        %v7937 = vrot.slane %v7935, 6
        %v7938 = vor.u32 %v7934, %v7937
        %v7939 = vsel %vm7282, %v7929, %v7938
        %7940 = vrot.lane.b32.xlu0 %v7795, 35
        %v7941 = vpop.permute.xlu0 %7940
        %7942 = vrot.lane.b32.xlu0 %v7804, 35
        %v7943 = vpop.permute.xlu0 %7942
        %7944 = vrot.lane.b32.xlu0 %v7813, 35
        %v7945 = vpop.permute.xlu0 %7944
        %7946 = vrot.lane.b32.xlu0 %v7822, 35
        %v7947 = vpop.permute.xlu0 %7946
        %7948 = vrot.lane.b32.xlu0 %v7831, 35
        %v7949 = vpop.permute.xlu0 %7948
        %7950 = vrot.lane.b32.xlu0 %v7840, 35
        %v7951 = vpop.permute.xlu0 %7950
        %7952 = vrot.lane.b32.xlu0 %v7849, 35
        %v7953 = vpop.permute.xlu0 %7952
        %7954 = vrot.lane.b32.xlu0 %v7858, 35
        %v7955 = vpop.permute.xlu0 %7954
        %7956 = vrot.lane.b32.xlu0 %v7867, 35
        %v7957 = vpop.permute.xlu0 %7956
        %7958 = vrot.lane.b32.xlu0 %v7876, 35
        %v7959 = vpop.permute.xlu0 %7958
        %7960 = vrot.lane.b32.xlu0 %v7885, 35
        %v7961 = vpop.permute.xlu0 %7960
        %7962 = vrot.lane.b32.xlu0 %v7894, 35
        %v7963 = vpop.permute.xlu0 %7962
        %7964 = vrot.lane.b32.xlu0 %v7903, 35
        %v7965 = vpop.permute.xlu0 %7964
        %7966 = vrot.lane.b32.xlu0 %v7912, 35
        %v7967 = vpop.permute.xlu0 %7966
        %7968 = vrot.lane.b32.xlu0 %v7921, 35
        %v7969 = vpop.permute.xlu0 %7968
        %7970 = vrot.lane.b32.xlu0 %v7930, 35
        %v7971 = vpop.permute.xlu0 %7970
        %7972 = vrot.lane.b32.xlu0 %v7939, 35
        %v7973 = vpop.permute.xlu0 %7972
        %vm7991 = vcmask 294168
        %7992 = vst.msk [vmem:[#allocation3] sm:$0xff] %vm7991, %v7941
        %7993 = vst.msk [vmem:[#allocation3 + $0x8] sm:$0xff] %vm7991, %v7943
        %7994 = vst.msk [vmem:[#allocation3 + $0x10] sm:$0xff] %vm7991, %v7945
        %7995 = vst.msk [vmem:[#allocation3 + $0x18] sm:$0xff] %vm7991, %v7947
        %7996 = vst.msk [vmem:[#allocation3 + $0x20] sm:$0xff] %vm7991, %v7949
        %7997 = vst.msk [vmem:[#allocation3 + $0x28] sm:$0xff] %vm7991, %v7951
        %7998 = vst.msk [vmem:[#allocation3 + $0x30] sm:$0xff] %vm7991, %v7953
        %7999 = vst.msk [vmem:[#allocation3 + $0x38] sm:$0xff] %vm7991, %v7955
        %8000 = vst.msk [vmem:[#allocation3 + $0x40] sm:$0xff] %vm7991, %v7957
        %8001 = vst.msk [vmem:[#allocation3 + $0x48] sm:$0xff] %vm7991, %v7959
        %8002 = vst.msk [vmem:[#allocation3 + $0x50] sm:$0xff] %vm7991, %v7961
        %8003 = vst.msk [vmem:[#allocation3 + $0x58] sm:$0xff] %vm7991, %v7963
        %8004 = vst.msk [vmem:[#allocation3 + $0x60] sm:$0xff] %vm7991, %v7965
        %8005 = vst.msk [vmem:[#allocation3 + $0x68] sm:$0xff] %vm7991, %v7967
        %8006 = vst.msk [vmem:[#allocation3 + $0x70] sm:$0xff] %vm7991, %v7969
        %8007 = vst.msk [vmem:[#allocation3 + $0x78] sm:$0xff] %vm7991, %v7971
        %8008 = vst.msk [vmem:[#allocation3 + $0x80] sm:$0xff] %vm7991, %v7973
        %v8009 = vld [vmem:[#allocation2] sm:$0xc0]
        %v8010 = vld [vmem:[#allocation2 + $0x8] sm:$0xff]
        %v8011 = vld [vmem:[#allocation2 + $0x10] sm:$0xff]
        %v8012 = vld [vmem:[#allocation2 + $0x18] sm:$0xff]
        %v8013 = vld [vmem:[#allocation2 + $0x20] sm:$0xff]
        %v8014 = vld [vmem:[#allocation2 + $0x28] sm:$0xff]
        %v8015 = vld [vmem:[#allocation2 + $0x30] sm:$0xff]
        %v8016 = vld [vmem:[#allocation2 + $0x38] sm:$0xff]
        %v8017 = vld [vmem:[#allocation2 + $0x40] sm:$0xff]
        %v8018 = vld [vmem:[#allocation2 + $0x48] sm:$0xff]
        %v8019 = vld [vmem:[#allocation2 + $0x50] sm:$0xff]
        %v8020 = vld [vmem:[#allocation2 + $0x58] sm:$0xff]
        %v8021 = vld [vmem:[#allocation2 + $0x60] sm:$0xff]
        %v8022 = vld [vmem:[#allocation2 + $0x68] sm:$0xff]
        %v8023 = vld [vmem:[#allocation2 + $0x70] sm:$0xff]
        %v8024 = vld [vmem:[#allocation2 + $0x78] sm:$0xff]
        %v8025 = vld [vmem:[#allocation2 + $0x80] sm:$0xff]
        %v8026 = vld [vmem:[#allocation2 + $0x88] sm:$0x3f]
        %vm8045 = vcmask 1041408
        %v8046 = vrot.slane %v8009, 6
        %v8047 = vrot.slane %v8010, 6
        %v8048 = vsel %vm8045, %v8046, %v8047
        %v8049 = vrot.slane %v8011, 6
        %v8050 = vsel %vm8045, %v8047, %v8049
        %v8051 = vrot.slane %v8012, 6
        %v8052 = vsel %vm8045, %v8049, %v8051
        %v8053 = vrot.slane %v8013, 6
        %v8054 = vsel %vm8045, %v8051, %v8053
        %v8055 = vrot.slane %v8014, 6
        %v8056 = vsel %vm8045, %v8053, %v8055
        %v8057 = vrot.slane %v8015, 6
        %v8058 = vsel %vm8045, %v8055, %v8057
        %v8059 = vrot.slane %v8016, 6
        %v8060 = vsel %vm8045, %v8057, %v8059
        %v8061 = vrot.slane %v8017, 6
        %v8062 = vsel %vm8045, %v8059, %v8061
        %v8063 = vrot.slane %v8018, 6
        %v8064 = vsel %vm8045, %v8061, %v8063
        %v8065 = vrot.slane %v8019, 6
        %v8066 = vsel %vm8045, %v8063, %v8065
        %v8067 = vrot.slane %v8020, 6
        %v8068 = vsel %vm8045, %v8065, %v8067
        %v8069 = vrot.slane %v8021, 6
        %v8070 = vsel %vm8045, %v8067, %v8069
        %v8071 = vrot.slane %v8022, 6
        %v8072 = vsel %vm8045, %v8069, %v8071
        %v8073 = vrot.slane %v8023, 6
        %v8074 = vsel %vm8045, %v8071, %v8073
        %v8075 = vrot.slane %v8024, 6
        %v8076 = vsel %vm8045, %v8073, %v8075
        %v8077 = vrot.slane %v8025, 6
        %v8078 = vsel %vm8045, %v8075, %v8077
        %v8079 = vrot.slane %v8026, 6
        %v8080 = vsel %vm8045, %v8077, %v8079
        %8081 = vrot.lane.b32.xlu0 %v8048, 36
        %v8082 = vpop.permute.xlu0 %8081
        %8083 = vrot.lane.b32.xlu0 %v8050, 36
        %v8084 = vpop.permute.xlu0 %8083
        %8085 = vrot.lane.b32.xlu0 %v8052, 36
        %v8086 = vpop.permute.xlu0 %8085
        %8087 = vrot.lane.b32.xlu0 %v8054, 36
        %v8088 = vpop.permute.xlu0 %8087
        %8089 = vrot.lane.b32.xlu0 %v8056, 36
        %v8090 = vpop.permute.xlu0 %8089
        %8091 = vrot.lane.b32.xlu0 %v8058, 36
        %v8092 = vpop.permute.xlu0 %8091
        %8093 = vrot.lane.b32.xlu0 %v8060, 36
        %v8094 = vpop.permute.xlu0 %8093
        %8095 = vrot.lane.b32.xlu0 %v8062, 36
        %v8096 = vpop.permute.xlu0 %8095
        %8097 = vrot.lane.b32.xlu0 %v8064, 36
        %v8098 = vpop.permute.xlu0 %8097
        %8099 = vrot.lane.b32.xlu0 %v8066, 36
        %v8100 = vpop.permute.xlu0 %8099
        %8101 = vrot.lane.b32.xlu0 %v8068, 36
        %v8102 = vpop.permute.xlu0 %8101
        %8103 = vrot.lane.b32.xlu0 %v8070, 36
        %v8104 = vpop.permute.xlu0 %8103
        %8105 = vrot.lane.b32.xlu0 %v8072, 36
        %v8106 = vpop.permute.xlu0 %8105
        %8107 = vrot.lane.b32.xlu0 %v8074, 36
        %v8108 = vpop.permute.xlu0 %8107
        %8109 = vrot.lane.b32.xlu0 %v8076, 36
        %v8110 = vpop.permute.xlu0 %8109
        %8111 = vrot.lane.b32.xlu0 %v8078, 36
        %v8112 = vpop.permute.xlu0 %8111
        %8113 = vrot.lane.b32.xlu0 %v8080, 36
        %v8114 = vpop.permute.xlu0 %8113
        %vm8132 = vcmask 302368
        %8133 = vst.msk [vmem:[#allocation3] sm:$0xff] %vm8132, %v8082
        %8134 = vst.msk [vmem:[#allocation3 + $0x8] sm:$0xff] %vm8132, %v8084
        %8135 = vst.msk [vmem:[#allocation3 + $0x10] sm:$0xff] %vm8132, %v8086
        %8136 = vst.msk [vmem:[#allocation3 + $0x18] sm:$0xff] %vm8132, %v8088
        %8137 = vst.msk [vmem:[#allocation3 + $0x20] sm:$0xff] %vm8132, %v8090
        %8138 = vst.msk [vmem:[#allocation3 + $0x28] sm:$0xff] %vm8132, %v8092
        %8139 = vst.msk [vmem:[#allocation3 + $0x30] sm:$0xff] %vm8132, %v8094
        %8140 = vst.msk [vmem:[#allocation3 + $0x38] sm:$0xff] %vm8132, %v8096
        %8141 = vst.msk [vmem:[#allocation3 + $0x40] sm:$0xff] %vm8132, %v8098
        %8142 = vst.msk [vmem:[#allocation3 + $0x48] sm:$0xff] %vm8132, %v8100
        %8143 = vst.msk [vmem:[#allocation3 + $0x50] sm:$0xff] %vm8132, %v8102
        %8144 = vst.msk [vmem:[#allocation3 + $0x58] sm:$0xff] %vm8132, %v8104
        %8145 = vst.msk [vmem:[#allocation3 + $0x60] sm:$0xff] %vm8132, %v8106
        %8146 = vst.msk [vmem:[#allocation3 + $0x68] sm:$0xff] %vm8132, %v8108
        %8147 = vst.msk [vmem:[#allocation3 + $0x70] sm:$0xff] %vm8132, %v8110
        %8148 = vst.msk [vmem:[#allocation3 + $0x78] sm:$0xff] %vm8132, %v8112
        %8149 = vst.msk [vmem:[#allocation3 + $0x80] sm:$0xff] %vm8132, %v8114
        %v8150 = vld [vmem:[%s1289] sm:$0xc0]
        %v8151 = vld [vmem:[%s1289 + $0x8] sm:$0xff]
        %v8152 = vld [vmem:[%s1289 + $0x10] sm:$0xff]
        %v8153 = vld [vmem:[%s1289 + $0x18] sm:$0xff]
        %v8154 = vld [vmem:[%s1289 + $0x20] sm:$0xff]
        %v8155 = vld [vmem:[%s1289 + $0x28] sm:$0xff]
        %v8156 = vld [vmem:[%s1289 + $0x30] sm:$0xff]
        %v8157 = vld [vmem:[%s1289 + $0x38] sm:$0xff]
        %v8158 = vld [vmem:[%s1289 + $0x40] sm:$0xff]
        %v8159 = vld [vmem:[%s1289 + $0x48] sm:$0xff]
        %v8160 = vld [vmem:[%s1289 + $0x50] sm:$0xff]
        %v8161 = vld [vmem:[%s1289 + $0x58] sm:$0xff]
        %v8162 = vld [vmem:[%s1289 + $0x60] sm:$0xff]
        %v8163 = vld [vmem:[%s1289 + $0x68] sm:$0xff]
        %v8164 = vld [vmem:[%s1289 + $0x70] sm:$0xff]
        %v8165 = vld [vmem:[%s1289 + $0x78] sm:$0xff]
        %v8166 = vld [vmem:[%s1289 + $0x80] sm:$0xff]
        %v8167 = vld [vmem:[%s1289 + $0x88] sm:$0x3f]
        %v8186 = vrot.slane %v8150, 6
        %v8187 = vrot.slane %v8151, 6
        %v8188 = vsel %vm8045, %v8186, %v8187
        %v8189 = vrot.slane %v8152, 6
        %v8190 = vsel %vm8045, %v8187, %v8189
        %v8191 = vrot.slane %v8153, 6
        %v8192 = vsel %vm8045, %v8189, %v8191
        %v8193 = vrot.slane %v8154, 6
        %v8194 = vsel %vm8045, %v8191, %v8193
        %v8195 = vrot.slane %v8155, 6
        %v8196 = vsel %vm8045, %v8193, %v8195
        %v8197 = vrot.slane %v8156, 6
        %v8198 = vsel %vm8045, %v8195, %v8197
        %v8199 = vrot.slane %v8157, 6
        %v8200 = vsel %vm8045, %v8197, %v8199
        %v8201 = vrot.slane %v8158, 6
        %v8202 = vsel %vm8045, %v8199, %v8201
        %v8203 = vrot.slane %v8159, 6
        %v8204 = vsel %vm8045, %v8201, %v8203
        %v8205 = vrot.slane %v8160, 6
        %v8206 = vsel %vm8045, %v8203, %v8205
        %v8207 = vrot.slane %v8161, 6
        %v8208 = vsel %vm8045, %v8205, %v8207
        %v8209 = vrot.slane %v8162, 6
        %v8210 = vsel %vm8045, %v8207, %v8209
        %v8211 = vrot.slane %v8163, 6
        %v8212 = vsel %vm8045, %v8209, %v8211
        %v8213 = vrot.slane %v8164, 6
        %v8214 = vsel %vm8045, %v8211, %v8213
        %v8215 = vrot.slane %v8165, 6
        %v8216 = vsel %vm8045, %v8213, %v8215
        %v8217 = vrot.slane %v8166, 6
        %v8218 = vsel %vm8045, %v8215, %v8217
        %v8219 = vrot.slane %v8167, 6
        %v8220 = vsel %vm8045, %v8217, %v8219
        %8221 = vrot.lane.b32.xlu0 %v8188, 37
        %v8222 = vpop.permute.xlu0 %8221
        %8223 = vrot.lane.b32.xlu0 %v8190, 37
        %v8224 = vpop.permute.xlu0 %8223
        %8225 = vrot.lane.b32.xlu0 %v8192, 37
        %v8226 = vpop.permute.xlu0 %8225
        %8227 = vrot.lane.b32.xlu0 %v8194, 37
        %v8228 = vpop.permute.xlu0 %8227
        %8229 = vrot.lane.b32.xlu0 %v8196, 37
        %v8230 = vpop.permute.xlu0 %8229
        %8231 = vrot.lane.b32.xlu0 %v8198, 37
        %v8232 = vpop.permute.xlu0 %8231
        %8233 = vrot.lane.b32.xlu0 %v8200, 37
        %v8234 = vpop.permute.xlu0 %8233
        %8235 = vrot.lane.b32.xlu0 %v8202, 37
        %v8236 = vpop.permute.xlu0 %8235
        %8237 = vrot.lane.b32.xlu0 %v8204, 37
        %v8238 = vpop.permute.xlu0 %8237
        %8239 = vrot.lane.b32.xlu0 %v8206, 37
        %v8240 = vpop.permute.xlu0 %8239
        %8241 = vrot.lane.b32.xlu0 %v8208, 37
        %v8242 = vpop.permute.xlu0 %8241
        %8243 = vrot.lane.b32.xlu0 %v8210, 37
        %v8244 = vpop.permute.xlu0 %8243
        %8245 = vrot.lane.b32.xlu0 %v8212, 37
        %v8246 = vpop.permute.xlu0 %8245
        %8247 = vrot.lane.b32.xlu0 %v8214, 37
        %v8248 = vpop.permute.xlu0 %8247
        %8249 = vrot.lane.b32.xlu0 %v8216, 37
        %v8250 = vpop.permute.xlu0 %8249
        %8251 = vrot.lane.b32.xlu0 %v8218, 37
        %v8252 = vpop.permute.xlu0 %8251
        %8253 = vrot.lane.b32.xlu0 %v8220, 37
        %v8254 = vpop.permute.xlu0 %8253
        %vm8272 = vcmask 310568
        %8273 = vst.msk [vmem:[#allocation3] sm:$0xff] %vm8272, %v8222
        %8274 = vst.msk [vmem:[#allocation3 + $0x8] sm:$0xff] %vm8272, %v8224
        %8275 = vst.msk [vmem:[#allocation3 + $0x10] sm:$0xff] %vm8272, %v8226
        %8276 = vst.msk [vmem:[#allocation3 + $0x18] sm:$0xff] %vm8272, %v8228
        %8277 = vst.msk [vmem:[#allocation3 + $0x20] sm:$0xff] %vm8272, %v8230
        %8278 = vst.msk [vmem:[#allocation3 + $0x28] sm:$0xff] %vm8272, %v8232
        %8279 = vst.msk [vmem:[#allocation3 + $0x30] sm:$0xff] %vm8272, %v8234
        %8280 = vst.msk [vmem:[#allocation3 + $0x38] sm:$0xff] %vm8272, %v8236
        %8281 = vst.msk [vmem:[#allocation3 + $0x40] sm:$0xff] %vm8272, %v8238
        %8282 = vst.msk [vmem:[#allocation3 + $0x48] sm:$0xff] %vm8272, %v8240
        %8283 = vst.msk [vmem:[#allocation3 + $0x50] sm:$0xff] %vm8272, %v8242
        %8284 = vst.msk [vmem:[#allocation3 + $0x58] sm:$0xff] %vm8272, %v8244
        %8285 = vst.msk [vmem:[#allocation3 + $0x60] sm:$0xff] %vm8272, %v8246
        %8286 = vst.msk [vmem:[#allocation3 + $0x68] sm:$0xff] %vm8272, %v8248
        %8287 = vst.msk [vmem:[#allocation3 + $0x70] sm:$0xff] %vm8272, %v8250
        %8288 = vst.msk [vmem:[#allocation3 + $0x78] sm:$0xff] %vm8272, %v8252
        %8289 = vst.msk [vmem:[#allocation3 + $0x80] sm:$0xff] %vm8272, %v8254
        %v8290 = vld [vmem:[%s1393] sm:$0xc0]
        %v8291 = vld [vmem:[%s1393 + $0x8] sm:$0xff]
        %v8292 = vld [vmem:[%s1393 + $0x10] sm:$0xff]
        %v8293 = vld [vmem:[%s1393 + $0x18] sm:$0xff]
        %v8294 = vld [vmem:[%s1393 + $0x20] sm:$0xff]
        %v8295 = vld [vmem:[%s1393 + $0x28] sm:$0xff]
        %v8296 = vld [vmem:[%s1393 + $0x30] sm:$0xff]
        %v8297 = vld [vmem:[%s1393 + $0x38] sm:$0xff]
        %v8298 = vld [vmem:[%s1393 + $0x40] sm:$0xff]
        %v8299 = vld [vmem:[%s1393 + $0x48] sm:$0xff]
        %v8300 = vld [vmem:[%s1393 + $0x50] sm:$0xff]
        %v8301 = vld [vmem:[%s1393 + $0x58] sm:$0xff]
        %v8302 = vld [vmem:[%s1393 + $0x60] sm:$0xff]
        %v8303 = vld [vmem:[%s1393 + $0x68] sm:$0xff]
        %v8304 = vld [vmem:[%s1393 + $0x70] sm:$0xff]
        %v8305 = vld [vmem:[%s1393 + $0x78] sm:$0xff]
        %v8306 = vld [vmem:[%s1393 + $0x80] sm:$0xff]
        %v8307 = vld [vmem:[%s1393 + $0x88] sm:$0x3f]
        %v8326 = vrot.slane %v8290, 6
        %v8327 = vrot.slane %v8291, 6
        %v8328 = vsel %vm8045, %v8326, %v8327
        %v8329 = vrot.slane %v8292, 6
        %v8330 = vsel %vm8045, %v8327, %v8329
        %v8331 = vrot.slane %v8293, 6
        %v8332 = vsel %vm8045, %v8329, %v8331
        %v8333 = vrot.slane %v8294, 6
        %v8334 = vsel %vm8045, %v8331, %v8333
        %v8335 = vrot.slane %v8295, 6
        %v8336 = vsel %vm8045, %v8333, %v8335
        %v8337 = vrot.slane %v8296, 6
        %v8338 = vsel %vm8045, %v8335, %v8337
        %v8339 = vrot.slane %v8297, 6
        %v8340 = vsel %vm8045, %v8337, %v8339
        %v8341 = vrot.slane %v8298, 6
        %v8342 = vsel %vm8045, %v8339, %v8341
        %v8343 = vrot.slane %v8299, 6
        %v8344 = vsel %vm8045, %v8341, %v8343
        %v8345 = vrot.slane %v8300, 6
        %v8346 = vsel %vm8045, %v8343, %v8345
        %v8347 = vrot.slane %v8301, 6
        %v8348 = vsel %vm8045, %v8345, %v8347
        %v8349 = vrot.slane %v8302, 6
        %v8350 = vsel %vm8045, %v8347, %v8349
        %v8351 = vrot.slane %v8303, 6
        %v8352 = vsel %vm8045, %v8349, %v8351
        %v8353 = vrot.slane %v8304, 6
        %v8354 = vsel %vm8045, %v8351, %v8353
        %v8355 = vrot.slane %v8305, 6
        %v8356 = vsel %vm8045, %v8353, %v8355
        %v8357 = vrot.slane %v8306, 6
        %v8358 = vsel %vm8045, %v8355, %v8357
        %v8359 = vrot.slane %v8307, 6
        %v8360 = vsel %vm8045, %v8357, %v8359
        %8361 = vrot.lane.b32.xlu0 %v8328, 38
        %v8362 = vpop.permute.xlu0 %8361
        %8363 = vrot.lane.b32.xlu0 %v8330, 38
        %v8364 = vpop.permute.xlu0 %8363
        %8365 = vrot.lane.b32.xlu0 %v8332, 38
        %v8366 = vpop.permute.xlu0 %8365
        %8367 = vrot.lane.b32.xlu0 %v8334, 38
        %v8368 = vpop.permute.xlu0 %8367
        %8369 = vrot.lane.b32.xlu0 %v8336, 38
        %v8370 = vpop.permute.xlu0 %8369
        %8371 = vrot.lane.b32.xlu0 %v8338, 38
        %v8372 = vpop.permute.xlu0 %8371
        %8373 = vrot.lane.b32.xlu0 %v8340, 38
        %v8374 = vpop.permute.xlu0 %8373
        %8375 = vrot.lane.b32.xlu0 %v8342, 38
        %v8376 = vpop.permute.xlu0 %8375
        %8377 = vrot.lane.b32.xlu0 %v8344, 38
        %v8378 = vpop.permute.xlu0 %8377
        %8379 = vrot.lane.b32.xlu0 %v8346, 38
        %v8380 = vpop.permute.xlu0 %8379
        %8381 = vrot.lane.b32.xlu0 %v8348, 38
        %v8382 = vpop.permute.xlu0 %8381
        %8383 = vrot.lane.b32.xlu0 %v8350, 38
        %v8384 = vpop.permute.xlu0 %8383
        %8385 = vrot.lane.b32.xlu0 %v8352, 38
        %v8386 = vpop.permute.xlu0 %8385
        %8387 = vrot.lane.b32.xlu0 %v8354, 38
        %v8388 = vpop.permute.xlu0 %8387
        %8389 = vrot.lane.b32.xlu0 %v8356, 38
        %v8390 = vpop.permute.xlu0 %8389
        %8391 = vrot.lane.b32.xlu0 %v8358, 38
        %v8392 = vpop.permute.xlu0 %8391
        %8393 = vrot.lane.b32.xlu0 %v8360, 38
        %v8394 = vpop.permute.xlu0 %8393
        %vm8412 = vcmask 318768
        %8413 = vst.msk [vmem:[#allocation3] sm:$0xff] %vm8412, %v8362
        %8414 = vst.msk [vmem:[#allocation3 + $0x8] sm:$0xff] %vm8412, %v8364
        %8415 = vst.msk [vmem:[#allocation3 + $0x10] sm:$0xff] %vm8412, %v8366
        %8416 = vst.msk [vmem:[#allocation3 + $0x18] sm:$0xff] %vm8412, %v8368
        %8417 = vst.msk [vmem:[#allocation3 + $0x20] sm:$0xff] %vm8412, %v8370
        %8418 = vst.msk [vmem:[#allocation3 + $0x28] sm:$0xff] %vm8412, %v8372
        %8419 = vst.msk [vmem:[#allocation3 + $0x30] sm:$0xff] %vm8412, %v8374
        %8420 = vst.msk [vmem:[#allocation3 + $0x38] sm:$0xff] %vm8412, %v8376
        %8421 = vst.msk [vmem:[#allocation3 + $0x40] sm:$0xff] %vm8412, %v8378
        %8422 = vst.msk [vmem:[#allocation3 + $0x48] sm:$0xff] %vm8412, %v8380
        %8423 = vst.msk [vmem:[#allocation3 + $0x50] sm:$0xff] %vm8412, %v8382
        %8424 = vst.msk [vmem:[#allocation3 + $0x58] sm:$0xff] %vm8412, %v8384
        %8425 = vst.msk [vmem:[#allocation3 + $0x60] sm:$0xff] %vm8412, %v8386
        %8426 = vst.msk [vmem:[#allocation3 + $0x68] sm:$0xff] %vm8412, %v8388
        %8427 = vst.msk [vmem:[#allocation3 + $0x70] sm:$0xff] %vm8412, %v8390
        %8428 = vst.msk [vmem:[#allocation3 + $0x78] sm:$0xff] %vm8412, %v8392
        %8429 = vst.msk [vmem:[#allocation3 + $0x80] sm:$0xff] %vm8412, %v8394
        %v8430 = vld [vmem:[#allocation2] sm:$0xc0]
        %v8431 = vld [vmem:[#allocation2 + $0x8] sm:$0xff]
        %v8432 = vld [vmem:[#allocation2 + $0x10] sm:$0xff]
        %v8433 = vld [vmem:[#allocation2 + $0x18] sm:$0xff]
        %v8434 = vld [vmem:[#allocation2 + $0x20] sm:$0xff]
        %v8435 = vld [vmem:[#allocation2 + $0x28] sm:$0xff]
        %v8436 = vld [vmem:[#allocation2 + $0x30] sm:$0xff]
        %v8437 = vld [vmem:[#allocation2 + $0x38] sm:$0xff]
        %v8438 = vld [vmem:[#allocation2 + $0x40] sm:$0xff]
        %v8439 = vld [vmem:[#allocation2 + $0x48] sm:$0xff]
        %v8440 = vld [vmem:[#allocation2 + $0x50] sm:$0xff]
        %v8441 = vld [vmem:[#allocation2 + $0x58] sm:$0xff]
        %v8442 = vld [vmem:[#allocation2 + $0x60] sm:$0xff]
        %v8443 = vld [vmem:[#allocation2 + $0x68] sm:$0xff]
        %v8444 = vld [vmem:[#allocation2 + $0x70] sm:$0xff]
        %v8445 = vld [vmem:[#allocation2 + $0x78] sm:$0xff]
        %v8446 = vld [vmem:[#allocation2 + $0x80] sm:$0xff]
        %v8447 = vld [vmem:[#allocation2 + $0x88] sm:$0x7f]
        %vm8448 = vsmask.f32 1280
        %v8450 = vshrl.u32 %v8430, 16
        %v8452 = vrot.slane %v8450, 6
        %v8453 = vshll.u32 %v8430, 16
        %v8455 = vrot.slane %v8453, 7
        %v8456 = vor.u32 %v8452, %v8455
        %v8458 = vshrl.u32 %v8431, 16
        %v8460 = vrot.slane %v8458, 6
        %v8461 = vshll.u32 %v8431, 16
        %v8463 = vrot.slane %v8461, 7
        %v8464 = vor.u32 %v8460, %v8463
        %v8465 = vsel %vm8448, %v8456, %v8464
        %v8467 = vshrl.u32 %v8432, 16
        %v8469 = vrot.slane %v8467, 6
        %v8470 = vshll.u32 %v8432, 16
        %v8472 = vrot.slane %v8470, 7
        %v8473 = vor.u32 %v8469, %v8472
        %v8474 = vsel %vm8448, %v8464, %v8473
        %v8476 = vshrl.u32 %v8433, 16
        %v8478 = vrot.slane %v8476, 6
        %v8479 = vshll.u32 %v8433, 16
        %v8481 = vrot.slane %v8479, 7
        %v8482 = vor.u32 %v8478, %v8481
        %v8483 = vsel %vm8448, %v8473, %v8482
        %v8485 = vshrl.u32 %v8434, 16
        %v8487 = vrot.slane %v8485, 6
        %v8488 = vshll.u32 %v8434, 16
        %v8490 = vrot.slane %v8488, 7
        %v8491 = vor.u32 %v8487, %v8490
        %v8492 = vsel %vm8448, %v8482, %v8491
        %v8494 = vshrl.u32 %v8435, 16
        %v8496 = vrot.slane %v8494, 6
        %v8497 = vshll.u32 %v8435, 16
        %v8499 = vrot.slane %v8497, 7
        %v8500 = vor.u32 %v8496, %v8499
        %v8501 = vsel %vm8448, %v8491, %v8500
        %v8503 = vshrl.u32 %v8436, 16
        %v8505 = vrot.slane %v8503, 6
        %v8506 = vshll.u32 %v8436, 16
        %v8508 = vrot.slane %v8506, 7
        %v8509 = vor.u32 %v8505, %v8508
        %v8510 = vsel %vm8448, %v8500, %v8509
        %v8512 = vshrl.u32 %v8437, 16
        %v8514 = vrot.slane %v8512, 6
        %v8515 = vshll.u32 %v8437, 16
        %v8517 = vrot.slane %v8515, 7
        %v8518 = vor.u32 %v8514, %v8517
        %v8519 = vsel %vm8448, %v8509, %v8518
        %v8521 = vshrl.u32 %v8438, 16
        %v8523 = vrot.slane %v8521, 6
        %v8524 = vshll.u32 %v8438, 16
        %v8526 = vrot.slane %v8524, 7
        %v8527 = vor.u32 %v8523, %v8526
        %v8528 = vsel %vm8448, %v8518, %v8527
        %v8530 = vshrl.u32 %v8439, 16
        %v8532 = vrot.slane %v8530, 6
        %v8533 = vshll.u32 %v8439, 16
        %v8535 = vrot.slane %v8533, 7
        %v8536 = vor.u32 %v8532, %v8535
        %v8537 = vsel %vm8448, %v8527, %v8536
        %v8539 = vshrl.u32 %v8440, 16
        %v8541 = vrot.slane %v8539, 6
        %v8542 = vshll.u32 %v8440, 16
        %v8544 = vrot.slane %v8542, 7
        %v8545 = vor.u32 %v8541, %v8544
        %v8546 = vsel %vm8448, %v8536, %v8545
        %v8548 = vshrl.u32 %v8441, 16
        %v8550 = vrot.slane %v8548, 6
        %v8551 = vshll.u32 %v8441, 16
        %v8553 = vrot.slane %v8551, 7
        %v8554 = vor.u32 %v8550, %v8553
        %v8555 = vsel %vm8448, %v8545, %v8554
        %v8557 = vshrl.u32 %v8442, 16
        %v8559 = vrot.slane %v8557, 6
        %v8560 = vshll.u32 %v8442, 16
        %v8562 = vrot.slane %v8560, 7
        %v8563 = vor.u32 %v8559, %v8562
        %v8564 = vsel %vm8448, %v8554, %v8563
        %v8566 = vshrl.u32 %v8443, 16
        %v8568 = vrot.slane %v8566, 6
        %v8569 = vshll.u32 %v8443, 16
        %v8571 = vrot.slane %v8569, 7
        %v8572 = vor.u32 %v8568, %v8571
        %v8573 = vsel %vm8448, %v8563, %v8572
        %v8575 = vshrl.u32 %v8444, 16
        %v8577 = vrot.slane %v8575, 6
        %v8578 = vshll.u32 %v8444, 16
        %v8580 = vrot.slane %v8578, 7
        %v8581 = vor.u32 %v8577, %v8580
        %v8582 = vsel %vm8448, %v8572, %v8581
        %v8584 = vshrl.u32 %v8445, 16
        %v8586 = vrot.slane %v8584, 6
        %v8587 = vshll.u32 %v8445, 16
        %v8589 = vrot.slane %v8587, 7
        %v8590 = vor.u32 %v8586, %v8589
        %v8591 = vsel %vm8448, %v8581, %v8590
        %v8593 = vshrl.u32 %v8446, 16
        %v8595 = vrot.slane %v8593, 6
        %v8596 = vshll.u32 %v8446, 16
        %v8598 = vrot.slane %v8596, 7
        %v8599 = vor.u32 %v8595, %v8598
        %v8600 = vsel %vm8448, %v8590, %v8599
        %v8602 = vshrl.u32 %v8447, 16
        %v8604 = vrot.slane %v8602, 6
        %v8605 = vshll.u32 %v8447, 16
        %v8607 = vrot.slane %v8605, 7
        %v8608 = vor.u32 %v8604, %v8607
        %v8609 = vsel %vm8448, %v8599, %v8608
        %8610 = vrot.lane.b32.xlu0 %v8465, 39
        %v8611 = vpop.permute.xlu0 %8610
        %8612 = vrot.lane.b32.xlu0 %v8474, 39
        %v8613 = vpop.permute.xlu0 %8612
        %8614 = vrot.lane.b32.xlu0 %v8483, 39
        %v8615 = vpop.permute.xlu0 %8614
        %8616 = vrot.lane.b32.xlu0 %v8492, 39
        %v8617 = vpop.permute.xlu0 %8616
        %8618 = vrot.lane.b32.xlu0 %v8501, 39
        %v8619 = vpop.permute.xlu0 %8618
        %8620 = vrot.lane.b32.xlu0 %v8510, 39
        %v8621 = vpop.permute.xlu0 %8620
        %8622 = vrot.lane.b32.xlu0 %v8519, 39
        %v8623 = vpop.permute.xlu0 %8622
        %8624 = vrot.lane.b32.xlu0 %v8528, 39
        %v8625 = vpop.permute.xlu0 %8624
        %8626 = vrot.lane.b32.xlu0 %v8537, 39
        %v8627 = vpop.permute.xlu0 %8626
        %8628 = vrot.lane.b32.xlu0 %v8546, 39
        %v8629 = vpop.permute.xlu0 %8628
        %8630 = vrot.lane.b32.xlu0 %v8555, 39
        %v8631 = vpop.permute.xlu0 %8630
        %8632 = vrot.lane.b32.xlu0 %v8564, 39
        %v8633 = vpop.permute.xlu0 %8632
        %8634 = vrot.lane.b32.xlu0 %v8573, 39
        %v8635 = vpop.permute.xlu0 %8634
        %8636 = vrot.lane.b32.xlu0 %v8582, 39
        %v8637 = vpop.permute.xlu0 %8636
        %8638 = vrot.lane.b32.xlu0 %v8591, 39
        %v8639 = vpop.permute.xlu0 %8638
        %8640 = vrot.lane.b32.xlu0 %v8600, 39
        %v8641 = vpop.permute.xlu0 %8640
        %8642 = vrot.lane.b32.xlu0 %v8609, 39
        %v8643 = vpop.permute.xlu0 %8642
        %vm8661 = vcmask 326968
        %8662 = vst.msk [vmem:[#allocation3] sm:$0xff] %vm8661, %v8611
        %8663 = vst.msk [vmem:[#allocation3 + $0x8] sm:$0xff] %vm8661, %v8613
        %8664 = vst.msk [vmem:[#allocation3 + $0x10] sm:$0xff] %vm8661, %v8615
        %8665 = vst.msk [vmem:[#allocation3 + $0x18] sm:$0xff] %vm8661, %v8617
        %8666 = vst.msk [vmem:[#allocation3 + $0x20] sm:$0xff] %vm8661, %v8619
        %8667 = vst.msk [vmem:[#allocation3 + $0x28] sm:$0xff] %vm8661, %v8621
        %8668 = vst.msk [vmem:[#allocation3 + $0x30] sm:$0xff] %vm8661, %v8623
        %8669 = vst.msk [vmem:[#allocation3 + $0x38] sm:$0xff] %vm8661, %v8625
        %8670 = vst.msk [vmem:[#allocation3 + $0x40] sm:$0xff] %vm8661, %v8627
        %8671 = vst.msk [vmem:[#allocation3 + $0x48] sm:$0xff] %vm8661, %v8629
        %8672 = vst.msk [vmem:[#allocation3 + $0x50] sm:$0xff] %vm8661, %v8631
        %8673 = vst.msk [vmem:[#allocation3 + $0x58] sm:$0xff] %vm8661, %v8633
        %8674 = vst.msk [vmem:[#allocation3 + $0x60] sm:$0xff] %vm8661, %v8635
        %8675 = vst.msk [vmem:[#allocation3 + $0x68] sm:$0xff] %vm8661, %v8637
        %8676 = vst.msk [vmem:[#allocation3 + $0x70] sm:$0xff] %vm8661, %v8639
        %8677 = vst.msk [vmem:[#allocation3 + $0x78] sm:$0xff] %vm8661, %v8641
        %8678 = vst.msk [vmem:[#allocation3 + $0x80] sm:$0xff] %vm8661, %v8643
        %v8679 = vld [vmem:[%s1289] sm:$0xc0]
        %v8680 = vld [vmem:[%s1289 + $0x8] sm:$0xff]
        %v8681 = vld [vmem:[%s1289 + $0x10] sm:$0xff]
        %v8682 = vld [vmem:[%s1289 + $0x18] sm:$0xff]
        %v8683 = vld [vmem:[%s1289 + $0x20] sm:$0xff]
        %v8684 = vld [vmem:[%s1289 + $0x28] sm:$0xff]
        %v8685 = vld [vmem:[%s1289 + $0x30] sm:$0xff]
        %v8686 = vld [vmem:[%s1289 + $0x38] sm:$0xff]
        %v8687 = vld [vmem:[%s1289 + $0x40] sm:$0xff]
        %v8688 = vld [vmem:[%s1289 + $0x48] sm:$0xff]
        %v8689 = vld [vmem:[%s1289 + $0x50] sm:$0xff]
        %v8690 = vld [vmem:[%s1289 + $0x58] sm:$0xff]
        %v8691 = vld [vmem:[%s1289 + $0x60] sm:$0xff]
        %v8692 = vld [vmem:[%s1289 + $0x68] sm:$0xff]
        %v8693 = vld [vmem:[%s1289 + $0x70] sm:$0xff]
        %v8694 = vld [vmem:[%s1289 + $0x78] sm:$0xff]
        %v8695 = vld [vmem:[%s1289 + $0x80] sm:$0xff]
        %v8696 = vld [vmem:[%s1289 + $0x88] sm:$0x7f]
        %v8698 = vshrl.u32 %v8679, 16
        %v8700 = vrot.slane %v8698, 6
        %v8701 = vshll.u32 %v8679, 16
        %v8703 = vrot.slane %v8701, 7
        %v8704 = vor.u32 %v8700, %v8703
        %v8706 = vshrl.u32 %v8680, 16
        %v8708 = vrot.slane %v8706, 6
        %v8709 = vshll.u32 %v8680, 16
        %v8711 = vrot.slane %v8709, 7
        %v8712 = vor.u32 %v8708, %v8711
        %v8713 = vsel %vm8448, %v8704, %v8712
        %v8715 = vshrl.u32 %v8681, 16
        %v8717 = vrot.slane %v8715, 6
        %v8718 = vshll.u32 %v8681, 16
        %v8720 = vrot.slane %v8718, 7
        %v8721 = vor.u32 %v8717, %v8720
        %v8722 = vsel %vm8448, %v8712, %v8721
        %v8724 = vshrl.u32 %v8682, 16
        %v8726 = vrot.slane %v8724, 6
        %v8727 = vshll.u32 %v8682, 16
        %v8729 = vrot.slane %v8727, 7
        %v8730 = vor.u32 %v8726, %v8729
        %v8731 = vsel %vm8448, %v8721, %v8730
        %v8733 = vshrl.u32 %v8683, 16
        %v8735 = vrot.slane %v8733, 6
        %v8736 = vshll.u32 %v8683, 16
        %v8738 = vrot.slane %v8736, 7
        %v8739 = vor.u32 %v8735, %v8738
        %v8740 = vsel %vm8448, %v8730, %v8739
        %v8742 = vshrl.u32 %v8684, 16
        %v8744 = vrot.slane %v8742, 6
        %v8745 = vshll.u32 %v8684, 16
        %v8747 = vrot.slane %v8745, 7
        %v8748 = vor.u32 %v8744, %v8747
        %v8749 = vsel %vm8448, %v8739, %v8748
        %v8751 = vshrl.u32 %v8685, 16
        %v8753 = vrot.slane %v8751, 6
        %v8754 = vshll.u32 %v8685, 16
        %v8756 = vrot.slane %v8754, 7
        %v8757 = vor.u32 %v8753, %v8756
        %v8758 = vsel %vm8448, %v8748, %v8757
        %v8760 = vshrl.u32 %v8686, 16
        %v8762 = vrot.slane %v8760, 6
        %v8763 = vshll.u32 %v8686, 16
        %v8765 = vrot.slane %v8763, 7
        %v8766 = vor.u32 %v8762, %v8765
        %v8767 = vsel %vm8448, %v8757, %v8766
        %v8769 = vshrl.u32 %v8687, 16
        %v8771 = vrot.slane %v8769, 6
        %v8772 = vshll.u32 %v8687, 16
        %v8774 = vrot.slane %v8772, 7
        %v8775 = vor.u32 %v8771, %v8774
        %v8776 = vsel %vm8448, %v8766, %v8775
        %v8778 = vshrl.u32 %v8688, 16
        %v8780 = vrot.slane %v8778, 6
        %v8781 = vshll.u32 %v8688, 16
        %v8783 = vrot.slane %v8781, 7
        %v8784 = vor.u32 %v8780, %v8783
        %v8785 = vsel %vm8448, %v8775, %v8784
        %v8787 = vshrl.u32 %v8689, 16
        %v8789 = vrot.slane %v8787, 6
        %v8790 = vshll.u32 %v8689, 16
        %v8792 = vrot.slane %v8790, 7
        %v8793 = vor.u32 %v8789, %v8792
        %v8794 = vsel %vm8448, %v8784, %v8793
        %v8796 = vshrl.u32 %v8690, 16
        %v8798 = vrot.slane %v8796, 6
        %v8799 = vshll.u32 %v8690, 16
        %v8801 = vrot.slane %v8799, 7
        %v8802 = vor.u32 %v8798, %v8801
        %v8803 = vsel %vm8448, %v8793, %v8802
        %v8805 = vshrl.u32 %v8691, 16
        %v8807 = vrot.slane %v8805, 6
        %v8808 = vshll.u32 %v8691, 16
        %v8810 = vrot.slane %v8808, 7
        %v8811 = vor.u32 %v8807, %v8810
        %v8812 = vsel %vm8448, %v8802, %v8811
        %v8814 = vshrl.u32 %v8692, 16
        %v8816 = vrot.slane %v8814, 6
        %v8817 = vshll.u32 %v8692, 16
        %v8819 = vrot.slane %v8817, 7
        %v8820 = vor.u32 %v8816, %v8819
        %v8821 = vsel %vm8448, %v8811, %v8820
        %v8823 = vshrl.u32 %v8693, 16
        %v8825 = vrot.slane %v8823, 6
        %v8826 = vshll.u32 %v8693, 16
        %v8828 = vrot.slane %v8826, 7
        %v8829 = vor.u32 %v8825, %v8828
        %v8830 = vsel %vm8448, %v8820, %v8829
        %v8832 = vshrl.u32 %v8694, 16
        %v8834 = vrot.slane %v8832, 6
        %v8835 = vshll.u32 %v8694, 16
        %v8837 = vrot.slane %v8835, 7
        %v8838 = vor.u32 %v8834, %v8837
        %v8839 = vsel %vm8448, %v8829, %v8838
        %v8841 = vshrl.u32 %v8695, 16
        %v8843 = vrot.slane %v8841, 6
        %v8844 = vshll.u32 %v8695, 16
        %v8846 = vrot.slane %v8844, 7
        %v8847 = vor.u32 %v8843, %v8846
        %v8848 = vsel %vm8448, %v8838, %v8847
        %v8850 = vshrl.u32 %v8696, 16
        %v8852 = vrot.slane %v8850, 6
        %v8853 = vshll.u32 %v8696, 16
        %v8855 = vrot.slane %v8853, 7
        %v8856 = vor.u32 %v8852, %v8855
        %v8857 = vsel %vm8448, %v8847, %v8856
        %8858 = vrot.lane.b32.xlu0 %v8713, 40
        %v8859 = vpop.permute.xlu0 %8858
        %8860 = vrot.lane.b32.xlu0 %v8722, 40
        %v8861 = vpop.permute.xlu0 %8860
        %8862 = vrot.lane.b32.xlu0 %v8731, 40
        %v8863 = vpop.permute.xlu0 %8862
        %8864 = vrot.lane.b32.xlu0 %v8740, 40
        %v8865 = vpop.permute.xlu0 %8864
        %8866 = vrot.lane.b32.xlu0 %v8749, 40
        %v8867 = vpop.permute.xlu0 %8866
        %8868 = vrot.lane.b32.xlu0 %v8758, 40
        %v8869 = vpop.permute.xlu0 %8868
        %8870 = vrot.lane.b32.xlu0 %v8767, 40
        %v8871 = vpop.permute.xlu0 %8870
        %8872 = vrot.lane.b32.xlu0 %v8776, 40
        %v8873 = vpop.permute.xlu0 %8872
        %8874 = vrot.lane.b32.xlu0 %v8785, 40
        %v8875 = vpop.permute.xlu0 %8874
        %8876 = vrot.lane.b32.xlu0 %v8794, 40
        %v8877 = vpop.permute.xlu0 %8876
        %8878 = vrot.lane.b32.xlu0 %v8803, 40
        %v8879 = vpop.permute.xlu0 %8878
        %8880 = vrot.lane.b32.xlu0 %v8812, 40
        %v8881 = vpop.permute.xlu0 %8880
        %8882 = vrot.lane.b32.xlu0 %v8821, 40
        %v8883 = vpop.permute.xlu0 %8882
        %8884 = vrot.lane.b32.xlu0 %v8830, 40
        %v8885 = vpop.permute.xlu0 %8884
        %8886 = vrot.lane.b32.xlu0 %v8839, 40
        %v8887 = vpop.permute.xlu0 %8886
        %8888 = vrot.lane.b32.xlu0 %v8848, 40
        %v8889 = vpop.permute.xlu0 %8888
        %8890 = vrot.lane.b32.xlu0 %v8857, 40
        %v8891 = vpop.permute.xlu0 %8890
        %vm8909 = vcmask 335168
        %8910 = vst.msk [vmem:[#allocation3] sm:$0xff] %vm8909, %v8859
        %8911 = vst.msk [vmem:[#allocation3 + $0x8] sm:$0xff] %vm8909, %v8861
        %8912 = vst.msk [vmem:[#allocation3 + $0x10] sm:$0xff] %vm8909, %v8863
        %8913 = vst.msk [vmem:[#allocation3 + $0x18] sm:$0xff] %vm8909, %v8865
        %8914 = vst.msk [vmem:[#allocation3 + $0x20] sm:$0xff] %vm8909, %v8867
        %8915 = vst.msk [vmem:[#allocation3 + $0x28] sm:$0xff] %vm8909, %v8869
        %8916 = vst.msk [vmem:[#allocation3 + $0x30] sm:$0xff] %vm8909, %v8871
        %8917 = vst.msk [vmem:[#allocation3 + $0x38] sm:$0xff] %vm8909, %v8873
        %8918 = vst.msk [vmem:[#allocation3 + $0x40] sm:$0xff] %vm8909, %v8875
        %8919 = vst.msk [vmem:[#allocation3 + $0x48] sm:$0xff] %vm8909, %v8877
        %8920 = vst.msk [vmem:[#allocation3 + $0x50] sm:$0xff] %vm8909, %v8879
        %8921 = vst.msk [vmem:[#allocation3 + $0x58] sm:$0xff] %vm8909, %v8881
        %8922 = vst.msk [vmem:[#allocation3 + $0x60] sm:$0xff] %vm8909, %v8883
        %8923 = vst.msk [vmem:[#allocation3 + $0x68] sm:$0xff] %vm8909, %v8885
        %8924 = vst.msk [vmem:[#allocation3 + $0x70] sm:$0xff] %vm8909, %v8887
        %8925 = vst.msk [vmem:[#allocation3 + $0x78] sm:$0xff] %vm8909, %v8889
        %8926 = vst.msk [vmem:[#allocation3 + $0x80] sm:$0xff] %vm8909, %v8891
        %v8927 = vld [vmem:[#allocation3] sm:$0xff]
        %v8928 = vld [vmem:[#allocation3 + $0x8] sm:$0xff]
        %v8929 = vld [vmem:[#allocation3 + $0x10] sm:$0xff]
        %v8930 = vld [vmem:[#allocation3 + $0x18] sm:$0xff]
        %v8931 = vld [vmem:[#allocation3 + $0x20] sm:$0xff]
        %v8932 = vld [vmem:[#allocation3 + $0x28] sm:$0xff]
        %v8933 = vld [vmem:[#allocation3 + $0x30] sm:$0xff]
        %v8934 = vld [vmem:[#allocation3 + $0x38] sm:$0xff]
        %v8935 = vld [vmem:[#allocation3 + $0x40] sm:$0xff]
        %v8936 = vld [vmem:[#allocation3 + $0x48] sm:$0xff]
        %v8937 = vld [vmem:[#allocation3 + $0x50] sm:$0xff]
        %v8938 = vld [vmem:[#allocation3 + $0x58] sm:$0xff]
        %v8939 = vld [vmem:[#allocation3 + $0x60] sm:$0xff]
        %v8940 = vld [vmem:[#allocation3 + $0x68] sm:$0xff]
        %v8941 = vld [vmem:[#allocation3 + $0x70] sm:$0xff]
        %v8942 = vld [vmem:[#allocation3 + $0x78] sm:$0xff]
        %v8943 = vld [vmem:[#allocation3 + $0x80] sm:$0xff]
        %v8944 = vld [vmem:[%s2] sm:$0xf]
        %v8945 = vld [vmem:[%s2 + $0x4] sm:$0xf]
        %v8946 = vld [vmem:[%s2 + $0x8] sm:$0xf]
        %v8947 = vld [vmem:[%s2 + $0xc] sm:$0xf]
        %v8948 = vld [vmem:[%s2 + $0x10] sm:$0xf]
        %v8949 = vld [vmem:[%s2 + $0x14] sm:$0x1]
        %v8950 = vld [vmem:[%s3] sm:$0x1]
        %v8952 = vlaneseq
        %v8953 = vshrl.u32 %v8952, 7
        %v8954 = vsub.s32 0, %v8953
        %v8955 = vrot.slane %v8950, %v8954
        %v8963 = vunpack.c.l.b16 %v8944
        %v8964 = vunpack.c.l.b16 %v8945
        %v8965 = vunpack.c.l.b16 %v8946
        %v8966 = vunpack.c.l.b16 %v8947
        %v8967 = vunpack.c.l.b16 %v8948
        %v8968 = vunpack.c.l.b16 %v8949
        %v8969 = vpack.c.b16 %v8964, %v8963
        %v8970 = vpack.c.b16 %v8966, %v8965
        %v8971 = vpack.c.b16 %v8968, %v8967
        %vm8974 = vcmask 334848
        %v8976 = vsel %vm8974, %v8927, 0
        %v8979 = vsel %vm8974, %v8928, 0
        %v8982 = vsel %vm8974, %v8929, 0
        %v8985 = vsel %vm8974, %v8930, 0
        %v8988 = vsel %vm8974, %v8931, 0
        %v8991 = vsel %vm8974, %v8932, 0
        %v8994 = vsel %vm8974, %v8933, 0
        %v8997 = vsel %vm8974, %v8934, 0
        %v9000 = vsel %vm8974, %v8935, 0
        %v9003 = vsel %vm8974, %v8936, 0
        %v9006 = vsel %vm8974, %v8937, 0
        %v9009 = vsel %vm8974, %v8938, 0
        %v9012 = vsel %vm8974, %v8939, 0
        %v9015 = vsel %vm8974, %v8940, 0
        %v9018 = vsel %vm8974, %v8941, 0
        %v9021 = vsel %vm8974, %v8942, 0
        %v9024 = vsel %vm8974, %v8943, 0
        %vm9026 = vcmask 1043456
        %vm9027 = vcmask 1044480
        %v9028 = vsel %vm9026, 4294967295, 65535
        %v9029 = vsel %vm9027, %v9028, 0
        %v9031 = vand.u32 %v8971, %v9029
        %9033 = vmatprep.subr.bf16.mxu0 0
        %9034 = vmatpush1.bf16.msra.mxu0 %v8969
        %9035 = vmatprep.subr.bf16.mxu0 0
        %9036 = vmatpush1.bf16.msra.mxu0 %v8970
        %9037 = vmatprep.subr.bf16.mxu0 0
        %9038 = vmatpush1.bf16.msra.mxu0 %v9031
        %9039 = vmatprep.subr.bf16.mxu0 0
        %9040 = vmatpush1.bf16.msra.mxu0 0
        %9041 = vmatprep.subr.bf16.mxu0 0
        %9042 = vmatpush1.bf16.msra.mxu0 0
        %9043 = vmatprep.subr.bf16.mxu0 0
        %9044 = vmatpush1.bf16.msra.mxu0 0
        %9045 = vmatprep.subr.bf16.mxu0 0
        %9046 = vmatpush1.bf16.msra.mxu0 0
        %9047 = vmatprep.subr.bf16.mxu0 0
        %9048 = vmatpush1.bf16.msra.mxu0 0
        %9049 = vmatprep.subr.bf16.mxu0 0
        %9050 = vmatpush1.bf16.msra.mxu0 0
        %9051 = vmatprep.subr.bf16.mxu0 0
        %9052 = vmatpush1.bf16.msra.mxu0 0
        %9053 = vmatprep.subr.bf16.mxu0 0
        %9054 = vmatpush1.bf16.msra.mxu0 0
        %9055 = vmatprep.subr.bf16.mxu0 0
        %9056 = vmatpush1.bf16.msra.mxu0 0
        %9057 = vmatprep.subr.bf16.mxu0 0
        %9058 = vmatpush1.bf16.msra.mxu0 0
        %9059 = vmatprep.subr.bf16.mxu0 0
        %9060 = vmatpush1.bf16.msra.mxu0 0
        %9061 = vmatprep.subr.bf16.mxu0 0
        %9062 = vmatpush1.bf16.msra.mxu0 0
        %9063 = vmatprep.subr.bf16.mxu0 0
        %9064 = vmatpush1.bf16.msra.mxu0 0
        %9065 = vmatprep.mubr.bf16.mxu0 0
        %9066 = vmatmul.mubr.bf16.gmra.mrb[0].mxu0 %v8976
        %v9067 = vpop.f32.mrb[0].mxu0
        %v9068 = vadd.f32 %v8955, %v9067
        %v9069 = vpop.f32.mrb[0].mxu0
        %v9070 = vpop.f32.mrb[0].mxu0
        %v9071 = vadd.f32 %v8955, %v9070
        %v9072 = vpop.f32.mrb[0].mxu0
        %9073 = vmatprep.mubr.bf16.mxu0 0
        %9074 = vmatmul.mubr.bf16.gmra.mrb[0].mxu0 %v8979
        %v9075 = vpop.f32.mrb[0].mxu0
        %v9076 = vadd.f32 %v8955, %v9075
        %v9077 = vpop.f32.mrb[0].mxu0
        %v9078 = vpop.f32.mrb[0].mxu0
        %v9079 = vadd.f32 %v8955, %v9078
        %v9080 = vpop.f32.mrb[0].mxu0
        %9081 = vmatprep.mubr.bf16.mxu0 0
        %9082 = vmatmul.mubr.bf16.gmra.mrb[0].mxu0 %v8982
        %v9083 = vpop.f32.mrb[0].mxu0
        %v9084 = vadd.f32 %v8955, %v9083
        %v9085 = vpop.f32.mrb[0].mxu0
        %v9086 = vpop.f32.mrb[0].mxu0
        %v9087 = vadd.f32 %v8955, %v9086
        %v9088 = vpop.f32.mrb[0].mxu0
        %9089 = vmatprep.mubr.bf16.mxu0 0
        %9090 = vmatmul.mubr.bf16.gmra.mrb[0].mxu0 %v8985
        %v9091 = vpop.f32.mrb[0].mxu0
        %v9092 = vadd.f32 %v8955, %v9091
        %v9093 = vpop.f32.mrb[0].mxu0
        %v9094 = vpop.f32.mrb[0].mxu0
        %v9095 = vadd.f32 %v8955, %v9094
        %v9096 = vpop.f32.mrb[0].mxu0
        %9097 = vmatprep.mubr.bf16.mxu0 0
        %9098 = vmatmul.mubr.bf16.gmra.mrb[0].mxu0 %v8988
        %v9099 = vpop.f32.mrb[0].mxu0
        %v9100 = vadd.f32 %v8955, %v9099
        %v9101 = vpop.f32.mrb[0].mxu0
        %v9102 = vpop.f32.mrb[0].mxu0
        %v9103 = vadd.f32 %v8955, %v9102
        %v9104 = vpop.f32.mrb[0].mxu0
        %9105 = vmatprep.mubr.bf16.mxu0 0
        %9106 = vmatmul.mubr.bf16.gmra.mrb[0].mxu0 %v8991
        %v9107 = vpop.f32.mrb[0].mxu0
        %v9108 = vadd.f32 %v8955, %v9107
        %v9109 = vpop.f32.mrb[0].mxu0
        %v9110 = vpop.f32.mrb[0].mxu0
        %v9111 = vadd.f32 %v8955, %v9110
        %v9112 = vpop.f32.mrb[0].mxu0
        %9113 = vmatprep.mubr.bf16.mxu0 0
        %9114 = vmatmul.mubr.bf16.gmra.mrb[0].mxu0 %v8994
        %v9115 = vpop.f32.mrb[0].mxu0
        %v9116 = vadd.f32 %v8955, %v9115
        %v9117 = vpop.f32.mrb[0].mxu0
        %v9118 = vpop.f32.mrb[0].mxu0
        %v9119 = vadd.f32 %v8955, %v9118
        %v9120 = vpop.f32.mrb[0].mxu0
        %9121 = vmatprep.mubr.bf16.mxu0 0
        %9122 = vmatmul.mubr.bf16.gmra.mrb[0].mxu0 %v8997
        %v9123 = vpop.f32.mrb[0].mxu0
        %v9124 = vadd.f32 %v8955, %v9123
        %v9125 = vpop.f32.mrb[0].mxu0
        %v9126 = vpop.f32.mrb[0].mxu0
        %v9127 = vadd.f32 %v8955, %v9126
        %v9128 = vpop.f32.mrb[0].mxu0
        %9129 = vmatprep.mubr.bf16.mxu0 0
        %9130 = vmatmul.mubr.bf16.gmra.mrb[0].mxu0 %v9000
        %v9131 = vpop.f32.mrb[0].mxu0
        %v9132 = vadd.f32 %v8955, %v9131
        %v9133 = vpop.f32.mrb[0].mxu0
        %v9134 = vpop.f32.mrb[0].mxu0
        %v9135 = vadd.f32 %v8955, %v9134
        %v9136 = vpop.f32.mrb[0].mxu0
        %9137 = vmatprep.mubr.bf16.mxu0 0
        %9138 = vmatmul.mubr.bf16.gmra.mrb[0].mxu0 %v9003
        %v9139 = vpop.f32.mrb[0].mxu0
        %v9140 = vadd.f32 %v8955, %v9139
        %v9141 = vpop.f32.mrb[0].mxu0
        %v9142 = vpop.f32.mrb[0].mxu0
        %v9143 = vadd.f32 %v8955, %v9142
        %v9144 = vpop.f32.mrb[0].mxu0
        %9145 = vmatprep.mubr.bf16.mxu0 0
        %9146 = vmatmul.mubr.bf16.gmra.mrb[0].mxu0 %v9006
        %v9147 = vpop.f32.mrb[0].mxu0
        %v9148 = vadd.f32 %v8955, %v9147
        %v9149 = vpop.f32.mrb[0].mxu0
        %v9150 = vpop.f32.mrb[0].mxu0
        %v9151 = vadd.f32 %v8955, %v9150
        %v9152 = vpop.f32.mrb[0].mxu0
        %9153 = vmatprep.mubr.bf16.mxu0 0
        %9154 = vmatmul.mubr.bf16.gmra.mrb[0].mxu0 %v9009
        %v9155 = vpop.f32.mrb[0].mxu0
        %v9156 = vadd.f32 %v8955, %v9155
        %v9157 = vpop.f32.mrb[0].mxu0
        %v9158 = vpop.f32.mrb[0].mxu0
        %v9159 = vadd.f32 %v8955, %v9158
        %v9160 = vpop.f32.mrb[0].mxu0
        %9161 = vmatprep.mubr.bf16.mxu0 0
        %9162 = vmatmul.mubr.bf16.gmra.mrb[0].mxu0 %v9012
        %v9163 = vpop.f32.mrb[0].mxu0
        %v9164 = vadd.f32 %v8955, %v9163
        %v9165 = vpop.f32.mrb[0].mxu0
        %v9166 = vpop.f32.mrb[0].mxu0
        %v9167 = vadd.f32 %v8955, %v9166
        %v9168 = vpop.f32.mrb[0].mxu0
        %9169 = vmatprep.mubr.bf16.mxu0 0
        %9170 = vmatmul.mubr.bf16.gmra.mrb[0].mxu0 %v9015
        %v9171 = vpop.f32.mrb[0].mxu0
        %v9172 = vadd.f32 %v8955, %v9171
        %v9173 = vpop.f32.mrb[0].mxu0
        %v9174 = vpop.f32.mrb[0].mxu0
        %v9175 = vadd.f32 %v8955, %v9174
        %v9176 = vpop.f32.mrb[0].mxu0
        %9177 = vmatprep.mubr.bf16.mxu0 0
        %9178 = vmatmul.mubr.bf16.gmra.mrb[0].mxu0 %v9018
        %v9179 = vpop.f32.mrb[0].mxu0
        %v9180 = vadd.f32 %v8955, %v9179
        %v9181 = vpop.f32.mrb[0].mxu0
        %v9182 = vpop.f32.mrb[0].mxu0
        %v9183 = vadd.f32 %v8955, %v9182
        %v9184 = vpop.f32.mrb[0].mxu0
        %9185 = vmatprep.mubr.bf16.mxu0 0
        %9186 = vmatmul.mubr.bf16.gmra.mrb[0].mxu0 %v9021
        %v9187 = vpop.f32.mrb[0].mxu0
        %v9188 = vadd.f32 %v8955, %v9187
        %v9189 = vpop.f32.mrb[0].mxu0
        %v9190 = vpop.f32.mrb[0].mxu0
        %v9191 = vadd.f32 %v8955, %v9190
        %v9192 = vpop.f32.mrb[0].mxu0
        %9193 = vmatprep.mubr.bf16.mxu0 0
        %9194 = vmatmul.mubr.bf16.gmra.mrb[0].mxu0 %v9024
        %v9195 = vpop.f32.mrb[0].mxu0
        %v9196 = vadd.f32 %v8955, %v9195
        %v9197 = vpop.f32.mrb[0].mxu0
        %v9198 = vpop.f32.mrb[0].mxu0
        %v9199 = vadd.f32 %v8955, %v9198
        %v9200 = vpop.f32.mrb[0].mxu0
        %9201 = vdwg.mxu0
        %v9202 = vpack.c.bf16 %v9071, %v9068
        %v9203 = vpack.c.bf16 %v9079, %v9076
        %v9204 = vpack.c.bf16 %v9087, %v9084
        %v9205 = vpack.c.bf16 %v9095, %v9092
        %v9206 = vpack.c.bf16 %v9103, %v9100
        %v9207 = vpack.c.bf16 %v9111, %v9108
        %v9208 = vpack.c.bf16 %v9119, %v9116
        %v9209 = vpack.c.bf16 %v9127, %v9124
        %v9210 = vpack.c.bf16 %v9135, %v9132
        %v9211 = vpack.c.bf16 %v9143, %v9140
        %v9212 = vpack.c.bf16 %v9151, %v9148
        %v9213 = vpack.c.bf16 %v9159, %v9156
        %v9214 = vpack.c.bf16 %v9167, %v9164
        %v9215 = vpack.c.bf16 %v9175, %v9172
        %v9216 = vpack.c.bf16 %v9183, %v9180
        %v9217 = vpack.c.bf16 %v9191, %v9188
        %v9218 = vpack.c.bf16 %v9199, %v9196
        %v9236 = vunpack.c.l.b16 %v9202
        %v9237 = vunpack.c.h.b16 %v9202
        %v9238 = vunpack.c.l.b16 %v9203
        %v9239 = vunpack.c.h.b16 %v9203
        %v9240 = vunpack.c.l.b16 %v9204
        %v9241 = vunpack.c.h.b16 %v9204
        %v9242 = vunpack.c.l.b16 %v9205
        %v9243 = vunpack.c.h.b16 %v9205
        %v9244 = vunpack.c.l.b16 %v9206
        %v9245 = vunpack.c.h.b16 %v9206
        %v9246 = vunpack.c.l.b16 %v9207
        %v9247 = vunpack.c.h.b16 %v9207
        %v9248 = vunpack.c.l.b16 %v9208
        %v9249 = vunpack.c.h.b16 %v9208
        %v9250 = vunpack.c.l.b16 %v9209
        %v9251 = vunpack.c.h.b16 %v9209
        %v9252 = vunpack.c.l.b16 %v9210
        %v9253 = vunpack.c.h.b16 %v9210
        %v9254 = vunpack.c.l.b16 %v9211
        %v9255 = vunpack.c.h.b16 %v9211
        %v9256 = vunpack.c.l.b16 %v9212
        %v9257 = vunpack.c.h.b16 %v9212
        %v9258 = vunpack.c.l.b16 %v9213
        %v9259 = vunpack.c.h.b16 %v9213
        %v9260 = vunpack.c.l.b16 %v9214
        %v9261 = vunpack.c.h.b16 %v9214
        %v9262 = vunpack.c.l.b16 %v9215
        %v9263 = vunpack.c.h.b16 %v9215
        %v9264 = vunpack.c.l.b16 %v9216
        %v9265 = vunpack.c.h.b16 %v9216
        %v9266 = vunpack.c.l.b16 %v9217
        %v9267 = vunpack.c.h.b16 %v9217
        %v9268 = vunpack.c.l.b16 %v9218
        %v9269 = vunpack.c.h.b16 %v9218
        %v9270 = vpack.c.b16 %v9236, %v9236
        %v9271 = vpack.c.b16 %v9237, %v9237
        %v9272 = vpack.c.b16 %v9238, %v9238
        %v9273 = vpack.c.b16 %v9239, %v9239
        %v9274 = vpack.c.b16 %v9240, %v9240
        %v9275 = vpack.c.b16 %v9241, %v9241
        %v9276 = vpack.c.b16 %v9242, %v9242
        %v9277 = vpack.c.b16 %v9243, %v9243
        %v9278 = vpack.c.b16 %v9244, %v9244
        %v9279 = vpack.c.b16 %v9245, %v9245
        %v9280 = vpack.c.b16 %v9246, %v9246
        %v9281 = vpack.c.b16 %v9247, %v9247
        %v9282 = vpack.c.b16 %v9248, %v9248
        %v9283 = vpack.c.b16 %v9249, %v9249
        %v9284 = vpack.c.b16 %v9250, %v9250
        %v9285 = vpack.c.b16 %v9251, %v9251
        %v9286 = vpack.c.b16 %v9252, %v9252
        %v9287 = vpack.c.b16 %v9253, %v9253
        %v9288 = vpack.c.b16 %v9254, %v9254
        %v9289 = vpack.c.b16 %v9255, %v9255
        %v9290 = vpack.c.b16 %v9256, %v9256
        %v9291 = vpack.c.b16 %v9257, %v9257
        %v9292 = vpack.c.b16 %v9258, %v9258
        %v9293 = vpack.c.b16 %v9259, %v9259
        %v9294 = vpack.c.b16 %v9260, %v9260
        %v9295 = vpack.c.b16 %v9261, %v9261
        %v9296 = vpack.c.b16 %v9262, %v9262
        %v9297 = vpack.c.b16 %v9263, %v9263
        %v9298 = vpack.c.b16 %v9264, %v9264
        %v9299 = vpack.c.b16 %v9265, %v9265
        %v9300 = vpack.c.b16 %v9266, %v9266
        %v9301 = vpack.c.b16 %v9267, %v9267
        %v9302 = vpack.c.b16 %v9268, %v9268
        %v9303 = vpack.c.b16 %v9269, %v9269
        %vm9338 = vcmask 125952
        %9339 = vst.msk [vmem:[%s765] sm:$0xf] %vm9338, %v9270
        %9340 = vst.msk [vmem:[%s765 + $0x4] sm:$0xf] %vm9338, %v9271
        %9341 = vst.msk [vmem:[%s765 + $0x8] sm:$0xf] %vm9338, %v9272
        %9342 = vst.msk [vmem:[%s765 + $0xc] sm:$0xf] %vm9338, %v9273
        %9343 = vst.msk [vmem:[%s765 + $0x10] sm:$0xf] %vm9338, %v9274
        %9344 = vst.msk [vmem:[%s765 + $0x14] sm:$0xf] %vm9338, %v9275
        %9345 = vst.msk [vmem:[%s765 + $0x18] sm:$0xf] %vm9338, %v9276
        %9346 = vst.msk [vmem:[%s765 + $0x1c] sm:$0xf] %vm9338, %v9277
        %9347 = vst.msk [vmem:[%s765 + $0x20] sm:$0xf] %vm9338, %v9278
        %9348 = vst.msk [vmem:[%s765 + $0x24] sm:$0xf] %vm9338, %v9279
        %9349 = vst.msk [vmem:[%s765 + $0x28] sm:$0xf] %vm9338, %v9280
        %9350 = vst.msk [vmem:[%s765 + $0x2c] sm:$0xf] %vm9338, %v9281
        %9351 = vst.msk [vmem:[%s765 + $0x30] sm:$0xf] %vm9338, %v9282
        %9352 = vst.msk [vmem:[%s765 + $0x34] sm:$0xf] %vm9338, %v9283
        %9353 = vst.msk [vmem:[%s765 + $0x38] sm:$0xf] %vm9338, %v9284
        %9354 = vst.msk [vmem:[%s765 + $0x3c] sm:$0xf] %vm9338, %v9285
        %9355 = vst.msk [vmem:[%s765 + $0x40] sm:$0xf] %vm9338, %v9286
        %9356 = vst.msk [vmem:[%s765 + $0x44] sm:$0xf] %vm9338, %v9287
        %9357 = vst.msk [vmem:[%s765 + $0x48] sm:$0xf] %vm9338, %v9288
        %9358 = vst.msk [vmem:[%s765 + $0x4c] sm:$0xf] %vm9338, %v9289
        %9359 = vst.msk [vmem:[%s765 + $0x50] sm:$0xf] %vm9338, %v9290
        %9360 = vst.msk [vmem:[%s765 + $0x54] sm:$0xf] %vm9338, %v9291
        %9361 = vst.msk [vmem:[%s765 + $0x58] sm:$0xf] %vm9338, %v9292
        %9362 = vst.msk [vmem:[%s765 + $0x5c] sm:$0xf] %vm9338, %v9293
        %9363 = vst.msk [vmem:[%s765 + $0x60] sm:$0xf] %vm9338, %v9294
        %9364 = vst.msk [vmem:[%s765 + $0x64] sm:$0xf] %vm9338, %v9295
        %9365 = vst.msk [vmem:[%s765 + $0x68] sm:$0xf] %vm9338, %v9296
        %9366 = vst.msk [vmem:[%s765 + $0x6c] sm:$0xf] %vm9338, %v9297
        %9367 = vst.msk [vmem:[%s765 + $0x70] sm:$0xf] %vm9338, %v9298
        %9368 = vst.msk [vmem:[%s765 + $0x74] sm:$0xf] %vm9338, %v9299
        %9369 = vst.msk [vmem:[%s765 + $0x78] sm:$0xf] %vm9338, %v9300
        %9370 = vst.msk [vmem:[%s765 + $0x7c] sm:$0xf] %vm9338, %v9301
        %9371 = vst.msk [vmem:[%s765 + $0x80] sm:$0xf] %vm9338, %v9302
        %9372 = vst.msk [vmem:[%s765 + $0x84] sm:$0xf] %vm9338, %v9303
        %s9373 = smul.u32 34, %s20
        %p9374 = scmp.lt.s32.totalorder %s19, 1
        %s9375 = scalar_select %p9374, %s19, 1
        %p9376 = scmp.lt.s32.totalorder %s9373, 33
        %s9377 = scalar_select %p9376, %s9373, 33
        %s9378 = smul.addr %s9375, 34
        %s9379 = sadd.s32 %s9377, %s9378
        %s9380 = smul.addr %s9379, 4
        %s9381 = scalar_lea.vmem %s4, %s9380
        // Predicated region
        $region119: #{tpu_custom_call.1} parent=109 // pred_check
          %p9382 = pneg %p149
        $region120: #{tpu_custom_call.1} parent=109 // pred_check_branch
          %9384 = sbr.rel (%p9382) target = $region122
        $region121: #{tpu_custom_call.1} parent=109 // pred_region
          %s9385 = smul.u32 34, %s20
        $region122: #{tpu_custom_call.1} parent=109 // pred_fallthru
          _
      $region110: #{tpu_custom_call.1} parent=5 // pred_fallthru
        _
      %p9386 = scmp.le.s32.totalorder 2, %s10
      // Predicated region
      $region123: #{tpu_custom_call.1} parent=5 // pred_check
        %p9387 = pneg %p9386
      $region124: #{tpu_custom_call.1} parent=5 // pred_check_branch
        %9389 = sbr.rel (%p9387) target = $region126
      $region125: #{tpu_custom_call.1} parent=5 // pred_region
        %s9390 = ssub.s32 %s10, 2
        // Predicated region
        $region127: #{tpu_custom_call.1} parent=125 // pred_check
          %p9391 = pneg %p155
        $region128: #{tpu_custom_call.1} parent=125 // pred_check_branch
          %9393 = sbr.rel (%p9391) target = $region130
        $region129: #{tpu_custom_call.1} parent=125 // pred_region
          %s9394 = smul.u32 34, %s22
          %p9395 = scmp.lt.s32.totalorder %s21, 1
          %s9396 = scalar_select %p9395, %s21, 1
          %p9397 = scmp.lt.s32.totalorder %s9394, 33
          %s9398 = scalar_select %p9397, %s9394, 33
          %s9399 = smul.addr %s9396, 34
          %s9400 = sadd.s32 %s9398, %s9399
          %s9401 = smul.addr %s9400, 4
          %s9402 = scalar_lea.vmem %s4, %s9401
        $region130: #{tpu_custom_call.1} parent=125 // pred_fallthru
          _
      $region126: #{tpu_custom_call.1} parent=5 // pred_fallthru
        _
    $region6: #{tpu_custom_call.1} parent=1 // loop_footer
      %s14 = sadd.s32 1, %s10
    $region7: #{tpu_custom_call.1} parent=1 // loop_footer_branch
      %9 = sbr.rel target = $region3
    $region8: #{tpu_custom_call.1} parent=1 // loop_exit
      _

</llo_original>
